<compile_context>
chip_gen: v7x
topology: tpu7x:2x2x1
jax: 0.10.0
libtpu: 0.0.40
codegen_flags: <defaults>
</compile_context>

<pallas_src>
import functools

import jax
import jax.numpy as jnp
from jax import lax
from jax.experimental import pallas as pl
from jax.experimental.pallas import tpu as pltpu

# ----------------------------- configuration --------------------------------
NUM_FEATURES = 4      # N  (number of variates / "tokens")
SEQ_LEN      = 16     # L  (lookback window, feeds the inverted embedding)
PRED_LEN     = 8      # forecast horizon
D_MODEL      = 32
D_FF         = 64
N_HEADS      = 4
E_LAYERS     = 2
USE_NORM     = True
ACTIVATION   = "relu"    # module arg; "relu" or "gelu"
EPS          = 1e-5

HEAD_DIM       = D_MODEL // N_HEADS
B_SUB          = 32                    # batch elems per 128-row sub-block
R_SUB          = B_SUB * NUM_FEATURES  # 128 rows -> fills the MXU sublanes
SUB_PER_BLOCK  = 8                     # sub-blocks per grid step (B_TILE=256)


# ------------------------------- the kernel ---------------------------------
def _itransformer_kernel(
    n_sub,
    x_ref,                                   # (n_sub*R_SUB, L)   f32
    attn_bias_ref,                           # (R_SUB, R_SUB)     f32 (precomp)
    head_mask_ref,                           # (H, 1, D)          f32 (precomp)
    selT_ref,                                # (R_SUB, B_SUB)     f32 (precomp)
    w_emb_ref, b_emb_ref,                    # (L, D) bf16, (1, D) f32
    w_qkv_ref, b_qkv_ref,                    # (E, D, 3D) bf16, (E, 1, 3D) f32
    wo_ref, bo_ref,                          # (E, D, D) bf16, (E, 1, D) f32
    ln1_ref,                                 # (E, 2, D)          f32
    w1_ref, b1_ref,                          # (E, D, Dff) bf16, (E, 1, Dff) f32
    w2_ref, b2_ref,                          # (E, Dff, D) bf16, (E, 1, D) f32
    ln2_ref,                                 # (E, 2, D)          f32
    lnf_ref,                                 # (2, D)             f32
    wp_ref, bp_ref,                          # (D, P) bf16, (1, P) f32
    bpf_ref,                                 # (1, 1)             f32
    out_ref,                                 # (P, n_sub*B_SUB)   f32
):
    f32 = jnp.float32
    bf16 = jnp.bfloat16
    scale = 1.0 / (HEAD_DIM ** 0.5)

    # Constant inputs (fetched once; constant block index -> never re-DMA'd).
    attn_bias = attn_bias_ref[...]                              # [R_SUB, R_SUB]
    selT = selT_ref[...]                                        # [R_SUB, B_SUB]

    def layer_norm(h, gb):
        g = gb[0:1, :]
        b = gb[1:2, :]
        mu = jnp.mean(h, axis=-1, keepdims=True)
        hc = h - mu
        v = jnp.mean(hc * hc, axis=-1, keepdims=True)
        return hc * lax.rsqrt(v + EPS) * g + b

    for sub in range(n_sub):
        r0 = sub * R_SUB
        x = x_ref[r0:r0 + R_SUB, :]                             # [128, L] f32

        # --- non-stationary instance norm over the time (lane) axis ---------
        if USE_NORM:
            means = jnp.mean(x, axis=-1, keepdims=True)         # [128, 1]
            xc = x - means
            var = jnp.mean(xc * xc, axis=-1, keepdims=True)     # unbiased=False
            stdev = jnp.sqrt(var + 1e-5)
            xn = xc * lax.rsqrt(var + 1e-5)
        else:
            means = jnp.zeros((R_SUB, 1), f32)
            stdev = jnp.ones((R_SUB, 1), f32)
            xn = x

        # --- inverted embedding: each variate's full series -> one token ----
        enc = jnp.dot(xn.astype(bf16), w_emb_ref[...],
                      preferred_element_type=f32) + b_emb_ref[...]   # [128, D]

        for l in range(E_LAYERS):
            # -------------- multi-head full attention over variates ---------
            qkv = jnp.dot(enc.astype(bf16), w_qkv_ref[l],
                          preferred_element_type=f32) + b_qkv_ref[l]  # [128,3D]
            qb = (qkv[:, :D_MODEL] * scale).astype(bf16)   # scale folded in Q
            kb = qkv[:, D_MODEL:2 * D_MODEL].astype(bf16)
            v_f32 = qkv[:, 2 * D_MODEL:]                   # keep f32 for mask

            attn = jnp.zeros((R_SUB, D_MODEL), f32)
            for h in range(N_HEADS):
                lo = h * HEAD_DIM
                hi = lo + HEAD_DIM
                s = lax.dot_general(qb[:, lo:hi], kb[:, lo:hi],
                                    (((1,), (1,)), ((), ())),
                                    preferred_element_type=f32)  # [128, 128]
                s = s + attn_bias                    # block-diag (per batch)
                s = s - jnp.max(s, axis=-1, keepdims=True)
                p = jnp.exp(s)
                p = p / jnp.sum(p, axis=-1, keepdims=True)
                # masked V: only this head's columns are nonzero -> summing
                # over heads reproduces the concatenated context (no concat).
                vhm = (v_f32 * head_mask_ref[h]).astype(bf16)    # [128, D]
                attn = attn + jnp.dot(p.astype(bf16), vhm,
                                      preferred_element_type=f32)  # [128, D]

            attn = jnp.dot(attn.astype(bf16), wo_ref[l],
                           preferred_element_type=f32) + bo_ref[l]
            enc = layer_norm(enc + attn, ln1_ref[l])

            # -------------- position-wise FFN (the 1x1 convs) ----------------
            y = jnp.dot(enc.astype(bf16), w1_ref[l],
                        preferred_element_type=f32) + b1_ref[l]      # [128,Dff]
            if ACTIVATION == "relu":
                y = jnp.maximum(y, 0.0)
            else:
                y = jax.nn.gelu(y, approximate=False)
            y = jnp.dot(y.astype(bf16), w2_ref[l],
                        preferred_element_type=f32) + b2_ref[l]      # [128, D]
            enc = layer_norm(enc + y, ln2_ref[l])

        # --- final encoder LayerNorm -----------------------------------------
        enc = layer_norm(enc, lnf_ref[...])

        # --- projection to the horizon + de-normalization (per row) ----------
        dec = jnp.dot(enc.astype(bf16), wp_ref[...],
                      preferred_element_type=f32) + bp_ref[...]      # [128, P]
        if USE_NORM:
            dec = dec * stdev + means

        # --- feature projection, emitted transposed (lane-dense output) ------
        # out_t[p, b] = sum_r dec[r, p] * selT[r, b] + bpf
        out_t = lax.dot_general(dec, selT, (((0,), (0,)), ((), ())),
                                preferred_element_type=f32) + bpf_ref[...]
        out_ref[:, sub * B_SUB:(sub + 1) * B_SUB] = out_t           # [P, 32]


# ------------------------------ wrappers -------------------------------------
def _const_map(nd, i):
    return (0,) * nd


def pack_params(params):
    """One-time packing of module parameters + constants into kernel slabs."""
    bf16 = jnp.bfloat16
    f32 = jnp.float32

    w_qkv = jnp.concatenate([params["wq"], params["wk"], params["wv"]],
                            axis=-1).astype(bf16)                   # (E, D, 3D)
    b_qkv = jnp.concatenate([params["bq"], params["bk"], params["bv"]],
                            axis=-1).astype(f32)                    # (E, 1, 3D)
    ln1 = jnp.concatenate([params["ln1g"], params["ln1b"]], axis=1).astype(f32)
    ln2 = jnp.concatenate([params["ln2g"], params["ln2b"]], axis=1).astype(f32)
    lnf = jnp.concatenate([params["lnfg"], params["lnfb"]], axis=0).astype(f32)

    # Block-diagonal attention bias (attention stays within each batch group).
    r = jnp.arange(R_SUB)
    same_batch = (r[:, None] // NUM_FEATURES) == (r[None, :] // NUM_FEATURES)
    attn_bias = jnp.where(same_batch, 0.0, -1e30).astype(f32)       # (128, 128)

    # Per-head column masks over the d_model axis.
    d = jnp.arange(D_MODEL)
    head_mask = (d[None, :] // HEAD_DIM ==
                 jnp.arange(N_HEADS)[:, None]).astype(f32)[:, None, :]  # (H,1,D)

    # Transposed feature-selection matrix with the projector_features weight
    # folded in: selT[r, b] = wpf[r % N] if r // N == b else 0.
    wpf = params["wpf"][:, 0]                                        # (N,)
    selT = jnp.where(
        (r[:, None] // NUM_FEATURES) == jnp.arange(B_SUB)[None, :],
        wpf[r % NUM_FEATURES][:, None], 0.0).astype(f32)             # (128, 32)

    return [
        attn_bias, head_mask, selT,
        params["w_emb"].astype(bf16), params["b_emb"].astype(f32),
        w_qkv, b_qkv,
        params["wo"].astype(bf16), params["bo"].astype(f32),
        ln1,
        params["w1"].astype(bf16), params["b1"].astype(f32),
        params["w2"].astype(bf16), params["b2"].astype(f32),
        ln2, lnf,
        params["wp"].astype(bf16), params["bp"].astype(f32),
        params["bpf"].astype(f32),
    ]


def itransformer_forward(x_enc, packed, sub_per_block=SUB_PER_BLOCK):
    """x_enc: [B, N, seq_len] float32 (same layout as the PyTorch forward)."""
    B, N, L = x_enc.shape
    assert N == NUM_FEATURES and L == SEQ_LEN

    n_sub_total = -(-B // B_SUB)
    if n_sub_total <= sub_per_block:
        sub_per_block = n_sub_total          # single grid step, full-dim block
    n_blocks = -(-n_sub_total // sub_per_block)
    b_pad = n_blocks * sub_per_block * B_SUB
    r_blk = sub_per_block * R_SUB
    b_tile = sub_per_block * B_SUB

    x = x_enc.astype(jnp.float32)
    if b_pad != B:
        x = jnp.pad(x, ((0, b_pad - B), (0, 0), (0, 0)))
    x2d = x.reshape(b_pad * N, L)            # rows ordered (batch, variate)

    in_specs = [pl.BlockSpec((r_blk, L), lambda i: (i, 0))]
    for arr in packed:
        in_specs.append(
            pl.BlockSpec(arr.shape, functools.partial(_const_map, arr.ndim)))

    kernel = functools.partial(_itransformer_kernel, sub_per_block)

    out_t = pl.pallas_call(
        kernel,
        grid=(n_blocks,),
        in_specs=in_specs,
        out_specs=pl.BlockSpec((PRED_LEN, b_tile), lambda i: (0, i)),
        out_shape=jax.ShapeDtypeStruct((PRED_LEN, b_pad), jnp.float32),
        compiler_params=pltpu.CompilerParams(
            dimension_semantics=("parallel",)),
    )(x2d, *packed)

    return out_t[:, :B].T.reshape(B, PRED_LEN, 1)


# --------------------------- pure-JAX reference ------------------------------
def reference_forward(x_enc, params):
    """Mirror of the PyTorch forward (bf16 weights, f32 math) for validation."""
    f32 = jnp.float32
    w = lambda a: a.astype(jnp.bfloat16).astype(f32)   # kernel stores wts bf16
    B, N, L = x_enc.shape
    x = x_enc.reshape(B * N, L).astype(f32)
    means = jnp.mean(x, -1, keepdims=True)
    xc = x - means
    var = jnp.mean(xc * xc, -1, keepdims=True)
    stdev = jnp.sqrt(var + 1e-5)
    xn = xc / stdev
    enc = xn @ w(params["w_emb"]) + params["b_emb"]
    scale = 1.0 / (HEAD_DIM ** 0.5)

    def ln(h, g, b):
        mu = jnp.mean(h, -1, keepdims=True)
        hc = h - mu
        v = jnp.mean(hc * hc, -1, keepdims=True)
        return hc / jnp.sqrt(v + EPS) * g + b

    for l in range(E_LAYERS):
        q = enc @ w(params["wq"][l]) + params["bq"][l]
        k = enc @ w(params["wk"][l]) + params["bk"][l]
        v = enc @ w(params["wv"][l]) + params["bv"][l]
        ctx = []
        for h in range(N_HEADS):
            lo, hi = h * HEAD_DIM, (h + 1) * HEAD_DIM
            qh = q[:, lo:hi].reshape(B, N, HEAD_DIM)
            kh = k[:, lo:hi].reshape(B, N, HEAD_DIM)
            vh = v[:, lo:hi].reshape(B, N, HEAD_DIM)
            s = jnp.einsum('bqd,bkd->bqk', qh, kh) * scale
            p = jax.nn.softmax(s, axis=-1)
            ctx.append(jnp.einsum('bqk,bkd->bqd', p, vh).reshape(B * N, HEAD_DIM))
        attn = jnp.concatenate(ctx, -1) @ w(params["wo"][l]) + params["bo"][l]
        enc = ln(enc + attn, params["ln1g"][l], params["ln1b"][l])
        y = jnp.maximum(enc @ w(params["w1"][l]) + params["b1"][l], 0.0)
        y = y @ w(params["w2"][l]) + params["b2"][l]
        enc = ln(enc + y, params["ln2g"][l], params["ln2b"][l])
    enc = ln(enc, params["lnfg"], params["lnfb"])
    dec = enc @ w(params["wp"]) + params["bp"]
    dec = dec * stdev + means
    dec = dec.reshape(B, N, PRED_LEN)
    out = jnp.einsum('bnp,n->bp', dec, params["wpf"][:, 0]) + params["bpf"][0, 0]
    return out[:, :, None]


# --------------------------- parameter init ----------------------------------
def init_params(key):
    keys = iter(jax.random.split(key, 24))

    def nrm(shape, scale=0.05):
        return jax.random.normal(next(keys), shape, jnp.float32) * scale

    p = {}
    p["w_emb"] = nrm((SEQ_LEN, D_MODEL))
    p["b_emb"] = nrm((1, D_MODEL))
    p["wq"] = nrm((E_LAYERS, D_MODEL, D_MODEL)); p["bq"] = nrm((E_LAYERS, 1, D_MODEL))
    p["wk"] = nrm((E_LAYERS, D_MODEL, D_MODEL)); p["bk"] = nrm((E_LAYERS, 1, D_MODEL))
    p["wv"] = nrm((E_LAYERS, D_MODEL, D_MODEL)); p["bv"] = nrm((E_LAYERS, 1, D_MODEL))
    p["wo"] = nrm((E_LAYERS, D_MODEL, D_MODEL)); p["bo"] = nrm((E_LAYERS, 1, D_MODEL))
    p["ln1g"] = jnp.ones((E_LAYERS, 1, D_MODEL), jnp.float32)
    p["ln1b"] = jnp.zeros((E_LAYERS, 1, D_MODEL), jnp.float32)
    p["ln2g"] = jnp.ones((E_LAYERS, 1, D_MODEL), jnp.float32)
    p["ln2b"] = jnp.zeros((E_LAYERS, 1, D_MODEL), jnp.float32)
    p["w1"] = nrm((E_LAYERS, D_MODEL, D_FF)); p["b1"] = nrm((E_LAYERS, 1, D_FF))
    p["w2"] = nrm((E_LAYERS, D_FF, D_MODEL)); p["b2"] = nrm((E_LAYERS, 1, D_MODEL))
    p["lnfg"] = jnp.ones((1, D_MODEL), jnp.float32)
    p["lnfb"] = jnp.zeros((1, D_MODEL), jnp.float32)
    p["wp"] = nrm((D_MODEL, PRED_LEN)); p["bp"] = nrm((1, PRED_LEN))
    p["wpf"] = nrm((NUM_FEATURES, 1)); p["bpf"] = nrm((1, 1))
    return p


# --------------------------------- main ---------------------------------------
if __name__ == "__main__":
    key = jax.random.PRNGKey(0)
    pkey, xkey = jax.random.split(key)
    params = init_params(pkey)
    packed = pack_params(params)

    B = 2
    # PyTorch forward input layout: [batch, num_features, seq_len]
    x_enc = jax.random.normal(xkey, (B, NUM_FEATURES, SEQ_LEN), jnp.float32)

    out = itransformer_forward(x_enc, packed)
    out = jax.block_until_ready(out)
    assert out.shape == (B, PRED_LEN, 1), out.shape
    assert bool(jnp.all(jnp.isfinite(out)))

    ref = jax.block_until_ready(reference_forward(x_enc, params))
    assert bool(jnp.allclose(out, ref, rtol=5e-2, atol=2e-2)), (
        float(jnp.max(jnp.abs(out - ref))))
    print("KERNEL_OK")
</pallas_src>

<mosaic_0001>
module attributes {stable_mosaic.version = 11 : i64} {
  func.func @_itransformer_kernel(%arg0: i32, %arg1: memref<128x16xf32, #tpu.memory_space<vmem>>, %arg2: memref<128x128xf32, #tpu.memory_space<vmem>>, %arg3: memref<4x1x32xf32, #tpu.memory_space<vmem>>, %arg4: memref<128x32xf32, #tpu.memory_space<vmem>>, %arg5: memref<16x32xbf16, #tpu.memory_space<vmem>>, %arg6: memref<1x32xf32, #tpu.memory_space<vmem>>, %arg7: memref<2x32x96xbf16, #tpu.memory_space<vmem>>, %arg8: memref<2x1x96xf32, #tpu.memory_space<vmem>>, %arg9: memref<2x32x32xbf16, #tpu.memory_space<vmem>>, %arg10: memref<2x1x32xf32, #tpu.memory_space<vmem>>, %arg11: memref<2x2x32xf32, #tpu.memory_space<vmem>>, %arg12: memref<2x32x64xbf16, #tpu.memory_space<vmem>>, %arg13: memref<2x1x64xf32, #tpu.memory_space<vmem>>, %arg14: memref<2x64x32xbf16, #tpu.memory_space<vmem>>, %arg15: memref<2x1x32xf32, #tpu.memory_space<vmem>>, %arg16: memref<2x2x32xf32, #tpu.memory_space<vmem>>, %arg17: memref<2x32xf32, #tpu.memory_space<vmem>>, %arg18: memref<32x8xbf16, #tpu.memory_space<vmem>>, %arg19: memref<1x8xf32, #tpu.memory_space<vmem>>, %arg20: memref<1x1xf32, #tpu.memory_space<vmem>>, %arg21: memref<8x32xf32, #tpu.memory_space<vmem>>) attributes {dimension_semantics = [#tpu.dimension_semantics<parallel>], iteration_bounds = array<i64: 1>, scalar_prefetch = 0 : i64, scratch_operands = 0 : i64, tpu.core_type = #tpu.core_type<tc>, window_params = [{transform_indices = @transform_0, window_bounds = array<i64: 128, 16>}, {pipeline_mode = #tpu.pipeline_mode<synchronous>, transform_indices = @transform_1, window_bounds = array<i64: 128, 128>}, {pipeline_mode = #tpu.pipeline_mode<synchronous>, transform_indices = @transform_2, window_bounds = array<i64: 4, 1, 32>}, {pipeline_mode = #tpu.pipeline_mode<synchronous>, transform_indices = @transform_3, window_bounds = array<i64: 128, 32>}, {pipeline_mode = #tpu.pipeline_mode<synchronous>, transform_indices = @transform_4, window_bounds = array<i64: 16, 32>}, {pipeline_mode = #tpu.pipeline_mode<synchronous>, transform_indices = @transform_5, window_bounds = array<i64: 1, 32>}, {pipeline_mode = #tpu.pipeline_mode<synchronous>, transform_indices = @transform_6, window_bounds = array<i64: 2, 32, 96>}, {pipeline_mode = #tpu.pipeline_mode<synchronous>, transform_indices = @transform_7, window_bounds = array<i64: 2, 1, 96>}, {pipeline_mode = #tpu.pipeline_mode<synchronous>, transform_indices = @transform_8, window_bounds = array<i64: 2, 32, 32>}, {pipeline_mode = #tpu.pipeline_mode<synchronous>, transform_indices = @transform_9, window_bounds = array<i64: 2, 1, 32>}, {pipeline_mode = #tpu.pipeline_mode<synchronous>, transform_indices = @transform_10, window_bounds = array<i64: 2, 2, 32>}, {pipeline_mode = #tpu.pipeline_mode<synchronous>, transform_indices = @transform_11, window_bounds = array<i64: 2, 32, 64>}, {pipeline_mode = #tpu.pipeline_mode<synchronous>, transform_indices = @transform_12, window_bounds = array<i64: 2, 1, 64>}, {pipeline_mode = #tpu.pipeline_mode<synchronous>, transform_indices = @transform_13, window_bounds = array<i64: 2, 64, 32>}, {pipeline_mode = #tpu.pipeline_mode<synchronous>, transform_indices = @transform_14, window_bounds = array<i64: 2, 1, 32>}, {pipeline_mode = #tpu.pipeline_mode<synchronous>, transform_indices = @transform_15, window_bounds = array<i64: 2, 2, 32>}, {pipeline_mode = #tpu.pipeline_mode<synchronous>, transform_indices = @transform_16, window_bounds = array<i64: 2, 32>}, {pipeline_mode = #tpu.pipeline_mode<synchronous>, transform_indices = @transform_17, window_bounds = array<i64: 32, 8>}, {pipeline_mode = #tpu.pipeline_mode<synchronous>, transform_indices = @transform_18, window_bounds = array<i64: 1, 8>}, {pipeline_mode = #tpu.pipeline_mode<synchronous>, transform_indices = @transform_19, window_bounds = array<i64: 1, 1>}, {transform_indices = @transform_20, window_bounds = array<i64: 8, 32>}]} {
    %c0 = arith.constant 0 : index
    %c0_0 = arith.constant 0 : index
    %0 = vector.load %arg2[%c0, %c0_0] : memref<128x128xf32, #tpu.memory_space<vmem>>, vector<128x128xf32>
    %c0_1 = arith.constant 0 : index
    %c0_2 = arith.constant 0 : index
    %1 = vector.load %arg4[%c0_1, %c0_2] : memref<128x32xf32, #tpu.memory_space<vmem>>, vector<128x32xf32>
    %c0_3 = arith.constant 0 : index
    %c0_4 = arith.constant 0 : index
    %2 = vector.load %arg1[%c0_3, %c0_4] : memref<128x16xf32, #tpu.memory_space<vmem>>, vector<128x16xf32>
    %cst = arith.constant dense<0.000000e+00> : vector<128xf32>
    %3 = vector.multi_reduction <add>, %2, %cst [1] : vector<128x16xf32> to vector<128xf32>
    %4 = vector.shape_cast %3 : vector<128xf32> to vector<128x1xf32>
    %cst_5 = arith.constant 1.600000e+01 : f32
    %5 = vector.broadcast %cst_5 : f32 to vector<128x1xf32>
    %6 = arith.divf %4, %5 : vector<128x1xf32>
    %7 = vector.broadcast %6 : vector<128x1xf32> to vector<128x16xf32>
    %8 = arith.subf %2, %7 : vector<128x16xf32>
    %9 = arith.mulf %8, %8 : vector<128x16xf32>
    %cst_6 = arith.constant dense<0.000000e+00> : vector<128xf32>
    %10 = vector.multi_reduction <add>, %9, %cst_6 [1] : vector<128x16xf32> to vector<128xf32>
    %11 = vector.shape_cast %10 : vector<128xf32> to vector<128x1xf32>
    %cst_7 = arith.constant 1.600000e+01 : f32
    %12 = vector.broadcast %cst_7 : f32 to vector<128x1xf32>
    %13 = arith.divf %11, %12 : vector<128x1xf32>
    %cst_8 = arith.constant 9.99999974E-6 : f32
    %14 = vector.broadcast %cst_8 : f32 to vector<128x1xf32>
    %15 = arith.addf %13, %14 : vector<128x1xf32>
    %16 = math.sqrt %15 : vector<128x1xf32>
    %cst_9 = arith.constant 9.99999974E-6 : f32
    %17 = vector.broadcast %cst_9 : f32 to vector<128x1xf32>
    %18 = arith.addf %13, %17 : vector<128x1xf32>
    %19 = math.rsqrt %18 : vector<128x1xf32>
    %20 = vector.broadcast %19 : vector<128x1xf32> to vector<128x16xf32>
    %21 = arith.mulf %8, %20 : vector<128x16xf32>
    %22 = arith.truncf %21 : vector<128x16xf32> to vector<128x16xbf16>
    %c0_10 = arith.constant 0 : index
    %c0_11 = arith.constant 0 : index
    %23 = vector.load %arg5[%c0_10, %c0_11] : memref<16x32xbf16, #tpu.memory_space<vmem>>, vector<16x32xbf16>
    %cst_12 = arith.constant dense<0.000000e+00> : vector<128x32xf32>
    %24 = tpu.matmul %22, %23, %cst_12 {dimension_numbers = #tpu.dot_dimension_numbers<[1], [0], [0], [1], [0, 0, 1, 1], [], []>} : vector<128x16xbf16>, vector<16x32xbf16>, vector<128x32xf32> -> vector<128x32xf32>
    %c0_13 = arith.constant 0 : index
    %c0_14 = arith.constant 0 : index
    %25 = vector.load %arg6[%c0_13, %c0_14] : memref<1x32xf32, #tpu.memory_space<vmem>>, vector<1x32xf32>
    %26 = vector.broadcast %25 : vector<1x32xf32> to vector<128x32xf32>
    %27 = arith.addf %24, %26 : vector<128x32xf32>
    %28 = arith.truncf %27 : vector<128x32xf32> to vector<128x32xbf16>
    %c0_15 = arith.constant 0 : index
    %c0_16 = arith.constant 0 : index
    %c0_17 = arith.constant 0 : index
    %29 = vector.load %arg7[%c0_15, %c0_16, %c0_17] : memref<2x32x96xbf16, #tpu.memory_space<vmem>>, vector<1x32x96xbf16>
    %30 = vector.shape_cast %29 : vector<1x32x96xbf16> to vector<32x96xbf16>
    %cst_18 = arith.constant dense<0.000000e+00> : vector<128x96xf32>
    %31 = tpu.matmul %28, %30, %cst_18 {dimension_numbers = #tpu.dot_dimension_numbers<[1], [0], [0], [1], [0, 0, 1, 1], [], []>} : vector<128x32xbf16>, vector<32x96xbf16>, vector<128x96xf32> -> vector<128x96xf32>
    %c0_19 = arith.constant 0 : index
    %c0_20 = arith.constant 0 : index
    %c0_21 = arith.constant 0 : index
    %32 = vector.load %arg8[%c0_19, %c0_20, %c0_21] : memref<2x1x96xf32, #tpu.memory_space<vmem>>, vector<1x1x96xf32>
    %33 = vector.shape_cast %32 : vector<1x1x96xf32> to vector<1x96xf32>
    %34 = vector.broadcast %33 : vector<1x96xf32> to vector<128x96xf32>
    %35 = arith.addf %31, %34 : vector<128x96xf32>
    %36 = vector.extract_strided_slice %35 {offsets = [0, 0], sizes = [128, 32], strides = [1, 1]} : vector<128x96xf32> to vector<128x32xf32>
    %cst_22 = arith.constant 0.353553385 : f32
    %37 = vector.broadcast %cst_22 : f32 to vector<128x32xf32>
    %38 = arith.mulf %36, %37 : vector<128x32xf32>
    %39 = arith.truncf %38 : vector<128x32xf32> to vector<128x32xbf16>
    %40 = vector.extract_strided_slice %35 {offsets = [0, 32], sizes = [128, 32], strides = [1, 1]} : vector<128x96xf32> to vector<128x32xf32>
    %41 = arith.truncf %40 : vector<128x32xf32> to vector<128x32xbf16>
    %42 = vector.extract_strided_slice %35 {offsets = [0, 64], sizes = [128, 32], strides = [1, 1]} : vector<128x96xf32> to vector<128x32xf32>
    %cst_23 = arith.constant 0.000000e+00 : f32
    %43 = vector.broadcast %cst_23 : f32 to vector<128x32xf32>
    %44 = vector.extract_strided_slice %39 {offsets = [0, 0], sizes = [128, 8], strides = [1, 1]} : vector<128x32xbf16> to vector<128x8xbf16>
    %45 = vector.extract_strided_slice %41 {offsets = [0, 0], sizes = [128, 8], strides = [1, 1]} : vector<128x32xbf16> to vector<128x8xbf16>
    %cst_24 = arith.constant dense<0.000000e+00> : vector<128x128xf32>
    %46 = tpu.matmul %44, %45, %cst_24 {dimension_numbers = #tpu.dot_dimension_numbers<[1], [1], [0], [0], [0, 0, 1, 0], [], []>} : vector<128x8xbf16>, vector<128x8xbf16>, vector<128x128xf32> -> vector<128x128xf32>
    %47 = arith.addf %46, %0 : vector<128x128xf32>
    %cst_25 = arith.constant dense<0xFF800000> : vector<128xf32>
    %48 = vector.multi_reduction <maximumf>, %47, %cst_25 [1] : vector<128x128xf32> to vector<128xf32>
    %49 = vector.shape_cast %48 : vector<128xf32> to vector<128x1xf32>
    %50 = vector.broadcast %49 : vector<128x1xf32> to vector<128x128xf32>
    %51 = arith.subf %47, %50 : vector<128x128xf32>
    %52 = math.exp %51 : vector<128x128xf32>
    %cst_26 = arith.constant dense<0.000000e+00> : vector<128xf32>
    %53 = vector.multi_reduction <add>, %52, %cst_26 [1] : vector<128x128xf32> to vector<128xf32>
    %54 = vector.shape_cast %53 : vector<128xf32> to vector<128x1xf32>
    %55 = vector.broadcast %54 : vector<128x1xf32> to vector<128x128xf32>
    %56 = arith.divf %52, %55 : vector<128x128xf32>
    %c0_27 = arith.constant 0 : index
    %c0_28 = arith.constant 0 : index
    %c0_29 = arith.constant 0 : index
    %57 = vector.load %arg3[%c0_27, %c0_28, %c0_29] : memref<4x1x32xf32, #tpu.memory_space<vmem>>, vector<1x1x32xf32>
    %58 = vector.shape_cast %57 : vector<1x1x32xf32> to vector<1x32xf32>
    %59 = vector.broadcast %58 : vector<1x32xf32> to vector<128x32xf32>
    %60 = arith.mulf %42, %59 : vector<128x32xf32>
    %61 = arith.truncf %60 : vector<128x32xf32> to vector<128x32xbf16>
    %62 = arith.truncf %56 : vector<128x128xf32> to vector<128x128xbf16>
    %cst_30 = arith.constant dense<0.000000e+00> : vector<128x32xf32>
    %63 = tpu.matmul %62, %61, %cst_30 {dimension_numbers = #tpu.dot_dimension_numbers<[1], [0], [0], [1], [0, 0, 1, 1], [], []>} : vector<128x128xbf16>, vector<128x32xbf16>, vector<128x32xf32> -> vector<128x32xf32>
    %64 = arith.addf %43, %63 : vector<128x32xf32>
    %65 = vector.extract_strided_slice %39 {offsets = [0, 8], sizes = [128, 8], strides = [1, 1]} : vector<128x32xbf16> to vector<128x8xbf16>
    %66 = vector.extract_strided_slice %41 {offsets = [0, 8], sizes = [128, 8], strides = [1, 1]} : vector<128x32xbf16> to vector<128x8xbf16>
    %cst_31 = arith.constant dense<0.000000e+00> : vector<128x128xf32>
    %67 = tpu.matmul %65, %66, %cst_31 {dimension_numbers = #tpu.dot_dimension_numbers<[1], [1], [0], [0], [0, 0, 1, 0], [], []>} : vector<128x8xbf16>, vector<128x8xbf16>, vector<128x128xf32> -> vector<128x128xf32>
    %68 = arith.addf %67, %0 : vector<128x128xf32>
    %cst_32 = arith.constant dense<0xFF800000> : vector<128xf32>
    %69 = vector.multi_reduction <maximumf>, %68, %cst_32 [1] : vector<128x128xf32> to vector<128xf32>
    %70 = vector.shape_cast %69 : vector<128xf32> to vector<128x1xf32>
    %71 = vector.broadcast %70 : vector<128x1xf32> to vector<128x128xf32>
    %72 = arith.subf %68, %71 : vector<128x128xf32>
    %73 = math.exp %72 : vector<128x128xf32>
    %cst_33 = arith.constant dense<0.000000e+00> : vector<128xf32>
    %74 = vector.multi_reduction <add>, %73, %cst_33 [1] : vector<128x128xf32> to vector<128xf32>
    %75 = vector.shape_cast %74 : vector<128xf32> to vector<128x1xf32>
    %76 = vector.broadcast %75 : vector<128x1xf32> to vector<128x128xf32>
    %77 = arith.divf %73, %76 : vector<128x128xf32>
    %c1 = arith.constant 1 : index
    %c0_34 = arith.constant 0 : index
    %c0_35 = arith.constant 0 : index
    %78 = vector.load %arg3[%c1, %c0_34, %c0_35] : memref<4x1x32xf32, #tpu.memory_space<vmem>>, vector<1x1x32xf32>
    %79 = vector.shape_cast %78 : vector<1x1x32xf32> to vector<1x32xf32>
    %80 = vector.broadcast %79 : vector<1x32xf32> to vector<128x32xf32>
    %81 = arith.mulf %42, %80 : vector<128x32xf32>
    %82 = arith.truncf %81 : vector<128x32xf32> to vector<128x32xbf16>
    %83 = arith.truncf %77 : vector<128x128xf32> to vector<128x128xbf16>
    %cst_36 = arith.constant dense<0.000000e+00> : vector<128x32xf32>
    %84 = tpu.matmul %83, %82, %cst_36 {dimension_numbers = #tpu.dot_dimension_numbers<[1], [0], [0], [1], [0, 0, 1, 1], [], []>} : vector<128x128xbf16>, vector<128x32xbf16>, vector<128x32xf32> -> vector<128x32xf32>
    %85 = arith.addf %64, %84 : vector<128x32xf32>
    %86 = vector.extract_strided_slice %39 {offsets = [0, 16], sizes = [128, 8], strides = [1, 1]} : vector<128x32xbf16> to vector<128x8xbf16>
    %87 = vector.extract_strided_slice %41 {offsets = [0, 16], sizes = [128, 8], strides = [1, 1]} : vector<128x32xbf16> to vector<128x8xbf16>
    %cst_37 = arith.constant dense<0.000000e+00> : vector<128x128xf32>
    %88 = tpu.matmul %86, %87, %cst_37 {dimension_numbers = #tpu.dot_dimension_numbers<[1], [1], [0], [0], [0, 0, 1, 0], [], []>} : vector<128x8xbf16>, vector<128x8xbf16>, vector<128x128xf32> -> vector<128x128xf32>
    %89 = arith.addf %88, %0 : vector<128x128xf32>
    %cst_38 = arith.constant dense<0xFF800000> : vector<128xf32>
    %90 = vector.multi_reduction <maximumf>, %89, %cst_38 [1] : vector<128x128xf32> to vector<128xf32>
    %91 = vector.shape_cast %90 : vector<128xf32> to vector<128x1xf32>
    %92 = vector.broadcast %91 : vector<128x1xf32> to vector<128x128xf32>
    %93 = arith.subf %89, %92 : vector<128x128xf32>
    %94 = math.exp %93 : vector<128x128xf32>
    %cst_39 = arith.constant dense<0.000000e+00> : vector<128xf32>
    %95 = vector.multi_reduction <add>, %94, %cst_39 [1] : vector<128x128xf32> to vector<128xf32>
    %96 = vector.shape_cast %95 : vector<128xf32> to vector<128x1xf32>
    %97 = vector.broadcast %96 : vector<128x1xf32> to vector<128x128xf32>
    %98 = arith.divf %94, %97 : vector<128x128xf32>
    %c2 = arith.constant 2 : index
    %c0_40 = arith.constant 0 : index
    %c0_41 = arith.constant 0 : index
    %99 = vector.load %arg3[%c2, %c0_40, %c0_41] : memref<4x1x32xf32, #tpu.memory_space<vmem>>, vector<1x1x32xf32>
    %100 = vector.shape_cast %99 : vector<1x1x32xf32> to vector<1x32xf32>
    %101 = vector.broadcast %100 : vector<1x32xf32> to vector<128x32xf32>
    %102 = arith.mulf %42, %101 : vector<128x32xf32>
    %103 = arith.truncf %102 : vector<128x32xf32> to vector<128x32xbf16>
    %104 = arith.truncf %98 : vector<128x128xf32> to vector<128x128xbf16>
    %cst_42 = arith.constant dense<0.000000e+00> : vector<128x32xf32>
    %105 = tpu.matmul %104, %103, %cst_42 {dimension_numbers = #tpu.dot_dimension_numbers<[1], [0], [0], [1], [0, 0, 1, 1], [], []>} : vector<128x128xbf16>, vector<128x32xbf16>, vector<128x32xf32> -> vector<128x32xf32>
    %106 = arith.addf %85, %105 : vector<128x32xf32>
    %107 = vector.extract_strided_slice %39 {offsets = [0, 24], sizes = [128, 8], strides = [1, 1]} : vector<128x32xbf16> to vector<128x8xbf16>
    %108 = vector.extract_strided_slice %41 {offsets = [0, 24], sizes = [128, 8], strides = [1, 1]} : vector<128x32xbf16> to vector<128x8xbf16>
    %cst_43 = arith.constant dense<0.000000e+00> : vector<128x128xf32>
    %109 = tpu.matmul %107, %108, %cst_43 {dimension_numbers = #tpu.dot_dimension_numbers<[1], [1], [0], [0], [0, 0, 1, 0], [], []>} : vector<128x8xbf16>, vector<128x8xbf16>, vector<128x128xf32> -> vector<128x128xf32>
    %110 = arith.addf %109, %0 : vector<128x128xf32>
    %cst_44 = arith.constant dense<0xFF800000> : vector<128xf32>
    %111 = vector.multi_reduction <maximumf>, %110, %cst_44 [1] : vector<128x128xf32> to vector<128xf32>
    %112 = vector.shape_cast %111 : vector<128xf32> to vector<128x1xf32>
    %113 = vector.broadcast %112 : vector<128x1xf32> to vector<128x128xf32>
    %114 = arith.subf %110, %113 : vector<128x128xf32>
    %115 = math.exp %114 : vector<128x128xf32>
    %cst_45 = arith.constant dense<0.000000e+00> : vector<128xf32>
    %116 = vector.multi_reduction <add>, %115, %cst_45 [1] : vector<128x128xf32> to vector<128xf32>
    %117 = vector.shape_cast %116 : vector<128xf32> to vector<128x1xf32>
    %118 = vector.broadcast %117 : vector<128x1xf32> to vector<128x128xf32>
    %119 = arith.divf %115, %118 : vector<128x128xf32>
    %c3 = arith.constant 3 : index
    %c0_46 = arith.constant 0 : index
    %c0_47 = arith.constant 0 : index
    %120 = vector.load %arg3[%c3, %c0_46, %c0_47] : memref<4x1x32xf32, #tpu.memory_space<vmem>>, vector<1x1x32xf32>
    %121 = vector.shape_cast %120 : vector<1x1x32xf32> to vector<1x32xf32>
    %122 = vector.broadcast %121 : vector<1x32xf32> to vector<128x32xf32>
    %123 = arith.mulf %42, %122 : vector<128x32xf32>
    %124 = arith.truncf %123 : vector<128x32xf32> to vector<128x32xbf16>
    %125 = arith.truncf %119 : vector<128x128xf32> to vector<128x128xbf16>
    %cst_48 = arith.constant dense<0.000000e+00> : vector<128x32xf32>
    %126 = tpu.matmul %125, %124, %cst_48 {dimension_numbers = #tpu.dot_dimension_numbers<[1], [0], [0], [1], [0, 0, 1, 1], [], []>} : vector<128x128xbf16>, vector<128x32xbf16>, vector<128x32xf32> -> vector<128x32xf32>
    %127 = arith.addf %106, %126 : vector<128x32xf32>
    %128 = arith.truncf %127 : vector<128x32xf32> to vector<128x32xbf16>
    %c0_49 = arith.constant 0 : index
    %c0_50 = arith.constant 0 : index
    %c0_51 = arith.constant 0 : index
    %129 = vector.load %arg9[%c0_49, %c0_50, %c0_51] : memref<2x32x32xbf16, #tpu.memory_space<vmem>>, vector<1x32x32xbf16>
    %130 = vector.shape_cast %129 : vector<1x32x32xbf16> to vector<32x32xbf16>
    %cst_52 = arith.constant dense<0.000000e+00> : vector<128x32xf32>
    %131 = tpu.matmul %128, %130, %cst_52 {dimension_numbers = #tpu.dot_dimension_numbers<[1], [0], [0], [1], [0, 0, 1, 1], [], []>} : vector<128x32xbf16>, vector<32x32xbf16>, vector<128x32xf32> -> vector<128x32xf32>
    %c0_53 = arith.constant 0 : index
    %c0_54 = arith.constant 0 : index
    %c0_55 = arith.constant 0 : index
    %132 = vector.load %arg10[%c0_53, %c0_54, %c0_55] : memref<2x1x32xf32, #tpu.memory_space<vmem>>, vector<1x1x32xf32>
    %133 = vector.shape_cast %132 : vector<1x1x32xf32> to vector<1x32xf32>
    %134 = vector.broadcast %133 : vector<1x32xf32> to vector<128x32xf32>
    %135 = arith.addf %131, %134 : vector<128x32xf32>
    %136 = arith.addf %27, %135 : vector<128x32xf32>
    %c0_56 = arith.constant 0 : index
    %c0_57 = arith.constant 0 : index
    %c0_58 = arith.constant 0 : index
    %137 = vector.load %arg11[%c0_56, %c0_57, %c0_58] : memref<2x2x32xf32, #tpu.memory_space<vmem>>, vector<1x2x32xf32>
    %138 = vector.shape_cast %137 : vector<1x2x32xf32> to vector<2x32xf32>
    %139 = vector.extract_strided_slice %138 {offsets = [0, 0], sizes = [1, 32], strides = [1, 1]} : vector<2x32xf32> to vector<1x32xf32>
    %140 = vector.extract_strided_slice %138 {offsets = [1, 0], sizes = [1, 32], strides = [1, 1]} : vector<2x32xf32> to vector<1x32xf32>
    %cst_59 = arith.constant dense<0.000000e+00> : vector<128xf32>
    %141 = vector.multi_reduction <add>, %136, %cst_59 [1] : vector<128x32xf32> to vector<128xf32>
    %142 = vector.shape_cast %141 : vector<128xf32> to vector<128x1xf32>
    %cst_60 = arith.constant 3.200000e+01 : f32
    %143 = vector.broadcast %cst_60 : f32 to vector<128x1xf32>
    %144 = arith.divf %142, %143 : vector<128x1xf32>
    %145 = vector.broadcast %144 : vector<128x1xf32> to vector<128x32xf32>
    %146 = arith.subf %136, %145 : vector<128x32xf32>
    %147 = arith.mulf %146, %146 : vector<128x32xf32>
    %cst_61 = arith.constant dense<0.000000e+00> : vector<128xf32>
    %148 = vector.multi_reduction <add>, %147, %cst_61 [1] : vector<128x32xf32> to vector<128xf32>
    %149 = vector.shape_cast %148 : vector<128xf32> to vector<128x1xf32>
    %cst_62 = arith.constant 3.200000e+01 : f32
    %150 = vector.broadcast %cst_62 : f32 to vector<128x1xf32>
    %151 = arith.divf %149, %150 : vector<128x1xf32>
    %cst_63 = arith.constant 9.99999974E-6 : f32
    %152 = vector.broadcast %cst_63 : f32 to vector<128x1xf32>
    %153 = arith.addf %151, %152 : vector<128x1xf32>
    %154 = math.rsqrt %153 : vector<128x1xf32>
    %155 = vector.broadcast %154 : vector<128x1xf32> to vector<128x32xf32>
    %156 = arith.mulf %146, %155 : vector<128x32xf32>
    %157 = vector.broadcast %139 : vector<1x32xf32> to vector<128x32xf32>
    %158 = arith.mulf %156, %157 : vector<128x32xf32>
    %159 = vector.broadcast %140 : vector<1x32xf32> to vector<128x32xf32>
    %160 = arith.addf %158, %159 : vector<128x32xf32>
    %161 = arith.truncf %160 : vector<128x32xf32> to vector<128x32xbf16>
    %c0_64 = arith.constant 0 : index
    %c0_65 = arith.constant 0 : index
    %c0_66 = arith.constant 0 : index
    %162 = vector.load %arg12[%c0_64, %c0_65, %c0_66] : memref<2x32x64xbf16, #tpu.memory_space<vmem>>, vector<1x32x64xbf16>
    %163 = vector.shape_cast %162 : vector<1x32x64xbf16> to vector<32x64xbf16>
    %cst_67 = arith.constant dense<0.000000e+00> : vector<128x64xf32>
    %164 = tpu.matmul %161, %163, %cst_67 {dimension_numbers = #tpu.dot_dimension_numbers<[1], [0], [0], [1], [0, 0, 1, 1], [], []>} : vector<128x32xbf16>, vector<32x64xbf16>, vector<128x64xf32> -> vector<128x64xf32>
    %c0_68 = arith.constant 0 : index
    %c0_69 = arith.constant 0 : index
    %c0_70 = arith.constant 0 : index
    %165 = vector.load %arg13[%c0_68, %c0_69, %c0_70] : memref<2x1x64xf32, #tpu.memory_space<vmem>>, vector<1x1x64xf32>
    %166 = vector.shape_cast %165 : vector<1x1x64xf32> to vector<1x64xf32>
    %167 = vector.broadcast %166 : vector<1x64xf32> to vector<128x64xf32>
    %168 = arith.addf %164, %167 : vector<128x64xf32>
    %cst_71 = arith.constant 0.000000e+00 : f32
    %169 = vector.broadcast %cst_71 : f32 to vector<128x64xf32>
    %170 = arith.maximumf %168, %169 : vector<128x64xf32>
    %171 = arith.truncf %170 : vector<128x64xf32> to vector<128x64xbf16>
    %c0_72 = arith.constant 0 : index
    %c0_73 = arith.constant 0 : index
    %c0_74 = arith.constant 0 : index
    %172 = vector.load %arg14[%c0_72, %c0_73, %c0_74] : memref<2x64x32xbf16, #tpu.memory_space<vmem>>, vector<1x64x32xbf16>
    %173 = vector.shape_cast %172 : vector<1x64x32xbf16> to vector<64x32xbf16>
    %cst_75 = arith.constant dense<0.000000e+00> : vector<128x32xf32>
    %174 = tpu.matmul %171, %173, %cst_75 {dimension_numbers = #tpu.dot_dimension_numbers<[1], [0], [0], [1], [0, 0, 1, 1], [], []>} : vector<128x64xbf16>, vector<64x32xbf16>, vector<128x32xf32> -> vector<128x32xf32>
    %c0_76 = arith.constant 0 : index
    %c0_77 = arith.constant 0 : index
    %c0_78 = arith.constant 0 : index
    %175 = vector.load %arg15[%c0_76, %c0_77, %c0_78] : memref<2x1x32xf32, #tpu.memory_space<vmem>>, vector<1x1x32xf32>
    %176 = vector.shape_cast %175 : vector<1x1x32xf32> to vector<1x32xf32>
    %177 = vector.broadcast %176 : vector<1x32xf32> to vector<128x32xf32>
    %178 = arith.addf %174, %177 : vector<128x32xf32>
    %179 = arith.addf %160, %178 : vector<128x32xf32>
    %c0_79 = arith.constant 0 : index
    %c0_80 = arith.constant 0 : index
    %c0_81 = arith.constant 0 : index
    %180 = vector.load %arg16[%c0_79, %c0_80, %c0_81] : memref<2x2x32xf32, #tpu.memory_space<vmem>>, vector<1x2x32xf32>
    %181 = vector.shape_cast %180 : vector<1x2x32xf32> to vector<2x32xf32>
    %182 = vector.extract_strided_slice %181 {offsets = [0, 0], sizes = [1, 32], strides = [1, 1]} : vector<2x32xf32> to vector<1x32xf32>
    %183 = vector.extract_strided_slice %181 {offsets = [1, 0], sizes = [1, 32], strides = [1, 1]} : vector<2x32xf32> to vector<1x32xf32>
    %cst_82 = arith.constant dense<0.000000e+00> : vector<128xf32>
    %184 = vector.multi_reduction <add>, %179, %cst_82 [1] : vector<128x32xf32> to vector<128xf32>
    %185 = vector.shape_cast %184 : vector<128xf32> to vector<128x1xf32>
    %cst_83 = arith.constant 3.200000e+01 : f32
    %186 = vector.broadcast %cst_83 : f32 to vector<128x1xf32>
    %187 = arith.divf %185, %186 : vector<128x1xf32>
    %188 = vector.broadcast %187 : vector<128x1xf32> to vector<128x32xf32>
    %189 = arith.subf %179, %188 : vector<128x32xf32>
    %190 = arith.mulf %189, %189 : vector<128x32xf32>
    %cst_84 = arith.constant dense<0.000000e+00> : vector<128xf32>
    %191 = vector.multi_reduction <add>, %190, %cst_84 [1] : vector<128x32xf32> to vector<128xf32>
    %192 = vector.shape_cast %191 : vector<128xf32> to vector<128x1xf32>
    %cst_85 = arith.constant 3.200000e+01 : f32
    %193 = vector.broadcast %cst_85 : f32 to vector<128x1xf32>
    %194 = arith.divf %192, %193 : vector<128x1xf32>
    %cst_86 = arith.constant 9.99999974E-6 : f32
    %195 = vector.broadcast %cst_86 : f32 to vector<128x1xf32>
    %196 = arith.addf %194, %195 : vector<128x1xf32>
    %197 = math.rsqrt %196 : vector<128x1xf32>
    %198 = vector.broadcast %197 : vector<128x1xf32> to vector<128x32xf32>
    %199 = arith.mulf %189, %198 : vector<128x32xf32>
    %200 = vector.broadcast %182 : vector<1x32xf32> to vector<128x32xf32>
    %201 = arith.mulf %199, %200 : vector<128x32xf32>
    %202 = vector.broadcast %183 : vector<1x32xf32> to vector<128x32xf32>
    %203 = arith.addf %201, %202 : vector<128x32xf32>
    %204 = arith.truncf %203 : vector<128x32xf32> to vector<128x32xbf16>
    %c1_87 = arith.constant 1 : index
    %c0_88 = arith.constant 0 : index
    %c0_89 = arith.constant 0 : index
    %205 = vector.load %arg7[%c1_87, %c0_88, %c0_89] : memref<2x32x96xbf16, #tpu.memory_space<vmem>>, vector<1x32x96xbf16>
    %206 = vector.shape_cast %205 : vector<1x32x96xbf16> to vector<32x96xbf16>
    %cst_90 = arith.constant dense<0.000000e+00> : vector<128x96xf32>
    %207 = tpu.matmul %204, %206, %cst_90 {dimension_numbers = #tpu.dot_dimension_numbers<[1], [0], [0], [1], [0, 0, 1, 1], [], []>} : vector<128x32xbf16>, vector<32x96xbf16>, vector<128x96xf32> -> vector<128x96xf32>
    %c1_91 = arith.constant 1 : index
    %c0_92 = arith.constant 0 : index
    %c0_93 = arith.constant 0 : index
    %208 = vector.load %arg8[%c1_91, %c0_92, %c0_93] : memref<2x1x96xf32, #tpu.memory_space<vmem>>, vector<1x1x96xf32>
    %209 = vector.shape_cast %208 : vector<1x1x96xf32> to vector<1x96xf32>
    %210 = vector.broadcast %209 : vector<1x96xf32> to vector<128x96xf32>
    %211 = arith.addf %207, %210 : vector<128x96xf32>
    %212 = vector.extract_strided_slice %211 {offsets = [0, 0], sizes = [128, 32], strides = [1, 1]} : vector<128x96xf32> to vector<128x32xf32>
    %cst_94 = arith.constant 0.353553385 : f32
    %213 = vector.broadcast %cst_94 : f32 to vector<128x32xf32>
    %214 = arith.mulf %212, %213 : vector<128x32xf32>
    %215 = arith.truncf %214 : vector<128x32xf32> to vector<128x32xbf16>
    %216 = vector.extract_strided_slice %211 {offsets = [0, 32], sizes = [128, 32], strides = [1, 1]} : vector<128x96xf32> to vector<128x32xf32>
    %217 = arith.truncf %216 : vector<128x32xf32> to vector<128x32xbf16>
    %218 = vector.extract_strided_slice %211 {offsets = [0, 64], sizes = [128, 32], strides = [1, 1]} : vector<128x96xf32> to vector<128x32xf32>
    %cst_95 = arith.constant 0.000000e+00 : f32
    %219 = vector.broadcast %cst_95 : f32 to vector<128x32xf32>
    %220 = vector.extract_strided_slice %215 {offsets = [0, 0], sizes = [128, 8], strides = [1, 1]} : vector<128x32xbf16> to vector<128x8xbf16>
    %221 = vector.extract_strided_slice %217 {offsets = [0, 0], sizes = [128, 8], strides = [1, 1]} : vector<128x32xbf16> to vector<128x8xbf16>
    %cst_96 = arith.constant dense<0.000000e+00> : vector<128x128xf32>
    %222 = tpu.matmul %220, %221, %cst_96 {dimension_numbers = #tpu.dot_dimension_numbers<[1], [1], [0], [0], [0, 0, 1, 0], [], []>} : vector<128x8xbf16>, vector<128x8xbf16>, vector<128x128xf32> -> vector<128x128xf32>
    %223 = arith.addf %222, %0 : vector<128x128xf32>
    %cst_97 = arith.constant dense<0xFF800000> : vector<128xf32>
    %224 = vector.multi_reduction <maximumf>, %223, %cst_97 [1] : vector<128x128xf32> to vector<128xf32>
    %225 = vector.shape_cast %224 : vector<128xf32> to vector<128x1xf32>
    %226 = vector.broadcast %225 : vector<128x1xf32> to vector<128x128xf32>
    %227 = arith.subf %223, %226 : vector<128x128xf32>
    %228 = math.exp %227 : vector<128x128xf32>
    %cst_98 = arith.constant dense<0.000000e+00> : vector<128xf32>
    %229 = vector.multi_reduction <add>, %228, %cst_98 [1] : vector<128x128xf32> to vector<128xf32>
    %230 = vector.shape_cast %229 : vector<128xf32> to vector<128x1xf32>
    %231 = vector.broadcast %230 : vector<128x1xf32> to vector<128x128xf32>
    %232 = arith.divf %228, %231 : vector<128x128xf32>
    %c0_99 = arith.constant 0 : index
    %c0_100 = arith.constant 0 : index
    %c0_101 = arith.constant 0 : index
    %233 = vector.load %arg3[%c0_99, %c0_100, %c0_101] : memref<4x1x32xf32, #tpu.memory_space<vmem>>, vector<1x1x32xf32>
    %234 = vector.shape_cast %233 : vector<1x1x32xf32> to vector<1x32xf32>
    %235 = vector.broadcast %234 : vector<1x32xf32> to vector<128x32xf32>
    %236 = arith.mulf %218, %235 : vector<128x32xf32>
    %237 = arith.truncf %236 : vector<128x32xf32> to vector<128x32xbf16>
    %238 = arith.truncf %232 : vector<128x128xf32> to vector<128x128xbf16>
    %cst_102 = arith.constant dense<0.000000e+00> : vector<128x32xf32>
    %239 = tpu.matmul %238, %237, %cst_102 {dimension_numbers = #tpu.dot_dimension_numbers<[1], [0], [0], [1], [0, 0, 1, 1], [], []>} : vector<128x128xbf16>, vector<128x32xbf16>, vector<128x32xf32> -> vector<128x32xf32>
    %240 = arith.addf %219, %239 : vector<128x32xf32>
    %241 = vector.extract_strided_slice %215 {offsets = [0, 8], sizes = [128, 8], strides = [1, 1]} : vector<128x32xbf16> to vector<128x8xbf16>
    %242 = vector.extract_strided_slice %217 {offsets = [0, 8], sizes = [128, 8], strides = [1, 1]} : vector<128x32xbf16> to vector<128x8xbf16>
    %cst_103 = arith.constant dense<0.000000e+00> : vector<128x128xf32>
    %243 = tpu.matmul %241, %242, %cst_103 {dimension_numbers = #tpu.dot_dimension_numbers<[1], [1], [0], [0], [0, 0, 1, 0], [], []>} : vector<128x8xbf16>, vector<128x8xbf16>, vector<128x128xf32> -> vector<128x128xf32>
    %244 = arith.addf %243, %0 : vector<128x128xf32>
    %cst_104 = arith.constant dense<0xFF800000> : vector<128xf32>
    %245 = vector.multi_reduction <maximumf>, %244, %cst_104 [1] : vector<128x128xf32> to vector<128xf32>
    %246 = vector.shape_cast %245 : vector<128xf32> to vector<128x1xf32>
    %247 = vector.broadcast %246 : vector<128x1xf32> to vector<128x128xf32>
    %248 = arith.subf %244, %247 : vector<128x128xf32>
    %249 = math.exp %248 : vector<128x128xf32>
    %cst_105 = arith.constant dense<0.000000e+00> : vector<128xf32>
    %250 = vector.multi_reduction <add>, %249, %cst_105 [1] : vector<128x128xf32> to vector<128xf32>
    %251 = vector.shape_cast %250 : vector<128xf32> to vector<128x1xf32>
    %252 = vector.broadcast %251 : vector<128x1xf32> to vector<128x128xf32>
    %253 = arith.divf %249, %252 : vector<128x128xf32>
    %c1_106 = arith.constant 1 : index
    %c0_107 = arith.constant 0 : index
    %c0_108 = arith.constant 0 : index
    %254 = vector.load %arg3[%c1_106, %c0_107, %c0_108] : memref<4x1x32xf32, #tpu.memory_space<vmem>>, vector<1x1x32xf32>
    %255 = vector.shape_cast %254 : vector<1x1x32xf32> to vector<1x32xf32>
    %256 = vector.broadcast %255 : vector<1x32xf32> to vector<128x32xf32>
    %257 = arith.mulf %218, %256 : vector<128x32xf32>
    %258 = arith.truncf %257 : vector<128x32xf32> to vector<128x32xbf16>
    %259 = arith.truncf %253 : vector<128x128xf32> to vector<128x128xbf16>
    %cst_109 = arith.constant dense<0.000000e+00> : vector<128x32xf32>
    %260 = tpu.matmul %259, %258, %cst_109 {dimension_numbers = #tpu.dot_dimension_numbers<[1], [0], [0], [1], [0, 0, 1, 1], [], []>} : vector<128x128xbf16>, vector<128x32xbf16>, vector<128x32xf32> -> vector<128x32xf32>
    %261 = arith.addf %240, %260 : vector<128x32xf32>
    %262 = vector.extract_strided_slice %215 {offsets = [0, 16], sizes = [128, 8], strides = [1, 1]} : vector<128x32xbf16> to vector<128x8xbf16>
    %263 = vector.extract_strided_slice %217 {offsets = [0, 16], sizes = [128, 8], strides = [1, 1]} : vector<128x32xbf16> to vector<128x8xbf16>
    %cst_110 = arith.constant dense<0.000000e+00> : vector<128x128xf32>
    %264 = tpu.matmul %262, %263, %cst_110 {dimension_numbers = #tpu.dot_dimension_numbers<[1], [1], [0], [0], [0, 0, 1, 0], [], []>} : vector<128x8xbf16>, vector<128x8xbf16>, vector<128x128xf32> -> vector<128x128xf32>
    %265 = arith.addf %264, %0 : vector<128x128xf32>
    %cst_111 = arith.constant dense<0xFF800000> : vector<128xf32>
    %266 = vector.multi_reduction <maximumf>, %265, %cst_111 [1] : vector<128x128xf32> to vector<128xf32>
    %267 = vector.shape_cast %266 : vector<128xf32> to vector<128x1xf32>
    %268 = vector.broadcast %267 : vector<128x1xf32> to vector<128x128xf32>
    %269 = arith.subf %265, %268 : vector<128x128xf32>
    %270 = math.exp %269 : vector<128x128xf32>
    %cst_112 = arith.constant dense<0.000000e+00> : vector<128xf32>
    %271 = vector.multi_reduction <add>, %270, %cst_112 [1] : vector<128x128xf32> to vector<128xf32>
    %272 = vector.shape_cast %271 : vector<128xf32> to vector<128x1xf32>
    %273 = vector.broadcast %272 : vector<128x1xf32> to vector<128x128xf32>
    %274 = arith.divf %270, %273 : vector<128x128xf32>
    %c2_113 = arith.constant 2 : index
    %c0_114 = arith.constant 0 : index
    %c0_115 = arith.constant 0 : index
    %275 = vector.load %arg3[%c2_113, %c0_114, %c0_115] : memref<4x1x32xf32, #tpu.memory_space<vmem>>, vector<1x1x32xf32>
    %276 = vector.shape_cast %275 : vector<1x1x32xf32> to vector<1x32xf32>
    %277 = vector.broadcast %276 : vector<1x32xf32> to vector<128x32xf32>
    %278 = arith.mulf %218, %277 : vector<128x32xf32>
    %279 = arith.truncf %278 : vector<128x32xf32> to vector<128x32xbf16>
    %280 = arith.truncf %274 : vector<128x128xf32> to vector<128x128xbf16>
    %cst_116 = arith.constant dense<0.000000e+00> : vector<128x32xf32>
    %281 = tpu.matmul %280, %279, %cst_116 {dimension_numbers = #tpu.dot_dimension_numbers<[1], [0], [0], [1], [0, 0, 1, 1], [], []>} : vector<128x128xbf16>, vector<128x32xbf16>, vector<128x32xf32> -> vector<128x32xf32>
    %282 = arith.addf %261, %281 : vector<128x32xf32>
    %283 = vector.extract_strided_slice %215 {offsets = [0, 24], sizes = [128, 8], strides = [1, 1]} : vector<128x32xbf16> to vector<128x8xbf16>
    %284 = vector.extract_strided_slice %217 {offsets = [0, 24], sizes = [128, 8], strides = [1, 1]} : vector<128x32xbf16> to vector<128x8xbf16>
    %cst_117 = arith.constant dense<0.000000e+00> : vector<128x128xf32>
    %285 = tpu.matmul %283, %284, %cst_117 {dimension_numbers = #tpu.dot_dimension_numbers<[1], [1], [0], [0], [0, 0, 1, 0], [], []>} : vector<128x8xbf16>, vector<128x8xbf16>, vector<128x128xf32> -> vector<128x128xf32>
    %286 = arith.addf %285, %0 : vector<128x128xf32>
    %cst_118 = arith.constant dense<0xFF800000> : vector<128xf32>
    %287 = vector.multi_reduction <maximumf>, %286, %cst_118 [1] : vector<128x128xf32> to vector<128xf32>
    %288 = vector.shape_cast %287 : vector<128xf32> to vector<128x1xf32>
    %289 = vector.broadcast %288 : vector<128x1xf32> to vector<128x128xf32>
    %290 = arith.subf %286, %289 : vector<128x128xf32>
    %291 = math.exp %290 : vector<128x128xf32>
    %cst_119 = arith.constant dense<0.000000e+00> : vector<128xf32>
    %292 = vector.multi_reduction <add>, %291, %cst_119 [1] : vector<128x128xf32> to vector<128xf32>
    %293 = vector.shape_cast %292 : vector<128xf32> to vector<128x1xf32>
    %294 = vector.broadcast %293 : vector<128x1xf32> to vector<128x128xf32>
    %295 = arith.divf %291, %294 : vector<128x128xf32>
    %c3_120 = arith.constant 3 : index
    %c0_121 = arith.constant 0 : index
    %c0_122 = arith.constant 0 : index
    %296 = vector.load %arg3[%c3_120, %c0_121, %c0_122] : memref<4x1x32xf32, #tpu.memory_space<vmem>>, vector<1x1x32xf32>
    %297 = vector.shape_cast %296 : vector<1x1x32xf32> to vector<1x32xf32>
    %298 = vector.broadcast %297 : vector<1x32xf32> to vector<128x32xf32>
    %299 = arith.mulf %218, %298 : vector<128x32xf32>
    %300 = arith.truncf %299 : vector<128x32xf32> to vector<128x32xbf16>
    %301 = arith.truncf %295 : vector<128x128xf32> to vector<128x128xbf16>
    %cst_123 = arith.constant dense<0.000000e+00> : vector<128x32xf32>
    %302 = tpu.matmul %301, %300, %cst_123 {dimension_numbers = #tpu.dot_dimension_numbers<[1], [0], [0], [1], [0, 0, 1, 1], [], []>} : vector<128x128xbf16>, vector<128x32xbf16>, vector<128x32xf32> -> vector<128x32xf32>
    %303 = arith.addf %282, %302 : vector<128x32xf32>
    %304 = arith.truncf %303 : vector<128x32xf32> to vector<128x32xbf16>
    %c1_124 = arith.constant 1 : index
    %c0_125 = arith.constant 0 : index
    %c0_126 = arith.constant 0 : index
    %305 = vector.load %arg9[%c1_124, %c0_125, %c0_126] : memref<2x32x32xbf16, #tpu.memory_space<vmem>>, vector<1x32x32xbf16>
    %306 = vector.shape_cast %305 : vector<1x32x32xbf16> to vector<32x32xbf16>
    %cst_127 = arith.constant dense<0.000000e+00> : vector<128x32xf32>
    %307 = tpu.matmul %304, %306, %cst_127 {dimension_numbers = #tpu.dot_dimension_numbers<[1], [0], [0], [1], [0, 0, 1, 1], [], []>} : vector<128x32xbf16>, vector<32x32xbf16>, vector<128x32xf32> -> vector<128x32xf32>
    %c1_128 = arith.constant 1 : index
    %c0_129 = arith.constant 0 : index
    %c0_130 = arith.constant 0 : index
    %308 = vector.load %arg10[%c1_128, %c0_129, %c0_130] : memref<2x1x32xf32, #tpu.memory_space<vmem>>, vector<1x1x32xf32>
    %309 = vector.shape_cast %308 : vector<1x1x32xf32> to vector<1x32xf32>
    %310 = vector.broadcast %309 : vector<1x32xf32> to vector<128x32xf32>
    %311 = arith.addf %307, %310 : vector<128x32xf32>
    %312 = arith.addf %203, %311 : vector<128x32xf32>
    %c1_131 = arith.constant 1 : index
    %c0_132 = arith.constant 0 : index
    %c0_133 = arith.constant 0 : index
    %313 = vector.load %arg11[%c1_131, %c0_132, %c0_133] : memref<2x2x32xf32, #tpu.memory_space<vmem>>, vector<1x2x32xf32>
    %314 = vector.shape_cast %313 : vector<1x2x32xf32> to vector<2x32xf32>
    %315 = vector.extract_strided_slice %314 {offsets = [0, 0], sizes = [1, 32], strides = [1, 1]} : vector<2x32xf32> to vector<1x32xf32>
    %316 = vector.extract_strided_slice %314 {offsets = [1, 0], sizes = [1, 32], strides = [1, 1]} : vector<2x32xf32> to vector<1x32xf32>
    %cst_134 = arith.constant dense<0.000000e+00> : vector<128xf32>
    %317 = vector.multi_reduction <add>, %312, %cst_134 [1] : vector<128x32xf32> to vector<128xf32>
    %318 = vector.shape_cast %317 : vector<128xf32> to vector<128x1xf32>
    %cst_135 = arith.constant 3.200000e+01 : f32
    %319 = vector.broadcast %cst_135 : f32 to vector<128x1xf32>
    %320 = arith.divf %318, %319 : vector<128x1xf32>
    %321 = vector.broadcast %320 : vector<128x1xf32> to vector<128x32xf32>
    %322 = arith.subf %312, %321 : vector<128x32xf32>
    %323 = arith.mulf %322, %322 : vector<128x32xf32>
    %cst_136 = arith.constant dense<0.000000e+00> : vector<128xf32>
    %324 = vector.multi_reduction <add>, %323, %cst_136 [1] : vector<128x32xf32> to vector<128xf32>
    %325 = vector.shape_cast %324 : vector<128xf32> to vector<128x1xf32>
    %cst_137 = arith.constant 3.200000e+01 : f32
    %326 = vector.broadcast %cst_137 : f32 to vector<128x1xf32>
    %327 = arith.divf %325, %326 : vector<128x1xf32>
    %cst_138 = arith.constant 9.99999974E-6 : f32
    %328 = vector.broadcast %cst_138 : f32 to vector<128x1xf32>
    %329 = arith.addf %327, %328 : vector<128x1xf32>
    %330 = math.rsqrt %329 : vector<128x1xf32>
    %331 = vector.broadcast %330 : vector<128x1xf32> to vector<128x32xf32>
    %332 = arith.mulf %322, %331 : vector<128x32xf32>
    %333 = vector.broadcast %315 : vector<1x32xf32> to vector<128x32xf32>
    %334 = arith.mulf %332, %333 : vector<128x32xf32>
    %335 = vector.broadcast %316 : vector<1x32xf32> to vector<128x32xf32>
    %336 = arith.addf %334, %335 : vector<128x32xf32>
    %337 = arith.truncf %336 : vector<128x32xf32> to vector<128x32xbf16>
    %c1_139 = arith.constant 1 : index
    %c0_140 = arith.constant 0 : index
    %c0_141 = arith.constant 0 : index
    %338 = vector.load %arg12[%c1_139, %c0_140, %c0_141] : memref<2x32x64xbf16, #tpu.memory_space<vmem>>, vector<1x32x64xbf16>
    %339 = vector.shape_cast %338 : vector<1x32x64xbf16> to vector<32x64xbf16>
    %cst_142 = arith.constant dense<0.000000e+00> : vector<128x64xf32>
    %340 = tpu.matmul %337, %339, %cst_142 {dimension_numbers = #tpu.dot_dimension_numbers<[1], [0], [0], [1], [0, 0, 1, 1], [], []>} : vector<128x32xbf16>, vector<32x64xbf16>, vector<128x64xf32> -> vector<128x64xf32>
    %c1_143 = arith.constant 1 : index
    %c0_144 = arith.constant 0 : index
    %c0_145 = arith.constant 0 : index
    %341 = vector.load %arg13[%c1_143, %c0_144, %c0_145] : memref<2x1x64xf32, #tpu.memory_space<vmem>>, vector<1x1x64xf32>
    %342 = vector.shape_cast %341 : vector<1x1x64xf32> to vector<1x64xf32>
    %343 = vector.broadcast %342 : vector<1x64xf32> to vector<128x64xf32>
    %344 = arith.addf %340, %343 : vector<128x64xf32>
    %cst_146 = arith.constant 0.000000e+00 : f32
    %345 = vector.broadcast %cst_146 : f32 to vector<128x64xf32>
    %346 = arith.maximumf %344, %345 : vector<128x64xf32>
    %347 = arith.truncf %346 : vector<128x64xf32> to vector<128x64xbf16>
    %c1_147 = arith.constant 1 : index
    %c0_148 = arith.constant 0 : index
    %c0_149 = arith.constant 0 : index
    %348 = vector.load %arg14[%c1_147, %c0_148, %c0_149] : memref<2x64x32xbf16, #tpu.memory_space<vmem>>, vector<1x64x32xbf16>
    %349 = vector.shape_cast %348 : vector<1x64x32xbf16> to vector<64x32xbf16>
    %cst_150 = arith.constant dense<0.000000e+00> : vector<128x32xf32>
    %350 = tpu.matmul %347, %349, %cst_150 {dimension_numbers = #tpu.dot_dimension_numbers<[1], [0], [0], [1], [0, 0, 1, 1], [], []>} : vector<128x64xbf16>, vector<64x32xbf16>, vector<128x32xf32> -> vector<128x32xf32>
    %c1_151 = arith.constant 1 : index
    %c0_152 = arith.constant 0 : index
    %c0_153 = arith.constant 0 : index
    %351 = vector.load %arg15[%c1_151, %c0_152, %c0_153] : memref<2x1x32xf32, #tpu.memory_space<vmem>>, vector<1x1x32xf32>
    %352 = vector.shape_cast %351 : vector<1x1x32xf32> to vector<1x32xf32>
    %353 = vector.broadcast %352 : vector<1x32xf32> to vector<128x32xf32>
    %354 = arith.addf %350, %353 : vector<128x32xf32>
    %355 = arith.addf %336, %354 : vector<128x32xf32>
    %c1_154 = arith.constant 1 : index
    %c0_155 = arith.constant 0 : index
    %c0_156 = arith.constant 0 : index
    %356 = vector.load %arg16[%c1_154, %c0_155, %c0_156] : memref<2x2x32xf32, #tpu.memory_space<vmem>>, vector<1x2x32xf32>
    %357 = vector.shape_cast %356 : vector<1x2x32xf32> to vector<2x32xf32>
    %358 = vector.extract_strided_slice %357 {offsets = [0, 0], sizes = [1, 32], strides = [1, 1]} : vector<2x32xf32> to vector<1x32xf32>
    %359 = vector.extract_strided_slice %357 {offsets = [1, 0], sizes = [1, 32], strides = [1, 1]} : vector<2x32xf32> to vector<1x32xf32>
    %cst_157 = arith.constant dense<0.000000e+00> : vector<128xf32>
    %360 = vector.multi_reduction <add>, %355, %cst_157 [1] : vector<128x32xf32> to vector<128xf32>
    %361 = vector.shape_cast %360 : vector<128xf32> to vector<128x1xf32>
    %cst_158 = arith.constant 3.200000e+01 : f32
    %362 = vector.broadcast %cst_158 : f32 to vector<128x1xf32>
    %363 = arith.divf %361, %362 : vector<128x1xf32>
    %364 = vector.broadcast %363 : vector<128x1xf32> to vector<128x32xf32>
    %365 = arith.subf %355, %364 : vector<128x32xf32>
    %366 = arith.mulf %365, %365 : vector<128x32xf32>
    %cst_159 = arith.constant dense<0.000000e+00> : vector<128xf32>
    %367 = vector.multi_reduction <add>, %366, %cst_159 [1] : vector<128x32xf32> to vector<128xf32>
    %368 = vector.shape_cast %367 : vector<128xf32> to vector<128x1xf32>
    %cst_160 = arith.constant 3.200000e+01 : f32
    %369 = vector.broadcast %cst_160 : f32 to vector<128x1xf32>
    %370 = arith.divf %368, %369 : vector<128x1xf32>
    %cst_161 = arith.constant 9.99999974E-6 : f32
    %371 = vector.broadcast %cst_161 : f32 to vector<128x1xf32>
    %372 = arith.addf %370, %371 : vector<128x1xf32>
    %373 = math.rsqrt %372 : vector<128x1xf32>
    %374 = vector.broadcast %373 : vector<128x1xf32> to vector<128x32xf32>
    %375 = arith.mulf %365, %374 : vector<128x32xf32>
    %376 = vector.broadcast %358 : vector<1x32xf32> to vector<128x32xf32>
    %377 = arith.mulf %375, %376 : vector<128x32xf32>
    %378 = vector.broadcast %359 : vector<1x32xf32> to vector<128x32xf32>
    %379 = arith.addf %377, %378 : vector<128x32xf32>
    %c0_162 = arith.constant 0 : index
    %c0_163 = arith.constant 0 : index
    %380 = vector.load %arg17[%c0_162, %c0_163] : memref<2x32xf32, #tpu.memory_space<vmem>>, vector<2x32xf32>
    %381 = vector.extract_strided_slice %380 {offsets = [0, 0], sizes = [1, 32], strides = [1, 1]} : vector<2x32xf32> to vector<1x32xf32>
    %382 = vector.extract_strided_slice %380 {offsets = [1, 0], sizes = [1, 32], strides = [1, 1]} : vector<2x32xf32> to vector<1x32xf32>
    %cst_164 = arith.constant dense<0.000000e+00> : vector<128xf32>
    %383 = vector.multi_reduction <add>, %379, %cst_164 [1] : vector<128x32xf32> to vector<128xf32>
    %384 = vector.shape_cast %383 : vector<128xf32> to vector<128x1xf32>
    %cst_165 = arith.constant 3.200000e+01 : f32
    %385 = vector.broadcast %cst_165 : f32 to vector<128x1xf32>
    %386 = arith.divf %384, %385 : vector<128x1xf32>
    %387 = vector.broadcast %386 : vector<128x1xf32> to vector<128x32xf32>
    %388 = arith.subf %379, %387 : vector<128x32xf32>
    %389 = arith.mulf %388, %388 : vector<128x32xf32>
    %cst_166 = arith.constant dense<0.000000e+00> : vector<128xf32>
    %390 = vector.multi_reduction <add>, %389, %cst_166 [1] : vector<128x32xf32> to vector<128xf32>
    %391 = vector.shape_cast %390 : vector<128xf32> to vector<128x1xf32>
    %cst_167 = arith.constant 3.200000e+01 : f32
    %392 = vector.broadcast %cst_167 : f32 to vector<128x1xf32>
    %393 = arith.divf %391, %392 : vector<128x1xf32>
    %cst_168 = arith.constant 9.99999974E-6 : f32
    %394 = vector.broadcast %cst_168 : f32 to vector<128x1xf32>
    %395 = arith.addf %393, %394 : vector<128x1xf32>
    %396 = math.rsqrt %395 : vector<128x1xf32>
    %397 = vector.broadcast %396 : vector<128x1xf32> to vector<128x32xf32>
    %398 = arith.mulf %388, %397 : vector<128x32xf32>
    %399 = vector.broadcast %381 : vector<1x32xf32> to vector<128x32xf32>
    %400 = arith.mulf %398, %399 : vector<128x32xf32>
    %401 = vector.broadcast %382 : vector<1x32xf32> to vector<128x32xf32>
    %402 = arith.addf %400, %401 : vector<128x32xf32>
    %403 = arith.truncf %402 : vector<128x32xf32> to vector<128x32xbf16>
    %c0_169 = arith.constant 0 : index
    %c0_170 = arith.constant 0 : index
    %404 = vector.load %arg18[%c0_169, %c0_170] : memref<32x8xbf16, #tpu.memory_space<vmem>>, vector<32x8xbf16>
    %cst_171 = arith.constant dense<0.000000e+00> : vector<128x8xf32>
    %405 = tpu.matmul %403, %404, %cst_171 {dimension_numbers = #tpu.dot_dimension_numbers<[1], [0], [0], [1], [0, 0, 1, 1], [], []>} : vector<128x32xbf16>, vector<32x8xbf16>, vector<128x8xf32> -> vector<128x8xf32>
    %c0_172 = arith.constant 0 : index
    %c0_173 = arith.constant 0 : index
    %406 = vector.load %arg19[%c0_172, %c0_173] : memref<1x8xf32, #tpu.memory_space<vmem>>, vector<1x8xf32>
    %407 = vector.broadcast %406 : vector<1x8xf32> to vector<128x8xf32>
    %408 = arith.addf %405, %407 : vector<128x8xf32>
    %409 = vector.broadcast %16 : vector<128x1xf32> to vector<128x8xf32>
    %410 = arith.mulf %408, %409 : vector<128x8xf32>
    %411 = vector.broadcast %6 : vector<128x1xf32> to vector<128x8xf32>
    %412 = arith.addf %410, %411 : vector<128x8xf32>
    %cst_174 = arith.constant dense<0.000000e+00> : vector<8x32xf32>
    %413 = tpu.matmul %412, %1, %cst_174 {dimension_numbers = #tpu.dot_dimension_numbers<[0], [0], [1], [1], [0, 1, 1, 1], [], []>} : vector<128x8xf32>, vector<128x32xf32>, vector<8x32xf32> -> vector<8x32xf32>
    %c0_175 = arith.constant 0 : index
    %c0_176 = arith.constant 0 : index
    %414 = vector.load %arg20[%c0_175, %c0_176] : memref<1x1xf32, #tpu.memory_space<vmem>>, vector<1x1xf32>
    %415 = vector.broadcast %414 : vector<1x1xf32> to vector<8x32xf32>
    %416 = arith.addf %413, %415 : vector<8x32xf32>
    %c0_177 = arith.constant 0 : index
    %c0_178 = arith.constant 0 : index
    %417 = vector.load %arg21[%c0_177, %c0_178] : memref<8x32xf32, #tpu.memory_space<vmem>>, vector<8x32xf32>
    tpu.vector_store %arg21[%c0_177, %c0_178], %416 {strides = array<i32>} : memref<8x32xf32, #tpu.memory_space<vmem>>, vector<8x32xf32>,
    return
  }
  func.func @transform_0(%arg0: i32) -> (i32, i32) {
    %c0_i32 = arith.constant 0 : i32
    %c0_i32_0 = arith.constant 0 : i32
    return %arg0, %c0_i32 : i32, i32
  }
  func.func @transform_1(%arg0: i32) -> (i32, i32) {
    %c0_i32 = arith.constant 0 : i32
    %c0_i32_0 = arith.constant 0 : i32
    %c0_i32_1 = arith.constant 0 : i32
    return %c0_i32, %c0_i32_0 : i32, i32
  }
  func.func @transform_2(%arg0: i32) -> (i32, i32, i32) {
    %c0_i32 = arith.constant 0 : i32
    %c0_i32_0 = arith.constant 0 : i32
    %c0_i32_1 = arith.constant 0 : i32
    %c0_i32_2 = arith.constant 0 : i32
    return %c0_i32, %c0_i32_0, %c0_i32_1 : i32, i32, i32
  }
  func.func @transform_3(%arg0: i32) -> (i32, i32) {
    %c0_i32 = arith.constant 0 : i32
    %c0_i32_0 = arith.constant 0 : i32
    %c0_i32_1 = arith.constant 0 : i32
    return %c0_i32, %c0_i32_0 : i32, i32
  }
  func.func @transform_4(%arg0: i32) -> (i32, i32) {
    %c0_i32 = arith.constant 0 : i32
    %c0_i32_0 = arith.constant 0 : i32
    %c0_i32_1 = arith.constant 0 : i32
    return %c0_i32, %c0_i32_0 : i32, i32
  }
  func.func @transform_5(%arg0: i32) -> (i32, i32) {
    %c0_i32 = arith.constant 0 : i32
    %c0_i32_0 = arith.constant 0 : i32
    %c0_i32_1 = arith.constant 0 : i32
    return %c0_i32, %c0_i32_0 : i32, i32
  }
  func.func @transform_6(%arg0: i32) -> (i32, i32, i32) {
    %c0_i32 = arith.constant 0 : i32
    %c0_i32_0 = arith.constant 0 : i32
    %c0_i32_1 = arith.constant 0 : i32
    %c0_i32_2 = arith.constant 0 : i32
    return %c0_i32, %c0_i32_0, %c0_i32_1 : i32, i32, i32
  }
  func.func @transform_7(%arg0: i32) -> (i32, i32, i32) {
    %c0_i32 = arith.constant 0 : i32
    %c0_i32_0 = arith.constant 0 : i32
    %c0_i32_1 = arith.constant 0 : i32
    %c0_i32_2 = arith.constant 0 : i32
    return %c0_i32, %c0_i32_0, %c0_i32_1 : i32, i32, i32
  }
  func.func @transform_8(%arg0: i32) -> (i32, i32, i32) {
    %c0_i32 = arith.constant 0 : i32
    %c0_i32_0 = arith.constant 0 : i32
    %c0_i32_1 = arith.constant 0 : i32
    %c0_i32_2 = arith.constant 0 : i32
    return %c0_i32, %c0_i32_0, %c0_i32_1 : i32, i32, i32
  }
  func.func @transform_9(%arg0: i32) -> (i32, i32, i32) {
    %c0_i32 = arith.constant 0 : i32
    %c0_i32_0 = arith.constant 0 : i32
    %c0_i32_1 = arith.constant 0 : i32
    %c0_i32_2 = arith.constant 0 : i32
    return %c0_i32, %c0_i32_0, %c0_i32_1 : i32, i32, i32
  }
  func.func @transform_10(%arg0: i32) -> (i32, i32, i32) {
    %c0_i32 = arith.constant 0 : i32
    %c0_i32_0 = arith.constant 0 : i32
    %c0_i32_1 = arith.constant 0 : i32
    %c0_i32_2 = arith.constant 0 : i32
    return %c0_i32, %c0_i32_0, %c0_i32_1 : i32, i32, i32
  }
  func.func @transform_11(%arg0: i32) -> (i32, i32, i32) {
    %c0_i32 = arith.constant 0 : i32
    %c0_i32_0 = arith.constant 0 : i32
    %c0_i32_1 = arith.constant 0 : i32
    %c0_i32_2 = arith.constant 0 : i32
    return %c0_i32, %c0_i32_0, %c0_i32_1 : i32, i32, i32
  }
  func.func @transform_12(%arg0: i32) -> (i32, i32, i32) {
    %c0_i32 = arith.constant 0 : i32
    %c0_i32_0 = arith.constant 0 : i32
    %c0_i32_1 = arith.constant 0 : i32
    %c0_i32_2 = arith.constant 0 : i32
    return %c0_i32, %c0_i32_0, %c0_i32_1 : i32, i32, i32
  }
  func.func @transform_13(%arg0: i32) -> (i32, i32, i32) {
    %c0_i32 = arith.constant 0 : i32
    %c0_i32_0 = arith.constant 0 : i32
    %c0_i32_1 = arith.constant 0 : i32
    %c0_i32_2 = arith.constant 0 : i32
    return %c0_i32, %c0_i32_0, %c0_i32_1 : i32, i32, i32
  }
  func.func @transform_14(%arg0: i32) -> (i32, i32, i32) {
    %c0_i32 = arith.constant 0 : i32
    %c0_i32_0 = arith.constant 0 : i32
    %c0_i32_1 = arith.constant 0 : i32
    %c0_i32_2 = arith.constant 0 : i32
    return %c0_i32, %c0_i32_0, %c0_i32_1 : i32, i32, i32
  }
  func.func @transform_15(%arg0: i32) -> (i32, i32, i32) {
    %c0_i32 = arith.constant 0 : i32
    %c0_i32_0 = arith.constant 0 : i32
    %c0_i32_1 = arith.constant 0 : i32
    %c0_i32_2 = arith.constant 0 : i32
    return %c0_i32, %c0_i32_0, %c0_i32_1 : i32, i32, i32
  }
  func.func @transform_16(%arg0: i32) -> (i32, i32) {
    %c0_i32 = arith.constant 0 : i32
    %c0_i32_0 = arith.constant 0 : i32
    %c0_i32_1 = arith.constant 0 : i32
    return %c0_i32, %c0_i32_0 : i32, i32
  }
  func.func @transform_17(%arg0: i32) -> (i32, i32) {
    %c0_i32 = arith.constant 0 : i32
    %c0_i32_0 = arith.constant 0 : i32
    %c0_i32_1 = arith.constant 0 : i32
    return %c0_i32, %c0_i32_0 : i32, i32
  }
  func.func @transform_18(%arg0: i32) -> (i32, i32) {
    %c0_i32 = arith.constant 0 : i32
    %c0_i32_0 = arith.constant 0 : i32
    %c0_i32_1 = arith.constant 0 : i32
    return %c0_i32, %c0_i32_0 : i32, i32
  }
  func.func @transform_19(%arg0: i32) -> (i32, i32) {
    %c0_i32 = arith.constant 0 : i32
    %c0_i32_0 = arith.constant 0 : i32
    %c0_i32_1 = arith.constant 0 : i32
    return %c0_i32, %c0_i32_0 : i32, i32
  }
  func.func @transform_20(%arg0: i32) -> (i32, i32) {
    %c0_i32 = arith.constant 0 : i32
    %c0_i32_0 = arith.constant 0 : i32
    return %c0_i32, %arg0 : i32, i32
  }
}

</mosaic_0001>

<llo_original>
// kernel: tpu_custom_call.1
$region0: #{tpu_custom_call.1}
  #allocation0 [shape = 'u32[]', space=smem, size = 0x4, offset = 0x4, fixed_abs, tag = 'smem constant byte address 0x4 - core index']
  #allocation1 [shape = 'u32[144,128]{1,0:T(1,128)}', space=vmem, size = 0x12000, scoped, tag = 'internal scratch']
  #allocation2 [shape = 'f32[1,1]{1,0:T(1,128)S(1)}', space=vmem, size = 0x200, scoped, tag = 'scoped memory for tpu_custom_call.1']
  %s0 = inlined_call_operand.vmem [shape: f32[128,16], index: 0, kind: input, shape index: {}]
  %s1 = inlined_call_operand.vmem [shape: f32[128,128], index: 1, kind: input, shape index: {}]
  %s2 = inlined_call_operand.vmem [shape: f32[4,1,32], index: 2, kind: input, shape index: {}]
  %s3 = inlined_call_operand.vmem [shape: f32[128,32], index: 3, kind: input, shape index: {}]
  %s4 = inlined_call_operand.vmem [shape: bf16[16,32], index: 4, kind: input, shape index: {}]
  %s5 = inlined_call_operand.vmem [shape: f32[1,32], index: 5, kind: input, shape index: {}]
  %s6 = inlined_call_operand.vmem [shape: bf16[2,32,96], index: 6, kind: input, shape index: {}]
  %s7 = inlined_call_operand.vmem [shape: f32[2,1,96], index: 7, kind: input, shape index: {}]
  %s8 = inlined_call_operand.vmem [shape: bf16[2,32,32], index: 8, kind: input, shape index: {}]
  %s9 = inlined_call_operand.vmem [shape: f32[2,1,32], index: 9, kind: input, shape index: {}]
  %s10 = inlined_call_operand.vmem [shape: f32[2,2,32], index: 10, kind: input, shape index: {}]
  %s11 = inlined_call_operand.vmem [shape: bf16[2,32,64], index: 11, kind: input, shape index: {}]
  %s12 = inlined_call_operand.vmem [shape: f32[2,1,64], index: 12, kind: input, shape index: {}]
  %s13 = inlined_call_operand.vmem [shape: bf16[2,64,32], index: 13, kind: input, shape index: {}]
  %s14 = inlined_call_operand.vmem [shape: f32[2,1,32], index: 14, kind: input, shape index: {}]
  %s15 = inlined_call_operand.vmem [shape: f32[2,2,32], index: 15, kind: input, shape index: {}]
  %s16 = inlined_call_operand.vmem [shape: f32[2,32], index: 16, kind: input, shape index: {}]
  %s17 = inlined_call_operand.vmem [shape: bf16[32,8], index: 17, kind: input, shape index: {}]
  %s18 = inlined_call_operand.vmem [shape: f32[1,8], index: 18, kind: input, shape index: {}]
  %s19 = inlined_call_operand.<no memory space> [shape: f32[1,1], index: 19, kind: input, shape index: {}]
  %s20 = inlined_call_operand.hbm [shape: f32[8,32], index: 20, kind: output, shape index: {}]
  %s21 = sld [smem:[#allocation0]]
  $region90: #{tpu_custom_call.1} parent=0
    _
  %s23 = ssub.s32 1, %s21
  %s24 = scalar_select 0, %s23, %s21
  %v25 = vstv %s19
  %26 = vst [vmem:[#allocation2] sm:$0x1] %v25
  $region1: #{tpu_custom_call.1} parent=0
    #allocation3 [shape = 'u8[4096]{0}', space=vmem, size = 0x1000, scoped, tag = 'output window, operand 0, single buffered']
    #allocation4 [shape = 's32[1]{0}', space=sflag, size = 0x4, scoped, tag = 'scoped memory for tpu_custom_call.1']
    %27 = vsyncpa [#allocation4], 0
    // Predicated region
    $region2: #{tpu_custom_call.1} parent=1 // pred_check
      _
    $region3: #{tpu_custom_call.1} parent=1 // pred_check_branch
      %29 = sbr.rel (0) target = $region5
    $region4: #{tpu_custom_call.1} parent=1 // pred_region
      _
    $region5: #{tpu_custom_call.1} parent=1 // pred_fallthru
      _
    // Predicated region
    $region6: #{tpu_custom_call.1} parent=1 // pred_check
      _
    $region7: #{tpu_custom_call.1} parent=1 // pred_check_branch
      %31 = sbr.rel (0) target = $region9
    $region8: #{tpu_custom_call.1} parent=1 // pred_region
      _
    $region9: #{tpu_custom_call.1} parent=1 // pred_fallthru
      _
    // Predicated region
    $region10: #{tpu_custom_call.1} parent=1 // pred_check
      _
    $region11: #{tpu_custom_call.1} parent=1 // pred_check_branch
      %33 = sbr.rel (0) target = $region13
    $region12: #{tpu_custom_call.1} parent=1 // pred_region
      _
    $region13: #{tpu_custom_call.1} parent=1 // pred_fallthru
      _
    // Predicated region
    $region14: #{tpu_custom_call.1} parent=1 // pred_check
      _
    $region15: #{tpu_custom_call.1} parent=1 // pred_check_branch
      %35 = sbr.rel (0) target = $region17
    $region16: #{tpu_custom_call.1} parent=1 // pred_region
      _
    $region17: #{tpu_custom_call.1} parent=1 // pred_fallthru
      _
    // Predicated region
    $region18: #{tpu_custom_call.1} parent=1 // pred_check
      _
    $region19: #{tpu_custom_call.1} parent=1 // pred_check_branch
      %37 = sbr.rel (0) target = $region21
    $region20: #{tpu_custom_call.1} parent=1 // pred_region
      _
    $region21: #{tpu_custom_call.1} parent=1 // pred_fallthru
      _
    // Predicated region
    $region22: #{tpu_custom_call.1} parent=1 // pred_check
      _
    $region23: #{tpu_custom_call.1} parent=1 // pred_check_branch
      %39 = sbr.rel (0) target = $region25
    $region24: #{tpu_custom_call.1} parent=1 // pred_region
      _
    $region25: #{tpu_custom_call.1} parent=1 // pred_fallthru
      _
    // Predicated region
    $region26: #{tpu_custom_call.1} parent=1 // pred_check
      _
    $region27: #{tpu_custom_call.1} parent=1 // pred_check_branch
      %41 = sbr.rel (0) target = $region29
    $region28: #{tpu_custom_call.1} parent=1 // pred_region
      _
    $region29: #{tpu_custom_call.1} parent=1 // pred_fallthru
      _
    // Predicated region
    $region30: #{tpu_custom_call.1} parent=1 // pred_check
      _
    $region31: #{tpu_custom_call.1} parent=1 // pred_check_branch
      %43 = sbr.rel (0) target = $region33
    $region32: #{tpu_custom_call.1} parent=1 // pred_region
      _
    $region33: #{tpu_custom_call.1} parent=1 // pred_fallthru
      _
    // Predicated region
    $region34: #{tpu_custom_call.1} parent=1 // pred_check
      _
    $region35: #{tpu_custom_call.1} parent=1 // pred_check_branch
      %45 = sbr.rel (0) target = $region37
    $region36: #{tpu_custom_call.1} parent=1 // pred_region
      _
    $region37: #{tpu_custom_call.1} parent=1 // pred_fallthru
      _
    // Predicated region
    $region38: #{tpu_custom_call.1} parent=1 // pred_check
      _
    $region39: #{tpu_custom_call.1} parent=1 // pred_check_branch
      %47 = sbr.rel (0) target = $region41
    $region40: #{tpu_custom_call.1} parent=1 // pred_region
      _
    $region41: #{tpu_custom_call.1} parent=1 // pred_fallthru
      _
    // Predicated region
    $region42: #{tpu_custom_call.1} parent=1 // pred_check
      _
    $region43: #{tpu_custom_call.1} parent=1 // pred_check_branch
      %49 = sbr.rel (0) target = $region45
    $region44: #{tpu_custom_call.1} parent=1 // pred_region
      _
    $region45: #{tpu_custom_call.1} parent=1 // pred_fallthru
      _
    // Predicated region
    $region46: #{tpu_custom_call.1} parent=1 // pred_check
      _
    $region47: #{tpu_custom_call.1} parent=1 // pred_check_branch
      %51 = sbr.rel (0) target = $region49
    $region48: #{tpu_custom_call.1} parent=1 // pred_region
      _
    $region49: #{tpu_custom_call.1} parent=1 // pred_fallthru
      _
    // Predicated region
    $region50: #{tpu_custom_call.1} parent=1 // pred_check
      _
    $region51: #{tpu_custom_call.1} parent=1 // pred_check_branch
      %53 = sbr.rel (0) target = $region53
    $region52: #{tpu_custom_call.1} parent=1 // pred_region
      _
    $region53: #{tpu_custom_call.1} parent=1 // pred_fallthru
      _
    // Predicated region
    $region54: #{tpu_custom_call.1} parent=1 // pred_check
      _
    $region55: #{tpu_custom_call.1} parent=1 // pred_check_branch
      %55 = sbr.rel (0) target = $region57
    $region56: #{tpu_custom_call.1} parent=1 // pred_region
      _
    $region57: #{tpu_custom_call.1} parent=1 // pred_fallthru
      _
    // Predicated region
    $region58: #{tpu_custom_call.1} parent=1 // pred_check
      _
    $region59: #{tpu_custom_call.1} parent=1 // pred_check_branch
      %57 = sbr.rel (0) target = $region61
    $region60: #{tpu_custom_call.1} parent=1 // pred_region
      _
    $region61: #{tpu_custom_call.1} parent=1 // pred_fallthru
      _
    // Predicated region
    $region62: #{tpu_custom_call.1} parent=1 // pred_check
      _
    $region63: #{tpu_custom_call.1} parent=1 // pred_check_branch
      %59 = sbr.rel (0) target = $region65
    $region64: #{tpu_custom_call.1} parent=1 // pred_region
      _
    $region65: #{tpu_custom_call.1} parent=1 // pred_fallthru
      _
    // Predicated region
    $region66: #{tpu_custom_call.1} parent=1 // pred_check
      _
    $region67: #{tpu_custom_call.1} parent=1 // pred_check_branch
      %61 = sbr.rel (0) target = $region69
    $region68: #{tpu_custom_call.1} parent=1 // pred_region
      _
    $region69: #{tpu_custom_call.1} parent=1 // pred_fallthru
      _
    // Predicated region
    $region70: #{tpu_custom_call.1} parent=1 // pred_check
      _
    $region71: #{tpu_custom_call.1} parent=1 // pred_check_branch
      %63 = sbr.rel (0) target = $region73
    $region72: #{tpu_custom_call.1} parent=1 // pred_region
      _
    $region73: #{tpu_custom_call.1} parent=1 // pred_fallthru
      _
    // Predicated region
    $region74: #{tpu_custom_call.1} parent=1 // pred_check
      _
    $region75: #{tpu_custom_call.1} parent=1 // pred_check_branch
      %65 = sbr.rel (0) target = $region77
    $region76: #{tpu_custom_call.1} parent=1 // pred_region
      _
    $region77: #{tpu_custom_call.1} parent=1 // pred_fallthru
      _
    // Predicated region
    $region78: #{tpu_custom_call.1} parent=1 // pred_check
      _
    $region79: #{tpu_custom_call.1} parent=1 // pred_check_branch
      %67 = sbr.rel (0) target = $region81
    $region80: #{tpu_custom_call.1} parent=1 // pred_region
      _
    $region81: #{tpu_custom_call.1} parent=1 // pred_fallthru
      _
    %v69 = vld [vmem:[%s1] sm:$0xff]
    %v70 = vld [vmem:[%s1 + $0x8] sm:$0xff]
    %v71 = vld [vmem:[%s1 + $0x10] sm:$0xff]
    %v72 = vld [vmem:[%s1 + $0x18] sm:$0xff]
    %v73 = vld [vmem:[%s1 + $0x20] sm:$0xff]
    %v74 = vld [vmem:[%s1 + $0x28] sm:$0xff]
    %v75 = vld [vmem:[%s1 + $0x30] sm:$0xff]
    %v76 = vld [vmem:[%s1 + $0x38] sm:$0xff]
    %v77 = vld [vmem:[%s1 + $0x40] sm:$0xff]
    %v78 = vld [vmem:[%s1 + $0x48] sm:$0xff]
    %v79 = vld [vmem:[%s1 + $0x50] sm:$0xff]
    %v80 = vld [vmem:[%s1 + $0x58] sm:$0xff]
    %v81 = vld [vmem:[%s1 + $0x60] sm:$0xff]
    %v82 = vld [vmem:[%s1 + $0x68] sm:$0xff]
    %v83 = vld [vmem:[%s1 + $0x70] sm:$0xff]
    %v84 = vld [vmem:[%s1 + $0x78] sm:$0xff]
    %v85 = vld [vmem:[%s3] sm:$0xff]
    %v86 = vld [vmem:[%s3 + $0x8] sm:$0xff]
    %v87 = vld [vmem:[%s3 + $0x10] sm:$0xff]
    %v88 = vld [vmem:[%s3 + $0x18] sm:$0xff]
    %v89 = vld [vmem:[%s3 + $0x20] sm:$0xff]
    %v90 = vld [vmem:[%s3 + $0x28] sm:$0xff]
    %v91 = vld [vmem:[%s3 + $0x30] sm:$0xff]
    %v92 = vld [vmem:[%s3 + $0x38] sm:$0xff]
    %v93 = vld [vmem:[%s3 + $0x40] sm:$0xff]
    %v94 = vld [vmem:[%s3 + $0x48] sm:$0xff]
    %v95 = vld [vmem:[%s3 + $0x50] sm:$0xff]
    %v96 = vld [vmem:[%s3 + $0x58] sm:$0xff]
    %v97 = vld [vmem:[%s3 + $0x60] sm:$0xff]
    %v98 = vld [vmem:[%s3 + $0x68] sm:$0xff]
    %v99 = vld [vmem:[%s3 + $0x70] sm:$0xff]
    %v100 = vld [vmem:[%s3 + $0x78] sm:$0xff]
    %v101 = vld [vmem:[%s0] sm:$0xff]
    %v102 = vld [vmem:[%s0 + $0x8] sm:$0xff]
    %v103 = vld [vmem:[%s0 + $0x10] sm:$0xff]
    %v104 = vld [vmem:[%s0 + $0x18] sm:$0xff]
    %v105 = vld [vmem:[%s0 + $0x20] sm:$0xff]
    %v106 = vld [vmem:[%s0 + $0x28] sm:$0xff]
    %v107 = vld [vmem:[%s0 + $0x30] sm:$0xff]
    %v108 = vld [vmem:[%s0 + $0x38] sm:$0xff]
    %v109 = vld [vmem:[%s0 + $0x40] sm:$0xff]
    %v110 = vld [vmem:[%s0 + $0x48] sm:$0xff]
    %v111 = vld [vmem:[%s0 + $0x50] sm:$0xff]
    %v112 = vld [vmem:[%s0 + $0x58] sm:$0xff]
    %v113 = vld [vmem:[%s0 + $0x60] sm:$0xff]
    %v114 = vld [vmem:[%s0 + $0x68] sm:$0xff]
    %v115 = vld [vmem:[%s0 + $0x70] sm:$0xff]
    %v116 = vld [vmem:[%s0 + $0x78] sm:$0xff]
    %vm117 = vcmask 130048
    %v118 = vsel %vm117, %v101, 0.0
    %119 = vadd.xlane.f32.xlu0 %v118
    %v120 = vpop.xlane.xlu0 %119
    %v121 = vsel %vm117, %v102, 0.0
    %122 = vadd.xlane.f32.xlu0 %v121
    %v123 = vpop.xlane.xlu0 %122
    %v124 = vsel %vm117, %v103, 0.0
    %125 = vadd.xlane.f32.xlu0 %v124
    %v126 = vpop.xlane.xlu0 %125
    %v127 = vsel %vm117, %v104, 0.0
    %128 = vadd.xlane.f32.xlu0 %v127
    %v129 = vpop.xlane.xlu0 %128
    %v130 = vsel %vm117, %v105, 0.0
    %131 = vadd.xlane.f32.xlu0 %v130
    %v132 = vpop.xlane.xlu0 %131
    %v133 = vsel %vm117, %v106, 0.0
    %134 = vadd.xlane.f32.xlu0 %v133
    %v135 = vpop.xlane.xlu0 %134
    %v136 = vsel %vm117, %v107, 0.0
    %137 = vadd.xlane.f32.xlu0 %v136
    %v138 = vpop.xlane.xlu0 %137
    %v139 = vsel %vm117, %v108, 0.0
    %140 = vadd.xlane.f32.xlu0 %v139
    %v141 = vpop.xlane.xlu0 %140
    %v142 = vsel %vm117, %v109, 0.0
    %143 = vadd.xlane.f32.xlu0 %v142
    %v144 = vpop.xlane.xlu0 %143
    %v145 = vsel %vm117, %v110, 0.0
    %146 = vadd.xlane.f32.xlu0 %v145
    %v147 = vpop.xlane.xlu0 %146
    %v148 = vsel %vm117, %v111, 0.0
    %149 = vadd.xlane.f32.xlu0 %v148
    %v150 = vpop.xlane.xlu0 %149
    %v151 = vsel %vm117, %v112, 0.0
    %152 = vadd.xlane.f32.xlu0 %v151
    %v153 = vpop.xlane.xlu0 %152
    %v154 = vsel %vm117, %v113, 0.0
    %155 = vadd.xlane.f32.xlu0 %v154
    %v156 = vpop.xlane.xlu0 %155
    %v157 = vsel %vm117, %v114, 0.0
    %158 = vadd.xlane.f32.xlu0 %v157
    %v159 = vpop.xlane.xlu0 %158
    %v160 = vsel %vm117, %v115, 0.0
    %161 = vadd.xlane.f32.xlu0 %v160
    %v162 = vpop.xlane.xlu0 %161
    %v163 = vsel %vm117, %v116, 0.0
    %164 = vadd.xlane.f32.xlu0 %v163
    %v165 = vpop.xlane.xlu0 %164
    %v166 = vrcp.pop 16.0
    %v167 = vmul.f32 %v120, %v166
    %v168 = vmul.f32 %v123, %v166
    %v169 = vmul.f32 %v126, %v166
    %v170 = vmul.f32 %v129, %v166
    %v171 = vmul.f32 %v132, %v166
    %v172 = vmul.f32 %v135, %v166
    %v173 = vmul.f32 %v138, %v166
    %v174 = vmul.f32 %v141, %v166
    %v175 = vmul.f32 %v144, %v166
    %v176 = vmul.f32 %v147, %v166
    %v177 = vmul.f32 %v150, %v166
    %v178 = vmul.f32 %v153, %v166
    %v179 = vmul.f32 %v156, %v166
    %v180 = vmul.f32 %v159, %v166
    %v181 = vmul.f32 %v162, %v166
    %v182 = vmul.f32 %v165, %v166
    %v183 = vsub.f32 %v101, %v167
    %v184 = vsub.f32 %v102, %v168
    %v185 = vsub.f32 %v103, %v169
    %v186 = vsub.f32 %v104, %v170
    %v187 = vsub.f32 %v105, %v171
    %v188 = vsub.f32 %v106, %v172
    %v189 = vsub.f32 %v107, %v173
    %v190 = vsub.f32 %v108, %v174
    %v191 = vsub.f32 %v109, %v175
    %v192 = vsub.f32 %v110, %v176
    %v193 = vsub.f32 %v111, %v177
    %v194 = vsub.f32 %v112, %v178
    %v195 = vsub.f32 %v113, %v179
    %v196 = vsub.f32 %v114, %v180
    %v197 = vsub.f32 %v115, %v181
    %v198 = vsub.f32 %v116, %v182
    %v199 = vmul.f32 %v183, %v183
    %v200 = vmul.f32 %v184, %v184
    %v201 = vmul.f32 %v185, %v185
    %v202 = vmul.f32 %v186, %v186
    %v203 = vmul.f32 %v187, %v187
    %v204 = vmul.f32 %v188, %v188
    %v205 = vmul.f32 %v189, %v189
    %v206 = vmul.f32 %v190, %v190
    %v207 = vmul.f32 %v191, %v191
    %v208 = vmul.f32 %v192, %v192
    %v209 = vmul.f32 %v193, %v193
    %v210 = vmul.f32 %v194, %v194
    %v211 = vmul.f32 %v195, %v195
    %v212 = vmul.f32 %v196, %v196
    %v213 = vmul.f32 %v197, %v197
    %v214 = vmul.f32 %v198, %v198
    %v215 = vsel %vm117, %v199, 0.0
    %216 = vadd.xlane.f32.xlu0 %v215
    %v217 = vpop.xlane.xlu0 %216
    %v218 = vsel %vm117, %v200, 0.0
    %219 = vadd.xlane.f32.xlu0 %v218
    %v220 = vpop.xlane.xlu0 %219
    %v221 = vsel %vm117, %v201, 0.0
    %222 = vadd.xlane.f32.xlu0 %v221
    %v223 = vpop.xlane.xlu0 %222
    %v224 = vsel %vm117, %v202, 0.0
    %225 = vadd.xlane.f32.xlu0 %v224
    %v226 = vpop.xlane.xlu0 %225
    %v227 = vsel %vm117, %v203, 0.0
    %228 = vadd.xlane.f32.xlu0 %v227
    %v229 = vpop.xlane.xlu0 %228
    %v230 = vsel %vm117, %v204, 0.0
    %231 = vadd.xlane.f32.xlu0 %v230
    %v232 = vpop.xlane.xlu0 %231
    %v233 = vsel %vm117, %v205, 0.0
    %234 = vadd.xlane.f32.xlu0 %v233
    %v235 = vpop.xlane.xlu0 %234
    %v236 = vsel %vm117, %v206, 0.0
    %237 = vadd.xlane.f32.xlu0 %v236
    %v238 = vpop.xlane.xlu0 %237
    %v239 = vsel %vm117, %v207, 0.0
    %240 = vadd.xlane.f32.xlu0 %v239
    %v241 = vpop.xlane.xlu0 %240
    %v242 = vsel %vm117, %v208, 0.0
    %243 = vadd.xlane.f32.xlu0 %v242
    %v244 = vpop.xlane.xlu0 %243
    %v245 = vsel %vm117, %v209, 0.0
    %246 = vadd.xlane.f32.xlu0 %v245
    %v247 = vpop.xlane.xlu0 %246
    %v248 = vsel %vm117, %v210, 0.0
    %249 = vadd.xlane.f32.xlu0 %v248
    %v250 = vpop.xlane.xlu0 %249
    %v251 = vsel %vm117, %v211, 0.0
    %252 = vadd.xlane.f32.xlu0 %v251
    %v253 = vpop.xlane.xlu0 %252
    %v254 = vsel %vm117, %v212, 0.0
    %255 = vadd.xlane.f32.xlu0 %v254
    %v256 = vpop.xlane.xlu0 %255
    %v257 = vsel %vm117, %v213, 0.0
    %258 = vadd.xlane.f32.xlu0 %v257
    %v259 = vpop.xlane.xlu0 %258
    %v260 = vsel %vm117, %v214, 0.0
    %261 = vadd.xlane.f32.xlu0 %v260
    %v262 = vpop.xlane.xlu0 %261
    %v263 = vmul.f32 %v217, %v166
    %v264 = vmul.f32 %v220, %v166
    %v265 = vmul.f32 %v223, %v166
    %v266 = vmul.f32 %v226, %v166
    %v267 = vmul.f32 %v229, %v166
    %v268 = vmul.f32 %v232, %v166
    %v269 = vmul.f32 %v235, %v166
    %v270 = vmul.f32 %v238, %v166
    %v271 = vmul.f32 %v241, %v166
    %v272 = vmul.f32 %v244, %v166
    %v273 = vmul.f32 %v247, %v166
    %v274 = vmul.f32 %v250, %v166
    %v275 = vmul.f32 %v253, %v166
    %v276 = vmul.f32 %v256, %v166
    %v277 = vmul.f32 %v259, %v166
    %v278 = vmul.f32 %v262, %v166
    %v279 = vadd.f32 %v263, 1e-05
    %v280 = vadd.f32 %v264, 1e-05
    %v281 = vadd.f32 %v265, 1e-05
    %v282 = vadd.f32 %v266, 1e-05
    %v283 = vadd.f32 %v267, 1e-05
    %v284 = vadd.f32 %v268, 1e-05
    %v285 = vadd.f32 %v269, 1e-05
    %v286 = vadd.f32 %v270, 1e-05
    %v287 = vadd.f32 %v271, 1e-05
    %v288 = vadd.f32 %v272, 1e-05
    %v289 = vadd.f32 %v273, 1e-05
    %v290 = vadd.f32 %v274, 1e-05
    %v291 = vadd.f32 %v275, 1e-05
    %v292 = vadd.f32 %v276, 1e-05
    %v293 = vadd.f32 %v277, 1e-05
    %v294 = vadd.f32 %v278, 1e-05
    %v295 = vrsqrt.pop %v279
    %v296 = vmul.f32 %v279, %v295
    %vm297 = vcmp.eq.f32.partialorder %v279, inf
    %v298 = vsel %vm297, %v279, %v296
    %vm299 = vcmp.eq.f32.partialorder %v279, 0.0
    %v300 = vand.u32 %v279, 2147483648
    %v301 = vsel %vm299, %v300, %v298
    %v302 = vrsqrt.pop %v280
    %v303 = vmul.f32 %v280, %v302
    %vm304 = vcmp.eq.f32.partialorder %v280, inf
    %v305 = vsel %vm304, %v280, %v303
    %vm306 = vcmp.eq.f32.partialorder %v280, 0.0
    %v307 = vand.u32 %v280, 2147483648
    %v308 = vsel %vm306, %v307, %v305
    %v309 = vrsqrt.pop %v281
    %v310 = vmul.f32 %v281, %v309
    %vm311 = vcmp.eq.f32.partialorder %v281, inf
    %v312 = vsel %vm311, %v281, %v310
    %vm313 = vcmp.eq.f32.partialorder %v281, 0.0
    %v314 = vand.u32 %v281, 2147483648
    %v315 = vsel %vm313, %v314, %v312
    %v316 = vrsqrt.pop %v282
    %v317 = vmul.f32 %v282, %v316
    %vm318 = vcmp.eq.f32.partialorder %v282, inf
    %v319 = vsel %vm318, %v282, %v317
    %vm320 = vcmp.eq.f32.partialorder %v282, 0.0
    %v321 = vand.u32 %v282, 2147483648
    %v322 = vsel %vm320, %v321, %v319
    %v323 = vrsqrt.pop %v283
    %v324 = vmul.f32 %v283, %v323
    %vm325 = vcmp.eq.f32.partialorder %v283, inf
    %v326 = vsel %vm325, %v283, %v324
    %vm327 = vcmp.eq.f32.partialorder %v283, 0.0
    %v328 = vand.u32 %v283, 2147483648
    %v329 = vsel %vm327, %v328, %v326
    %v330 = vrsqrt.pop %v284
    %v331 = vmul.f32 %v284, %v330
    %vm332 = vcmp.eq.f32.partialorder %v284, inf
    %v333 = vsel %vm332, %v284, %v331
    %vm334 = vcmp.eq.f32.partialorder %v284, 0.0
    %v335 = vand.u32 %v284, 2147483648
    %v336 = vsel %vm334, %v335, %v333
    %v337 = vrsqrt.pop %v285
    %v338 = vmul.f32 %v285, %v337
    %vm339 = vcmp.eq.f32.partialorder %v285, inf
    %v340 = vsel %vm339, %v285, %v338
    %vm341 = vcmp.eq.f32.partialorder %v285, 0.0
    %v342 = vand.u32 %v285, 2147483648
    %v343 = vsel %vm341, %v342, %v340
    %v344 = vrsqrt.pop %v286
    %v345 = vmul.f32 %v286, %v344
    %vm346 = vcmp.eq.f32.partialorder %v286, inf
    %v347 = vsel %vm346, %v286, %v345
    %vm348 = vcmp.eq.f32.partialorder %v286, 0.0
    %v349 = vand.u32 %v286, 2147483648
    %v350 = vsel %vm348, %v349, %v347
    %v351 = vrsqrt.pop %v287
    %v352 = vmul.f32 %v287, %v351
    %vm353 = vcmp.eq.f32.partialorder %v287, inf
    %v354 = vsel %vm353, %v287, %v352
    %vm355 = vcmp.eq.f32.partialorder %v287, 0.0
    %v356 = vand.u32 %v287, 2147483648
    %v357 = vsel %vm355, %v356, %v354
    %v358 = vrsqrt.pop %v288
    %v359 = vmul.f32 %v288, %v358
    %vm360 = vcmp.eq.f32.partialorder %v288, inf
    %v361 = vsel %vm360, %v288, %v359
    %vm362 = vcmp.eq.f32.partialorder %v288, 0.0
    %v363 = vand.u32 %v288, 2147483648
    %v364 = vsel %vm362, %v363, %v361
    %v365 = vrsqrt.pop %v289
    %v366 = vmul.f32 %v289, %v365
    %vm367 = vcmp.eq.f32.partialorder %v289, inf
    %v368 = vsel %vm367, %v289, %v366
    %vm369 = vcmp.eq.f32.partialorder %v289, 0.0
    %v370 = vand.u32 %v289, 2147483648
    %v371 = vsel %vm369, %v370, %v368
    %v372 = vrsqrt.pop %v290
    %v373 = vmul.f32 %v290, %v372
    %vm374 = vcmp.eq.f32.partialorder %v290, inf
    %v375 = vsel %vm374, %v290, %v373
    %vm376 = vcmp.eq.f32.partialorder %v290, 0.0
    %v377 = vand.u32 %v290, 2147483648
    %v378 = vsel %vm376, %v377, %v375
    %v379 = vrsqrt.pop %v291
    %v380 = vmul.f32 %v291, %v379
    %vm381 = vcmp.eq.f32.partialorder %v291, inf
    %v382 = vsel %vm381, %v291, %v380
    %vm383 = vcmp.eq.f32.partialorder %v291, 0.0
    %v384 = vand.u32 %v291, 2147483648
    %v385 = vsel %vm383, %v384, %v382
    %v386 = vrsqrt.pop %v292
    %v387 = vmul.f32 %v292, %v386
    %vm388 = vcmp.eq.f32.partialorder %v292, inf
    %v389 = vsel %vm388, %v292, %v387
    %vm390 = vcmp.eq.f32.partialorder %v292, 0.0
    %v391 = vand.u32 %v292, 2147483648
    %v392 = vsel %vm390, %v391, %v389
    %v393 = vrsqrt.pop %v293
    %v394 = vmul.f32 %v293, %v393
    %vm395 = vcmp.eq.f32.partialorder %v293, inf
    %v396 = vsel %vm395, %v293, %v394
    %vm397 = vcmp.eq.f32.partialorder %v293, 0.0
    %v398 = vand.u32 %v293, 2147483648
    %v399 = vsel %vm397, %v398, %v396
    %v400 = vrsqrt.pop %v294
    %v401 = vmul.f32 %v294, %v400
    %vm402 = vcmp.eq.f32.partialorder %v294, inf
    %v403 = vsel %vm402, %v294, %v401
    %vm404 = vcmp.eq.f32.partialorder %v294, 0.0
    %v405 = vand.u32 %v294, 2147483648
    %v406 = vsel %vm404, %v405, %v403
    %v407 = vrsqrt.pop %v279
    %v408 = vrsqrt.pop %v280
    %v409 = vrsqrt.pop %v281
    %v410 = vrsqrt.pop %v282
    %v411 = vrsqrt.pop %v283
    %v412 = vrsqrt.pop %v284
    %v413 = vrsqrt.pop %v285
    %v414 = vrsqrt.pop %v286
    %v415 = vrsqrt.pop %v287
    %v416 = vrsqrt.pop %v288
    %v417 = vrsqrt.pop %v289
    %v418 = vrsqrt.pop %v290
    %v419 = vrsqrt.pop %v291
    %v420 = vrsqrt.pop %v292
    %v421 = vrsqrt.pop %v293
    %v422 = vrsqrt.pop %v294
    %v423 = vmul.f32 %v183, %v407
    %v424 = vmul.f32 %v184, %v408
    %v425 = vmul.f32 %v185, %v409
    %v426 = vmul.f32 %v186, %v410
    %v427 = vmul.f32 %v187, %v411
    %v428 = vmul.f32 %v188, %v412
    %v429 = vmul.f32 %v189, %v413
    %v430 = vmul.f32 %v190, %v414
    %v431 = vmul.f32 %v191, %v415
    %v432 = vmul.f32 %v192, %v416
    %v433 = vmul.f32 %v193, %v417
    %v434 = vmul.f32 %v194, %v418
    %v435 = vmul.f32 %v195, %v419
    %v436 = vmul.f32 %v196, %v420
    %v437 = vmul.f32 %v197, %v421
    %v438 = vmul.f32 %v198, %v422
    %v439 = vpack.c.bf16 %v424, %v423
    %v440 = vpack.c.bf16 %v426, %v425
    %v441 = vpack.c.bf16 %v428, %v427
    %v442 = vpack.c.bf16 %v430, %v429
    %v443 = vpack.c.bf16 %v432, %v431
    %v444 = vpack.c.bf16 %v434, %v433
    %v445 = vpack.c.bf16 %v436, %v435
    %v446 = vpack.c.bf16 %v438, %v437
    %v447 = vld [vmem:[%s4] sm:$0xf]
    %v448 = vld [vmem:[%s4 + $0x4] sm:$0xf]
    %v449 = vld [vmem:[%s5] sm:$0x1]
    %v451 = vlaneseq
    %v452 = vshrl.u32 %v451, 7
    %v453 = vsub.s32 0, %v452
    %v454 = vrot.slane %v449, %v453
    %v458 = vunpack.c.l.b16 %v447
    %v459 = vunpack.c.l.b16 %v448
    %v460 = vpack.c.b16 %v459, %v458
    %v463 = vsel %vm117, %v439, 0
    %v466 = vsel %vm117, %v440, 0
    %v469 = vsel %vm117, %v441, 0
    %v472 = vsel %vm117, %v442, 0
    %v475 = vsel %vm117, %v443, 0
    %v478 = vsel %vm117, %v444, 0
    %v481 = vsel %vm117, %v445, 0
    %v484 = vsel %vm117, %v446, 0
    %486 = vmatprep.subr.bf16.mxu0 0
    %487 = vmatpush1.bf16.msra.mxu0 %v460
    %488 = vmatprep.subr.bf16.mxu0 0
    %489 = vmatpush1.bf16.msra.mxu0 0
    %490 = vmatprep.subr.bf16.mxu0 0
    %491 = vmatpush1.bf16.msra.mxu0 0
    %492 = vmatprep.subr.bf16.mxu0 0
    %493 = vmatpush1.bf16.msra.mxu0 0
    %494 = vmatprep.subr.bf16.mxu0 0
    %495 = vmatpush1.bf16.msra.mxu0 0
    %496 = vmatprep.subr.bf16.mxu0 0
    %497 = vmatpush1.bf16.msra.mxu0 0
    %498 = vmatprep.subr.bf16.mxu0 0
    %499 = vmatpush1.bf16.msra.mxu0 0
    %500 = vmatprep.subr.bf16.mxu0 0
    %501 = vmatpush1.bf16.msra.mxu0 0
    %502 = vmatprep.subr.bf16.mxu0 0
    %503 = vmatpush1.bf16.msra.mxu0 0
    %504 = vmatprep.subr.bf16.mxu0 0
    %505 = vmatpush1.bf16.msra.mxu0 0
    %506 = vmatprep.subr.bf16.mxu0 0
    %507 = vmatpush1.bf16.msra.mxu0 0
    %508 = vmatprep.subr.bf16.mxu0 0
    %509 = vmatpush1.bf16.msra.mxu0 0
    %510 = vmatprep.subr.bf16.mxu0 0
    %511 = vmatpush1.bf16.msra.mxu0 0
    %512 = vmatprep.subr.bf16.mxu0 0
    %513 = vmatpush1.bf16.msra.mxu0 0
    %514 = vmatprep.subr.bf16.mxu0 0
    %515 = vmatpush1.bf16.msra.mxu0 0
    %516 = vmatprep.subr.bf16.mxu0 0
    %517 = vmatpush1.bf16.msra.mxu0 0
    %518 = vmatprep.mubr.bf16.mxu0 0
    %519 = vmatmul.mubr.bf16.gmra.mrb[0].mxu0 %v463
    %v520 = vpop.f32.mrb[0].mxu0
    %v521 = vadd.f32 %v454, %v520
    %v522 = vpop.f32.mrb[0].mxu0
    %v523 = vpop.f32.mrb[0].mxu0
    %v524 = vadd.f32 %v454, %v523
    %v525 = vpop.f32.mrb[0].mxu0
    %526 = vmatprep.mubr.bf16.mxu0 0
    %527 = vmatmul.mubr.bf16.gmra.mrb[0].mxu0 %v466
    %v528 = vpop.f32.mrb[0].mxu0
    %v529 = vadd.f32 %v454, %v528
    %v530 = vpop.f32.mrb[0].mxu0
    %v531 = vpop.f32.mrb[0].mxu0
    %v532 = vadd.f32 %v454, %v531
    %v533 = vpop.f32.mrb[0].mxu0
    %534 = vmatprep.mubr.bf16.mxu0 0
    %535 = vmatmul.mubr.bf16.gmra.mrb[0].mxu0 %v469
    %v536 = vpop.f32.mrb[0].mxu0
    %v537 = vadd.f32 %v454, %v536
    %v538 = vpop.f32.mrb[0].mxu0
    %v539 = vpop.f32.mrb[0].mxu0
    %v540 = vadd.f32 %v454, %v539
    %v541 = vpop.f32.mrb[0].mxu0
    %542 = vmatprep.mubr.bf16.mxu0 0
    %543 = vmatmul.mubr.bf16.gmra.mrb[0].mxu0 %v472
    %v544 = vpop.f32.mrb[0].mxu0
    %v545 = vadd.f32 %v454, %v544
    %v546 = vpop.f32.mrb[0].mxu0
    %v547 = vpop.f32.mrb[0].mxu0
    %v548 = vadd.f32 %v454, %v547
    %v549 = vpop.f32.mrb[0].mxu0
    %550 = vmatprep.mubr.bf16.mxu0 0
    %551 = vmatmul.mubr.bf16.gmra.mrb[0].mxu0 %v475
    %v552 = vpop.f32.mrb[0].mxu0
    %v553 = vadd.f32 %v454, %v552
    %v554 = vpop.f32.mrb[0].mxu0
    %v555 = vpop.f32.mrb[0].mxu0
    %v556 = vadd.f32 %v454, %v555
    %v557 = vpop.f32.mrb[0].mxu0
    %558 = vmatprep.mubr.bf16.mxu0 0
    %559 = vmatmul.mubr.bf16.gmra.mrb[0].mxu0 %v478
    %v560 = vpop.f32.mrb[0].mxu0
    %v561 = vadd.f32 %v454, %v560
    %v562 = vpop.f32.mrb[0].mxu0
    %v563 = vpop.f32.mrb[0].mxu0
    %v564 = vadd.f32 %v454, %v563
    %v565 = vpop.f32.mrb[0].mxu0
    %566 = vmatprep.mubr.bf16.mxu0 0
    %567 = vmatmul.mubr.bf16.gmra.mrb[0].mxu0 %v481
    %v568 = vpop.f32.mrb[0].mxu0
    %v569 = vadd.f32 %v454, %v568
    %v570 = vpop.f32.mrb[0].mxu0
    %v571 = vpop.f32.mrb[0].mxu0
    %v572 = vadd.f32 %v454, %v571
    %v573 = vpop.f32.mrb[0].mxu0
    %574 = vmatprep.mubr.bf16.mxu0 0
    %575 = vmatmul.mubr.bf16.gmra.mrb[0].mxu0 %v484
    %v576 = vpop.f32.mrb[0].mxu0
    %v577 = vadd.f32 %v454, %v576
    %v578 = vpop.f32.mrb[0].mxu0
    %v579 = vpop.f32.mrb[0].mxu0
    %v580 = vadd.f32 %v454, %v579
    %v581 = vpop.f32.mrb[0].mxu0
    %582 = vdwg.mxu0
    %v583 = vpack.c.bf16 %v524, %v521
    %v584 = vpack.c.bf16 %v532, %v529
    %v585 = vpack.c.bf16 %v540, %v537
    %v586 = vpack.c.bf16 %v548, %v545
    %v587 = vpack.c.bf16 %v556, %v553
    %v588 = vpack.c.bf16 %v564, %v561
    %v589 = vpack.c.bf16 %v572, %v569
    %v590 = vpack.c.bf16 %v580, %v577
    %v591 = vld [vmem:[%s6] sm:$0xf]
    %v592 = vld [vmem:[%s6 + $0x4] sm:$0xf]
    %v593 = vld [vmem:[%s6 + $0x8] sm:$0xf]
    %v594 = vld [vmem:[%s6 + $0xc] sm:$0xf]
    %v595 = vld [vmem:[%s7] sm:$0x1]
    %v597 = vlaneseq
    %v598 = vshrl.u32 %v597, 7
    %v599 = vsub.s32 0, %v598
    %v600 = vrot.slane %v595, %v599
    %v606 = vunpack.c.l.b16 %v591
    %v607 = vunpack.c.l.b16 %v592
    %v608 = vunpack.c.l.b16 %v593
    %v609 = vunpack.c.l.b16 %v594
    %v610 = vpack.c.b16 %v607, %v606
    %v611 = vpack.c.b16 %v609, %v608
    %vm614 = vcmask 261120
    %v616 = vsel %vm614, %v583, 0
    %v619 = vsel %vm614, %v584, 0
    %v622 = vsel %vm614, %v585, 0
    %v625 = vsel %vm614, %v586, 0
    %v628 = vsel %vm614, %v587, 0
    %v631 = vsel %vm614, %v588, 0
    %v634 = vsel %vm614, %v589, 0
    %v637 = vsel %vm614, %v590, 0
    %639 = vmatprep.subr.bf16.mxu0 0
    %640 = vmatpush1.bf16.msra.mxu0 %v610
    %641 = vmatprep.subr.bf16.mxu0 0
    %642 = vmatpush1.bf16.msra.mxu0 %v611
    %643 = vmatprep.subr.bf16.mxu0 0
    %644 = vmatpush1.bf16.msra.mxu0 0
    %645 = vmatprep.subr.bf16.mxu0 0
    %646 = vmatpush1.bf16.msra.mxu0 0
    %647 = vmatprep.subr.bf16.mxu0 0
    %648 = vmatpush1.bf16.msra.mxu0 0
    %649 = vmatprep.subr.bf16.mxu0 0
    %650 = vmatpush1.bf16.msra.mxu0 0
    %651 = vmatprep.subr.bf16.mxu0 0
    %652 = vmatpush1.bf16.msra.mxu0 0
    %653 = vmatprep.subr.bf16.mxu0 0
    %654 = vmatpush1.bf16.msra.mxu0 0
    %655 = vmatprep.subr.bf16.mxu0 0
    %656 = vmatpush1.bf16.msra.mxu0 0
    %657 = vmatprep.subr.bf16.mxu0 0
    %658 = vmatpush1.bf16.msra.mxu0 0
    %659 = vmatprep.subr.bf16.mxu0 0
    %660 = vmatpush1.bf16.msra.mxu0 0
    %661 = vmatprep.subr.bf16.mxu0 0
    %662 = vmatpush1.bf16.msra.mxu0 0
    %663 = vmatprep.subr.bf16.mxu0 0
    %664 = vmatpush1.bf16.msra.mxu0 0
    %665 = vmatprep.subr.bf16.mxu0 0
    %666 = vmatpush1.bf16.msra.mxu0 0
    %667 = vmatprep.subr.bf16.mxu0 0
    %668 = vmatpush1.bf16.msra.mxu0 0
    %669 = vmatprep.subr.bf16.mxu0 0
    %670 = vmatpush1.bf16.msra.mxu0 0
    %671 = vmatprep.mubr.bf16.mxu0 0
    %672 = vmatmul.mubr.bf16.gmra.mrb[0].mxu0 %v616
    %v673 = vpop.f32.mrb[0].mxu0
    %v674 = vadd.f32 %v600, %v673
    %v675 = vpop.f32.mrb[0].mxu0
    %v676 = vpop.f32.mrb[0].mxu0
    %v677 = vadd.f32 %v600, %v676
    %v678 = vpop.f32.mrb[0].mxu0
    %679 = vmatprep.mubr.bf16.mxu0 0
    %680 = vmatmul.mubr.bf16.gmra.mrb[0].mxu0 %v619
    %v681 = vpop.f32.mrb[0].mxu0
    %v682 = vadd.f32 %v600, %v681
    %v683 = vpop.f32.mrb[0].mxu0
    %v684 = vpop.f32.mrb[0].mxu0
    %v685 = vadd.f32 %v600, %v684
    %v686 = vpop.f32.mrb[0].mxu0
    %687 = vmatprep.mubr.bf16.mxu0 0
    %688 = vmatmul.mubr.bf16.gmra.mrb[0].mxu0 %v622
    %v689 = vpop.f32.mrb[0].mxu0
    %v690 = vadd.f32 %v600, %v689
    %v691 = vpop.f32.mrb[0].mxu0
    %v692 = vpop.f32.mrb[0].mxu0
    %v693 = vadd.f32 %v600, %v692
    %v694 = vpop.f32.mrb[0].mxu0
    %695 = vmatprep.mubr.bf16.mxu0 0
    %696 = vmatmul.mubr.bf16.gmra.mrb[0].mxu0 %v625
    %v697 = vpop.f32.mrb[0].mxu0
    %v698 = vadd.f32 %v600, %v697
    %v699 = vpop.f32.mrb[0].mxu0
    %v700 = vpop.f32.mrb[0].mxu0
    %v701 = vadd.f32 %v600, %v700
    %v702 = vpop.f32.mrb[0].mxu0
    %703 = vmatprep.mubr.bf16.mxu0 0
    %704 = vmatmul.mubr.bf16.gmra.mrb[0].mxu0 %v628
    %v705 = vpop.f32.mrb[0].mxu0
    %v706 = vadd.f32 %v600, %v705
    %v707 = vpop.f32.mrb[0].mxu0
    %v708 = vpop.f32.mrb[0].mxu0
    %v709 = vadd.f32 %v600, %v708
    %v710 = vpop.f32.mrb[0].mxu0
    %711 = vmatprep.mubr.bf16.mxu0 0
    %712 = vmatmul.mubr.bf16.gmra.mrb[0].mxu0 %v631
    %v713 = vpop.f32.mrb[0].mxu0
    %v714 = vadd.f32 %v600, %v713
    %v715 = vpop.f32.mrb[0].mxu0
    %v716 = vpop.f32.mrb[0].mxu0
    %v717 = vadd.f32 %v600, %v716
    %v718 = vpop.f32.mrb[0].mxu0
    %719 = vmatprep.mubr.bf16.mxu0 0
    %720 = vmatmul.mubr.bf16.gmra.mrb[0].mxu0 %v634
    %v721 = vpop.f32.mrb[0].mxu0
    %v722 = vadd.f32 %v600, %v721
    %v723 = vpop.f32.mrb[0].mxu0
    %v724 = vpop.f32.mrb[0].mxu0
    %v725 = vadd.f32 %v600, %v724
    %v726 = vpop.f32.mrb[0].mxu0
    %727 = vmatprep.mubr.bf16.mxu0 0
    %728 = vmatmul.mubr.bf16.gmra.mrb[0].mxu0 %v637
    %v729 = vpop.f32.mrb[0].mxu0
    %v730 = vadd.f32 %v600, %v729
    %v731 = vpop.f32.mrb[0].mxu0
    %v732 = vpop.f32.mrb[0].mxu0
    %v733 = vadd.f32 %v600, %v732
    %v734 = vpop.f32.mrb[0].mxu0
    %735 = vdwg.mxu0
    %v736 = vmul.f32 %v674, 0.35355338
    %v737 = vmul.f32 %v677, 0.35355338
    %v738 = vmul.f32 %v682, 0.35355338
    %v739 = vmul.f32 %v685, 0.35355338
    %v740 = vmul.f32 %v690, 0.35355338
    %v741 = vmul.f32 %v693, 0.35355338
    %v742 = vmul.f32 %v698, 0.35355338
    %v743 = vmul.f32 %v701, 0.35355338
    %v744 = vmul.f32 %v706, 0.35355338
    %v745 = vmul.f32 %v709, 0.35355338
    %v746 = vmul.f32 %v714, 0.35355338
    %v747 = vmul.f32 %v717, 0.35355338
    %v748 = vmul.f32 %v722, 0.35355338
    %v749 = vmul.f32 %v725, 0.35355338
    %v750 = vmul.f32 %v730, 0.35355338
    %v751 = vmul.f32 %v733, 0.35355338
    %v752 = vpack.c.bf16 %v737, %v736
    %v753 = vpack.c.bf16 %v739, %v738
    %v754 = vpack.c.bf16 %v741, %v740
    %v755 = vpack.c.bf16 %v743, %v742
    %v756 = vpack.c.bf16 %v745, %v744
    %v757 = vpack.c.bf16 %v747, %v746
    %v758 = vpack.c.bf16 %v749, %v748
    %v759 = vpack.c.bf16 %v751, %v750
    %v760 = vpack.c.bf16 %v677, %v674
    %v761 = vpack.c.bf16 %v685, %v682
    %v762 = vpack.c.bf16 %v693, %v690
    %v763 = vpack.c.bf16 %v701, %v698
    %v764 = vpack.c.bf16 %v709, %v706
    %v765 = vpack.c.bf16 %v717, %v714
    %v766 = vpack.c.bf16 %v725, %v722
    %v767 = vpack.c.bf16 %v733, %v730
    %776 = vrot.lane.b32.xlu0 %v760, 96
    %v777 = vpop.permute.xlu0 %776
    %778 = vrot.lane.b32.xlu0 %v761, 96
    %v779 = vpop.permute.xlu0 %778
    %780 = vrot.lane.b32.xlu0 %v762, 96
    %v781 = vpop.permute.xlu0 %780
    %782 = vrot.lane.b32.xlu0 %v763, 96
    %v783 = vpop.permute.xlu0 %782
    %784 = vrot.lane.b32.xlu0 %v764, 96
    %v785 = vpop.permute.xlu0 %784
    %786 = vrot.lane.b32.xlu0 %v765, 96
    %v787 = vpop.permute.xlu0 %786
    %788 = vrot.lane.b32.xlu0 %v766, 96
    %v789 = vpop.permute.xlu0 %788
    %790 = vrot.lane.b32.xlu0 %v767, 96
    %v791 = vpop.permute.xlu0 %790
    %vm792 = vcmask 64512
    %v794 = vsel %vm792, %v752, 0
    %v797 = vsel %vm792, %v753, 0
    %v800 = vsel %vm792, %v754, 0
    %v803 = vsel %vm792, %v755, 0
    %v806 = vsel %vm792, %v756, 0
    %v809 = vsel %vm792, %v757, 0
    %v812 = vsel %vm792, %v758, 0
    %v815 = vsel %vm792, %v759, 0
    %v818 = vsel %vm792, %v777, 0
    %v821 = vsel %vm792, %v779, 0
    %v824 = vsel %vm792, %v781, 0
    %v827 = vsel %vm792, %v783, 0
    %v830 = vsel %vm792, %v785, 0
    %v833 = vsel %vm792, %v787, 0
    %v836 = vsel %vm792, %v789, 0
    %v839 = vsel %vm792, %v791, 0
    %841 = vmatprep.subr.bf16.mxu0 0
    %842 = vmatpush1.bf16.xpose.msra.mxu0 %v818
    %843 = vmatprep.subr.bf16.mxu0 0
    %844 = vmatpush1.bf16.xpose.msra.mxu0 %v821
    %845 = vmatprep.subr.bf16.mxu0 0
    %846 = vmatpush1.bf16.xpose.msra.mxu0 %v824
    %847 = vmatprep.subr.bf16.mxu0 0
    %848 = vmatpush1.bf16.xpose.msra.mxu0 %v827
    %849 = vmatprep.subr.bf16.mxu0 0
    %850 = vmatpush1.bf16.xpose.msra.mxu0 %v830
    %851 = vmatprep.subr.bf16.mxu0 0
    %852 = vmatpush1.bf16.xpose.msra.mxu0 %v833
    %853 = vmatprep.subr.bf16.mxu0 0
    %854 = vmatpush1.bf16.xpose.msra.mxu0 %v836
    %855 = vmatprep.subr.bf16.mxu0 0
    %856 = vmatpush1.bf16.xpose.msra.mxu0 %v839
    %857 = vmatprep.subr.bf16.mxu0 0
    %858 = vmatpush1.bf16.xpose.msra.mxu0 0
    %859 = vmatprep.subr.bf16.mxu0 0
    %860 = vmatpush1.bf16.xpose.msra.mxu0 0
    %861 = vmatprep.subr.bf16.mxu0 0
    %862 = vmatpush1.bf16.xpose.msra.mxu0 0
    %863 = vmatprep.subr.bf16.mxu0 0
    %864 = vmatpush1.bf16.xpose.msra.mxu0 0
    %865 = vmatprep.subr.bf16.mxu0 0
    %866 = vmatpush1.bf16.xpose.msra.mxu0 0
    %867 = vmatprep.subr.bf16.mxu0 0
    %868 = vmatpush1.bf16.xpose.msra.mxu0 0
    %869 = vmatprep.subr.bf16.mxu0 0
    %870 = vmatpush1.bf16.xpose.msra.mxu0 0
    %871 = vmatprep.subr.bf16.mxu0 0
    %872 = vmatpush1.bf16.xpose.msra.mxu0 0
    %873 = vmatprep.mubr.bf16.mxu0 0
    %874 = vmatmul.mubr.bf16.gmra.mrb[0].mxu0 %v794
    %v875 = vpop.f32.mrb[0].mxu0
    %v876 = vadd.f32 %v69, %v875
    %v877 = vpop.f32.mrb[0].mxu0
    %v878 = vpop.f32.mrb[0].mxu0
    %v879 = vadd.f32 %v70, %v878
    %v880 = vpop.f32.mrb[0].mxu0
    %881 = vmatprep.mubr.bf16.mxu0 0
    %882 = vmatmul.mubr.bf16.gmra.mrb[0].mxu0 %v797
    %v883 = vpop.f32.mrb[0].mxu0
    %v884 = vadd.f32 %v71, %v883
    %v885 = vpop.f32.mrb[0].mxu0
    %v886 = vpop.f32.mrb[0].mxu0
    %v887 = vadd.f32 %v72, %v886
    %v888 = vpop.f32.mrb[0].mxu0
    %889 = vmatprep.mubr.bf16.mxu0 0
    %890 = vmatmul.mubr.bf16.gmra.mrb[0].mxu0 %v800
    %v891 = vpop.f32.mrb[0].mxu0
    %v892 = vadd.f32 %v73, %v891
    %v893 = vpop.f32.mrb[0].mxu0
    %v894 = vpop.f32.mrb[0].mxu0
    %v895 = vadd.f32 %v74, %v894
    %v896 = vpop.f32.mrb[0].mxu0
    %897 = vmatprep.mubr.bf16.mxu0 0
    %898 = vmatmul.mubr.bf16.gmra.mrb[0].mxu0 %v803
    %v899 = vpop.f32.mrb[0].mxu0
    %v900 = vadd.f32 %v75, %v899
    %v901 = vpop.f32.mrb[0].mxu0
    %v902 = vpop.f32.mrb[0].mxu0
    %v903 = vadd.f32 %v76, %v902
    %v904 = vpop.f32.mrb[0].mxu0
    %905 = vmatprep.mubr.bf16.mxu0 0
    %906 = vmatmul.mubr.bf16.gmra.mrb[0].mxu0 %v806
    %v907 = vpop.f32.mrb[0].mxu0
    %v908 = vadd.f32 %v77, %v907
    %v909 = vpop.f32.mrb[0].mxu0
    %v910 = vpop.f32.mrb[0].mxu0
    %v911 = vadd.f32 %v78, %v910
    %v912 = vpop.f32.mrb[0].mxu0
    %913 = vmatprep.mubr.bf16.mxu0 0
    %914 = vmatmul.mubr.bf16.gmra.mrb[0].mxu0 %v809
    %v915 = vpop.f32.mrb[0].mxu0
    %v916 = vadd.f32 %v79, %v915
    %v917 = vpop.f32.mrb[0].mxu0
    %v918 = vpop.f32.mrb[0].mxu0
    %v919 = vadd.f32 %v80, %v918
    %v920 = vpop.f32.mrb[0].mxu0
    %921 = vmatprep.mubr.bf16.mxu0 0
    %922 = vmatmul.mubr.bf16.gmra.mrb[0].mxu0 %v812
    %v923 = vpop.f32.mrb[0].mxu0
    %v924 = vadd.f32 %v81, %v923
    %v925 = vpop.f32.mrb[0].mxu0
    %v926 = vpop.f32.mrb[0].mxu0
    %v927 = vadd.f32 %v82, %v926
    %v928 = vpop.f32.mrb[0].mxu0
    %929 = vmatprep.mubr.bf16.mxu0 0
    %930 = vmatmul.mubr.bf16.gmra.mrb[0].mxu0 %v815
    %v931 = vpop.f32.mrb[0].mxu0
    %v932 = vadd.f32 %v83, %v931
    %v933 = vpop.f32.mrb[0].mxu0
    %v934 = vpop.f32.mrb[0].mxu0
    %v935 = vadd.f32 %v84, %v934
    %v936 = vpop.f32.mrb[0].mxu0
    %937 = vdwg.mxu0
    %938 = vmax.xlane.f32.xlu0 %v876
    %v939 = vpop.xlane.xlu0 %938
    %940 = vmax.xlane.f32.xlu0 %v879
    %v941 = vpop.xlane.xlu0 %940
    %942 = vmax.xlane.f32.xlu0 %v884
    %v943 = vpop.xlane.xlu0 %942
    %944 = vmax.xlane.f32.xlu0 %v887
    %v945 = vpop.xlane.xlu0 %944
    %946 = vmax.xlane.f32.xlu0 %v892
    %v947 = vpop.xlane.xlu0 %946
    %948 = vmax.xlane.f32.xlu0 %v895
    %v949 = vpop.xlane.xlu0 %948
    %950 = vmax.xlane.f32.xlu0 %v900
    %v951 = vpop.xlane.xlu0 %950
    %952 = vmax.xlane.f32.xlu0 %v903
    %v953 = vpop.xlane.xlu0 %952
    %954 = vmax.xlane.f32.xlu0 %v908
    %v955 = vpop.xlane.xlu0 %954
    %956 = vmax.xlane.f32.xlu0 %v911
    %v957 = vpop.xlane.xlu0 %956
    %958 = vmax.xlane.f32.xlu0 %v916
    %v959 = vpop.xlane.xlu0 %958
    %960 = vmax.xlane.f32.xlu0 %v919
    %v961 = vpop.xlane.xlu0 %960
    %962 = vmax.xlane.f32.xlu0 %v924
    %v963 = vpop.xlane.xlu0 %962
    %964 = vmax.xlane.f32.xlu0 %v927
    %v965 = vpop.xlane.xlu0 %964
    %966 = vmax.xlane.f32.xlu0 %v932
    %v967 = vpop.xlane.xlu0 %966
    %968 = vmax.xlane.f32.xlu0 %v935
    %v969 = vpop.xlane.xlu0 %968
    %v970 = vsub.f32 %v876, %v939
    %v971 = vsub.f32 %v879, %v941
    %v972 = vsub.f32 %v884, %v943
    %v973 = vsub.f32 %v887, %v945
    %v974 = vsub.f32 %v892, %v947
    %v975 = vsub.f32 %v895, %v949
    %v976 = vsub.f32 %v900, %v951
    %v977 = vsub.f32 %v903, %v953
    %v978 = vsub.f32 %v908, %v955
    %v979 = vsub.f32 %v911, %v957
    %v980 = vsub.f32 %v916, %v959
    %v981 = vsub.f32 %v919, %v961
    %v982 = vsub.f32 %v924, %v963
    %v983 = vsub.f32 %v927, %v965
    %v984 = vsub.f32 %v932, %v967
    %v985 = vsub.f32 %v935, %v969
    %v986 = vmul.f32 %v970, 1.442695
    %v987 = vpow.pop %v986
    %v988 = vmul.f32 %v971, 1.442695
    %v989 = vpow.pop %v988
    %v990 = vmul.f32 %v972, 1.442695
    %v991 = vpow.pop %v990
    %v992 = vmul.f32 %v973, 1.442695
    %v993 = vpow.pop %v992
    %v994 = vmul.f32 %v974, 1.442695
    %v995 = vpow.pop %v994
    %v996 = vmul.f32 %v975, 1.442695
    %v997 = vpow.pop %v996
    %v998 = vmul.f32 %v976, 1.442695
    %v999 = vpow.pop %v998
    %v1000 = vmul.f32 %v977, 1.442695
    %v1001 = vpow.pop %v1000
    %v1002 = vmul.f32 %v978, 1.442695
    %v1003 = vpow.pop %v1002
    %v1004 = vmul.f32 %v979, 1.442695
    %v1005 = vpow.pop %v1004
    %v1006 = vmul.f32 %v980, 1.442695
    %v1007 = vpow.pop %v1006
    %v1008 = vmul.f32 %v981, 1.442695
    %v1009 = vpow.pop %v1008
    %v1010 = vmul.f32 %v982, 1.442695
    %v1011 = vpow.pop %v1010
    %v1012 = vmul.f32 %v983, 1.442695
    %v1013 = vpow.pop %v1012
    %v1014 = vmul.f32 %v984, 1.442695
    %v1015 = vpow.pop %v1014
    %v1016 = vmul.f32 %v985, 1.442695
    %v1017 = vpow.pop %v1016
    %1018 = vadd.xlane.f32.xlu0 %v987
    %v1019 = vpop.xlane.xlu0 %1018
    %1020 = vadd.xlane.f32.xlu0 %v989
    %v1021 = vpop.xlane.xlu0 %1020
    %1022 = vadd.xlane.f32.xlu0 %v991
    %v1023 = vpop.xlane.xlu0 %1022
    %1024 = vadd.xlane.f32.xlu0 %v993
    %v1025 = vpop.xlane.xlu0 %1024
    %1026 = vadd.xlane.f32.xlu0 %v995
    %v1027 = vpop.xlane.xlu0 %1026
    %1028 = vadd.xlane.f32.xlu0 %v997
    %v1029 = vpop.xlane.xlu0 %1028
    %1030 = vadd.xlane.f32.xlu0 %v999
    %v1031 = vpop.xlane.xlu0 %1030
    %1032 = vadd.xlane.f32.xlu0 %v1001
    %v1033 = vpop.xlane.xlu0 %1032
    %1034 = vadd.xlane.f32.xlu0 %v1003
    %v1035 = vpop.xlane.xlu0 %1034
    %1036 = vadd.xlane.f32.xlu0 %v1005
    %v1037 = vpop.xlane.xlu0 %1036
    %1038 = vadd.xlane.f32.xlu0 %v1007
    %v1039 = vpop.xlane.xlu0 %1038
    %1040 = vadd.xlane.f32.xlu0 %v1009
    %v1041 = vpop.xlane.xlu0 %1040
    %1042 = vadd.xlane.f32.xlu0 %v1011
    %v1043 = vpop.xlane.xlu0 %1042
    %1044 = vadd.xlane.f32.xlu0 %v1013
    %v1045 = vpop.xlane.xlu0 %1044
    %1046 = vadd.xlane.f32.xlu0 %v1015
    %v1047 = vpop.xlane.xlu0 %1046
    %1048 = vadd.xlane.f32.xlu0 %v1017
    %v1049 = vpop.xlane.xlu0 %1048
    %v1050 = vrcp.pop %v1019
    %v1051 = vmul.f32 %v987, %v1050
    %v1052 = vrcp.pop %v1021
    %v1053 = vmul.f32 %v989, %v1052
    %v1054 = vrcp.pop %v1023
    %v1055 = vmul.f32 %v991, %v1054
    %v1056 = vrcp.pop %v1025
    %v1057 = vmul.f32 %v993, %v1056
    %v1058 = vrcp.pop %v1027
    %v1059 = vmul.f32 %v995, %v1058
    %v1060 = vrcp.pop %v1029
    %v1061 = vmul.f32 %v997, %v1060
    %v1062 = vrcp.pop %v1031
    %v1063 = vmul.f32 %v999, %v1062
    %v1064 = vrcp.pop %v1033
    %v1065 = vmul.f32 %v1001, %v1064
    %v1066 = vrcp.pop %v1035
    %v1067 = vmul.f32 %v1003, %v1066
    %v1068 = vrcp.pop %v1037
    %v1069 = vmul.f32 %v1005, %v1068
    %v1070 = vrcp.pop %v1039
    %v1071 = vmul.f32 %v1007, %v1070
    %v1072 = vrcp.pop %v1041
    %v1073 = vmul.f32 %v1009, %v1072
    %v1074 = vrcp.pop %v1043
    %v1075 = vmul.f32 %v1011, %v1074
    %v1076 = vrcp.pop %v1045
    %v1077 = vmul.f32 %v1013, %v1076
    %v1078 = vrcp.pop %v1047
    %v1079 = vmul.f32 %v1015, %v1078
    %v1080 = vrcp.pop %v1049
    %v1081 = vmul.f32 %v1017, %v1080
    %v1082 = vld [vmem:[%s2] sm:$0x1]
    %v1084 = vlaneseq
    %v1085 = vshrl.u32 %v1084, 7
    %v1086 = vsub.s32 0, %v1085
    %v1087 = vrot.slane %v1082, %v1086
    %1088 = vrot.lane.b32.xlu0 %v1087, 64
    %v1089 = vpop.permute.xlu0 %1088
    %v1091 = vmul.f32 %v674, %v1089
    %v1092 = vmul.f32 %v677, %v1089
    %v1093 = vmul.f32 %v682, %v1089
    %v1094 = vmul.f32 %v685, %v1089
    %v1095 = vmul.f32 %v690, %v1089
    %v1096 = vmul.f32 %v693, %v1089
    %v1097 = vmul.f32 %v698, %v1089
    %v1098 = vmul.f32 %v701, %v1089
    %v1099 = vmul.f32 %v706, %v1089
    %v1100 = vmul.f32 %v709, %v1089
    %v1101 = vmul.f32 %v714, %v1089
    %v1102 = vmul.f32 %v717, %v1089
    %v1103 = vmul.f32 %v722, %v1089
    %v1104 = vmul.f32 %v725, %v1089
    %v1105 = vmul.f32 %v730, %v1089
    %v1106 = vmul.f32 %v733, %v1089
    %v1107 = vpack.c.bf16 %v1092, %v1091
    %v1108 = vpack.c.bf16 %v1094, %v1093
    %v1109 = vpack.c.bf16 %v1096, %v1095
    %v1110 = vpack.c.bf16 %v1098, %v1097
    %v1111 = vpack.c.bf16 %v1100, %v1099
    %v1112 = vpack.c.bf16 %v1102, %v1101
    %v1113 = vpack.c.bf16 %v1104, %v1103
    %v1114 = vpack.c.bf16 %v1106, %v1105
    %v1115 = vpack.c.bf16 %v1053, %v1051
    %v1116 = vpack.c.bf16 %v1057, %v1055
    %v1117 = vpack.c.bf16 %v1061, %v1059
    %v1118 = vpack.c.bf16 %v1065, %v1063
    %v1119 = vpack.c.bf16 %v1069, %v1067
    %v1120 = vpack.c.bf16 %v1073, %v1071
    %v1121 = vpack.c.bf16 %v1077, %v1075
    %v1122 = vpack.c.bf16 %v1081, %v1079
    %1131 = vrot.lane.b32.xlu0 %v752, 120
    %v1132 = vpop.permute.xlu0 %1131
    %1133 = vrot.lane.b32.xlu0 %v753, 120
    %v1134 = vpop.permute.xlu0 %1133
    %1135 = vrot.lane.b32.xlu0 %v754, 120
    %v1136 = vpop.permute.xlu0 %1135
    %1137 = vrot.lane.b32.xlu0 %v755, 120
    %v1138 = vpop.permute.xlu0 %1137
    %1139 = vrot.lane.b32.xlu0 %v756, 120
    %v1140 = vpop.permute.xlu0 %1139
    %1141 = vrot.lane.b32.xlu0 %v757, 120
    %v1142 = vpop.permute.xlu0 %1141
    %1143 = vrot.lane.b32.xlu0 %v758, 120
    %v1144 = vpop.permute.xlu0 %1143
    %1145 = vrot.lane.b32.xlu0 %v759, 120
    %v1146 = vpop.permute.xlu0 %1145
    %1147 = vrot.lane.b32.xlu0 %v760, 88
    %v1148 = vpop.permute.xlu0 %1147
    %1149 = vrot.lane.b32.xlu0 %v761, 88
    %v1150 = vpop.permute.xlu0 %1149
    %1151 = vrot.lane.b32.xlu0 %v762, 88
    %v1152 = vpop.permute.xlu0 %1151
    %1153 = vrot.lane.b32.xlu0 %v763, 88
    %v1154 = vpop.permute.xlu0 %1153
    %1155 = vrot.lane.b32.xlu0 %v764, 88
    %v1156 = vpop.permute.xlu0 %1155
    %1157 = vrot.lane.b32.xlu0 %v765, 88
    %v1158 = vpop.permute.xlu0 %1157
    %1159 = vrot.lane.b32.xlu0 %v766, 88
    %v1160 = vpop.permute.xlu0 %1159
    %1161 = vrot.lane.b32.xlu0 %v767, 88
    %v1162 = vpop.permute.xlu0 %1161
    %v1164 = vsel %vm792, %v1132, 0
    %v1167 = vsel %vm792, %v1134, 0
    %v1170 = vsel %vm792, %v1136, 0
    %v1173 = vsel %vm792, %v1138, 0
    %v1176 = vsel %vm792, %v1140, 0
    %v1179 = vsel %vm792, %v1142, 0
    %v1182 = vsel %vm792, %v1144, 0
    %v1185 = vsel %vm792, %v1146, 0
    %v1188 = vsel %vm792, %v1148, 0
    %v1191 = vsel %vm792, %v1150, 0
    %v1194 = vsel %vm792, %v1152, 0
    %v1197 = vsel %vm792, %v1154, 0
    %v1200 = vsel %vm792, %v1156, 0
    %v1203 = vsel %vm792, %v1158, 0
    %v1206 = vsel %vm792, %v1160, 0
    %v1209 = vsel %vm792, %v1162, 0
    %1211 = vmatprep.subr.bf16.mxu0 0
    %1212 = vmatpush1.bf16.xpose.msra.mxu0 %v1188
    %1213 = vmatprep.subr.bf16.mxu0 0
    %1214 = vmatpush1.bf16.xpose.msra.mxu0 %v1191
    %1215 = vmatprep.subr.bf16.mxu0 0
    %1216 = vmatpush1.bf16.xpose.msra.mxu0 %v1194
    %1217 = vmatprep.subr.bf16.mxu0 0
    %1218 = vmatpush1.bf16.xpose.msra.mxu0 %v1197
    %1219 = vmatprep.subr.bf16.mxu0 0
    %1220 = vmatpush1.bf16.xpose.msra.mxu0 %v1200
    %1221 = vmatprep.subr.bf16.mxu0 0
    %1222 = vmatpush1.bf16.xpose.msra.mxu0 %v1203
    %1223 = vmatprep.subr.bf16.mxu0 0
    %1224 = vmatpush1.bf16.xpose.msra.mxu0 %v1206
    %1225 = vmatprep.subr.bf16.mxu0 0
    %1226 = vmatpush1.bf16.xpose.msra.mxu0 %v1209
    %1227 = vmatprep.subr.bf16.mxu0 0
    %1228 = vmatpush1.bf16.xpose.msra.mxu0 0
    %1229 = vmatprep.subr.bf16.mxu0 0
    %1230 = vmatpush1.bf16.xpose.msra.mxu0 0
    %1231 = vmatprep.subr.bf16.mxu0 0
    %1232 = vmatpush1.bf16.xpose.msra.mxu0 0
    %1233 = vmatprep.subr.bf16.mxu0 0
    %1234 = vmatpush1.bf16.xpose.msra.mxu0 0
    %1235 = vmatprep.subr.bf16.mxu0 0
    %1236 = vmatpush1.bf16.xpose.msra.mxu0 0
    %1237 = vmatprep.subr.bf16.mxu0 0
    %1238 = vmatpush1.bf16.xpose.msra.mxu0 0
    %1239 = vmatprep.subr.bf16.mxu0 0
    %1240 = vmatpush1.bf16.xpose.msra.mxu0 0
    %1241 = vmatprep.subr.bf16.mxu0 0
    %1242 = vmatpush1.bf16.xpose.msra.mxu0 0
    %1243 = vmatprep.mubr.bf16.mxu0 0
    %1244 = vmatmul.mubr.bf16.gmra.mrb[0].mxu0 %v1164
    %v1245 = vpop.f32.mrb[0].mxu0
    %v1246 = vadd.f32 %v69, %v1245
    %v1247 = vpop.f32.mrb[0].mxu0
    %v1248 = vpop.f32.mrb[0].mxu0
    %v1249 = vadd.f32 %v70, %v1248
    %v1250 = vpop.f32.mrb[0].mxu0
    %1251 = vmatprep.mubr.bf16.mxu0 0
    %1252 = vmatmul.mubr.bf16.gmra.mrb[0].mxu0 %v1167
    %v1253 = vpop.f32.mrb[0].mxu0
    %v1254 = vadd.f32 %v71, %v1253
    %v1255 = vpop.f32.mrb[0].mxu0
    %v1256 = vpop.f32.mrb[0].mxu0
    %v1257 = vadd.f32 %v72, %v1256
    %v1258 = vpop.f32.mrb[0].mxu0
    %1259 = vmatprep.mubr.bf16.mxu0 0
    %1260 = vmatmul.mubr.bf16.gmra.mrb[0].mxu0 %v1170
    %v1261 = vpop.f32.mrb[0].mxu0
    %v1262 = vadd.f32 %v73, %v1261
    %v1263 = vpop.f32.mrb[0].mxu0
    %v1264 = vpop.f32.mrb[0].mxu0
    %v1265 = vadd.f32 %v74, %v1264
    %v1266 = vpop.f32.mrb[0].mxu0
    %1267 = vmatprep.mubr.bf16.mxu0 0
    %1268 = vmatmul.mubr.bf16.gmra.mrb[0].mxu0 %v1173
    %v1269 = vpop.f32.mrb[0].mxu0
    %v1270 = vadd.f32 %v75, %v1269
    %v1271 = vpop.f32.mrb[0].mxu0
    %v1272 = vpop.f32.mrb[0].mxu0
    %v1273 = vadd.f32 %v76, %v1272
    %v1274 = vpop.f32.mrb[0].mxu0
    %1275 = vmatprep.mubr.bf16.mxu0 0
    %1276 = vmatmul.mubr.bf16.gmra.mrb[0].mxu0 %v1176
    %v1277 = vpop.f32.mrb[0].mxu0
    %v1278 = vadd.f32 %v77, %v1277
    %v1279 = vpop.f32.mrb[0].mxu0
    %v1280 = vpop.f32.mrb[0].mxu0
    %v1281 = vadd.f32 %v78, %v1280
    %v1282 = vpop.f32.mrb[0].mxu0
    %1283 = vmatprep.mubr.bf16.mxu0 0
    %1284 = vmatmul.mubr.bf16.gmra.mrb[0].mxu0 %v1179
    %v1285 = vpop.f32.mrb[0].mxu0
    %v1286 = vadd.f32 %v79, %v1285
    %v1287 = vpop.f32.mrb[0].mxu0
    %v1288 = vpop.f32.mrb[0].mxu0
    %v1289 = vadd.f32 %v80, %v1288
    %v1290 = vpop.f32.mrb[0].mxu0
    %1291 = vmatprep.mubr.bf16.mxu0 0
    %1292 = vmatmul.mubr.bf16.gmra.mrb[0].mxu0 %v1182
    %v1293 = vpop.f32.mrb[0].mxu0
    %v1294 = vadd.f32 %v81, %v1293
    %v1295 = vpop.f32.mrb[0].mxu0
    %v1296 = vpop.f32.mrb[0].mxu0
    %v1297 = vadd.f32 %v82, %v1296
    %v1298 = vpop.f32.mrb[0].mxu0
    %1299 = vmatprep.mubr.bf16.mxu0 0
    %1300 = vmatmul.mubr.bf16.gmra.mrb[0].mxu0 %v1185
    %v1301 = vpop.f32.mrb[0].mxu0
    %v1302 = vadd.f32 %v83, %v1301
    %v1303 = vpop.f32.mrb[0].mxu0
    %v1304 = vpop.f32.mrb[0].mxu0
    %v1305 = vadd.f32 %v84, %v1304
    %v1306 = vpop.f32.mrb[0].mxu0
    %1307 = vdwg.mxu0
    %1308 = vmax.xlane.f32.xlu0 %v1246
    %v1309 = vpop.xlane.xlu0 %1308
    %1310 = vmax.xlane.f32.xlu0 %v1249
    %v1311 = vpop.xlane.xlu0 %1310
    %1312 = vmax.xlane.f32.xlu0 %v1254
    %v1313 = vpop.xlane.xlu0 %1312
    %1314 = vmax.xlane.f32.xlu0 %v1257
    %v1315 = vpop.xlane.xlu0 %1314
    %1316 = vmax.xlane.f32.xlu0 %v1262
    %v1317 = vpop.xlane.xlu0 %1316
    %1318 = vmax.xlane.f32.xlu0 %v1265
    %v1319 = vpop.xlane.xlu0 %1318
    %1320 = vmax.xlane.f32.xlu0 %v1270
    %v1321 = vpop.xlane.xlu0 %1320
    %1322 = vmax.xlane.f32.xlu0 %v1273
    %v1323 = vpop.xlane.xlu0 %1322
    %1324 = vmax.xlane.f32.xlu0 %v1278
    %v1325 = vpop.xlane.xlu0 %1324
    %1326 = vmax.xlane.f32.xlu0 %v1281
    %v1327 = vpop.xlane.xlu0 %1326
    %1328 = vmax.xlane.f32.xlu0 %v1286
    %v1329 = vpop.xlane.xlu0 %1328
    %1330 = vmax.xlane.f32.xlu0 %v1289
    %v1331 = vpop.xlane.xlu0 %1330
    %1332 = vmax.xlane.f32.xlu0 %v1294
    %v1333 = vpop.xlane.xlu0 %1332
    %1334 = vmax.xlane.f32.xlu0 %v1297
    %v1335 = vpop.xlane.xlu0 %1334
    %1336 = vmax.xlane.f32.xlu0 %v1302
    %v1337 = vpop.xlane.xlu0 %1336
    %1338 = vmax.xlane.f32.xlu0 %v1305
    %v1339 = vpop.xlane.xlu0 %1338
    %v1340 = vsub.f32 %v1246, %v1309
    %v1341 = vsub.f32 %v1249, %v1311
    %v1342 = vsub.f32 %v1254, %v1313
    %v1343 = vsub.f32 %v1257, %v1315
    %v1344 = vsub.f32 %v1262, %v1317
    %v1345 = vsub.f32 %v1265, %v1319
    %v1346 = vsub.f32 %v1270, %v1321
    %v1347 = vsub.f32 %v1273, %v1323
    %v1348 = vsub.f32 %v1278, %v1325
    %v1349 = vsub.f32 %v1281, %v1327
    %v1350 = vsub.f32 %v1286, %v1329
    %v1351 = vsub.f32 %v1289, %v1331
    %v1352 = vsub.f32 %v1294, %v1333
    %v1353 = vsub.f32 %v1297, %v1335
    %v1354 = vsub.f32 %v1302, %v1337
    %v1355 = vsub.f32 %v1305, %v1339
    %v1356 = vmul.f32 %v1340, 1.442695
    %v1357 = vpow.pop %v1356
    %v1358 = vmul.f32 %v1341, 1.442695
    %v1359 = vpow.pop %v1358
    %v1360 = vmul.f32 %v1342, 1.442695
    %v1361 = vpow.pop %v1360
    %v1362 = vmul.f32 %v1343, 1.442695
    %v1363 = vpow.pop %v1362
    %v1364 = vmul.f32 %v1344, 1.442695
    %v1365 = vpow.pop %v1364
    %v1366 = vmul.f32 %v1345, 1.442695
    %v1367 = vpow.pop %v1366
    %v1368 = vmul.f32 %v1346, 1.442695
    %v1369 = vpow.pop %v1368
    %v1370 = vmul.f32 %v1347, 1.442695
    %v1371 = vpow.pop %v1370
    %v1372 = vmul.f32 %v1348, 1.442695
    %v1373 = vpow.pop %v1372
    %v1374 = vmul.f32 %v1349, 1.442695
    %v1375 = vpow.pop %v1374
    %v1376 = vmul.f32 %v1350, 1.442695
    %v1377 = vpow.pop %v1376
    %v1378 = vmul.f32 %v1351, 1.442695
    %v1379 = vpow.pop %v1378
    %v1380 = vmul.f32 %v1352, 1.442695
    %v1381 = vpow.pop %v1380
    %v1382 = vmul.f32 %v1353, 1.442695
    %v1383 = vpow.pop %v1382
    %v1384 = vmul.f32 %v1354, 1.442695
    %v1385 = vpow.pop %v1384
    %v1386 = vmul.f32 %v1355, 1.442695
    %v1387 = vpow.pop %v1386
    %1388 = vadd.xlane.f32.xlu0 %v1357
    %v1389 = vpop.xlane.xlu0 %1388
    %1390 = vadd.xlane.f32.xlu0 %v1359
    %v1391 = vpop.xlane.xlu0 %1390
    %1392 = vadd.xlane.f32.xlu0 %v1361
    %v1393 = vpop.xlane.xlu0 %1392
    %1394 = vadd.xlane.f32.xlu0 %v1363
    %v1395 = vpop.xlane.xlu0 %1394
    %1396 = vadd.xlane.f32.xlu0 %v1365
    %v1397 = vpop.xlane.xlu0 %1396
    %1398 = vadd.xlane.f32.xlu0 %v1367
    %v1399 = vpop.xlane.xlu0 %1398
    %1400 = vadd.xlane.f32.xlu0 %v1369
    %v1401 = vpop.xlane.xlu0 %1400
    %1402 = vadd.xlane.f32.xlu0 %v1371
    %v1403 = vpop.xlane.xlu0 %1402
    %1404 = vadd.xlane.f32.xlu0 %v1373
    %v1405 = vpop.xlane.xlu0 %1404
    %1406 = vadd.xlane.f32.xlu0 %v1375
    %v1407 = vpop.xlane.xlu0 %1406
    %1408 = vadd.xlane.f32.xlu0 %v1377
    %v1409 = vpop.xlane.xlu0 %1408
    %1410 = vadd.xlane.f32.xlu0 %v1379
    %v1411 = vpop.xlane.xlu0 %1410
    %1412 = vadd.xlane.f32.xlu0 %v1381
    %v1413 = vpop.xlane.xlu0 %1412
    %1414 = vadd.xlane.f32.xlu0 %v1383
    %v1415 = vpop.xlane.xlu0 %1414
    %1416 = vadd.xlane.f32.xlu0 %v1385
    %v1417 = vpop.xlane.xlu0 %1416
    %1418 = vadd.xlane.f32.xlu0 %v1387
    %v1419 = vpop.xlane.xlu0 %1418
    %v1420 = vrcp.pop %v1389
    %v1421 = vmul.f32 %v1357, %v1420
    %v1422 = vrcp.pop %v1391
    %v1423 = vmul.f32 %v1359, %v1422
    %v1424 = vrcp.pop %v1393
    %v1425 = vmul.f32 %v1361, %v1424
    %v1426 = vrcp.pop %v1395
    %v1427 = vmul.f32 %v1363, %v1426
    %v1428 = vrcp.pop %v1397
    %v1429 = vmul.f32 %v1365, %v1428
    %v1430 = vrcp.pop %v1399
    %v1431 = vmul.f32 %v1367, %v1430
    %v1432 = vrcp.pop %v1401
    %v1433 = vmul.f32 %v1369, %v1432
    %v1434 = vrcp.pop %v1403
    %v1435 = vmul.f32 %v1371, %v1434
    %v1436 = vrcp.pop %v1405
    %v1437 = vmul.f32 %v1373, %v1436
    %v1438 = vrcp.pop %v1407
    %v1439 = vmul.f32 %v1375, %v1438
    %v1440 = vrcp.pop %v1409
    %v1441 = vmul.f32 %v1377, %v1440
    %v1442 = vrcp.pop %v1411
    %v1443 = vmul.f32 %v1379, %v1442
    %v1444 = vrcp.pop %v1413
    %v1445 = vmul.f32 %v1381, %v1444
    %v1446 = vrcp.pop %v1415
    %v1447 = vmul.f32 %v1383, %v1446
    %v1448 = vrcp.pop %v1417
    %v1449 = vmul.f32 %v1385, %v1448
    %v1450 = vrcp.pop %v1419
    %v1451 = vmul.f32 %v1387, %v1450
    %s1452 = scalar_lea.vmem %s2, 1
    %v1453 = vld [vmem:[%s1452] sm:$0x1]
    %v1455 = vlaneseq
    %v1456 = vshrl.u32 %v1455, 7
    %v1457 = vsub.s32 0, %v1456
    %v1458 = vrot.slane %v1453, %v1457
    %1459 = vrot.lane.b32.xlu0 %v1458, 64
    %v1460 = vpop.permute.xlu0 %1459
    %v1462 = vmul.f32 %v674, %v1460
    %v1463 = vmul.f32 %v677, %v1460
    %v1464 = vmul.f32 %v682, %v1460
    %v1465 = vmul.f32 %v685, %v1460
    %v1466 = vmul.f32 %v690, %v1460
    %v1467 = vmul.f32 %v693, %v1460
    %v1468 = vmul.f32 %v698, %v1460
    %v1469 = vmul.f32 %v701, %v1460
    %v1470 = vmul.f32 %v706, %v1460
    %v1471 = vmul.f32 %v709, %v1460
    %v1472 = vmul.f32 %v714, %v1460
    %v1473 = vmul.f32 %v717, %v1460
    %v1474 = vmul.f32 %v722, %v1460
    %v1475 = vmul.f32 %v725, %v1460
    %v1476 = vmul.f32 %v730, %v1460
    %v1477 = vmul.f32 %v733, %v1460
    %v1478 = vpack.c.bf16 %v1463, %v1462
    %v1479 = vpack.c.bf16 %v1465, %v1464
    %v1480 = vpack.c.bf16 %v1467, %v1466
    %v1481 = vpack.c.bf16 %v1469, %v1468
    %v1482 = vpack.c.bf16 %v1471, %v1470
    %v1483 = vpack.c.bf16 %v1473, %v1472
    %v1484 = vpack.c.bf16 %v1475, %v1474
    %v1485 = vpack.c.bf16 %v1477, %v1476
    %v1486 = vpack.c.bf16 %v1423, %v1421
    %v1487 = vpack.c.bf16 %v1427, %v1425
    %v1488 = vpack.c.bf16 %v1431, %v1429
    %v1489 = vpack.c.bf16 %v1435, %v1433
    %v1490 = vpack.c.bf16 %v1439, %v1437
    %v1491 = vpack.c.bf16 %v1443, %v1441
    %v1492 = vpack.c.bf16 %v1447, %v1445
    %v1493 = vpack.c.bf16 %v1451, %v1449
    %1502 = vrot.lane.b32.xlu0 %v1478, 64
    %v1503 = vpop.permute.xlu0 %1502
    %1504 = vrot.lane.b32.xlu0 %v1479, 64
    %v1505 = vpop.permute.xlu0 %1504
    %1506 = vrot.lane.b32.xlu0 %v1480, 64
    %v1507 = vpop.permute.xlu0 %1506
    %1508 = vrot.lane.b32.xlu0 %v1481, 64
    %v1509 = vpop.permute.xlu0 %1508
    %1510 = vrot.lane.b32.xlu0 %v1482, 64
    %v1511 = vpop.permute.xlu0 %1510
    %1512 = vrot.lane.b32.xlu0 %v1483, 64
    %v1513 = vpop.permute.xlu0 %1512
    %1514 = vrot.lane.b32.xlu0 %v1484, 64
    %v1515 = vpop.permute.xlu0 %1514
    %1516 = vrot.lane.b32.xlu0 %v1485, 64
    %v1517 = vpop.permute.xlu0 %1516
    %1526 = vmatprep.subr.bf16.mxu0 0
    %1527 = vmatpush1.bf16.msra.mxu0 %v1503
    %1528 = vmatprep.subr.bf16.mxu0 0
    %1529 = vmatpush1.bf16.msra.mxu0 %v1505
    %1530 = vmatprep.subr.bf16.mxu0 0
    %1531 = vmatpush1.bf16.msra.mxu0 %v1507
    %1532 = vmatprep.subr.bf16.mxu0 0
    %1533 = vmatpush1.bf16.msra.mxu0 %v1509
    %1534 = vmatprep.subr.bf16.mxu0 0
    %1535 = vmatpush1.bf16.msra.mxu0 %v1511
    %1536 = vmatprep.subr.bf16.mxu0 0
    %1537 = vmatpush1.bf16.msra.mxu0 %v1513
    %1538 = vmatprep.subr.bf16.mxu0 0
    %1539 = vmatpush1.bf16.msra.mxu0 %v1515
    %1540 = vmatprep.subr.bf16.mxu0 0
    %1541 = vmatpush1.bf16.msra.mxu0 %v1517
    %1542 = vmatprep.subr.bf16.mxu0 0
    %1543 = vmatpush1.bf16.msra.mxu0 0
    %1544 = vmatprep.subr.bf16.mxu0 0
    %1545 = vmatpush1.bf16.msra.mxu0 0
    %1546 = vmatprep.subr.bf16.mxu0 0
    %1547 = vmatpush1.bf16.msra.mxu0 0
    %1548 = vmatprep.subr.bf16.mxu0 0
    %1549 = vmatpush1.bf16.msra.mxu0 0
    %1550 = vmatprep.subr.bf16.mxu0 0
    %1551 = vmatpush1.bf16.msra.mxu0 0
    %1552 = vmatprep.subr.bf16.mxu0 0
    %1553 = vmatpush1.bf16.msra.mxu0 0
    %1554 = vmatprep.subr.bf16.mxu0 0
    %1555 = vmatpush1.bf16.msra.mxu0 0
    %1556 = vmatprep.subr.bf16.mxu0 0
    %1557 = vmatpush1.bf16.msra.mxu0 0
    %1558 = vmatprep.mubr.bf16.mxu0 0
    %1559 = vmatmul.mubr.bf16.gmra.mrb[0].mxu0 %v1486
    %v1560 = vpop.f32.mrb[0].mxu0
    %v1561 = vadd.f32 0.0, %v1560
    %v1562 = vpop.f32.mrb[0].mxu0
    %v1563 = vpop.f32.mrb[0].mxu0
    %v1564 = vadd.f32 0.0, %v1563
    %v1565 = vpop.f32.mrb[0].mxu0
    %1566 = vmatprep.mubr.bf16.mxu0 0
    %1567 = vmatmul.mubr.bf16.gmra.mrb[0].mxu0 %v1487
    %v1568 = vpop.f32.mrb[0].mxu0
    %v1569 = vadd.f32 0.0, %v1568
    %v1570 = vpop.f32.mrb[0].mxu0
    %v1571 = vpop.f32.mrb[0].mxu0
    %v1572 = vadd.f32 0.0, %v1571
    %v1573 = vpop.f32.mrb[0].mxu0
    %1574 = vmatprep.mubr.bf16.mxu0 0
    %1575 = vmatmul.mubr.bf16.gmra.mrb[0].mxu0 %v1488
    %v1576 = vpop.f32.mrb[0].mxu0
    %v1577 = vadd.f32 0.0, %v1576
    %v1578 = vpop.f32.mrb[0].mxu0
    %v1579 = vpop.f32.mrb[0].mxu0
    %v1580 = vadd.f32 0.0, %v1579
    %v1581 = vpop.f32.mrb[0].mxu0
    %1582 = vmatprep.mubr.bf16.mxu0 0
    %1583 = vmatmul.mubr.bf16.gmra.mrb[0].mxu0 %v1489
    %v1584 = vpop.f32.mrb[0].mxu0
    %v1585 = vadd.f32 0.0, %v1584
    %v1586 = vpop.f32.mrb[0].mxu0
    %v1587 = vpop.f32.mrb[0].mxu0
    %v1588 = vadd.f32 0.0, %v1587
    %v1589 = vpop.f32.mrb[0].mxu0
    %1590 = vmatprep.mubr.bf16.mxu0 0
    %1591 = vmatmul.mubr.bf16.gmra.mrb[0].mxu0 %v1490
    %v1592 = vpop.f32.mrb[0].mxu0
    %v1593 = vadd.f32 0.0, %v1592
    %v1594 = vpop.f32.mrb[0].mxu0
    %v1595 = vpop.f32.mrb[0].mxu0
    %v1596 = vadd.f32 0.0, %v1595
    %v1597 = vpop.f32.mrb[0].mxu0
    %1598 = vmatprep.mubr.bf16.mxu0 0
    %1599 = vmatmul.mubr.bf16.gmra.mrb[0].mxu0 %v1491
    %v1600 = vpop.f32.mrb[0].mxu0
    %v1601 = vadd.f32 0.0, %v1600
    %v1602 = vpop.f32.mrb[0].mxu0
    %v1603 = vpop.f32.mrb[0].mxu0
    %v1604 = vadd.f32 0.0, %v1603
    %v1605 = vpop.f32.mrb[0].mxu0
    %1606 = vmatprep.mubr.bf16.mxu0 0
    %1607 = vmatmul.mubr.bf16.gmra.mrb[0].mxu0 %v1492
    %v1608 = vpop.f32.mrb[0].mxu0
    %v1609 = vadd.f32 0.0, %v1608
    %v1610 = vpop.f32.mrb[0].mxu0
    %v1611 = vpop.f32.mrb[0].mxu0
    %v1612 = vadd.f32 0.0, %v1611
    %v1613 = vpop.f32.mrb[0].mxu0
    %1614 = vmatprep.mubr.bf16.mxu0 0
    %1615 = vmatmul.mubr.bf16.gmra.mrb[0].mxu0 %v1493
    %v1616 = vpop.f32.mrb[0].mxu0
    %v1617 = vadd.f32 0.0, %v1616
    %v1618 = vpop.f32.mrb[0].mxu0
    %v1619 = vpop.f32.mrb[0].mxu0
    %v1620 = vadd.f32 0.0, %v1619
    %v1621 = vpop.f32.mrb[0].mxu0
    %1622 = vdwg.mxu0
    %1631 = vrot.lane.b32.xlu0 %v1107, 64
    %v1632 = vpop.permute.xlu0 %1631
    %1633 = vrot.lane.b32.xlu0 %v1108, 64
    %v1634 = vpop.permute.xlu0 %1633
    %1635 = vrot.lane.b32.xlu0 %v1109, 64
    %v1636 = vpop.permute.xlu0 %1635
    %1637 = vrot.lane.b32.xlu0 %v1110, 64
    %v1638 = vpop.permute.xlu0 %1637
    %1639 = vrot.lane.b32.xlu0 %v1111, 64
    %v1640 = vpop.permute.xlu0 %1639
    %1641 = vrot.lane.b32.xlu0 %v1112, 64
    %v1642 = vpop.permute.xlu0 %1641
    %1643 = vrot.lane.b32.xlu0 %v1113, 64
    %v1644 = vpop.permute.xlu0 %1643
    %1645 = vrot.lane.b32.xlu0 %v1114, 64
    %v1646 = vpop.permute.xlu0 %1645
    %1655 = vmatprep.subr.bf16.mxu0 0
    %1656 = vmatpush1.bf16.msra.mxu0 %v1632
    %1657 = vmatprep.subr.bf16.mxu0 0
    %1658 = vmatpush1.bf16.msra.mxu0 %v1634
    %1659 = vmatprep.subr.bf16.mxu0 0
    %1660 = vmatpush1.bf16.msra.mxu0 %v1636
    %1661 = vmatprep.subr.bf16.mxu0 0
    %1662 = vmatpush1.bf16.msra.mxu0 %v1638
    %1663 = vmatprep.subr.bf16.mxu0 0
    %1664 = vmatpush1.bf16.msra.mxu0 %v1640
    %1665 = vmatprep.subr.bf16.mxu0 0
    %1666 = vmatpush1.bf16.msra.mxu0 %v1642
    %1667 = vmatprep.subr.bf16.mxu0 0
    %1668 = vmatpush1.bf16.msra.mxu0 %v1644
    %1669 = vmatprep.subr.bf16.mxu0 0
    %1670 = vmatpush1.bf16.msra.mxu0 %v1646
    %1671 = vmatprep.subr.bf16.mxu0 0
    %1672 = vmatpush1.bf16.msra.mxu0 0
    %1673 = vmatprep.subr.bf16.mxu0 0
    %1674 = vmatpush1.bf16.msra.mxu0 0
    %1675 = vmatprep.subr.bf16.mxu0 0
    %1676 = vmatpush1.bf16.msra.mxu0 0
    %1677 = vmatprep.subr.bf16.mxu0 0
    %1678 = vmatpush1.bf16.msra.mxu0 0
    %1679 = vmatprep.subr.bf16.mxu0 0
    %1680 = vmatpush1.bf16.msra.mxu0 0
    %1681 = vmatprep.subr.bf16.mxu0 0
    %1682 = vmatpush1.bf16.msra.mxu0 0
    %1683 = vmatprep.subr.bf16.mxu0 0
    %1684 = vmatpush1.bf16.msra.mxu0 0
    %1685 = vmatprep.subr.bf16.mxu0 0
    %1686 = vmatpush1.bf16.msra.mxu0 0
    %1687 = vmatprep.mubr.bf16.mxu0 0
    %1688 = vmatmul.mubr.bf16.gmra.mrb[0].mxu0 %v1115
    %v1689 = vpop.f32.mrb[0].mxu0
    %v1690 = vadd.f32 %v1561, %v1689
    %v1691 = vpop.f32.mrb[0].mxu0
    %v1692 = vpop.f32.mrb[0].mxu0
    %v1693 = vadd.f32 %v1564, %v1692
    %v1694 = vpop.f32.mrb[0].mxu0
    %1695 = vmatprep.mubr.bf16.mxu0 0
    %1696 = vmatmul.mubr.bf16.gmra.mrb[0].mxu0 %v1116
    %v1697 = vpop.f32.mrb[0].mxu0
    %v1698 = vadd.f32 %v1569, %v1697
    %v1699 = vpop.f32.mrb[0].mxu0
    %v1700 = vpop.f32.mrb[0].mxu0
    %v1701 = vadd.f32 %v1572, %v1700
    %v1702 = vpop.f32.mrb[0].mxu0
    %1703 = vmatprep.mubr.bf16.mxu0 0
    %1704 = vmatmul.mubr.bf16.gmra.mrb[0].mxu0 %v1117
    %v1705 = vpop.f32.mrb[0].mxu0
    %v1706 = vadd.f32 %v1577, %v1705
    %v1707 = vpop.f32.mrb[0].mxu0
    %v1708 = vpop.f32.mrb[0].mxu0
    %v1709 = vadd.f32 %v1580, %v1708
    %v1710 = vpop.f32.mrb[0].mxu0
    %1711 = vmatprep.mubr.bf16.mxu0 0
    %1712 = vmatmul.mubr.bf16.gmra.mrb[0].mxu0 %v1118
    %v1713 = vpop.f32.mrb[0].mxu0
    %v1714 = vadd.f32 %v1585, %v1713
    %v1715 = vpop.f32.mrb[0].mxu0
    %v1716 = vpop.f32.mrb[0].mxu0
    %v1717 = vadd.f32 %v1588, %v1716
    %v1718 = vpop.f32.mrb[0].mxu0
    %1719 = vmatprep.mubr.bf16.mxu0 0
    %1720 = vmatmul.mubr.bf16.gmra.mrb[0].mxu0 %v1119
    %v1721 = vpop.f32.mrb[0].mxu0
    %v1722 = vadd.f32 %v1593, %v1721
    %v1723 = vpop.f32.mrb[0].mxu0
    %v1724 = vpop.f32.mrb[0].mxu0
    %v1725 = vadd.f32 %v1596, %v1724
    %v1726 = vpop.f32.mrb[0].mxu0
    %1727 = vmatprep.mubr.bf16.mxu0 0
    %1728 = vmatmul.mubr.bf16.gmra.mrb[0].mxu0 %v1120
    %v1729 = vpop.f32.mrb[0].mxu0
    %v1730 = vadd.f32 %v1601, %v1729
    %v1731 = vpop.f32.mrb[0].mxu0
    %v1732 = vpop.f32.mrb[0].mxu0
    %v1733 = vadd.f32 %v1604, %v1732
    %v1734 = vpop.f32.mrb[0].mxu0
    %1735 = vmatprep.mubr.bf16.mxu0 0
    %1736 = vmatmul.mubr.bf16.gmra.mrb[0].mxu0 %v1121
    %v1737 = vpop.f32.mrb[0].mxu0
    %v1738 = vadd.f32 %v1609, %v1737
    %v1739 = vpop.f32.mrb[0].mxu0
    %v1740 = vpop.f32.mrb[0].mxu0
    %v1741 = vadd.f32 %v1612, %v1740
    %v1742 = vpop.f32.mrb[0].mxu0
    %1743 = vmatprep.mubr.bf16.mxu0 0
    %1744 = vmatmul.mubr.bf16.gmra.mrb[0].mxu0 %v1122
    %v1745 = vpop.f32.mrb[0].mxu0
    %v1746 = vadd.f32 %v1617, %v1745
    %v1747 = vpop.f32.mrb[0].mxu0
    %v1748 = vpop.f32.mrb[0].mxu0
    %v1749 = vadd.f32 %v1620, %v1748
    %v1750 = vpop.f32.mrb[0].mxu0
    %1751 = vdwg.mxu0
    %1752 = vrot.lane.b32.xlu0 %v752, 112
    %v1753 = vpop.permute.xlu0 %1752
    %1754 = vrot.lane.b32.xlu0 %v753, 112
    %v1755 = vpop.permute.xlu0 %1754
    %1756 = vrot.lane.b32.xlu0 %v754, 112
    %v1757 = vpop.permute.xlu0 %1756
    %1758 = vrot.lane.b32.xlu0 %v755, 112
    %v1759 = vpop.permute.xlu0 %1758
    %1760 = vrot.lane.b32.xlu0 %v756, 112
    %v1761 = vpop.permute.xlu0 %1760
    %1762 = vrot.lane.b32.xlu0 %v757, 112
    %v1763 = vpop.permute.xlu0 %1762
    %1764 = vrot.lane.b32.xlu0 %v758, 112
    %v1765 = vpop.permute.xlu0 %1764
    %1766 = vrot.lane.b32.xlu0 %v759, 112
    %v1767 = vpop.permute.xlu0 %1766
    %1768 = vrot.lane.b32.xlu0 %v760, 80
    %v1769 = vpop.permute.xlu0 %1768
    %1770 = vrot.lane.b32.xlu0 %v761, 80
    %v1771 = vpop.permute.xlu0 %1770
    %1772 = vrot.lane.b32.xlu0 %v762, 80
    %v1773 = vpop.permute.xlu0 %1772
    %1774 = vrot.lane.b32.xlu0 %v763, 80
    %v1775 = vpop.permute.xlu0 %1774
    %1776 = vrot.lane.b32.xlu0 %v764, 80
    %v1777 = vpop.permute.xlu0 %1776
    %1778 = vrot.lane.b32.xlu0 %v765, 80
    %v1779 = vpop.permute.xlu0 %1778
    %1780 = vrot.lane.b32.xlu0 %v766, 80
    %v1781 = vpop.permute.xlu0 %1780
    %1782 = vrot.lane.b32.xlu0 %v767, 80
    %v1783 = vpop.permute.xlu0 %1782
    %v1785 = vsel %vm792, %v1753, 0
    %v1788 = vsel %vm792, %v1755, 0
    %v1791 = vsel %vm792, %v1757, 0
    %v1794 = vsel %vm792, %v1759, 0
    %v1797 = vsel %vm792, %v1761, 0
    %v1800 = vsel %vm792, %v1763, 0
    %v1803 = vsel %vm792, %v1765, 0
    %v1806 = vsel %vm792, %v1767, 0
    %v1809 = vsel %vm792, %v1769, 0
    %v1812 = vsel %vm792, %v1771, 0
    %v1815 = vsel %vm792, %v1773, 0
    %v1818 = vsel %vm792, %v1775, 0
    %v1821 = vsel %vm792, %v1777, 0
    %v1824 = vsel %vm792, %v1779, 0
    %v1827 = vsel %vm792, %v1781, 0
    %v1830 = vsel %vm792, %v1783, 0
    %1832 = vmatprep.subr.bf16.mxu0 0
    %1833 = vmatpush1.bf16.xpose.msra.mxu0 %v1809
    %1834 = vmatprep.subr.bf16.mxu0 0
    %1835 = vmatpush1.bf16.xpose.msra.mxu0 %v1812
    %1836 = vmatprep.subr.bf16.mxu0 0
    %1837 = vmatpush1.bf16.xpose.msra.mxu0 %v1815
    %1838 = vmatprep.subr.bf16.mxu0 0
    %1839 = vmatpush1.bf16.xpose.msra.mxu0 %v1818
    %1840 = vmatprep.subr.bf16.mxu0 0
    %1841 = vmatpush1.bf16.xpose.msra.mxu0 %v1821
    %1842 = vmatprep.subr.bf16.mxu0 0
    %1843 = vmatpush1.bf16.xpose.msra.mxu0 %v1824
    %1844 = vmatprep.subr.bf16.mxu0 0
    %1845 = vmatpush1.bf16.xpose.msra.mxu0 %v1827
    %1846 = vmatprep.subr.bf16.mxu0 0
    %1847 = vmatpush1.bf16.xpose.msra.mxu0 %v1830
    %1848 = vmatprep.subr.bf16.mxu0 0
    %1849 = vmatpush1.bf16.xpose.msra.mxu0 0
    %1850 = vmatprep.subr.bf16.mxu0 0
    %1851 = vmatpush1.bf16.xpose.msra.mxu0 0
    %1852 = vmatprep.subr.bf16.mxu0 0
    %1853 = vmatpush1.bf16.xpose.msra.mxu0 0
    %1854 = vmatprep.subr.bf16.mxu0 0
    %1855 = vmatpush1.bf16.xpose.msra.mxu0 0
    %1856 = vmatprep.subr.bf16.mxu0 0
    %1857 = vmatpush1.bf16.xpose.msra.mxu0 0
    %1858 = vmatprep.subr.bf16.mxu0 0
    %1859 = vmatpush1.bf16.xpose.msra.mxu0 0
    %1860 = vmatprep.subr.bf16.mxu0 0
    %1861 = vmatpush1.bf16.xpose.msra.mxu0 0
    %1862 = vmatprep.subr.bf16.mxu0 0
    %1863 = vmatpush1.bf16.xpose.msra.mxu0 0
    %1864 = vmatprep.mubr.bf16.mxu0 0
    %1865 = vmatmul.mubr.bf16.gmra.mrb[0].mxu0 %v1785
    %v1866 = vpop.f32.mrb[0].mxu0
    %v1867 = vadd.f32 %v69, %v1866
    %v1868 = vpop.f32.mrb[0].mxu0
    %v1869 = vpop.f32.mrb[0].mxu0
    %v1870 = vadd.f32 %v70, %v1869
    %v1871 = vpop.f32.mrb[0].mxu0
    %1872 = vmatprep.mubr.bf16.mxu0 0
    %1873 = vmatmul.mubr.bf16.gmra.mrb[0].mxu0 %v1788
    %v1874 = vpop.f32.mrb[0].mxu0
    %v1875 = vadd.f32 %v71, %v1874
    %v1876 = vpop.f32.mrb[0].mxu0
    %v1877 = vpop.f32.mrb[0].mxu0
    %v1878 = vadd.f32 %v72, %v1877
    %v1879 = vpop.f32.mrb[0].mxu0
    %1880 = vmatprep.mubr.bf16.mxu0 0
    %1881 = vmatmul.mubr.bf16.gmra.mrb[0].mxu0 %v1791
    %v1882 = vpop.f32.mrb[0].mxu0
    %v1883 = vadd.f32 %v73, %v1882
    %v1884 = vpop.f32.mrb[0].mxu0
    %v1885 = vpop.f32.mrb[0].mxu0
    %v1886 = vadd.f32 %v74, %v1885
    %v1887 = vpop.f32.mrb[0].mxu0
    %1888 = vmatprep.mubr.bf16.mxu0 0
    %1889 = vmatmul.mubr.bf16.gmra.mrb[0].mxu0 %v1794
    %v1890 = vpop.f32.mrb[0].mxu0
    %v1891 = vadd.f32 %v75, %v1890
    %v1892 = vpop.f32.mrb[0].mxu0
    %v1893 = vpop.f32.mrb[0].mxu0
    %v1894 = vadd.f32 %v76, %v1893
    %v1895 = vpop.f32.mrb[0].mxu0
    %1896 = vmatprep.mubr.bf16.mxu0 0
    %1897 = vmatmul.mubr.bf16.gmra.mrb[0].mxu0 %v1797
    %v1898 = vpop.f32.mrb[0].mxu0
    %v1899 = vadd.f32 %v77, %v1898
    %v1900 = vpop.f32.mrb[0].mxu0
    %v1901 = vpop.f32.mrb[0].mxu0
    %v1902 = vadd.f32 %v78, %v1901
    %v1903 = vpop.f32.mrb[0].mxu0
    %1904 = vmatprep.mubr.bf16.mxu0 0
    %1905 = vmatmul.mubr.bf16.gmra.mrb[0].mxu0 %v1800
    %v1906 = vpop.f32.mrb[0].mxu0
    %v1907 = vadd.f32 %v79, %v1906
    %v1908 = vpop.f32.mrb[0].mxu0
    %v1909 = vpop.f32.mrb[0].mxu0
    %v1910 = vadd.f32 %v80, %v1909
    %v1911 = vpop.f32.mrb[0].mxu0
    %1912 = vmatprep.mubr.bf16.mxu0 0
    %1913 = vmatmul.mubr.bf16.gmra.mrb[0].mxu0 %v1803
    %v1914 = vpop.f32.mrb[0].mxu0
    %v1915 = vadd.f32 %v81, %v1914
    %v1916 = vpop.f32.mrb[0].mxu0
    %v1917 = vpop.f32.mrb[0].mxu0
    %v1918 = vadd.f32 %v82, %v1917
    %v1919 = vpop.f32.mrb[0].mxu0
    %1920 = vmatprep.mubr.bf16.mxu0 0
    %1921 = vmatmul.mubr.bf16.gmra.mrb[0].mxu0 %v1806
    %v1922 = vpop.f32.mrb[0].mxu0
    %v1923 = vadd.f32 %v83, %v1922
    %v1924 = vpop.f32.mrb[0].mxu0
    %v1925 = vpop.f32.mrb[0].mxu0
    %v1926 = vadd.f32 %v84, %v1925
    %v1927 = vpop.f32.mrb[0].mxu0
    %1928 = vdwg.mxu0
    %1929 = vmax.xlane.f32.xlu0 %v1867
    %v1930 = vpop.xlane.xlu0 %1929
    %1931 = vmax.xlane.f32.xlu0 %v1870
    %v1932 = vpop.xlane.xlu0 %1931
    %1933 = vmax.xlane.f32.xlu0 %v1875
    %v1934 = vpop.xlane.xlu0 %1933
    %1935 = vmax.xlane.f32.xlu0 %v1878
    %v1936 = vpop.xlane.xlu0 %1935
    %1937 = vmax.xlane.f32.xlu0 %v1883
    %v1938 = vpop.xlane.xlu0 %1937
    %1939 = vmax.xlane.f32.xlu0 %v1886
    %v1940 = vpop.xlane.xlu0 %1939
    %1941 = vmax.xlane.f32.xlu0 %v1891
    %v1942 = vpop.xlane.xlu0 %1941
    %1943 = vmax.xlane.f32.xlu0 %v1894
    %v1944 = vpop.xlane.xlu0 %1943
    %1945 = vmax.xlane.f32.xlu0 %v1899
    %v1946 = vpop.xlane.xlu0 %1945
    %1947 = vmax.xlane.f32.xlu0 %v1902
    %v1948 = vpop.xlane.xlu0 %1947
    %1949 = vmax.xlane.f32.xlu0 %v1907
    %v1950 = vpop.xlane.xlu0 %1949
    %1951 = vmax.xlane.f32.xlu0 %v1910
    %v1952 = vpop.xlane.xlu0 %1951
    %1953 = vmax.xlane.f32.xlu0 %v1915
    %v1954 = vpop.xlane.xlu0 %1953
    %1955 = vmax.xlane.f32.xlu0 %v1918
    %v1956 = vpop.xlane.xlu0 %1955
    %1957 = vmax.xlane.f32.xlu0 %v1923
    %v1958 = vpop.xlane.xlu0 %1957
    %1959 = vmax.xlane.f32.xlu0 %v1926
    %v1960 = vpop.xlane.xlu0 %1959
    %v1961 = vsub.f32 %v1867, %v1930
    %v1962 = vsub.f32 %v1870, %v1932
    %v1963 = vsub.f32 %v1875, %v1934
    %v1964 = vsub.f32 %v1878, %v1936
    %v1965 = vsub.f32 %v1883, %v1938
    %v1966 = vsub.f32 %v1886, %v1940
    %v1967 = vsub.f32 %v1891, %v1942
    %v1968 = vsub.f32 %v1894, %v1944
    %v1969 = vsub.f32 %v1899, %v1946
    %v1970 = vsub.f32 %v1902, %v1948
    %v1971 = vsub.f32 %v1907, %v1950
    %v1972 = vsub.f32 %v1910, %v1952
    %v1973 = vsub.f32 %v1915, %v1954
    %v1974 = vsub.f32 %v1918, %v1956
    %v1975 = vsub.f32 %v1923, %v1958
    %v1976 = vsub.f32 %v1926, %v1960
    %v1977 = vmul.f32 %v1961, 1.442695
    %v1978 = vpow.pop %v1977
    %v1979 = vmul.f32 %v1962, 1.442695
    %v1980 = vpow.pop %v1979
    %v1981 = vmul.f32 %v1963, 1.442695
    %v1982 = vpow.pop %v1981
    %v1983 = vmul.f32 %v1964, 1.442695
    %v1984 = vpow.pop %v1983
    %v1985 = vmul.f32 %v1965, 1.442695
    %v1986 = vpow.pop %v1985
    %v1987 = vmul.f32 %v1966, 1.442695
    %v1988 = vpow.pop %v1987
    %v1989 = vmul.f32 %v1967, 1.442695
    %v1990 = vpow.pop %v1989
    %v1991 = vmul.f32 %v1968, 1.442695
    %v1992 = vpow.pop %v1991
    %v1993 = vmul.f32 %v1969, 1.442695
    %v1994 = vpow.pop %v1993
    %v1995 = vmul.f32 %v1970, 1.442695
    %v1996 = vpow.pop %v1995
    %v1997 = vmul.f32 %v1971, 1.442695
    %v1998 = vpow.pop %v1997
    %v1999 = vmul.f32 %v1972, 1.442695
    %v2000 = vpow.pop %v1999
    %v2001 = vmul.f32 %v1973, 1.442695
    %v2002 = vpow.pop %v2001
    %v2003 = vmul.f32 %v1974, 1.442695
    %v2004 = vpow.pop %v2003
    %v2005 = vmul.f32 %v1975, 1.442695
    %v2006 = vpow.pop %v2005
    %v2007 = vmul.f32 %v1976, 1.442695
    %v2008 = vpow.pop %v2007
    %2009 = vadd.xlane.f32.xlu0 %v1978
    %v2010 = vpop.xlane.xlu0 %2009
    %2011 = vadd.xlane.f32.xlu0 %v1980
    %v2012 = vpop.xlane.xlu0 %2011
    %2013 = vadd.xlane.f32.xlu0 %v1982
    %v2014 = vpop.xlane.xlu0 %2013
    %2015 = vadd.xlane.f32.xlu0 %v1984
    %v2016 = vpop.xlane.xlu0 %2015
    %2017 = vadd.xlane.f32.xlu0 %v1986
    %v2018 = vpop.xlane.xlu0 %2017
    %2019 = vadd.xlane.f32.xlu0 %v1988
    %v2020 = vpop.xlane.xlu0 %2019
    %2021 = vadd.xlane.f32.xlu0 %v1990
    %v2022 = vpop.xlane.xlu0 %2021
    %2023 = vadd.xlane.f32.xlu0 %v1992
    %v2024 = vpop.xlane.xlu0 %2023
    %2025 = vadd.xlane.f32.xlu0 %v1994
    %v2026 = vpop.xlane.xlu0 %2025
    %2027 = vadd.xlane.f32.xlu0 %v1996
    %v2028 = vpop.xlane.xlu0 %2027
    %2029 = vadd.xlane.f32.xlu0 %v1998
    %v2030 = vpop.xlane.xlu0 %2029
    %2031 = vadd.xlane.f32.xlu0 %v2000
    %v2032 = vpop.xlane.xlu0 %2031
    %2033 = vadd.xlane.f32.xlu0 %v2002
    %v2034 = vpop.xlane.xlu0 %2033
    %2035 = vadd.xlane.f32.xlu0 %v2004
    %v2036 = vpop.xlane.xlu0 %2035
    %2037 = vadd.xlane.f32.xlu0 %v2006
    %v2038 = vpop.xlane.xlu0 %2037
    %2039 = vadd.xlane.f32.xlu0 %v2008
    %v2040 = vpop.xlane.xlu0 %2039
    %v2041 = vrcp.pop %v2010
    %v2042 = vmul.f32 %v1978, %v2041
    %v2043 = vrcp.pop %v2012
    %v2044 = vmul.f32 %v1980, %v2043
    %v2045 = vrcp.pop %v2014
    %v2046 = vmul.f32 %v1982, %v2045
    %v2047 = vrcp.pop %v2016
    %v2048 = vmul.f32 %v1984, %v2047
    %v2049 = vrcp.pop %v2018
    %v2050 = vmul.f32 %v1986, %v2049
    %v2051 = vrcp.pop %v2020
    %v2052 = vmul.f32 %v1988, %v2051
    %v2053 = vrcp.pop %v2022
    %v2054 = vmul.f32 %v1990, %v2053
    %v2055 = vrcp.pop %v2024
    %v2056 = vmul.f32 %v1992, %v2055
    %v2057 = vrcp.pop %v2026
    %v2058 = vmul.f32 %v1994, %v2057
    %v2059 = vrcp.pop %v2028
    %v2060 = vmul.f32 %v1996, %v2059
    %v2061 = vrcp.pop %v2030
    %v2062 = vmul.f32 %v1998, %v2061
    %v2063 = vrcp.pop %v2032
    %v2064 = vmul.f32 %v2000, %v2063
    %v2065 = vrcp.pop %v2034
    %v2066 = vmul.f32 %v2002, %v2065
    %v2067 = vrcp.pop %v2036
    %v2068 = vmul.f32 %v2004, %v2067
    %v2069 = vrcp.pop %v2038
    %v2070 = vmul.f32 %v2006, %v2069
    %v2071 = vrcp.pop %v2040
    %v2072 = vmul.f32 %v2008, %v2071
    %s2073 = scalar_lea.vmem %s2, 2
    %v2074 = vld [vmem:[%s2073] sm:$0x1]
    %v2076 = vlaneseq
    %v2077 = vshrl.u32 %v2076, 7
    %v2078 = vsub.s32 0, %v2077
    %v2079 = vrot.slane %v2074, %v2078
    %2080 = vrot.lane.b32.xlu0 %v2079, 64
    %v2081 = vpop.permute.xlu0 %2080
    %v2083 = vmul.f32 %v674, %v2081
    %v2084 = vmul.f32 %v677, %v2081
    %v2085 = vmul.f32 %v682, %v2081
    %v2086 = vmul.f32 %v685, %v2081
    %v2087 = vmul.f32 %v690, %v2081
    %v2088 = vmul.f32 %v693, %v2081
    %v2089 = vmul.f32 %v698, %v2081
    %v2090 = vmul.f32 %v701, %v2081
    %v2091 = vmul.f32 %v706, %v2081
    %v2092 = vmul.f32 %v709, %v2081
    %v2093 = vmul.f32 %v714, %v2081
    %v2094 = vmul.f32 %v717, %v2081
    %v2095 = vmul.f32 %v722, %v2081
    %v2096 = vmul.f32 %v725, %v2081
    %v2097 = vmul.f32 %v730, %v2081
    %v2098 = vmul.f32 %v733, %v2081
    %v2099 = vpack.c.bf16 %v2084, %v2083
    %v2100 = vpack.c.bf16 %v2086, %v2085
    %v2101 = vpack.c.bf16 %v2088, %v2087
    %v2102 = vpack.c.bf16 %v2090, %v2089
    %v2103 = vpack.c.bf16 %v2092, %v2091
    %v2104 = vpack.c.bf16 %v2094, %v2093
    %v2105 = vpack.c.bf16 %v2096, %v2095
    %v2106 = vpack.c.bf16 %v2098, %v2097
    %v2107 = vpack.c.bf16 %v2044, %v2042
    %v2108 = vpack.c.bf16 %v2048, %v2046
    %v2109 = vpack.c.bf16 %v2052, %v2050
    %v2110 = vpack.c.bf16 %v2056, %v2054
    %v2111 = vpack.c.bf16 %v2060, %v2058
    %v2112 = vpack.c.bf16 %v2064, %v2062
    %v2113 = vpack.c.bf16 %v2068, %v2066
    %v2114 = vpack.c.bf16 %v2072, %v2070
    %2123 = vrot.lane.b32.xlu0 %v2099, 64
    %v2124 = vpop.permute.xlu0 %2123
    %2125 = vrot.lane.b32.xlu0 %v2100, 64
    %v2126 = vpop.permute.xlu0 %2125
    %2127 = vrot.lane.b32.xlu0 %v2101, 64
    %v2128 = vpop.permute.xlu0 %2127
    %2129 = vrot.lane.b32.xlu0 %v2102, 64
    %v2130 = vpop.permute.xlu0 %2129
    %2131 = vrot.lane.b32.xlu0 %v2103, 64
    %v2132 = vpop.permute.xlu0 %2131
    %2133 = vrot.lane.b32.xlu0 %v2104, 64
    %v2134 = vpop.permute.xlu0 %2133
    %2135 = vrot.lane.b32.xlu0 %v2105, 64
    %v2136 = vpop.permute.xlu0 %2135
    %2137 = vrot.lane.b32.xlu0 %v2106, 64
    %v2138 = vpop.permute.xlu0 %2137
    %2147 = vmatprep.subr.bf16.mxu0 0
    %2148 = vmatpush1.bf16.msra.mxu0 %v2124
    %2149 = vmatprep.subr.bf16.mxu0 0
    %2150 = vmatpush1.bf16.msra.mxu0 %v2126
    %2151 = vmatprep.subr.bf16.mxu0 0
    %2152 = vmatpush1.bf16.msra.mxu0 %v2128
    %2153 = vmatprep.subr.bf16.mxu0 0
    %2154 = vmatpush1.bf16.msra.mxu0 %v2130
    %2155 = vmatprep.subr.bf16.mxu0 0
    %2156 = vmatpush1.bf16.msra.mxu0 %v2132
    %2157 = vmatprep.subr.bf16.mxu0 0
    %2158 = vmatpush1.bf16.msra.mxu0 %v2134
    %2159 = vmatprep.subr.bf16.mxu0 0
    %2160 = vmatpush1.bf16.msra.mxu0 %v2136
    %2161 = vmatprep.subr.bf16.mxu0 0
    %2162 = vmatpush1.bf16.msra.mxu0 %v2138
    %2163 = vmatprep.subr.bf16.mxu0 0
    %2164 = vmatpush1.bf16.msra.mxu0 0
    %2165 = vmatprep.subr.bf16.mxu0 0
    %2166 = vmatpush1.bf16.msra.mxu0 0
    %2167 = vmatprep.subr.bf16.mxu0 0
    %2168 = vmatpush1.bf16.msra.mxu0 0
    %2169 = vmatprep.subr.bf16.mxu0 0
    %2170 = vmatpush1.bf16.msra.mxu0 0
    %2171 = vmatprep.subr.bf16.mxu0 0
    %2172 = vmatpush1.bf16.msra.mxu0 0
    %2173 = vmatprep.subr.bf16.mxu0 0
    %2174 = vmatpush1.bf16.msra.mxu0 0
    %2175 = vmatprep.subr.bf16.mxu0 0
    %2176 = vmatpush1.bf16.msra.mxu0 0
    %2177 = vmatprep.subr.bf16.mxu0 0
    %2178 = vmatpush1.bf16.msra.mxu0 0
    %2179 = vmatprep.mubr.bf16.mxu0 0
    %2180 = vmatmul.mubr.bf16.gmra.mrb[0].mxu0 %v2107
    %v2181 = vpop.f32.mrb[0].mxu0
    %v2182 = vadd.f32 0.0, %v2181
    %v2183 = vpop.f32.mrb[0].mxu0
    %v2184 = vpop.f32.mrb[0].mxu0
    %v2185 = vadd.f32 0.0, %v2184
    %v2186 = vpop.f32.mrb[0].mxu0
    %2187 = vmatprep.mubr.bf16.mxu0 0
    %2188 = vmatmul.mubr.bf16.gmra.mrb[0].mxu0 %v2108
    %v2189 = vpop.f32.mrb[0].mxu0
    %v2190 = vadd.f32 0.0, %v2189
    %v2191 = vpop.f32.mrb[0].mxu0
    %v2192 = vpop.f32.mrb[0].mxu0
    %v2193 = vadd.f32 0.0, %v2192
    %v2194 = vpop.f32.mrb[0].mxu0
    %2195 = vmatprep.mubr.bf16.mxu0 0
    %2196 = vmatmul.mubr.bf16.gmra.mrb[0].mxu0 %v2109
    %v2197 = vpop.f32.mrb[0].mxu0
    %v2198 = vadd.f32 0.0, %v2197
    %v2199 = vpop.f32.mrb[0].mxu0
    %v2200 = vpop.f32.mrb[0].mxu0
    %v2201 = vadd.f32 0.0, %v2200
    %v2202 = vpop.f32.mrb[0].mxu0
    %2203 = vmatprep.mubr.bf16.mxu0 0
    %2204 = vmatmul.mubr.bf16.gmra.mrb[0].mxu0 %v2110
    %v2205 = vpop.f32.mrb[0].mxu0
    %v2206 = vadd.f32 0.0, %v2205
    %v2207 = vpop.f32.mrb[0].mxu0
    %v2208 = vpop.f32.mrb[0].mxu0
    %v2209 = vadd.f32 0.0, %v2208
    %v2210 = vpop.f32.mrb[0].mxu0
    %2211 = vmatprep.mubr.bf16.mxu0 0
    %2212 = vmatmul.mubr.bf16.gmra.mrb[0].mxu0 %v2111
    %v2213 = vpop.f32.mrb[0].mxu0
    %v2214 = vadd.f32 0.0, %v2213
    %v2215 = vpop.f32.mrb[0].mxu0
    %v2216 = vpop.f32.mrb[0].mxu0
    %v2217 = vadd.f32 0.0, %v2216
    %v2218 = vpop.f32.mrb[0].mxu0
    %2219 = vmatprep.mubr.bf16.mxu0 0
    %2220 = vmatmul.mubr.bf16.gmra.mrb[0].mxu0 %v2112
    %v2221 = vpop.f32.mrb[0].mxu0
    %v2222 = vadd.f32 0.0, %v2221
    %v2223 = vpop.f32.mrb[0].mxu0
    %v2224 = vpop.f32.mrb[0].mxu0
    %v2225 = vadd.f32 0.0, %v2224
    %v2226 = vpop.f32.mrb[0].mxu0
    %2227 = vmatprep.mubr.bf16.mxu0 0
    %2228 = vmatmul.mubr.bf16.gmra.mrb[0].mxu0 %v2113
    %v2229 = vpop.f32.mrb[0].mxu0
    %v2230 = vadd.f32 0.0, %v2229
    %v2231 = vpop.f32.mrb[0].mxu0
    %v2232 = vpop.f32.mrb[0].mxu0
    %v2233 = vadd.f32 0.0, %v2232
    %v2234 = vpop.f32.mrb[0].mxu0
    %2235 = vmatprep.mubr.bf16.mxu0 0
    %2236 = vmatmul.mubr.bf16.gmra.mrb[0].mxu0 %v2114
    %v2237 = vpop.f32.mrb[0].mxu0
    %v2238 = vadd.f32 0.0, %v2237
    %v2239 = vpop.f32.mrb[0].mxu0
    %v2240 = vpop.f32.mrb[0].mxu0
    %v2241 = vadd.f32 0.0, %v2240
    %v2242 = vpop.f32.mrb[0].mxu0
    %2243 = vdwg.mxu0
    %v2244 = vadd.f32 %v1690, %v2182
    %v2245 = vadd.f32 %v1693, %v2185
    %v2246 = vadd.f32 %v1698, %v2190
    %v2247 = vadd.f32 %v1701, %v2193
    %v2248 = vadd.f32 %v1706, %v2198
    %v2249 = vadd.f32 %v1709, %v2201
    %v2250 = vadd.f32 %v1714, %v2206
    %v2251 = vadd.f32 %v1717, %v2209
    %v2252 = vadd.f32 %v1722, %v2214
    %v2253 = vadd.f32 %v1725, %v2217
    %v2254 = vadd.f32 %v1730, %v2222
    %v2255 = vadd.f32 %v1733, %v2225
    %v2256 = vadd.f32 %v1738, %v2230
    %v2257 = vadd.f32 %v1741, %v2233
    %v2258 = vadd.f32 %v1746, %v2238
    %v2259 = vadd.f32 %v1749, %v2241
    %2260 = vrot.lane.b32.xlu0 %v752, 104
    %v2261 = vpop.permute.xlu0 %2260
    %2262 = vrot.lane.b32.xlu0 %v753, 104
    %v2263 = vpop.permute.xlu0 %2262
    %2264 = vrot.lane.b32.xlu0 %v754, 104
    %v2265 = vpop.permute.xlu0 %2264
    %2266 = vrot.lane.b32.xlu0 %v755, 104
    %v2267 = vpop.permute.xlu0 %2266
    %2268 = vrot.lane.b32.xlu0 %v756, 104
    %v2269 = vpop.permute.xlu0 %2268
    %2270 = vrot.lane.b32.xlu0 %v757, 104
    %v2271 = vpop.permute.xlu0 %2270
    %2272 = vrot.lane.b32.xlu0 %v758, 104
    %v2273 = vpop.permute.xlu0 %2272
    %2274 = vrot.lane.b32.xlu0 %v759, 104
    %v2275 = vpop.permute.xlu0 %2274
    %2276 = vrot.lane.b32.xlu0 %v760, 72
    %v2277 = vpop.permute.xlu0 %2276
    %2278 = vrot.lane.b32.xlu0 %v761, 72
    %v2279 = vpop.permute.xlu0 %2278
    %2280 = vrot.lane.b32.xlu0 %v762, 72
    %v2281 = vpop.permute.xlu0 %2280
    %2282 = vrot.lane.b32.xlu0 %v763, 72
    %v2283 = vpop.permute.xlu0 %2282
    %2284 = vrot.lane.b32.xlu0 %v764, 72
    %v2285 = vpop.permute.xlu0 %2284
    %2286 = vrot.lane.b32.xlu0 %v765, 72
    %v2287 = vpop.permute.xlu0 %2286
    %2288 = vrot.lane.b32.xlu0 %v766, 72
    %v2289 = vpop.permute.xlu0 %2288
    %2290 = vrot.lane.b32.xlu0 %v767, 72
    %v2291 = vpop.permute.xlu0 %2290
    %v2293 = vsel %vm792, %v2261, 0
    %v2296 = vsel %vm792, %v2263, 0
    %v2299 = vsel %vm792, %v2265, 0
    %v2302 = vsel %vm792, %v2267, 0
    %v2305 = vsel %vm792, %v2269, 0
    %v2308 = vsel %vm792, %v2271, 0
    %v2311 = vsel %vm792, %v2273, 0
    %v2314 = vsel %vm792, %v2275, 0
    %v2317 = vsel %vm792, %v2277, 0
    %v2320 = vsel %vm792, %v2279, 0
    %v2323 = vsel %vm792, %v2281, 0
    %v2326 = vsel %vm792, %v2283, 0
    %v2329 = vsel %vm792, %v2285, 0
    %v2332 = vsel %vm792, %v2287, 0
    %v2335 = vsel %vm792, %v2289, 0
    %v2338 = vsel %vm792, %v2291, 0
    %2340 = vmatprep.subr.bf16.mxu0 0
    %2341 = vmatpush1.bf16.xpose.msra.mxu0 %v2317
    %2342 = vmatprep.subr.bf16.mxu0 0
    %2343 = vmatpush1.bf16.xpose.msra.mxu0 %v2320
    %2344 = vmatprep.subr.bf16.mxu0 0
    %2345 = vmatpush1.bf16.xpose.msra.mxu0 %v2323
    %2346 = vmatprep.subr.bf16.mxu0 0
    %2347 = vmatpush1.bf16.xpose.msra.mxu0 %v2326
    %2348 = vmatprep.subr.bf16.mxu0 0
    %2349 = vmatpush1.bf16.xpose.msra.mxu0 %v2329
    %2350 = vmatprep.subr.bf16.mxu0 0
    %2351 = vmatpush1.bf16.xpose.msra.mxu0 %v2332
    %2352 = vmatprep.subr.bf16.mxu0 0
    %2353 = vmatpush1.bf16.xpose.msra.mxu0 %v2335
    %2354 = vmatprep.subr.bf16.mxu0 0
    %2355 = vmatpush1.bf16.xpose.msra.mxu0 %v2338
    %2356 = vmatprep.subr.bf16.mxu0 0
    %2357 = vmatpush1.bf16.xpose.msra.mxu0 0
    %2358 = vmatprep.subr.bf16.mxu0 0
    %2359 = vmatpush1.bf16.xpose.msra.mxu0 0
    %2360 = vmatprep.subr.bf16.mxu0 0
    %2361 = vmatpush1.bf16.xpose.msra.mxu0 0
    %2362 = vmatprep.subr.bf16.mxu0 0
    %2363 = vmatpush1.bf16.xpose.msra.mxu0 0
    %2364 = vmatprep.subr.bf16.mxu0 0
    %2365 = vmatpush1.bf16.xpose.msra.mxu0 0
    %2366 = vmatprep.subr.bf16.mxu0 0
    %2367 = vmatpush1.bf16.xpose.msra.mxu0 0
    %2368 = vmatprep.subr.bf16.mxu0 0
    %2369 = vmatpush1.bf16.xpose.msra.mxu0 0
    %2370 = vmatprep.subr.bf16.mxu0 0
    %2371 = vmatpush1.bf16.xpose.msra.mxu0 0
    %2372 = vmatprep.mubr.bf16.mxu0 0
    %2373 = vmatmul.mubr.bf16.gmra.mrb[0].mxu0 %v2293
    %v2374 = vpop.f32.mrb[0].mxu0
    %v2375 = vadd.f32 %v69, %v2374
    %v2376 = vpop.f32.mrb[0].mxu0
    %v2377 = vpop.f32.mrb[0].mxu0
    %v2378 = vadd.f32 %v70, %v2377
    %v2379 = vpop.f32.mrb[0].mxu0
    %2380 = vmatprep.mubr.bf16.mxu0 0
    %2381 = vmatmul.mubr.bf16.gmra.mrb[0].mxu0 %v2296
    %v2382 = vpop.f32.mrb[0].mxu0
    %v2383 = vadd.f32 %v71, %v2382
    %v2384 = vpop.f32.mrb[0].mxu0
    %v2385 = vpop.f32.mrb[0].mxu0
    %v2386 = vadd.f32 %v72, %v2385
    %v2387 = vpop.f32.mrb[0].mxu0
    %2388 = vmatprep.mubr.bf16.mxu0 0
    %2389 = vmatmul.mubr.bf16.gmra.mrb[0].mxu0 %v2299
    %v2390 = vpop.f32.mrb[0].mxu0
    %v2391 = vadd.f32 %v73, %v2390
    %v2392 = vpop.f32.mrb[0].mxu0
    %v2393 = vpop.f32.mrb[0].mxu0
    %v2394 = vadd.f32 %v74, %v2393
    %v2395 = vpop.f32.mrb[0].mxu0
    %2396 = vmatprep.mubr.bf16.mxu0 0
    %2397 = vmatmul.mubr.bf16.gmra.mrb[0].mxu0 %v2302
    %v2398 = vpop.f32.mrb[0].mxu0
    %v2399 = vadd.f32 %v75, %v2398
    %v2400 = vpop.f32.mrb[0].mxu0
    %v2401 = vpop.f32.mrb[0].mxu0
    %v2402 = vadd.f32 %v76, %v2401
    %v2403 = vpop.f32.mrb[0].mxu0
    %2404 = vmatprep.mubr.bf16.mxu0 0
    %2405 = vmatmul.mubr.bf16.gmra.mrb[0].mxu0 %v2305
    %v2406 = vpop.f32.mrb[0].mxu0
    %v2407 = vadd.f32 %v77, %v2406
    %v2408 = vpop.f32.mrb[0].mxu0
    %v2409 = vpop.f32.mrb[0].mxu0
    %v2410 = vadd.f32 %v78, %v2409
    %v2411 = vpop.f32.mrb[0].mxu0
    %2412 = vmatprep.mubr.bf16.mxu0 0
    %2413 = vmatmul.mubr.bf16.gmra.mrb[0].mxu0 %v2308
    %v2414 = vpop.f32.mrb[0].mxu0
    %v2415 = vadd.f32 %v79, %v2414
    %v2416 = vpop.f32.mrb[0].mxu0
    %v2417 = vpop.f32.mrb[0].mxu0
    %v2418 = vadd.f32 %v80, %v2417
    %v2419 = vpop.f32.mrb[0].mxu0
    %2420 = vmatprep.mubr.bf16.mxu0 0
    %2421 = vmatmul.mubr.bf16.gmra.mrb[0].mxu0 %v2311
    %v2422 = vpop.f32.mrb[0].mxu0
    %v2423 = vadd.f32 %v81, %v2422
    %v2424 = vpop.f32.mrb[0].mxu0
    %v2425 = vpop.f32.mrb[0].mxu0
    %v2426 = vadd.f32 %v82, %v2425
    %v2427 = vpop.f32.mrb[0].mxu0
    %2428 = vmatprep.mubr.bf16.mxu0 0
    %2429 = vmatmul.mubr.bf16.gmra.mrb[0].mxu0 %v2314
    %v2430 = vpop.f32.mrb[0].mxu0
    %v2431 = vadd.f32 %v83, %v2430
    %v2432 = vpop.f32.mrb[0].mxu0
    %v2433 = vpop.f32.mrb[0].mxu0
    %v2434 = vadd.f32 %v84, %v2433
    %v2435 = vpop.f32.mrb[0].mxu0
    %2436 = vdwg.mxu0
    %2437 = vmax.xlane.f32.xlu0 %v2375
    %v2438 = vpop.xlane.xlu0 %2437
    %2439 = vmax.xlane.f32.xlu0 %v2378
    %v2440 = vpop.xlane.xlu0 %2439
    %2441 = vmax.xlane.f32.xlu0 %v2383
    %v2442 = vpop.xlane.xlu0 %2441
    %2443 = vmax.xlane.f32.xlu0 %v2386
    %v2444 = vpop.xlane.xlu0 %2443
    %2445 = vmax.xlane.f32.xlu0 %v2391
    %v2446 = vpop.xlane.xlu0 %2445
    %2447 = vmax.xlane.f32.xlu0 %v2394
    %v2448 = vpop.xlane.xlu0 %2447
    %2449 = vmax.xlane.f32.xlu0 %v2399
    %v2450 = vpop.xlane.xlu0 %2449
    %2451 = vmax.xlane.f32.xlu0 %v2402
    %v2452 = vpop.xlane.xlu0 %2451
    %2453 = vmax.xlane.f32.xlu0 %v2407
    %v2454 = vpop.xlane.xlu0 %2453
    %2455 = vmax.xlane.f32.xlu0 %v2410
    %v2456 = vpop.xlane.xlu0 %2455
    %2457 = vmax.xlane.f32.xlu0 %v2415
    %v2458 = vpop.xlane.xlu0 %2457
    %2459 = vmax.xlane.f32.xlu0 %v2418
    %v2460 = vpop.xlane.xlu0 %2459
    %2461 = vmax.xlane.f32.xlu0 %v2423
    %v2462 = vpop.xlane.xlu0 %2461
    %2463 = vmax.xlane.f32.xlu0 %v2426
    %v2464 = vpop.xlane.xlu0 %2463
    %2465 = vmax.xlane.f32.xlu0 %v2431
    %v2466 = vpop.xlane.xlu0 %2465
    %2467 = vmax.xlane.f32.xlu0 %v2434
    %v2468 = vpop.xlane.xlu0 %2467
    %v2469 = vsub.f32 %v2375, %v2438
    %v2470 = vsub.f32 %v2378, %v2440
    %v2471 = vsub.f32 %v2383, %v2442
    %v2472 = vsub.f32 %v2386, %v2444
    %v2473 = vsub.f32 %v2391, %v2446
    %v2474 = vsub.f32 %v2394, %v2448
    %v2475 = vsub.f32 %v2399, %v2450
    %v2476 = vsub.f32 %v2402, %v2452
    %v2477 = vsub.f32 %v2407, %v2454
    %v2478 = vsub.f32 %v2410, %v2456
    %v2479 = vsub.f32 %v2415, %v2458
    %v2480 = vsub.f32 %v2418, %v2460
    %v2481 = vsub.f32 %v2423, %v2462
    %v2482 = vsub.f32 %v2426, %v2464
    %v2483 = vsub.f32 %v2431, %v2466
    %v2484 = vsub.f32 %v2434, %v2468
    %v2485 = vmul.f32 %v2469, 1.442695
    %v2486 = vpow.pop %v2485
    %v2487 = vmul.f32 %v2470, 1.442695
    %v2488 = vpow.pop %v2487
    %v2489 = vmul.f32 %v2471, 1.442695
    %v2490 = vpow.pop %v2489
    %v2491 = vmul.f32 %v2472, 1.442695
    %v2492 = vpow.pop %v2491
    %v2493 = vmul.f32 %v2473, 1.442695
    %v2494 = vpow.pop %v2493
    %v2495 = vmul.f32 %v2474, 1.442695
    %v2496 = vpow.pop %v2495
    %v2497 = vmul.f32 %v2475, 1.442695
    %v2498 = vpow.pop %v2497
    %v2499 = vmul.f32 %v2476, 1.442695
    %v2500 = vpow.pop %v2499
    %v2501 = vmul.f32 %v2477, 1.442695
    %v2502 = vpow.pop %v2501
    %v2503 = vmul.f32 %v2478, 1.442695
    %v2504 = vpow.pop %v2503
    %v2505 = vmul.f32 %v2479, 1.442695
    %v2506 = vpow.pop %v2505
    %v2507 = vmul.f32 %v2480, 1.442695
    %v2508 = vpow.pop %v2507
    %v2509 = vmul.f32 %v2481, 1.442695
    %v2510 = vpow.pop %v2509
    %v2511 = vmul.f32 %v2482, 1.442695
    %v2512 = vpow.pop %v2511
    %v2513 = vmul.f32 %v2483, 1.442695
    %v2514 = vpow.pop %v2513
    %v2515 = vmul.f32 %v2484, 1.442695
    %v2516 = vpow.pop %v2515
    %2517 = vadd.xlane.f32.xlu0 %v2486
    %v2518 = vpop.xlane.xlu0 %2517
    %2519 = vadd.xlane.f32.xlu0 %v2488
    %v2520 = vpop.xlane.xlu0 %2519
    %2521 = vadd.xlane.f32.xlu0 %v2490
    %v2522 = vpop.xlane.xlu0 %2521
    %2523 = vadd.xlane.f32.xlu0 %v2492
    %v2524 = vpop.xlane.xlu0 %2523
    %2525 = vadd.xlane.f32.xlu0 %v2494
    %v2526 = vpop.xlane.xlu0 %2525
    %2527 = vadd.xlane.f32.xlu0 %v2496
    %v2528 = vpop.xlane.xlu0 %2527
    %2529 = vadd.xlane.f32.xlu0 %v2498
    %v2530 = vpop.xlane.xlu0 %2529
    %2531 = vadd.xlane.f32.xlu0 %v2500
    %v2532 = vpop.xlane.xlu0 %2531
    %2533 = vadd.xlane.f32.xlu0 %v2502
    %v2534 = vpop.xlane.xlu0 %2533
    %2535 = vadd.xlane.f32.xlu0 %v2504
    %v2536 = vpop.xlane.xlu0 %2535
    %2537 = vadd.xlane.f32.xlu0 %v2506
    %v2538 = vpop.xlane.xlu0 %2537
    %2539 = vadd.xlane.f32.xlu0 %v2508
    %v2540 = vpop.xlane.xlu0 %2539
    %2541 = vadd.xlane.f32.xlu0 %v2510
    %v2542 = vpop.xlane.xlu0 %2541
    %2543 = vadd.xlane.f32.xlu0 %v2512
    %v2544 = vpop.xlane.xlu0 %2543
    %2545 = vadd.xlane.f32.xlu0 %v2514
    %v2546 = vpop.xlane.xlu0 %2545
    %2547 = vadd.xlane.f32.xlu0 %v2516
    %v2548 = vpop.xlane.xlu0 %2547
    %v2549 = vrcp.pop %v2518
    %v2550 = vmul.f32 %v2486, %v2549
    %v2551 = vrcp.pop %v2520
    %v2552 = vmul.f32 %v2488, %v2551
    %v2553 = vrcp.pop %v2522
    %v2554 = vmul.f32 %v2490, %v2553
    %v2555 = vrcp.pop %v2524
    %v2556 = vmul.f32 %v2492, %v2555
    %v2557 = vrcp.pop %v2526
    %v2558 = vmul.f32 %v2494, %v2557
    %v2559 = vrcp.pop %v2528
    %v2560 = vmul.f32 %v2496, %v2559
    %v2561 = vrcp.pop %v2530
    %v2562 = vmul.f32 %v2498, %v2561
    %v2563 = vrcp.pop %v2532
    %v2564 = vmul.f32 %v2500, %v2563
    %v2565 = vrcp.pop %v2534
    %v2566 = vmul.f32 %v2502, %v2565
    %v2567 = vrcp.pop %v2536
    %v2568 = vmul.f32 %v2504, %v2567
    %v2569 = vrcp.pop %v2538
    %v2570 = vmul.f32 %v2506, %v2569
    %v2571 = vrcp.pop %v2540
    %v2572 = vmul.f32 %v2508, %v2571
    %v2573 = vrcp.pop %v2542
    %v2574 = vmul.f32 %v2510, %v2573
    %v2575 = vrcp.pop %v2544
    %v2576 = vmul.f32 %v2512, %v2575
    %v2577 = vrcp.pop %v2546
    %v2578 = vmul.f32 %v2514, %v2577
    %v2579 = vrcp.pop %v2548
    %v2580 = vmul.f32 %v2516, %v2579
    %s2581 = scalar_lea.vmem %s2, 3
    %v2582 = vld [vmem:[%s2581] sm:$0x1]
    %v2584 = vlaneseq
    %v2585 = vshrl.u32 %v2584, 7
    %v2586 = vsub.s32 0, %v2585
    %v2587 = vrot.slane %v2582, %v2586
    %2588 = vrot.lane.b32.xlu0 %v2587, 64
    %v2589 = vpop.permute.xlu0 %2588
    %v2591 = vmul.f32 %v674, %v2589
    %v2592 = vmul.f32 %v677, %v2589
    %v2593 = vmul.f32 %v682, %v2589
    %v2594 = vmul.f32 %v685, %v2589
    %v2595 = vmul.f32 %v690, %v2589
    %v2596 = vmul.f32 %v693, %v2589
    %v2597 = vmul.f32 %v698, %v2589
    %v2598 = vmul.f32 %v701, %v2589
    %v2599 = vmul.f32 %v706, %v2589
    %v2600 = vmul.f32 %v709, %v2589
    %v2601 = vmul.f32 %v714, %v2589
    %v2602 = vmul.f32 %v717, %v2589
    %v2603 = vmul.f32 %v722, %v2589
    %v2604 = vmul.f32 %v725, %v2589
    %v2605 = vmul.f32 %v730, %v2589
    %v2606 = vmul.f32 %v733, %v2589
    %v2607 = vpack.c.bf16 %v2592, %v2591
    %v2608 = vpack.c.bf16 %v2594, %v2593
    %v2609 = vpack.c.bf16 %v2596, %v2595
    %v2610 = vpack.c.bf16 %v2598, %v2597
    %v2611 = vpack.c.bf16 %v2600, %v2599
    %v2612 = vpack.c.bf16 %v2602, %v2601
    %v2613 = vpack.c.bf16 %v2604, %v2603
    %v2614 = vpack.c.bf16 %v2606, %v2605
    %v2615 = vpack.c.bf16 %v2552, %v2550
    %v2616 = vpack.c.bf16 %v2556, %v2554
    %v2617 = vpack.c.bf16 %v2560, %v2558
    %v2618 = vpack.c.bf16 %v2564, %v2562
    %v2619 = vpack.c.bf16 %v2568, %v2566
    %v2620 = vpack.c.bf16 %v2572, %v2570
    %v2621 = vpack.c.bf16 %v2576, %v2574
    %v2622 = vpack.c.bf16 %v2580, %v2578
    %2631 = vrot.lane.b32.xlu0 %v2607, 64
    %v2632 = vpop.permute.xlu0 %2631
    %2633 = vrot.lane.b32.xlu0 %v2608, 64
    %v2634 = vpop.permute.xlu0 %2633
    %2635 = vrot.lane.b32.xlu0 %v2609, 64
    %v2636 = vpop.permute.xlu0 %2635
    %2637 = vrot.lane.b32.xlu0 %v2610, 64
    %v2638 = vpop.permute.xlu0 %2637
    %2639 = vrot.lane.b32.xlu0 %v2611, 64
    %v2640 = vpop.permute.xlu0 %2639
    %2641 = vrot.lane.b32.xlu0 %v2612, 64
    %v2642 = vpop.permute.xlu0 %2641
    %2643 = vrot.lane.b32.xlu0 %v2613, 64
    %v2644 = vpop.permute.xlu0 %2643
    %2645 = vrot.lane.b32.xlu0 %v2614, 64
    %v2646 = vpop.permute.xlu0 %2645
    %2655 = vmatprep.subr.bf16.mxu0 0
    %2656 = vmatpush1.bf16.msra.mxu0 %v2632
    %2657 = vmatprep.subr.bf16.mxu0 0
    %2658 = vmatpush1.bf16.msra.mxu0 %v2634
    %2659 = vmatprep.subr.bf16.mxu0 0
    %2660 = vmatpush1.bf16.msra.mxu0 %v2636
    %2661 = vmatprep.subr.bf16.mxu0 0
    %2662 = vmatpush1.bf16.msra.mxu0 %v2638
    %2663 = vmatprep.subr.bf16.mxu0 0
    %2664 = vmatpush1.bf16.msra.mxu0 %v2640
    %2665 = vmatprep.subr.bf16.mxu0 0
    %2666 = vmatpush1.bf16.msra.mxu0 %v2642
    %2667 = vmatprep.subr.bf16.mxu0 0
    %2668 = vmatpush1.bf16.msra.mxu0 %v2644
    %2669 = vmatprep.subr.bf16.mxu0 0
    %2670 = vmatpush1.bf16.msra.mxu0 %v2646
    %2671 = vmatprep.subr.bf16.mxu0 0
    %2672 = vmatpush1.bf16.msra.mxu0 0
    %2673 = vmatprep.subr.bf16.mxu0 0
    %2674 = vmatpush1.bf16.msra.mxu0 0
    %2675 = vmatprep.subr.bf16.mxu0 0
    %2676 = vmatpush1.bf16.msra.mxu0 0
    %2677 = vmatprep.subr.bf16.mxu0 0
    %2678 = vmatpush1.bf16.msra.mxu0 0
    %2679 = vmatprep.subr.bf16.mxu0 0
    %2680 = vmatpush1.bf16.msra.mxu0 0
    %2681 = vmatprep.subr.bf16.mxu0 0
    %2682 = vmatpush1.bf16.msra.mxu0 0
    %2683 = vmatprep.subr.bf16.mxu0 0
    %2684 = vmatpush1.bf16.msra.mxu0 0
    %2685 = vmatprep.subr.bf16.mxu0 0
    %2686 = vmatpush1.bf16.msra.mxu0 0
    %2687 = vmatprep.mubr.bf16.mxu0 0
    %2688 = vmatmul.mubr.bf16.gmra.mrb[0].mxu0 %v2615
    %v2689 = vpop.f32.mrb[0].mxu0
    %v2690 = vadd.f32 0.0, %v2689
    %v2691 = vpop.f32.mrb[0].mxu0
    %v2692 = vpop.f32.mrb[0].mxu0
    %v2693 = vadd.f32 0.0, %v2692
    %v2694 = vpop.f32.mrb[0].mxu0
    %2695 = vmatprep.mubr.bf16.mxu0 0
    %2696 = vmatmul.mubr.bf16.gmra.mrb[0].mxu0 %v2616
    %v2697 = vpop.f32.mrb[0].mxu0
    %v2698 = vadd.f32 0.0, %v2697
    %v2699 = vpop.f32.mrb[0].mxu0
    %v2700 = vpop.f32.mrb[0].mxu0
    %v2701 = vadd.f32 0.0, %v2700
    %v2702 = vpop.f32.mrb[0].mxu0
    %2703 = vmatprep.mubr.bf16.mxu0 0
    %2704 = vmatmul.mubr.bf16.gmra.mrb[0].mxu0 %v2617
    %v2705 = vpop.f32.mrb[0].mxu0
    %v2706 = vadd.f32 0.0, %v2705
    %v2707 = vpop.f32.mrb[0].mxu0
    %v2708 = vpop.f32.mrb[0].mxu0
    %v2709 = vadd.f32 0.0, %v2708
    %v2710 = vpop.f32.mrb[0].mxu0
    %2711 = vmatprep.mubr.bf16.mxu0 0
    %2712 = vmatmul.mubr.bf16.gmra.mrb[0].mxu0 %v2618
    %v2713 = vpop.f32.mrb[0].mxu0
    %v2714 = vadd.f32 0.0, %v2713
    %v2715 = vpop.f32.mrb[0].mxu0
    %v2716 = vpop.f32.mrb[0].mxu0
    %v2717 = vadd.f32 0.0, %v2716
    %v2718 = vpop.f32.mrb[0].mxu0
    %2719 = vmatprep.mubr.bf16.mxu0 0
    %2720 = vmatmul.mubr.bf16.gmra.mrb[0].mxu0 %v2619
    %v2721 = vpop.f32.mrb[0].mxu0
    %v2722 = vadd.f32 0.0, %v2721
    %v2723 = vpop.f32.mrb[0].mxu0
    %v2724 = vpop.f32.mrb[0].mxu0
    %v2725 = vadd.f32 0.0, %v2724
    %v2726 = vpop.f32.mrb[0].mxu0
    %2727 = vmatprep.mubr.bf16.mxu0 0
    %2728 = vmatmul.mubr.bf16.gmra.mrb[0].mxu0 %v2620
    %v2729 = vpop.f32.mrb[0].mxu0
    %v2730 = vadd.f32 0.0, %v2729
    %v2731 = vpop.f32.mrb[0].mxu0
    %v2732 = vpop.f32.mrb[0].mxu0
    %v2733 = vadd.f32 0.0, %v2732
    %v2734 = vpop.f32.mrb[0].mxu0
    %2735 = vmatprep.mubr.bf16.mxu0 0
    %2736 = vmatmul.mubr.bf16.gmra.mrb[0].mxu0 %v2621
    %v2737 = vpop.f32.mrb[0].mxu0
    %v2738 = vadd.f32 0.0, %v2737
    %v2739 = vpop.f32.mrb[0].mxu0
    %v2740 = vpop.f32.mrb[0].mxu0
    %v2741 = vadd.f32 0.0, %v2740
    %v2742 = vpop.f32.mrb[0].mxu0
    %2743 = vmatprep.mubr.bf16.mxu0 0
    %2744 = vmatmul.mubr.bf16.gmra.mrb[0].mxu0 %v2622
    %v2745 = vpop.f32.mrb[0].mxu0
    %v2746 = vadd.f32 0.0, %v2745
    %v2747 = vpop.f32.mrb[0].mxu0
    %v2748 = vpop.f32.mrb[0].mxu0
    %v2749 = vadd.f32 0.0, %v2748
    %v2750 = vpop.f32.mrb[0].mxu0
    %2751 = vdwg.mxu0
    %v2752 = vadd.f32 %v2244, %v2690
    %v2753 = vadd.f32 %v2245, %v2693
    %v2754 = vadd.f32 %v2246, %v2698
    %v2755 = vadd.f32 %v2247, %v2701
    %v2756 = vadd.f32 %v2248, %v2706
    %v2757 = vadd.f32 %v2249, %v2709
    %v2758 = vadd.f32 %v2250, %v2714
    %v2759 = vadd.f32 %v2251, %v2717
    %v2760 = vadd.f32 %v2252, %v2722
    %v2761 = vadd.f32 %v2253, %v2725
    %v2762 = vadd.f32 %v2254, %v2730
    %v2763 = vadd.f32 %v2255, %v2733
    %v2764 = vadd.f32 %v2256, %v2738
    %v2765 = vadd.f32 %v2257, %v2741
    %v2766 = vadd.f32 %v2258, %v2746
    %v2767 = vadd.f32 %v2259, %v2749
    %v2768 = vpack.c.bf16 %v2753, %v2752
    %v2769 = vpack.c.bf16 %v2755, %v2754
    %v2770 = vpack.c.bf16 %v2757, %v2756
    %v2771 = vpack.c.bf16 %v2759, %v2758
    %v2772 = vpack.c.bf16 %v2761, %v2760
    %v2773 = vpack.c.bf16 %v2763, %v2762
    %v2774 = vpack.c.bf16 %v2765, %v2764
    %v2775 = vpack.c.bf16 %v2767, %v2766
    %v2776 = vld [vmem:[%s8] sm:$0xf]
    %v2777 = vld [vmem:[%s8 + $0x4] sm:$0xf]
    %v2778 = vld [vmem:[%s8 + $0x8] sm:$0xf]
    %v2779 = vld [vmem:[%s8 + $0xc] sm:$0xf]
    %v2780 = vld [vmem:[%s9] sm:$0x1]
    %v2782 = vlaneseq
    %v2783 = vshrl.u32 %v2782, 7
    %v2784 = vsub.s32 0, %v2783
    %v2785 = vrot.slane %v2780, %v2784
    %v2791 = vunpack.c.l.b16 %v2776
    %v2792 = vunpack.c.l.b16 %v2777
    %v2793 = vunpack.c.l.b16 %v2778
    %v2794 = vunpack.c.l.b16 %v2779
    %v2795 = vpack.c.b16 %v2792, %v2791
    %v2796 = vpack.c.b16 %v2794, %v2793
    %v2800 = vsel %vm614, %v2768, 0
    %v2803 = vsel %vm614, %v2769, 0
    %v2806 = vsel %vm614, %v2770, 0
    %v2809 = vsel %vm614, %v2771, 0
    %v2812 = vsel %vm614, %v2772, 0
    %v2815 = vsel %vm614, %v2773, 0
    %v2818 = vsel %vm614, %v2774, 0
    %v2821 = vsel %vm614, %v2775, 0
    %2823 = vmatprep.subr.bf16.mxu0 0
    %2824 = vmatpush1.bf16.msra.mxu0 %v2795
    %2825 = vmatprep.subr.bf16.mxu0 0
    %2826 = vmatpush1.bf16.msra.mxu0 %v2796
    %2827 = vmatprep.subr.bf16.mxu0 0
    %2828 = vmatpush1.bf16.msra.mxu0 0
    %2829 = vmatprep.subr.bf16.mxu0 0
    %2830 = vmatpush1.bf16.msra.mxu0 0
    %2831 = vmatprep.subr.bf16.mxu0 0
    %2832 = vmatpush1.bf16.msra.mxu0 0
    %2833 = vmatprep.subr.bf16.mxu0 0
    %2834 = vmatpush1.bf16.msra.mxu0 0
    %2835 = vmatprep.subr.bf16.mxu0 0
    %2836 = vmatpush1.bf16.msra.mxu0 0
    %2837 = vmatprep.subr.bf16.mxu0 0
    %2838 = vmatpush1.bf16.msra.mxu0 0
    %2839 = vmatprep.subr.bf16.mxu0 0
    %2840 = vmatpush1.bf16.msra.mxu0 0
    %2841 = vmatprep.subr.bf16.mxu0 0
    %2842 = vmatpush1.bf16.msra.mxu0 0
    %2843 = vmatprep.subr.bf16.mxu0 0
    %2844 = vmatpush1.bf16.msra.mxu0 0
    %2845 = vmatprep.subr.bf16.mxu0 0
    %2846 = vmatpush1.bf16.msra.mxu0 0
    %2847 = vmatprep.subr.bf16.mxu0 0
    %2848 = vmatpush1.bf16.msra.mxu0 0
    %2849 = vmatprep.subr.bf16.mxu0 0
    %2850 = vmatpush1.bf16.msra.mxu0 0
    %2851 = vmatprep.subr.bf16.mxu0 0
    %2852 = vmatpush1.bf16.msra.mxu0 0
    %2853 = vmatprep.subr.bf16.mxu0 0
    %2854 = vmatpush1.bf16.msra.mxu0 0
    %2855 = vmatprep.mubr.bf16.mxu0 0
    %2856 = vmatmul.mubr.bf16.gmra.mrb[0].mxu0 %v2800
    %v2857 = vpop.f32.mrb[0].mxu0
    %v2858 = vadd.f32 %v2785, %v2857
    %v2859 = vpop.f32.mrb[0].mxu0
    %v2860 = vpop.f32.mrb[0].mxu0
    %v2861 = vadd.f32 %v2785, %v2860
    %v2862 = vpop.f32.mrb[0].mxu0
    %2863 = vmatprep.mubr.bf16.mxu0 0
    %2864 = vmatmul.mubr.bf16.gmra.mrb[0].mxu0 %v2803
    %v2865 = vpop.f32.mrb[0].mxu0
    %v2866 = vadd.f32 %v2785, %v2865
    %v2867 = vpop.f32.mrb[0].mxu0
    %v2868 = vpop.f32.mrb[0].mxu0
    %v2869 = vadd.f32 %v2785, %v2868
    %v2870 = vpop.f32.mrb[0].mxu0
    %2871 = vmatprep.mubr.bf16.mxu0 0
    %2872 = vmatmul.mubr.bf16.gmra.mrb[0].mxu0 %v2806
    %v2873 = vpop.f32.mrb[0].mxu0
    %v2874 = vadd.f32 %v2785, %v2873
    %v2875 = vpop.f32.mrb[0].mxu0
    %v2876 = vpop.f32.mrb[0].mxu0
    %v2877 = vadd.f32 %v2785, %v2876
    %v2878 = vpop.f32.mrb[0].mxu0
    %2879 = vmatprep.mubr.bf16.mxu0 0
    %2880 = vmatmul.mubr.bf16.gmra.mrb[0].mxu0 %v2809
    %v2881 = vpop.f32.mrb[0].mxu0
    %v2882 = vadd.f32 %v2785, %v2881
    %v2883 = vpop.f32.mrb[0].mxu0
    %v2884 = vpop.f32.mrb[0].mxu0
    %v2885 = vadd.f32 %v2785, %v2884
    %v2886 = vpop.f32.mrb[0].mxu0
    %2887 = vmatprep.mubr.bf16.mxu0 0
    %2888 = vmatmul.mubr.bf16.gmra.mrb[0].mxu0 %v2812
    %v2889 = vpop.f32.mrb[0].mxu0
    %v2890 = vadd.f32 %v2785, %v2889
    %v2891 = vpop.f32.mrb[0].mxu0
    %v2892 = vpop.f32.mrb[0].mxu0
    %v2893 = vadd.f32 %v2785, %v2892
    %v2894 = vpop.f32.mrb[0].mxu0
    %2895 = vmatprep.mubr.bf16.mxu0 0
    %2896 = vmatmul.mubr.bf16.gmra.mrb[0].mxu0 %v2815
    %v2897 = vpop.f32.mrb[0].mxu0
    %v2898 = vadd.f32 %v2785, %v2897
    %v2899 = vpop.f32.mrb[0].mxu0
    %v2900 = vpop.f32.mrb[0].mxu0
    %v2901 = vadd.f32 %v2785, %v2900
    %v2902 = vpop.f32.mrb[0].mxu0
    %2903 = vmatprep.mubr.bf16.mxu0 0
    %2904 = vmatmul.mubr.bf16.gmra.mrb[0].mxu0 %v2818
    %v2905 = vpop.f32.mrb[0].mxu0
    %v2906 = vadd.f32 %v2785, %v2905
    %v2907 = vpop.f32.mrb[0].mxu0
    %v2908 = vpop.f32.mrb[0].mxu0
    %v2909 = vadd.f32 %v2785, %v2908
    %v2910 = vpop.f32.mrb[0].mxu0
    %2911 = vmatprep.mubr.bf16.mxu0 0
    %2912 = vmatmul.mubr.bf16.gmra.mrb[0].mxu0 %v2821
    %v2913 = vpop.f32.mrb[0].mxu0
    %v2914 = vadd.f32 %v2785, %v2913
    %v2915 = vpop.f32.mrb[0].mxu0
    %v2916 = vpop.f32.mrb[0].mxu0
    %v2917 = vadd.f32 %v2785, %v2916
    %v2918 = vpop.f32.mrb[0].mxu0
    %2919 = vdwg.mxu0
    %v2920 = vadd.f32 %v521, %v2858
    %v2921 = vadd.f32 %v524, %v2861
    %v2922 = vadd.f32 %v529, %v2866
    %v2923 = vadd.f32 %v532, %v2869
    %v2924 = vadd.f32 %v537, %v2874
    %v2925 = vadd.f32 %v540, %v2877
    %v2926 = vadd.f32 %v545, %v2882
    %v2927 = vadd.f32 %v548, %v2885
    %v2928 = vadd.f32 %v553, %v2890
    %v2929 = vadd.f32 %v556, %v2893
    %v2930 = vadd.f32 %v561, %v2898
    %v2931 = vadd.f32 %v564, %v2901
    %v2932 = vadd.f32 %v569, %v2906
    %v2933 = vadd.f32 %v572, %v2909
    %v2934 = vadd.f32 %v577, %v2914
    %v2935 = vadd.f32 %v580, %v2917
    %v2936 = vld [vmem:[%s10] sm:$0x3]
    %v2937 = vsel %vm614, %v2920, 0.0
    %2938 = vadd.xlane.f32.xlu0 %v2937
    %v2939 = vpop.xlane.xlu0 %2938
    %v2940 = vsel %vm614, %v2921, 0.0
    %2941 = vadd.xlane.f32.xlu0 %v2940
    %v2942 = vpop.xlane.xlu0 %2941
    %v2943 = vsel %vm614, %v2922, 0.0
    %2944 = vadd.xlane.f32.xlu0 %v2943
    %v2945 = vpop.xlane.xlu0 %2944
    %v2946 = vsel %vm614, %v2923, 0.0
    %2947 = vadd.xlane.f32.xlu0 %v2946
    %v2948 = vpop.xlane.xlu0 %2947
    %v2949 = vsel %vm614, %v2924, 0.0
    %2950 = vadd.xlane.f32.xlu0 %v2949
    %v2951 = vpop.xlane.xlu0 %2950
    %v2952 = vsel %vm614, %v2925, 0.0
    %2953 = vadd.xlane.f32.xlu0 %v2952
    %v2954 = vpop.xlane.xlu0 %2953
    %v2955 = vsel %vm614, %v2926, 0.0
    %2956 = vadd.xlane.f32.xlu0 %v2955
    %v2957 = vpop.xlane.xlu0 %2956
    %v2958 = vsel %vm614, %v2927, 0.0
    %2959 = vadd.xlane.f32.xlu0 %v2958
    %v2960 = vpop.xlane.xlu0 %2959
    %v2961 = vsel %vm614, %v2928, 0.0
    %2962 = vadd.xlane.f32.xlu0 %v2961
    %v2963 = vpop.xlane.xlu0 %2962
    %v2964 = vsel %vm614, %v2929, 0.0
    %2965 = vadd.xlane.f32.xlu0 %v2964
    %v2966 = vpop.xlane.xlu0 %2965
    %v2967 = vsel %vm614, %v2930, 0.0
    %2968 = vadd.xlane.f32.xlu0 %v2967
    %v2969 = vpop.xlane.xlu0 %2968
    %v2970 = vsel %vm614, %v2931, 0.0
    %2971 = vadd.xlane.f32.xlu0 %v2970
    %v2972 = vpop.xlane.xlu0 %2971
    %v2973 = vsel %vm614, %v2932, 0.0
    %2974 = vadd.xlane.f32.xlu0 %v2973
    %v2975 = vpop.xlane.xlu0 %2974
    %v2976 = vsel %vm614, %v2933, 0.0
    %2977 = vadd.xlane.f32.xlu0 %v2976
    %v2978 = vpop.xlane.xlu0 %2977
    %v2979 = vsel %vm614, %v2934, 0.0
    %2980 = vadd.xlane.f32.xlu0 %v2979
    %v2981 = vpop.xlane.xlu0 %2980
    %v2982 = vsel %vm614, %v2935, 0.0
    %2983 = vadd.xlane.f32.xlu0 %v2982
    %v2984 = vpop.xlane.xlu0 %2983
    %v2985 = vrcp.pop 32.0
    %v2986 = vmul.f32 %v2939, %v2985
    %v2987 = vmul.f32 %v2942, %v2985
    %v2988 = vmul.f32 %v2945, %v2985
    %v2989 = vmul.f32 %v2948, %v2985
    %v2990 = vmul.f32 %v2951, %v2985
    %v2991 = vmul.f32 %v2954, %v2985
    %v2992 = vmul.f32 %v2957, %v2985
    %v2993 = vmul.f32 %v2960, %v2985
    %v2994 = vmul.f32 %v2963, %v2985
    %v2995 = vmul.f32 %v2966, %v2985
    %v2996 = vmul.f32 %v2969, %v2985
    %v2997 = vmul.f32 %v2972, %v2985
    %v2998 = vmul.f32 %v2975, %v2985
    %v2999 = vmul.f32 %v2978, %v2985
    %v3000 = vmul.f32 %v2981, %v2985
    %v3001 = vmul.f32 %v2984, %v2985
    %v3002 = vsub.f32 %v2920, %v2986
    %v3003 = vsub.f32 %v2921, %v2987
    %v3004 = vsub.f32 %v2922, %v2988
    %v3005 = vsub.f32 %v2923, %v2989
    %v3006 = vsub.f32 %v2924, %v2990
    %v3007 = vsub.f32 %v2925, %v2991
    %v3008 = vsub.f32 %v2926, %v2992
    %v3009 = vsub.f32 %v2927, %v2993
    %v3010 = vsub.f32 %v2928, %v2994
    %v3011 = vsub.f32 %v2929, %v2995
    %v3012 = vsub.f32 %v2930, %v2996
    %v3013 = vsub.f32 %v2931, %v2997
    %v3014 = vsub.f32 %v2932, %v2998
    %v3015 = vsub.f32 %v2933, %v2999
    %v3016 = vsub.f32 %v2934, %v3000
    %v3017 = vsub.f32 %v2935, %v3001
    %v3018 = vmul.f32 %v3002, %v3002
    %v3019 = vmul.f32 %v3003, %v3003
    %v3020 = vmul.f32 %v3004, %v3004
    %v3021 = vmul.f32 %v3005, %v3005
    %v3022 = vmul.f32 %v3006, %v3006
    %v3023 = vmul.f32 %v3007, %v3007
    %v3024 = vmul.f32 %v3008, %v3008
    %v3025 = vmul.f32 %v3009, %v3009
    %v3026 = vmul.f32 %v3010, %v3010
    %v3027 = vmul.f32 %v3011, %v3011
    %v3028 = vmul.f32 %v3012, %v3012
    %v3029 = vmul.f32 %v3013, %v3013
    %v3030 = vmul.f32 %v3014, %v3014
    %v3031 = vmul.f32 %v3015, %v3015
    %v3032 = vmul.f32 %v3016, %v3016
    %v3033 = vmul.f32 %v3017, %v3017
    %v3034 = vsel %vm614, %v3018, 0.0
    %3035 = vadd.xlane.f32.xlu0 %v3034
    %v3036 = vpop.xlane.xlu0 %3035
    %v3037 = vsel %vm614, %v3019, 0.0
    %3038 = vadd.xlane.f32.xlu0 %v3037
    %v3039 = vpop.xlane.xlu0 %3038
    %v3040 = vsel %vm614, %v3020, 0.0
    %3041 = vadd.xlane.f32.xlu0 %v3040
    %v3042 = vpop.xlane.xlu0 %3041
    %v3043 = vsel %vm614, %v3021, 0.0
    %3044 = vadd.xlane.f32.xlu0 %v3043
    %v3045 = vpop.xlane.xlu0 %3044
    %v3046 = vsel %vm614, %v3022, 0.0
    %3047 = vadd.xlane.f32.xlu0 %v3046
    %v3048 = vpop.xlane.xlu0 %3047
    %v3049 = vsel %vm614, %v3023, 0.0
    %3050 = vadd.xlane.f32.xlu0 %v3049
    %v3051 = vpop.xlane.xlu0 %3050
    %v3052 = vsel %vm614, %v3024, 0.0
    %3053 = vadd.xlane.f32.xlu0 %v3052
    %v3054 = vpop.xlane.xlu0 %3053
    %v3055 = vsel %vm614, %v3025, 0.0
    %3056 = vadd.xlane.f32.xlu0 %v3055
    %v3057 = vpop.xlane.xlu0 %3056
    %v3058 = vsel %vm614, %v3026, 0.0
    %3059 = vadd.xlane.f32.xlu0 %v3058
    %v3060 = vpop.xlane.xlu0 %3059
    %v3061 = vsel %vm614, %v3027, 0.0
    %3062 = vadd.xlane.f32.xlu0 %v3061
    %v3063 = vpop.xlane.xlu0 %3062
    %v3064 = vsel %vm614, %v3028, 0.0
    %3065 = vadd.xlane.f32.xlu0 %v3064
    %v3066 = vpop.xlane.xlu0 %3065
    %v3067 = vsel %vm614, %v3029, 0.0
    %3068 = vadd.xlane.f32.xlu0 %v3067
    %v3069 = vpop.xlane.xlu0 %3068
    %v3070 = vsel %vm614, %v3030, 0.0
    %3071 = vadd.xlane.f32.xlu0 %v3070
    %v3072 = vpop.xlane.xlu0 %3071
    %v3073 = vsel %vm614, %v3031, 0.0
    %3074 = vadd.xlane.f32.xlu0 %v3073
    %v3075 = vpop.xlane.xlu0 %3074
    %v3076 = vsel %vm614, %v3032, 0.0
    %3077 = vadd.xlane.f32.xlu0 %v3076
    %v3078 = vpop.xlane.xlu0 %3077
    %v3079 = vsel %vm614, %v3033, 0.0
    %3080 = vadd.xlane.f32.xlu0 %v3079
    %v3081 = vpop.xlane.xlu0 %3080
    %v3082 = vmul.f32 %v3036, %v2985
    %v3083 = vmul.f32 %v3039, %v2985
    %v3084 = vmul.f32 %v3042, %v2985
    %v3085 = vmul.f32 %v3045, %v2985
    %v3086 = vmul.f32 %v3048, %v2985
    %v3087 = vmul.f32 %v3051, %v2985
    %v3088 = vmul.f32 %v3054, %v2985
    %v3089 = vmul.f32 %v3057, %v2985
    %v3090 = vmul.f32 %v3060, %v2985
    %v3091 = vmul.f32 %v3063, %v2985
    %v3092 = vmul.f32 %v3066, %v2985
    %v3093 = vmul.f32 %v3069, %v2985
    %v3094 = vmul.f32 %v3072, %v2985
    %v3095 = vmul.f32 %v3075, %v2985
    %v3096 = vmul.f32 %v3078, %v2985
    %v3097 = vmul.f32 %v3081, %v2985
    %v3098 = vadd.f32 %v3082, 1e-05
    %v3099 = vadd.f32 %v3083, 1e-05
    %v3100 = vadd.f32 %v3084, 1e-05
    %v3101 = vadd.f32 %v3085, 1e-05
    %v3102 = vadd.f32 %v3086, 1e-05
    %v3103 = vadd.f32 %v3087, 1e-05
    %v3104 = vadd.f32 %v3088, 1e-05
    %v3105 = vadd.f32 %v3089, 1e-05
    %v3106 = vadd.f32 %v3090, 1e-05
    %v3107 = vadd.f32 %v3091, 1e-05
    %v3108 = vadd.f32 %v3092, 1e-05
    %v3109 = vadd.f32 %v3093, 1e-05
    %v3110 = vadd.f32 %v3094, 1e-05
    %v3111 = vadd.f32 %v3095, 1e-05
    %v3112 = vadd.f32 %v3096, 1e-05
    %v3113 = vadd.f32 %v3097, 1e-05
    %v3114 = vrsqrt.pop %v3098
    %v3115 = vrsqrt.pop %v3099
    %v3116 = vrsqrt.pop %v3100
    %v3117 = vrsqrt.pop %v3101
    %v3118 = vrsqrt.pop %v3102
    %v3119 = vrsqrt.pop %v3103
    %v3120 = vrsqrt.pop %v3104
    %v3121 = vrsqrt.pop %v3105
    %v3122 = vrsqrt.pop %v3106
    %v3123 = vrsqrt.pop %v3107
    %v3124 = vrsqrt.pop %v3108
    %v3125 = vrsqrt.pop %v3109
    %v3126 = vrsqrt.pop %v3110
    %v3127 = vrsqrt.pop %v3111
    %v3128 = vrsqrt.pop %v3112
    %v3129 = vrsqrt.pop %v3113
    %v3130 = vmul.f32 %v3002, %v3114
    %v3131 = vmul.f32 %v3003, %v3115
    %v3132 = vmul.f32 %v3004, %v3116
    %v3133 = vmul.f32 %v3005, %v3117
    %v3134 = vmul.f32 %v3006, %v3118
    %v3135 = vmul.f32 %v3007, %v3119
    %v3136 = vmul.f32 %v3008, %v3120
    %v3137 = vmul.f32 %v3009, %v3121
    %v3138 = vmul.f32 %v3010, %v3122
    %v3139 = vmul.f32 %v3011, %v3123
    %v3140 = vmul.f32 %v3012, %v3124
    %v3141 = vmul.f32 %v3013, %v3125
    %v3142 = vmul.f32 %v3014, %v3126
    %v3143 = vmul.f32 %v3015, %v3127
    %v3144 = vmul.f32 %v3016, %v3128
    %v3145 = vmul.f32 %v3017, %v3129
    %v3146 = vlaneseq
    %v3147 = vshrl.u32 %v3146, 7
    %v3148 = vsub.s32 0, %v3147
    %v3149 = vrot.slane %v2936, %v3148
    %v3150 = vmul.f32 %v3130, %v3149
    %v3151 = vmul.f32 %v3131, %v3149
    %v3152 = vmul.f32 %v3132, %v3149
    %v3153 = vmul.f32 %v3133, %v3149
    %v3154 = vmul.f32 %v3134, %v3149
    %v3155 = vmul.f32 %v3135, %v3149
    %v3156 = vmul.f32 %v3136, %v3149
    %v3157 = vmul.f32 %v3137, %v3149
    %v3158 = vmul.f32 %v3138, %v3149
    %v3159 = vmul.f32 %v3139, %v3149
    %v3160 = vmul.f32 %v3140, %v3149
    %v3161 = vmul.f32 %v3141, %v3149
    %v3162 = vmul.f32 %v3142, %v3149
    %v3163 = vmul.f32 %v3143, %v3149
    %v3164 = vmul.f32 %v3144, %v3149
    %v3165 = vmul.f32 %v3145, %v3149
    %v3166 = vlaneseq
    %v3167 = vshrl.u32 %v3166, 7
    %v3168 = vsub.s32 1, %v3167
    %v3169 = vrot.slane %v2936, %v3168
    %v3170 = vadd.f32 %v3150, %v3169
    %v3171 = vadd.f32 %v3151, %v3169
    %v3172 = vadd.f32 %v3152, %v3169
    %v3173 = vadd.f32 %v3153, %v3169
    %v3174 = vadd.f32 %v3154, %v3169
    %v3175 = vadd.f32 %v3155, %v3169
    %v3176 = vadd.f32 %v3156, %v3169
    %v3177 = vadd.f32 %v3157, %v3169
    %v3178 = vadd.f32 %v3158, %v3169
    %v3179 = vadd.f32 %v3159, %v3169
    %v3180 = vadd.f32 %v3160, %v3169
    %v3181 = vadd.f32 %v3161, %v3169
    %v3182 = vadd.f32 %v3162, %v3169
    %v3183 = vadd.f32 %v3163, %v3169
    %v3184 = vadd.f32 %v3164, %v3169
    %v3185 = vadd.f32 %v3165, %v3169
    %v3186 = vpack.c.bf16 %v3171, %v3170
    %v3187 = vpack.c.bf16 %v3173, %v3172
    %v3188 = vpack.c.bf16 %v3175, %v3174
    %v3189 = vpack.c.bf16 %v3177, %v3176
    %v3190 = vpack.c.bf16 %v3179, %v3178
    %v3191 = vpack.c.bf16 %v3181, %v3180
    %v3192 = vpack.c.bf16 %v3183, %v3182
    %v3193 = vpack.c.bf16 %v3185, %v3184
    %v3194 = vld [vmem:[%s11] sm:$0xf]
    %v3195 = vld [vmem:[%s11 + $0x4] sm:$0xf]
    %v3196 = vld [vmem:[%s11 + $0x8] sm:$0xf]
    %v3197 = vld [vmem:[%s11 + $0xc] sm:$0xf]
    %v3198 = vld [vmem:[%s12] sm:$0x1]
    %v3200 = vlaneseq
    %v3201 = vshrl.u32 %v3200, 7
    %v3202 = vsub.s32 0, %v3201
    %v3203 = vrot.slane %v3198, %v3202
    %v3209 = vunpack.c.l.b16 %v3194
    %v3210 = vunpack.c.l.b16 %v3195
    %v3211 = vunpack.c.l.b16 %v3196
    %v3212 = vunpack.c.l.b16 %v3197
    %v3213 = vpack.c.b16 %v3210, %v3209
    %v3214 = vpack.c.b16 %v3212, %v3211
    %v3218 = vsel %vm614, %v3186, 0
    %v3221 = vsel %vm614, %v3187, 0
    %v3224 = vsel %vm614, %v3188, 0
    %v3227 = vsel %vm614, %v3189, 0
    %v3230 = vsel %vm614, %v3190, 0
    %v3233 = vsel %vm614, %v3191, 0
    %v3236 = vsel %vm614, %v3192, 0
    %v3239 = vsel %vm614, %v3193, 0
    %3241 = vmatprep.subr.bf16.mxu0 0
    %3242 = vmatpush1.bf16.msra.mxu0 %v3213
    %3243 = vmatprep.subr.bf16.mxu0 0
    %3244 = vmatpush1.bf16.msra.mxu0 %v3214
    %3245 = vmatprep.subr.bf16.mxu0 0
    %3246 = vmatpush1.bf16.msra.mxu0 0
    %3247 = vmatprep.subr.bf16.mxu0 0
    %3248 = vmatpush1.bf16.msra.mxu0 0
    %3249 = vmatprep.subr.bf16.mxu0 0
    %3250 = vmatpush1.bf16.msra.mxu0 0
    %3251 = vmatprep.subr.bf16.mxu0 0
    %3252 = vmatpush1.bf16.msra.mxu0 0
    %3253 = vmatprep.subr.bf16.mxu0 0
    %3254 = vmatpush1.bf16.msra.mxu0 0
    %3255 = vmatprep.subr.bf16.mxu0 0
    %3256 = vmatpush1.bf16.msra.mxu0 0
    %3257 = vmatprep.subr.bf16.mxu0 0
    %3258 = vmatpush1.bf16.msra.mxu0 0
    %3259 = vmatprep.subr.bf16.mxu0 0
    %3260 = vmatpush1.bf16.msra.mxu0 0
    %3261 = vmatprep.subr.bf16.mxu0 0
    %3262 = vmatpush1.bf16.msra.mxu0 0
    %3263 = vmatprep.subr.bf16.mxu0 0
    %3264 = vmatpush1.bf16.msra.mxu0 0
    %3265 = vmatprep.subr.bf16.mxu0 0
    %3266 = vmatpush1.bf16.msra.mxu0 0
    %3267 = vmatprep.subr.bf16.mxu0 0
    %3268 = vmatpush1.bf16.msra.mxu0 0
    %3269 = vmatprep.subr.bf16.mxu0 0
    %3270 = vmatpush1.bf16.msra.mxu0 0
    %3271 = vmatprep.subr.bf16.mxu0 0
    %3272 = vmatpush1.bf16.msra.mxu0 0
    %3273 = vmatprep.mubr.bf16.mxu0 0
    %3274 = vmatmul.mubr.bf16.gmra.mrb[0].mxu0 %v3218
    %v3275 = vpop.f32.mrb[0].mxu0
    %v3276 = vadd.f32 %v3203, %v3275
    %v3277 = vpop.f32.mrb[0].mxu0
    %v3278 = vpop.f32.mrb[0].mxu0
    %v3279 = vadd.f32 %v3203, %v3278
    %v3280 = vpop.f32.mrb[0].mxu0
    %3281 = vmatprep.mubr.bf16.mxu0 0
    %3282 = vmatmul.mubr.bf16.gmra.mrb[0].mxu0 %v3221
    %v3283 = vpop.f32.mrb[0].mxu0
    %v3284 = vadd.f32 %v3203, %v3283
    %v3285 = vpop.f32.mrb[0].mxu0
    %v3286 = vpop.f32.mrb[0].mxu0
    %v3287 = vadd.f32 %v3203, %v3286
    %v3288 = vpop.f32.mrb[0].mxu0
    %3289 = vmatprep.mubr.bf16.mxu0 0
    %3290 = vmatmul.mubr.bf16.gmra.mrb[0].mxu0 %v3224
    %v3291 = vpop.f32.mrb[0].mxu0
    %v3292 = vadd.f32 %v3203, %v3291
    %v3293 = vpop.f32.mrb[0].mxu0
    %v3294 = vpop.f32.mrb[0].mxu0
    %v3295 = vadd.f32 %v3203, %v3294
    %v3296 = vpop.f32.mrb[0].mxu0
    %3297 = vmatprep.mubr.bf16.mxu0 0
    %3298 = vmatmul.mubr.bf16.gmra.mrb[0].mxu0 %v3227
    %v3299 = vpop.f32.mrb[0].mxu0
    %v3300 = vadd.f32 %v3203, %v3299
    %v3301 = vpop.f32.mrb[0].mxu0
    %v3302 = vpop.f32.mrb[0].mxu0
    %v3303 = vadd.f32 %v3203, %v3302
    %v3304 = vpop.f32.mrb[0].mxu0
    %3305 = vmatprep.mubr.bf16.mxu0 0
    %3306 = vmatmul.mubr.bf16.gmra.mrb[0].mxu0 %v3230
    %v3307 = vpop.f32.mrb[0].mxu0
    %v3308 = vadd.f32 %v3203, %v3307
    %v3309 = vpop.f32.mrb[0].mxu0
    %v3310 = vpop.f32.mrb[0].mxu0
    %v3311 = vadd.f32 %v3203, %v3310
    %v3312 = vpop.f32.mrb[0].mxu0
    %3313 = vmatprep.mubr.bf16.mxu0 0
    %3314 = vmatmul.mubr.bf16.gmra.mrb[0].mxu0 %v3233
    %v3315 = vpop.f32.mrb[0].mxu0
    %v3316 = vadd.f32 %v3203, %v3315
    %v3317 = vpop.f32.mrb[0].mxu0
    %v3318 = vpop.f32.mrb[0].mxu0
    %v3319 = vadd.f32 %v3203, %v3318
    %v3320 = vpop.f32.mrb[0].mxu0
    %3321 = vmatprep.mubr.bf16.mxu0 0
    %3322 = vmatmul.mubr.bf16.gmra.mrb[0].mxu0 %v3236
    %v3323 = vpop.f32.mrb[0].mxu0
    %v3324 = vadd.f32 %v3203, %v3323
    %v3325 = vpop.f32.mrb[0].mxu0
    %v3326 = vpop.f32.mrb[0].mxu0
    %v3327 = vadd.f32 %v3203, %v3326
    %v3328 = vpop.f32.mrb[0].mxu0
    %3329 = vmatprep.mubr.bf16.mxu0 0
    %3330 = vmatmul.mubr.bf16.gmra.mrb[0].mxu0 %v3239
    %v3331 = vpop.f32.mrb[0].mxu0
    %v3332 = vadd.f32 %v3203, %v3331
    %v3333 = vpop.f32.mrb[0].mxu0
    %v3334 = vpop.f32.mrb[0].mxu0
    %v3335 = vadd.f32 %v3203, %v3334
    %v3336 = vpop.f32.mrb[0].mxu0
    %3337 = vdwg.mxu0
    %v3338 = vmax.f32 %v3276, 0.0
    %v3339 = vmax.f32 %v3279, 0.0
    %v3340 = vmax.f32 %v3284, 0.0
    %v3341 = vmax.f32 %v3287, 0.0
    %v3342 = vmax.f32 %v3292, 0.0
    %v3343 = vmax.f32 %v3295, 0.0
    %v3344 = vmax.f32 %v3300, 0.0
    %v3345 = vmax.f32 %v3303, 0.0
    %v3346 = vmax.f32 %v3308, 0.0
    %v3347 = vmax.f32 %v3311, 0.0
    %v3348 = vmax.f32 %v3316, 0.0
    %v3349 = vmax.f32 %v3319, 0.0
    %v3350 = vmax.f32 %v3324, 0.0
    %v3351 = vmax.f32 %v3327, 0.0
    %v3352 = vmax.f32 %v3332, 0.0
    %v3353 = vmax.f32 %v3335, 0.0
    %v3354 = vpack.c.bf16 %v3339, %v3338
    %v3355 = vpack.c.bf16 %v3341, %v3340
    %v3356 = vpack.c.bf16 %v3343, %v3342
    %v3357 = vpack.c.bf16 %v3345, %v3344
    %v3358 = vpack.c.bf16 %v3347, %v3346
    %v3359 = vpack.c.bf16 %v3349, %v3348
    %v3360 = vpack.c.bf16 %v3351, %v3350
    %v3361 = vpack.c.bf16 %v3353, %v3352
    %v3362 = vld [vmem:[%s13] sm:$0xf]
    %v3363 = vld [vmem:[%s13 + $0x4] sm:$0xf]
    %v3364 = vld [vmem:[%s13 + $0x8] sm:$0xf]
    %v3365 = vld [vmem:[%s13 + $0xc] sm:$0xf]
    %v3366 = vld [vmem:[%s13 + $0x10] sm:$0xf]
    %v3367 = vld [vmem:[%s13 + $0x14] sm:$0xf]
    %v3368 = vld [vmem:[%s13 + $0x18] sm:$0xf]
    %v3369 = vld [vmem:[%s13 + $0x1c] sm:$0xf]
    %v3370 = vld [vmem:[%s14] sm:$0x1]
    %v3372 = vlaneseq
    %v3373 = vshrl.u32 %v3372, 7
    %v3374 = vsub.s32 0, %v3373
    %v3375 = vrot.slane %v3370, %v3374
    %v3385 = vunpack.c.l.b16 %v3362
    %v3386 = vunpack.c.l.b16 %v3363
    %v3387 = vunpack.c.l.b16 %v3364
    %v3388 = vunpack.c.l.b16 %v3365
    %v3389 = vunpack.c.l.b16 %v3366
    %v3390 = vunpack.c.l.b16 %v3367
    %v3391 = vunpack.c.l.b16 %v3368
    %v3392 = vunpack.c.l.b16 %v3369
    %v3393 = vpack.c.b16 %v3386, %v3385
    %v3394 = vpack.c.b16 %v3388, %v3387
    %v3395 = vpack.c.b16 %v3390, %v3389
    %v3396 = vpack.c.b16 %v3392, %v3391
    %vm3401 = vcmask 523264
    %v3403 = vsel %vm3401, %v3354, 0
    %v3406 = vsel %vm3401, %v3355, 0
    %v3409 = vsel %vm3401, %v3356, 0
    %v3412 = vsel %vm3401, %v3357, 0
    %v3415 = vsel %vm3401, %v3358, 0
    %v3418 = vsel %vm3401, %v3359, 0
    %v3421 = vsel %vm3401, %v3360, 0
    %v3424 = vsel %vm3401, %v3361, 0
    %3426 = vmatprep.subr.bf16.mxu0 0
    %3427 = vmatpush1.bf16.msra.mxu0 %v3393
    %3428 = vmatprep.subr.bf16.mxu0 0
    %3429 = vmatpush1.bf16.msra.mxu0 %v3394
    %3430 = vmatprep.subr.bf16.mxu0 0
    %3431 = vmatpush1.bf16.msra.mxu0 %v3395
    %3432 = vmatprep.subr.bf16.mxu0 0
    %3433 = vmatpush1.bf16.msra.mxu0 %v3396
    %3434 = vmatprep.subr.bf16.mxu0 0
    %3435 = vmatpush1.bf16.msra.mxu0 0
    %3436 = vmatprep.subr.bf16.mxu0 0
    %3437 = vmatpush1.bf16.msra.mxu0 0
    %3438 = vmatprep.subr.bf16.mxu0 0
    %3439 = vmatpush1.bf16.msra.mxu0 0
    %3440 = vmatprep.subr.bf16.mxu0 0
    %3441 = vmatpush1.bf16.msra.mxu0 0
    %3442 = vmatprep.subr.bf16.mxu0 0
    %3443 = vmatpush1.bf16.msra.mxu0 0
    %3444 = vmatprep.subr.bf16.mxu0 0
    %3445 = vmatpush1.bf16.msra.mxu0 0
    %3446 = vmatprep.subr.bf16.mxu0 0
    %3447 = vmatpush1.bf16.msra.mxu0 0
    %3448 = vmatprep.subr.bf16.mxu0 0
    %3449 = vmatpush1.bf16.msra.mxu0 0
    %3450 = vmatprep.subr.bf16.mxu0 0
    %3451 = vmatpush1.bf16.msra.mxu0 0
    %3452 = vmatprep.subr.bf16.mxu0 0
    %3453 = vmatpush1.bf16.msra.mxu0 0
    %3454 = vmatprep.subr.bf16.mxu0 0
    %3455 = vmatpush1.bf16.msra.mxu0 0
    %3456 = vmatprep.subr.bf16.mxu0 0
    %3457 = vmatpush1.bf16.msra.mxu0 0
    %3458 = vmatprep.mubr.bf16.mxu0 0
    %3459 = vmatmul.mubr.bf16.gmra.mrb[0].mxu0 %v3403
    %v3460 = vpop.f32.mrb[0].mxu0
    %v3461 = vadd.f32 %v3375, %v3460
    %v3462 = vpop.f32.mrb[0].mxu0
    %v3463 = vpop.f32.mrb[0].mxu0
    %v3464 = vadd.f32 %v3375, %v3463
    %v3465 = vpop.f32.mrb[0].mxu0
    %3466 = vmatprep.mubr.bf16.mxu0 0
    %3467 = vmatmul.mubr.bf16.gmra.mrb[0].mxu0 %v3406
    %v3468 = vpop.f32.mrb[0].mxu0
    %v3469 = vadd.f32 %v3375, %v3468
    %v3470 = vpop.f32.mrb[0].mxu0
    %v3471 = vpop.f32.mrb[0].mxu0
    %v3472 = vadd.f32 %v3375, %v3471
    %v3473 = vpop.f32.mrb[0].mxu0
    %3474 = vmatprep.mubr.bf16.mxu0 0
    %3475 = vmatmul.mubr.bf16.gmra.mrb[0].mxu0 %v3409
    %v3476 = vpop.f32.mrb[0].mxu0
    %v3477 = vadd.f32 %v3375, %v3476
    %v3478 = vpop.f32.mrb[0].mxu0
    %v3479 = vpop.f32.mrb[0].mxu0
    %v3480 = vadd.f32 %v3375, %v3479
    %v3481 = vpop.f32.mrb[0].mxu0
    %3482 = vmatprep.mubr.bf16.mxu0 0
    %3483 = vmatmul.mubr.bf16.gmra.mrb[0].mxu0 %v3412
    %v3484 = vpop.f32.mrb[0].mxu0
    %v3485 = vadd.f32 %v3375, %v3484
    %v3486 = vpop.f32.mrb[0].mxu0
    %v3487 = vpop.f32.mrb[0].mxu0
    %v3488 = vadd.f32 %v3375, %v3487
    %v3489 = vpop.f32.mrb[0].mxu0
    %3490 = vmatprep.mubr.bf16.mxu0 0
    %3491 = vmatmul.mubr.bf16.gmra.mrb[0].mxu0 %v3415
    %v3492 = vpop.f32.mrb[0].mxu0
    %v3493 = vadd.f32 %v3375, %v3492
    %v3494 = vpop.f32.mrb[0].mxu0
    %v3495 = vpop.f32.mrb[0].mxu0
    %v3496 = vadd.f32 %v3375, %v3495
    %v3497 = vpop.f32.mrb[0].mxu0
    %3498 = vmatprep.mubr.bf16.mxu0 0
    %3499 = vmatmul.mubr.bf16.gmra.mrb[0].mxu0 %v3418
    %v3500 = vpop.f32.mrb[0].mxu0
    %v3501 = vadd.f32 %v3375, %v3500
    %v3502 = vpop.f32.mrb[0].mxu0
    %v3503 = vpop.f32.mrb[0].mxu0
    %v3504 = vadd.f32 %v3375, %v3503
    %v3505 = vpop.f32.mrb[0].mxu0
    %3506 = vmatprep.mubr.bf16.mxu0 0
    %3507 = vmatmul.mubr.bf16.gmra.mrb[0].mxu0 %v3421
    %v3508 = vpop.f32.mrb[0].mxu0
    %v3509 = vadd.f32 %v3375, %v3508
    %v3510 = vpop.f32.mrb[0].mxu0
    %v3511 = vpop.f32.mrb[0].mxu0
    %v3512 = vadd.f32 %v3375, %v3511
    %v3513 = vpop.f32.mrb[0].mxu0
    %3514 = vmatprep.mubr.bf16.mxu0 0
    %3515 = vmatmul.mubr.bf16.gmra.mrb[0].mxu0 %v3424
    %v3516 = vpop.f32.mrb[0].mxu0
    %v3517 = vadd.f32 %v3375, %v3516
    %v3518 = vpop.f32.mrb[0].mxu0
    %v3519 = vpop.f32.mrb[0].mxu0
    %v3520 = vadd.f32 %v3375, %v3519
    %v3521 = vpop.f32.mrb[0].mxu0
    %3522 = vdwg.mxu0
    %v3523 = vadd.f32 %v3170, %v3461
    %v3524 = vadd.f32 %v3171, %v3464
    %v3525 = vadd.f32 %v3172, %v3469
    %v3526 = vadd.f32 %v3173, %v3472
    %v3527 = vadd.f32 %v3174, %v3477
    %v3528 = vadd.f32 %v3175, %v3480
    %v3529 = vadd.f32 %v3176, %v3485
    %v3530 = vadd.f32 %v3177, %v3488
    %v3531 = vadd.f32 %v3178, %v3493
    %v3532 = vadd.f32 %v3179, %v3496
    %v3533 = vadd.f32 %v3180, %v3501
    %v3534 = vadd.f32 %v3181, %v3504
    %v3535 = vadd.f32 %v3182, %v3509
    %v3536 = vadd.f32 %v3183, %v3512
    %v3537 = vadd.f32 %v3184, %v3517
    %v3538 = vadd.f32 %v3185, %v3520
    %v3539 = vld [vmem:[%s15] sm:$0x3]
    %v3540 = vsel %vm614, %v3523, 0.0
    %3541 = vadd.xlane.f32.xlu0 %v3540
    %v3542 = vpop.xlane.xlu0 %3541
    %v3543 = vsel %vm614, %v3524, 0.0
    %3544 = vadd.xlane.f32.xlu0 %v3543
    %v3545 = vpop.xlane.xlu0 %3544
    %v3546 = vsel %vm614, %v3525, 0.0
    %3547 = vadd.xlane.f32.xlu0 %v3546
    %v3548 = vpop.xlane.xlu0 %3547
    %v3549 = vsel %vm614, %v3526, 0.0
    %3550 = vadd.xlane.f32.xlu0 %v3549
    %v3551 = vpop.xlane.xlu0 %3550
    %v3552 = vsel %vm614, %v3527, 0.0
    %3553 = vadd.xlane.f32.xlu0 %v3552
    %v3554 = vpop.xlane.xlu0 %3553
    %v3555 = vsel %vm614, %v3528, 0.0
    %3556 = vadd.xlane.f32.xlu0 %v3555
    %v3557 = vpop.xlane.xlu0 %3556
    %v3558 = vsel %vm614, %v3529, 0.0
    %3559 = vadd.xlane.f32.xlu0 %v3558
    %v3560 = vpop.xlane.xlu0 %3559
    %v3561 = vsel %vm614, %v3530, 0.0
    %3562 = vadd.xlane.f32.xlu0 %v3561
    %v3563 = vpop.xlane.xlu0 %3562
    %v3564 = vsel %vm614, %v3531, 0.0
    %3565 = vadd.xlane.f32.xlu0 %v3564
    %v3566 = vpop.xlane.xlu0 %3565
    %v3567 = vsel %vm614, %v3532, 0.0
    %3568 = vadd.xlane.f32.xlu0 %v3567
    %v3569 = vpop.xlane.xlu0 %3568
    %v3570 = vsel %vm614, %v3533, 0.0
    %3571 = vadd.xlane.f32.xlu0 %v3570
    %v3572 = vpop.xlane.xlu0 %3571
    %v3573 = vsel %vm614, %v3534, 0.0
    %3574 = vadd.xlane.f32.xlu0 %v3573
    %v3575 = vpop.xlane.xlu0 %3574
    %v3576 = vsel %vm614, %v3535, 0.0
    %3577 = vadd.xlane.f32.xlu0 %v3576
    %v3578 = vpop.xlane.xlu0 %3577
    %v3579 = vsel %vm614, %v3536, 0.0
    %3580 = vadd.xlane.f32.xlu0 %v3579
    %v3581 = vpop.xlane.xlu0 %3580
    %v3582 = vsel %vm614, %v3537, 0.0
    %3583 = vadd.xlane.f32.xlu0 %v3582
    %v3584 = vpop.xlane.xlu0 %3583
    %v3585 = vsel %vm614, %v3538, 0.0
    %3586 = vadd.xlane.f32.xlu0 %v3585
    %v3587 = vpop.xlane.xlu0 %3586
    %v3588 = vmul.f32 %v3542, %v2985
    %v3589 = vmul.f32 %v3545, %v2985
    %v3590 = vmul.f32 %v3548, %v2985
    %v3591 = vmul.f32 %v3551, %v2985
    %v3592 = vmul.f32 %v3554, %v2985
    %v3593 = vmul.f32 %v3557, %v2985
    %v3594 = vmul.f32 %v3560, %v2985
    %v3595 = vmul.f32 %v3563, %v2985
    %v3596 = vmul.f32 %v3566, %v2985
    %v3597 = vmul.f32 %v3569, %v2985
    %v3598 = vmul.f32 %v3572, %v2985
    %v3599 = vmul.f32 %v3575, %v2985
    %v3600 = vmul.f32 %v3578, %v2985
    %v3601 = vmul.f32 %v3581, %v2985
    %v3602 = vmul.f32 %v3584, %v2985
    %v3603 = vmul.f32 %v3587, %v2985
    %v3604 = vsub.f32 %v3523, %v3588
    %v3605 = vsub.f32 %v3524, %v3589
    %v3606 = vsub.f32 %v3525, %v3590
    %v3607 = vsub.f32 %v3526, %v3591
    %v3608 = vsub.f32 %v3527, %v3592
    %v3609 = vsub.f32 %v3528, %v3593
    %v3610 = vsub.f32 %v3529, %v3594
    %v3611 = vsub.f32 %v3530, %v3595
    %v3612 = vsub.f32 %v3531, %v3596
    %v3613 = vsub.f32 %v3532, %v3597
    %v3614 = vsub.f32 %v3533, %v3598
    %v3615 = vsub.f32 %v3534, %v3599
    %v3616 = vsub.f32 %v3535, %v3600
    %v3617 = vsub.f32 %v3536, %v3601
    %v3618 = vsub.f32 %v3537, %v3602
    %v3619 = vsub.f32 %v3538, %v3603
    %v3620 = vmul.f32 %v3604, %v3604
    %v3621 = vmul.f32 %v3605, %v3605
    %v3622 = vmul.f32 %v3606, %v3606
    %v3623 = vmul.f32 %v3607, %v3607
    %v3624 = vmul.f32 %v3608, %v3608
    %v3625 = vmul.f32 %v3609, %v3609
    %v3626 = vmul.f32 %v3610, %v3610
    %v3627 = vmul.f32 %v3611, %v3611
    %v3628 = vmul.f32 %v3612, %v3612
    %v3629 = vmul.f32 %v3613, %v3613
    %v3630 = vmul.f32 %v3614, %v3614
    %v3631 = vmul.f32 %v3615, %v3615
    %v3632 = vmul.f32 %v3616, %v3616
    %v3633 = vmul.f32 %v3617, %v3617
    %v3634 = vmul.f32 %v3618, %v3618
    %v3635 = vmul.f32 %v3619, %v3619
    %v3636 = vsel %vm614, %v3620, 0.0
    %3637 = vadd.xlane.f32.xlu0 %v3636
    %v3638 = vpop.xlane.xlu0 %3637
    %v3639 = vsel %vm614, %v3621, 0.0
    %3640 = vadd.xlane.f32.xlu0 %v3639
    %v3641 = vpop.xlane.xlu0 %3640
    %v3642 = vsel %vm614, %v3622, 0.0
    %3643 = vadd.xlane.f32.xlu0 %v3642
    %v3644 = vpop.xlane.xlu0 %3643
    %v3645 = vsel %vm614, %v3623, 0.0
    %3646 = vadd.xlane.f32.xlu0 %v3645
    %v3647 = vpop.xlane.xlu0 %3646
    %v3648 = vsel %vm614, %v3624, 0.0
    %3649 = vadd.xlane.f32.xlu0 %v3648
    %v3650 = vpop.xlane.xlu0 %3649
    %v3651 = vsel %vm614, %v3625, 0.0
    %3652 = vadd.xlane.f32.xlu0 %v3651
    %v3653 = vpop.xlane.xlu0 %3652
    %v3654 = vsel %vm614, %v3626, 0.0
    %3655 = vadd.xlane.f32.xlu0 %v3654
    %v3656 = vpop.xlane.xlu0 %3655
    %v3657 = vsel %vm614, %v3627, 0.0
    %3658 = vadd.xlane.f32.xlu0 %v3657
    %v3659 = vpop.xlane.xlu0 %3658
    %v3660 = vsel %vm614, %v3628, 0.0
    %3661 = vadd.xlane.f32.xlu0 %v3660
    %v3662 = vpop.xlane.xlu0 %3661
    %v3663 = vsel %vm614, %v3629, 0.0
    %3664 = vadd.xlane.f32.xlu0 %v3663
    %v3665 = vpop.xlane.xlu0 %3664
    %v3666 = vsel %vm614, %v3630, 0.0
    %3667 = vadd.xlane.f32.xlu0 %v3666
    %v3668 = vpop.xlane.xlu0 %3667
    %v3669 = vsel %vm614, %v3631, 0.0
    %3670 = vadd.xlane.f32.xlu0 %v3669
    %v3671 = vpop.xlane.xlu0 %3670
    %v3672 = vsel %vm614, %v3632, 0.0
    %3673 = vadd.xlane.f32.xlu0 %v3672
    %v3674 = vpop.xlane.xlu0 %3673
    %v3675 = vsel %vm614, %v3633, 0.0
    %3676 = vadd.xlane.f32.xlu0 %v3675
    %v3677 = vpop.xlane.xlu0 %3676
    %v3678 = vsel %vm614, %v3634, 0.0
    %3679 = vadd.xlane.f32.xlu0 %v3678
    %v3680 = vpop.xlane.xlu0 %3679
    %v3681 = vsel %vm614, %v3635, 0.0
    %3682 = vadd.xlane.f32.xlu0 %v3681
    %v3683 = vpop.xlane.xlu0 %3682
    %v3684 = vmul.f32 %v3638, %v2985
    %v3685 = vmul.f32 %v3641, %v2985
    %v3686 = vmul.f32 %v3644, %v2985
    %v3687 = vmul.f32 %v3647, %v2985
    %v3688 = vmul.f32 %v3650, %v2985
    %v3689 = vmul.f32 %v3653, %v2985
    %v3690 = vmul.f32 %v3656, %v2985
    %v3691 = vmul.f32 %v3659, %v2985
    %v3692 = vmul.f32 %v3662, %v2985
    %v3693 = vmul.f32 %v3665, %v2985
    %v3694 = vmul.f32 %v3668, %v2985
    %v3695 = vmul.f32 %v3671, %v2985
    %v3696 = vmul.f32 %v3674, %v2985
    %v3697 = vmul.f32 %v3677, %v2985
    %v3698 = vmul.f32 %v3680, %v2985
    %v3699 = vmul.f32 %v3683, %v2985
    %v3700 = vadd.f32 %v3684, 1e-05
    %v3701 = vadd.f32 %v3685, 1e-05
    %v3702 = vadd.f32 %v3686, 1e-05
    %v3703 = vadd.f32 %v3687, 1e-05
    %v3704 = vadd.f32 %v3688, 1e-05
    %v3705 = vadd.f32 %v3689, 1e-05
    %v3706 = vadd.f32 %v3690, 1e-05
    %v3707 = vadd.f32 %v3691, 1e-05
    %v3708 = vadd.f32 %v3692, 1e-05
    %v3709 = vadd.f32 %v3693, 1e-05
    %v3710 = vadd.f32 %v3694, 1e-05
    %v3711 = vadd.f32 %v3695, 1e-05
    %v3712 = vadd.f32 %v3696, 1e-05
    %v3713 = vadd.f32 %v3697, 1e-05
    %v3714 = vadd.f32 %v3698, 1e-05
    %v3715 = vadd.f32 %v3699, 1e-05
    %v3716 = vrsqrt.pop %v3700
    %v3717 = vrsqrt.pop %v3701
    %v3718 = vrsqrt.pop %v3702
    %v3719 = vrsqrt.pop %v3703
    %v3720 = vrsqrt.pop %v3704
    %v3721 = vrsqrt.pop %v3705
    %v3722 = vrsqrt.pop %v3706
    %v3723 = vrsqrt.pop %v3707
    %v3724 = vrsqrt.pop %v3708
    %v3725 = vrsqrt.pop %v3709
    %v3726 = vrsqrt.pop %v3710
    %v3727 = vrsqrt.pop %v3711
    %v3728 = vrsqrt.pop %v3712
    %v3729 = vrsqrt.pop %v3713
    %v3730 = vrsqrt.pop %v3714
    %v3731 = vrsqrt.pop %v3715
    %v3732 = vmul.f32 %v3604, %v3716
    %v3733 = vmul.f32 %v3605, %v3717
    %v3734 = vmul.f32 %v3606, %v3718
    %v3735 = vmul.f32 %v3607, %v3719
    %v3736 = vmul.f32 %v3608, %v3720
    %v3737 = vmul.f32 %v3609, %v3721
    %v3738 = vmul.f32 %v3610, %v3722
    %v3739 = vmul.f32 %v3611, %v3723
    %v3740 = vmul.f32 %v3612, %v3724
    %v3741 = vmul.f32 %v3613, %v3725
    %v3742 = vmul.f32 %v3614, %v3726
    %v3743 = vmul.f32 %v3615, %v3727
    %v3744 = vmul.f32 %v3616, %v3728
    %v3745 = vmul.f32 %v3617, %v3729
    %v3746 = vmul.f32 %v3618, %v3730
    %v3747 = vmul.f32 %v3619, %v3731
    %v3748 = vlaneseq
    %v3749 = vshrl.u32 %v3748, 7
    %v3750 = vsub.s32 0, %v3749
    %v3751 = vrot.slane %v3539, %v3750
    %v3752 = vmul.f32 %v3732, %v3751
    %v3753 = vmul.f32 %v3733, %v3751
    %v3754 = vmul.f32 %v3734, %v3751
    %v3755 = vmul.f32 %v3735, %v3751
    %v3756 = vmul.f32 %v3736, %v3751
    %v3757 = vmul.f32 %v3737, %v3751
    %v3758 = vmul.f32 %v3738, %v3751
    %v3759 = vmul.f32 %v3739, %v3751
    %v3760 = vmul.f32 %v3740, %v3751
    %v3761 = vmul.f32 %v3741, %v3751
    %v3762 = vmul.f32 %v3742, %v3751
    %v3763 = vmul.f32 %v3743, %v3751
    %v3764 = vmul.f32 %v3744, %v3751
    %v3765 = vmul.f32 %v3745, %v3751
    %v3766 = vmul.f32 %v3746, %v3751
    %v3767 = vmul.f32 %v3747, %v3751
    %v3768 = vlaneseq
    %v3769 = vshrl.u32 %v3768, 7
    %v3770 = vsub.s32 1, %v3769
    %v3771 = vrot.slane %v3539, %v3770
    %v3772 = vadd.f32 %v3752, %v3771
    %v3773 = vadd.f32 %v3753, %v3771
    %v3774 = vadd.f32 %v3754, %v3771
    %v3775 = vadd.f32 %v3755, %v3771
    %v3776 = vadd.f32 %v3756, %v3771
    %v3777 = vadd.f32 %v3757, %v3771
    %v3778 = vadd.f32 %v3758, %v3771
    %v3779 = vadd.f32 %v3759, %v3771
    %v3780 = vadd.f32 %v3760, %v3771
    %v3781 = vadd.f32 %v3761, %v3771
    %v3782 = vadd.f32 %v3762, %v3771
    %v3783 = vadd.f32 %v3763, %v3771
    %v3784 = vadd.f32 %v3764, %v3771
    %v3785 = vadd.f32 %v3765, %v3771
    %v3786 = vadd.f32 %v3766, %v3771
    %v3787 = vadd.f32 %v3767, %v3771
    %v3788 = vpack.c.bf16 %v3773, %v3772
    %v3789 = vpack.c.bf16 %v3775, %v3774
    %v3790 = vpack.c.bf16 %v3777, %v3776
    %v3791 = vpack.c.bf16 %v3779, %v3778
    %v3792 = vpack.c.bf16 %v3781, %v3780
    %v3793 = vpack.c.bf16 %v3783, %v3782
    %v3794 = vpack.c.bf16 %v3785, %v3784
    %v3795 = vpack.c.bf16 %v3787, %v3786
    %s3796 = scalar_lea.vmem %s6, 16
    %v3797 = vld [vmem:[%s3796] sm:$0xf]
    %v3798 = vld [vmem:[%s3796 + $0x4] sm:$0xf]
    %v3799 = vld [vmem:[%s3796 + $0x8] sm:$0xf]
    %v3800 = vld [vmem:[%s3796 + $0xc] sm:$0xf]
    %s3801 = scalar_lea.vmem %s7, 1
    %v3802 = vld [vmem:[%s3801] sm:$0x1]
    %v3804 = vlaneseq
    %v3805 = vshrl.u32 %v3804, 7
    %v3806 = vsub.s32 0, %v3805
    %v3807 = vrot.slane %v3802, %v3806
    %v3813 = vunpack.c.l.b16 %v3797
    %v3814 = vunpack.c.l.b16 %v3798
    %v3815 = vunpack.c.l.b16 %v3799
    %v3816 = vunpack.c.l.b16 %v3800
    %v3817 = vpack.c.b16 %v3814, %v3813
    %v3818 = vpack.c.b16 %v3816, %v3815
    %v3822 = vsel %vm614, %v3788, 0
    %v3825 = vsel %vm614, %v3789, 0
    %v3828 = vsel %vm614, %v3790, 0
    %v3831 = vsel %vm614, %v3791, 0
    %v3834 = vsel %vm614, %v3792, 0
    %v3837 = vsel %vm614, %v3793, 0
    %v3840 = vsel %vm614, %v3794, 0
    %v3843 = vsel %vm614, %v3795, 0
    %3845 = vmatprep.subr.bf16.mxu0 0
    %3846 = vmatpush1.bf16.msra.mxu0 %v3817
    %3847 = vmatprep.subr.bf16.mxu0 0
    %3848 = vmatpush1.bf16.msra.mxu0 %v3818
    %3849 = vmatprep.subr.bf16.mxu0 0
    %3850 = vmatpush1.bf16.msra.mxu0 0
    %3851 = vmatprep.subr.bf16.mxu0 0
    %3852 = vmatpush1.bf16.msra.mxu0 0
    %3853 = vmatprep.subr.bf16.mxu0 0
    %3854 = vmatpush1.bf16.msra.mxu0 0
    %3855 = vmatprep.subr.bf16.mxu0 0
    %3856 = vmatpush1.bf16.msra.mxu0 0
    %3857 = vmatprep.subr.bf16.mxu0 0
    %3858 = vmatpush1.bf16.msra.mxu0 0
    %3859 = vmatprep.subr.bf16.mxu0 0
    %3860 = vmatpush1.bf16.msra.mxu0 0
    %3861 = vmatprep.subr.bf16.mxu0 0
    %3862 = vmatpush1.bf16.msra.mxu0 0
    %3863 = vmatprep.subr.bf16.mxu0 0
    %3864 = vmatpush1.bf16.msra.mxu0 0
    %3865 = vmatprep.subr.bf16.mxu0 0
    %3866 = vmatpush1.bf16.msra.mxu0 0
    %3867 = vmatprep.subr.bf16.mxu0 0
    %3868 = vmatpush1.bf16.msra.mxu0 0
    %3869 = vmatprep.subr.bf16.mxu0 0
    %3870 = vmatpush1.bf16.msra.mxu0 0
    %3871 = vmatprep.subr.bf16.mxu0 0
    %3872 = vmatpush1.bf16.msra.mxu0 0
    %3873 = vmatprep.subr.bf16.mxu0 0
    %3874 = vmatpush1.bf16.msra.mxu0 0
    %3875 = vmatprep.subr.bf16.mxu0 0
    %3876 = vmatpush1.bf16.msra.mxu0 0
    %3877 = vmatprep.mubr.bf16.mxu0 0
    %3878 = vmatmul.mubr.bf16.gmra.mrb[0].mxu0 %v3822
    %v3879 = vpop.f32.mrb[0].mxu0
    %v3880 = vadd.f32 %v3807, %v3879
    %v3881 = vpop.f32.mrb[0].mxu0
    %v3882 = vpop.f32.mrb[0].mxu0
    %v3883 = vadd.f32 %v3807, %v3882
    %v3884 = vpop.f32.mrb[0].mxu0
    %3885 = vmatprep.mubr.bf16.mxu0 0
    %3886 = vmatmul.mubr.bf16.gmra.mrb[0].mxu0 %v3825
    %v3887 = vpop.f32.mrb[0].mxu0
    %v3888 = vadd.f32 %v3807, %v3887
    %v3889 = vpop.f32.mrb[0].mxu0
    %v3890 = vpop.f32.mrb[0].mxu0
    %v3891 = vadd.f32 %v3807, %v3890
    %v3892 = vpop.f32.mrb[0].mxu0
    %3893 = vmatprep.mubr.bf16.mxu0 0
    %3894 = vmatmul.mubr.bf16.gmra.mrb[0].mxu0 %v3828
    %v3895 = vpop.f32.mrb[0].mxu0
    %v3896 = vadd.f32 %v3807, %v3895
    %v3897 = vpop.f32.mrb[0].mxu0
    %v3898 = vpop.f32.mrb[0].mxu0
    %v3899 = vadd.f32 %v3807, %v3898
    %v3900 = vpop.f32.mrb[0].mxu0
    %3901 = vmatprep.mubr.bf16.mxu0 0
    %3902 = vmatmul.mubr.bf16.gmra.mrb[0].mxu0 %v3831
    %v3903 = vpop.f32.mrb[0].mxu0
    %v3904 = vadd.f32 %v3807, %v3903
    %v3905 = vpop.f32.mrb[0].mxu0
    %v3906 = vpop.f32.mrb[0].mxu0
    %v3907 = vadd.f32 %v3807, %v3906
    %v3908 = vpop.f32.mrb[0].mxu0
    %3909 = vmatprep.mubr.bf16.mxu0 0
    %3910 = vmatmul.mubr.bf16.gmra.mrb[0].mxu0 %v3834
    %v3911 = vpop.f32.mrb[0].mxu0
    %v3912 = vadd.f32 %v3807, %v3911
    %v3913 = vpop.f32.mrb[0].mxu0
    %v3914 = vpop.f32.mrb[0].mxu0
    %v3915 = vadd.f32 %v3807, %v3914
    %v3916 = vpop.f32.mrb[0].mxu0
    %3917 = vmatprep.mubr.bf16.mxu0 0
    %3918 = vmatmul.mubr.bf16.gmra.mrb[0].mxu0 %v3837
    %v3919 = vpop.f32.mrb[0].mxu0
    %v3920 = vadd.f32 %v3807, %v3919
    %v3921 = vpop.f32.mrb[0].mxu0
    %v3922 = vpop.f32.mrb[0].mxu0
    %v3923 = vadd.f32 %v3807, %v3922
    %v3924 = vpop.f32.mrb[0].mxu0
    %3925 = vmatprep.mubr.bf16.mxu0 0
    %3926 = vmatmul.mubr.bf16.gmra.mrb[0].mxu0 %v3840
    %v3927 = vpop.f32.mrb[0].mxu0
    %v3928 = vadd.f32 %v3807, %v3927
    %v3929 = vpop.f32.mrb[0].mxu0
    %v3930 = vpop.f32.mrb[0].mxu0
    %v3931 = vadd.f32 %v3807, %v3930
    %v3932 = vpop.f32.mrb[0].mxu0
    %3933 = vmatprep.mubr.bf16.mxu0 0
    %3934 = vmatmul.mubr.bf16.gmra.mrb[0].mxu0 %v3843
    %v3935 = vpop.f32.mrb[0].mxu0
    %v3936 = vadd.f32 %v3807, %v3935
    %v3937 = vpop.f32.mrb[0].mxu0
    %v3938 = vpop.f32.mrb[0].mxu0
    %v3939 = vadd.f32 %v3807, %v3938
    %v3940 = vpop.f32.mrb[0].mxu0
    %3941 = vdwg.mxu0
    %v3942 = vmul.f32 %v3880, 0.35355338
    %v3943 = vmul.f32 %v3883, 0.35355338
    %v3944 = vmul.f32 %v3888, 0.35355338
    %v3945 = vmul.f32 %v3891, 0.35355338
    %v3946 = vmul.f32 %v3896, 0.35355338
    %v3947 = vmul.f32 %v3899, 0.35355338
    %v3948 = vmul.f32 %v3904, 0.35355338
    %v3949 = vmul.f32 %v3907, 0.35355338
    %v3950 = vmul.f32 %v3912, 0.35355338
    %v3951 = vmul.f32 %v3915, 0.35355338
    %v3952 = vmul.f32 %v3920, 0.35355338
    %v3953 = vmul.f32 %v3923, 0.35355338
    %v3954 = vmul.f32 %v3928, 0.35355338
    %v3955 = vmul.f32 %v3931, 0.35355338
    %v3956 = vmul.f32 %v3936, 0.35355338
    %v3957 = vmul.f32 %v3939, 0.35355338
    %v3958 = vpack.c.bf16 %v3943, %v3942
    %v3959 = vpack.c.bf16 %v3945, %v3944
    %v3960 = vpack.c.bf16 %v3947, %v3946
    %v3961 = vpack.c.bf16 %v3949, %v3948
    %v3962 = vpack.c.bf16 %v3951, %v3950
    %v3963 = vpack.c.bf16 %v3953, %v3952
    %v3964 = vpack.c.bf16 %v3955, %v3954
    %v3965 = vpack.c.bf16 %v3957, %v3956
    %v3966 = vpack.c.bf16 %v3883, %v3880
    %v3967 = vpack.c.bf16 %v3891, %v3888
    %v3968 = vpack.c.bf16 %v3899, %v3896
    %v3969 = vpack.c.bf16 %v3907, %v3904
    %v3970 = vpack.c.bf16 %v3915, %v3912
    %v3971 = vpack.c.bf16 %v3923, %v3920
    %v3972 = vpack.c.bf16 %v3931, %v3928
    %v3973 = vpack.c.bf16 %v3939, %v3936
    %3982 = vrot.lane.b32.xlu0 %v3966, 96
    %v3983 = vpop.permute.xlu0 %3982
    %3984 = vrot.lane.b32.xlu0 %v3967, 96
    %v3985 = vpop.permute.xlu0 %3984
    %3986 = vrot.lane.b32.xlu0 %v3968, 96
    %v3987 = vpop.permute.xlu0 %3986
    %3988 = vrot.lane.b32.xlu0 %v3969, 96
    %v3989 = vpop.permute.xlu0 %3988
    %3990 = vrot.lane.b32.xlu0 %v3970, 96
    %v3991 = vpop.permute.xlu0 %3990
    %3992 = vrot.lane.b32.xlu0 %v3971, 96
    %v3993 = vpop.permute.xlu0 %3992
    %3994 = vrot.lane.b32.xlu0 %v3972, 96
    %v3995 = vpop.permute.xlu0 %3994
    %3996 = vrot.lane.b32.xlu0 %v3973, 96
    %v3997 = vpop.permute.xlu0 %3996
    %v3999 = vsel %vm792, %v3958, 0
    %v4002 = vsel %vm792, %v3959, 0
    %v4005 = vsel %vm792, %v3960, 0
    %v4008 = vsel %vm792, %v3961, 0
    %v4011 = vsel %vm792, %v3962, 0
    %v4014 = vsel %vm792, %v3963, 0
    %v4017 = vsel %vm792, %v3964, 0
    %v4020 = vsel %vm792, %v3965, 0
    %v4023 = vsel %vm792, %v3983, 0
    %v4026 = vsel %vm792, %v3985, 0
    %v4029 = vsel %vm792, %v3987, 0
    %v4032 = vsel %vm792, %v3989, 0
    %v4035 = vsel %vm792, %v3991, 0
    %v4038 = vsel %vm792, %v3993, 0
    %v4041 = vsel %vm792, %v3995, 0
    %v4044 = vsel %vm792, %v3997, 0
    %4046 = vmatprep.subr.bf16.mxu0 0
    %4047 = vmatpush1.bf16.xpose.msra.mxu0 %v4023
    %4048 = vmatprep.subr.bf16.mxu0 0
    %4049 = vmatpush1.bf16.xpose.msra.mxu0 %v4026
    %4050 = vmatprep.subr.bf16.mxu0 0
    %4051 = vmatpush1.bf16.xpose.msra.mxu0 %v4029
    %4052 = vmatprep.subr.bf16.mxu0 0
    %4053 = vmatpush1.bf16.xpose.msra.mxu0 %v4032
    %4054 = vmatprep.subr.bf16.mxu0 0
    %4055 = vmatpush1.bf16.xpose.msra.mxu0 %v4035
    %4056 = vmatprep.subr.bf16.mxu0 0
    %4057 = vmatpush1.bf16.xpose.msra.mxu0 %v4038
    %4058 = vmatprep.subr.bf16.mxu0 0
    %4059 = vmatpush1.bf16.xpose.msra.mxu0 %v4041
    %4060 = vmatprep.subr.bf16.mxu0 0
    %4061 = vmatpush1.bf16.xpose.msra.mxu0 %v4044
    %4062 = vmatprep.subr.bf16.mxu0 0
    %4063 = vmatpush1.bf16.xpose.msra.mxu0 0
    %4064 = vmatprep.subr.bf16.mxu0 0
    %4065 = vmatpush1.bf16.xpose.msra.mxu0 0
    %4066 = vmatprep.subr.bf16.mxu0 0
    %4067 = vmatpush1.bf16.xpose.msra.mxu0 0
    %4068 = vmatprep.subr.bf16.mxu0 0
    %4069 = vmatpush1.bf16.xpose.msra.mxu0 0
    %4070 = vmatprep.subr.bf16.mxu0 0
    %4071 = vmatpush1.bf16.xpose.msra.mxu0 0
    %4072 = vmatprep.subr.bf16.mxu0 0
    %4073 = vmatpush1.bf16.xpose.msra.mxu0 0
    %4074 = vmatprep.subr.bf16.mxu0 0
    %4075 = vmatpush1.bf16.xpose.msra.mxu0 0
    %4076 = vmatprep.subr.bf16.mxu0 0
    %4077 = vmatpush1.bf16.xpose.msra.mxu0 0
    %4078 = vmatprep.mubr.bf16.mxu0 0
    %4079 = vmatmul.mubr.bf16.gmra.mrb[0].mxu0 %v3999
    %v4080 = vpop.f32.mrb[0].mxu0
    %v4081 = vadd.f32 %v69, %v4080
    %v4082 = vpop.f32.mrb[0].mxu0
    %v4083 = vpop.f32.mrb[0].mxu0
    %v4084 = vadd.f32 %v70, %v4083
    %v4085 = vpop.f32.mrb[0].mxu0
    %4086 = vmatprep.mubr.bf16.mxu0 0
    %4087 = vmatmul.mubr.bf16.gmra.mrb[0].mxu0 %v4002
    %v4088 = vpop.f32.mrb[0].mxu0
    %v4089 = vadd.f32 %v71, %v4088
    %v4090 = vpop.f32.mrb[0].mxu0
    %v4091 = vpop.f32.mrb[0].mxu0
    %v4092 = vadd.f32 %v72, %v4091
    %v4093 = vpop.f32.mrb[0].mxu0
    %4094 = vmatprep.mubr.bf16.mxu0 0
    %4095 = vmatmul.mubr.bf16.gmra.mrb[0].mxu0 %v4005
    %v4096 = vpop.f32.mrb[0].mxu0
    %v4097 = vadd.f32 %v73, %v4096
    %v4098 = vpop.f32.mrb[0].mxu0
    %v4099 = vpop.f32.mrb[0].mxu0
    %v4100 = vadd.f32 %v74, %v4099
    %v4101 = vpop.f32.mrb[0].mxu0
    %4102 = vmatprep.mubr.bf16.mxu0 0
    %4103 = vmatmul.mubr.bf16.gmra.mrb[0].mxu0 %v4008
    %v4104 = vpop.f32.mrb[0].mxu0
    %v4105 = vadd.f32 %v75, %v4104
    %v4106 = vpop.f32.mrb[0].mxu0
    %v4107 = vpop.f32.mrb[0].mxu0
    %v4108 = vadd.f32 %v76, %v4107
    %v4109 = vpop.f32.mrb[0].mxu0
    %4110 = vmatprep.mubr.bf16.mxu0 0
    %4111 = vmatmul.mubr.bf16.gmra.mrb[0].mxu0 %v4011
    %v4112 = vpop.f32.mrb[0].mxu0
    %v4113 = vadd.f32 %v77, %v4112
    %v4114 = vpop.f32.mrb[0].mxu0
    %v4115 = vpop.f32.mrb[0].mxu0
    %v4116 = vadd.f32 %v78, %v4115
    %v4117 = vpop.f32.mrb[0].mxu0
    %4118 = vmatprep.mubr.bf16.mxu0 0
    %4119 = vmatmul.mubr.bf16.gmra.mrb[0].mxu0 %v4014
    %v4120 = vpop.f32.mrb[0].mxu0
    %v4121 = vadd.f32 %v79, %v4120
    %v4122 = vpop.f32.mrb[0].mxu0
    %v4123 = vpop.f32.mrb[0].mxu0
    %v4124 = vadd.f32 %v80, %v4123
    %v4125 = vpop.f32.mrb[0].mxu0
    %4126 = vmatprep.mubr.bf16.mxu0 0
    %4127 = vmatmul.mubr.bf16.gmra.mrb[0].mxu0 %v4017
    %v4128 = vpop.f32.mrb[0].mxu0
    %v4129 = vadd.f32 %v81, %v4128
    %v4130 = vpop.f32.mrb[0].mxu0
    %v4131 = vpop.f32.mrb[0].mxu0
    %v4132 = vadd.f32 %v82, %v4131
    %v4133 = vpop.f32.mrb[0].mxu0
    %4134 = vmatprep.mubr.bf16.mxu0 0
    %4135 = vmatmul.mubr.bf16.gmra.mrb[0].mxu0 %v4020
    %v4136 = vpop.f32.mrb[0].mxu0
    %v4137 = vadd.f32 %v83, %v4136
    %v4138 = vpop.f32.mrb[0].mxu0
    %v4139 = vpop.f32.mrb[0].mxu0
    %v4140 = vadd.f32 %v84, %v4139
    %v4141 = vpop.f32.mrb[0].mxu0
    %4142 = vdwg.mxu0
    %4143 = vmax.xlane.f32.xlu0 %v4081
    %v4144 = vpop.xlane.xlu0 %4143
    %4145 = vmax.xlane.f32.xlu0 %v4084
    %v4146 = vpop.xlane.xlu0 %4145
    %4147 = vmax.xlane.f32.xlu0 %v4089
    %v4148 = vpop.xlane.xlu0 %4147
    %4149 = vmax.xlane.f32.xlu0 %v4092
    %v4150 = vpop.xlane.xlu0 %4149
    %4151 = vmax.xlane.f32.xlu0 %v4097
    %v4152 = vpop.xlane.xlu0 %4151
    %4153 = vmax.xlane.f32.xlu0 %v4100
    %v4154 = vpop.xlane.xlu0 %4153
    %4155 = vmax.xlane.f32.xlu0 %v4105
    %v4156 = vpop.xlane.xlu0 %4155
    %4157 = vmax.xlane.f32.xlu0 %v4108
    %v4158 = vpop.xlane.xlu0 %4157
    %4159 = vmax.xlane.f32.xlu0 %v4113
    %v4160 = vpop.xlane.xlu0 %4159
    %4161 = vmax.xlane.f32.xlu0 %v4116
    %v4162 = vpop.xlane.xlu0 %4161
    %4163 = vmax.xlane.f32.xlu0 %v4121
    %v4164 = vpop.xlane.xlu0 %4163
    %4165 = vmax.xlane.f32.xlu0 %v4124
    %v4166 = vpop.xlane.xlu0 %4165
    %4167 = vmax.xlane.f32.xlu0 %v4129
    %v4168 = vpop.xlane.xlu0 %4167
    %4169 = vmax.xlane.f32.xlu0 %v4132
    %v4170 = vpop.xlane.xlu0 %4169
    %4171 = vmax.xlane.f32.xlu0 %v4137
    %v4172 = vpop.xlane.xlu0 %4171
    %4173 = vmax.xlane.f32.xlu0 %v4140
    %v4174 = vpop.xlane.xlu0 %4173
    %v4175 = vsub.f32 %v4081, %v4144
    %v4176 = vsub.f32 %v4084, %v4146
    %v4177 = vsub.f32 %v4089, %v4148
    %v4178 = vsub.f32 %v4092, %v4150
    %v4179 = vsub.f32 %v4097, %v4152
    %v4180 = vsub.f32 %v4100, %v4154
    %v4181 = vsub.f32 %v4105, %v4156
    %v4182 = vsub.f32 %v4108, %v4158
    %v4183 = vsub.f32 %v4113, %v4160
    %v4184 = vsub.f32 %v4116, %v4162
    %v4185 = vsub.f32 %v4121, %v4164
    %v4186 = vsub.f32 %v4124, %v4166
    %v4187 = vsub.f32 %v4129, %v4168
    %v4188 = vsub.f32 %v4132, %v4170
    %v4189 = vsub.f32 %v4137, %v4172
    %v4190 = vsub.f32 %v4140, %v4174
    %v4191 = vmul.f32 %v4175, 1.442695
    %v4192 = vpow.pop %v4191
    %v4193 = vmul.f32 %v4176, 1.442695
    %v4194 = vpow.pop %v4193
    %v4195 = vmul.f32 %v4177, 1.442695
    %v4196 = vpow.pop %v4195
    %v4197 = vmul.f32 %v4178, 1.442695
    %v4198 = vpow.pop %v4197
    %v4199 = vmul.f32 %v4179, 1.442695
    %v4200 = vpow.pop %v4199
    %v4201 = vmul.f32 %v4180, 1.442695
    %v4202 = vpow.pop %v4201
    %v4203 = vmul.f32 %v4181, 1.442695
    %v4204 = vpow.pop %v4203
    %v4205 = vmul.f32 %v4182, 1.442695
    %v4206 = vpow.pop %v4205
    %v4207 = vmul.f32 %v4183, 1.442695
    %v4208 = vpow.pop %v4207
    %v4209 = vmul.f32 %v4184, 1.442695
    %v4210 = vpow.pop %v4209
    %v4211 = vmul.f32 %v4185, 1.442695
    %v4212 = vpow.pop %v4211
    %v4213 = vmul.f32 %v4186, 1.442695
    %v4214 = vpow.pop %v4213
    %v4215 = vmul.f32 %v4187, 1.442695
    %v4216 = vpow.pop %v4215
    %v4217 = vmul.f32 %v4188, 1.442695
    %v4218 = vpow.pop %v4217
    %v4219 = vmul.f32 %v4189, 1.442695
    %v4220 = vpow.pop %v4219
    %v4221 = vmul.f32 %v4190, 1.442695
    %v4222 = vpow.pop %v4221
    %4223 = vadd.xlane.f32.xlu0 %v4192
    %v4224 = vpop.xlane.xlu0 %4223
    %4225 = vadd.xlane.f32.xlu0 %v4194
    %v4226 = vpop.xlane.xlu0 %4225
    %4227 = vadd.xlane.f32.xlu0 %v4196
    %v4228 = vpop.xlane.xlu0 %4227
    %4229 = vadd.xlane.f32.xlu0 %v4198
    %v4230 = vpop.xlane.xlu0 %4229
    %4231 = vadd.xlane.f32.xlu0 %v4200
    %v4232 = vpop.xlane.xlu0 %4231
    %4233 = vadd.xlane.f32.xlu0 %v4202
    %v4234 = vpop.xlane.xlu0 %4233
    %4235 = vadd.xlane.f32.xlu0 %v4204
    %v4236 = vpop.xlane.xlu0 %4235
    %4237 = vadd.xlane.f32.xlu0 %v4206
    %v4238 = vpop.xlane.xlu0 %4237
    %4239 = vadd.xlane.f32.xlu0 %v4208
    %v4240 = vpop.xlane.xlu0 %4239
    %4241 = vadd.xlane.f32.xlu0 %v4210
    %v4242 = vpop.xlane.xlu0 %4241
    %4243 = vadd.xlane.f32.xlu0 %v4212
    %v4244 = vpop.xlane.xlu0 %4243
    %4245 = vadd.xlane.f32.xlu0 %v4214
    %v4246 = vpop.xlane.xlu0 %4245
    %4247 = vadd.xlane.f32.xlu0 %v4216
    %v4248 = vpop.xlane.xlu0 %4247
    %4249 = vadd.xlane.f32.xlu0 %v4218
    %v4250 = vpop.xlane.xlu0 %4249
    %4251 = vadd.xlane.f32.xlu0 %v4220
    %v4252 = vpop.xlane.xlu0 %4251
    %4253 = vadd.xlane.f32.xlu0 %v4222
    %v4254 = vpop.xlane.xlu0 %4253
    %v4255 = vrcp.pop %v4224
    %v4256 = vmul.f32 %v4192, %v4255
    %v4257 = vrcp.pop %v4226
    %v4258 = vmul.f32 %v4194, %v4257
    %v4259 = vrcp.pop %v4228
    %v4260 = vmul.f32 %v4196, %v4259
    %v4261 = vrcp.pop %v4230
    %v4262 = vmul.f32 %v4198, %v4261
    %v4263 = vrcp.pop %v4232
    %v4264 = vmul.f32 %v4200, %v4263
    %v4265 = vrcp.pop %v4234
    %v4266 = vmul.f32 %v4202, %v4265
    %v4267 = vrcp.pop %v4236
    %v4268 = vmul.f32 %v4204, %v4267
    %v4269 = vrcp.pop %v4238
    %v4270 = vmul.f32 %v4206, %v4269
    %v4271 = vrcp.pop %v4240
    %v4272 = vmul.f32 %v4208, %v4271
    %v4273 = vrcp.pop %v4242
    %v4274 = vmul.f32 %v4210, %v4273
    %v4275 = vrcp.pop %v4244
    %v4276 = vmul.f32 %v4212, %v4275
    %v4277 = vrcp.pop %v4246
    %v4278 = vmul.f32 %v4214, %v4277
    %v4279 = vrcp.pop %v4248
    %v4280 = vmul.f32 %v4216, %v4279
    %v4281 = vrcp.pop %v4250
    %v4282 = vmul.f32 %v4218, %v4281
    %v4283 = vrcp.pop %v4252
    %v4284 = vmul.f32 %v4220, %v4283
    %v4285 = vrcp.pop %v4254
    %v4286 = vmul.f32 %v4222, %v4285
    %v4287 = vmul.f32 %v3880, %v1089
    %v4288 = vmul.f32 %v3883, %v1089
    %v4289 = vmul.f32 %v3888, %v1089
    %v4290 = vmul.f32 %v3891, %v1089
    %v4291 = vmul.f32 %v3896, %v1089
    %v4292 = vmul.f32 %v3899, %v1089
    %v4293 = vmul.f32 %v3904, %v1089
    %v4294 = vmul.f32 %v3907, %v1089
    %v4295 = vmul.f32 %v3912, %v1089
    %v4296 = vmul.f32 %v3915, %v1089
    %v4297 = vmul.f32 %v3920, %v1089
    %v4298 = vmul.f32 %v3923, %v1089
    %v4299 = vmul.f32 %v3928, %v1089
    %v4300 = vmul.f32 %v3931, %v1089
    %v4301 = vmul.f32 %v3936, %v1089
    %v4302 = vmul.f32 %v3939, %v1089
    %v4303 = vpack.c.bf16 %v4288, %v4287
    %v4304 = vpack.c.bf16 %v4290, %v4289
    %v4305 = vpack.c.bf16 %v4292, %v4291
    %v4306 = vpack.c.bf16 %v4294, %v4293
    %v4307 = vpack.c.bf16 %v4296, %v4295
    %v4308 = vpack.c.bf16 %v4298, %v4297
    %v4309 = vpack.c.bf16 %v4300, %v4299
    %v4310 = vpack.c.bf16 %v4302, %v4301
    %v4311 = vpack.c.bf16 %v4258, %v4256
    %v4312 = vpack.c.bf16 %v4262, %v4260
    %v4313 = vpack.c.bf16 %v4266, %v4264
    %v4314 = vpack.c.bf16 %v4270, %v4268
    %v4315 = vpack.c.bf16 %v4274, %v4272
    %v4316 = vpack.c.bf16 %v4278, %v4276
    %v4317 = vpack.c.bf16 %v4282, %v4280
    %v4318 = vpack.c.bf16 %v4286, %v4284
    %4327 = vrot.lane.b32.xlu0 %v3958, 120
    %v4328 = vpop.permute.xlu0 %4327
    %4329 = vrot.lane.b32.xlu0 %v3959, 120
    %v4330 = vpop.permute.xlu0 %4329
    %4331 = vrot.lane.b32.xlu0 %v3960, 120
    %v4332 = vpop.permute.xlu0 %4331
    %4333 = vrot.lane.b32.xlu0 %v3961, 120
    %v4334 = vpop.permute.xlu0 %4333
    %4335 = vrot.lane.b32.xlu0 %v3962, 120
    %v4336 = vpop.permute.xlu0 %4335
    %4337 = vrot.lane.b32.xlu0 %v3963, 120
    %v4338 = vpop.permute.xlu0 %4337
    %4339 = vrot.lane.b32.xlu0 %v3964, 120
    %v4340 = vpop.permute.xlu0 %4339
    %4341 = vrot.lane.b32.xlu0 %v3965, 120
    %v4342 = vpop.permute.xlu0 %4341
    %4343 = vrot.lane.b32.xlu0 %v3966, 88
    %v4344 = vpop.permute.xlu0 %4343
    %4345 = vrot.lane.b32.xlu0 %v3967, 88
    %v4346 = vpop.permute.xlu0 %4345
    %4347 = vrot.lane.b32.xlu0 %v3968, 88
    %v4348 = vpop.permute.xlu0 %4347
    %4349 = vrot.lane.b32.xlu0 %v3969, 88
    %v4350 = vpop.permute.xlu0 %4349
    %4351 = vrot.lane.b32.xlu0 %v3970, 88
    %v4352 = vpop.permute.xlu0 %4351
    %4353 = vrot.lane.b32.xlu0 %v3971, 88
    %v4354 = vpop.permute.xlu0 %4353
    %4355 = vrot.lane.b32.xlu0 %v3972, 88
    %v4356 = vpop.permute.xlu0 %4355
    %4357 = vrot.lane.b32.xlu0 %v3973, 88
    %v4358 = vpop.permute.xlu0 %4357
    %v4360 = vsel %vm792, %v4328, 0
    %v4363 = vsel %vm792, %v4330, 0
    %v4366 = vsel %vm792, %v4332, 0
    %v4369 = vsel %vm792, %v4334, 0
    %v4372 = vsel %vm792, %v4336, 0
    %v4375 = vsel %vm792, %v4338, 0
    %v4378 = vsel %vm792, %v4340, 0
    %v4381 = vsel %vm792, %v4342, 0
    %v4384 = vsel %vm792, %v4344, 0
    %v4387 = vsel %vm792, %v4346, 0
    %v4390 = vsel %vm792, %v4348, 0
    %v4393 = vsel %vm792, %v4350, 0
    %v4396 = vsel %vm792, %v4352, 0
    %v4399 = vsel %vm792, %v4354, 0
    %v4402 = vsel %vm792, %v4356, 0
    %v4405 = vsel %vm792, %v4358, 0
    %4407 = vmatprep.subr.bf16.mxu0 0
    %4408 = vmatpush1.bf16.xpose.msra.mxu0 %v4384
    %4409 = vmatprep.subr.bf16.mxu0 0
    %4410 = vmatpush1.bf16.xpose.msra.mxu0 %v4387
    %4411 = vmatprep.subr.bf16.mxu0 0
    %4412 = vmatpush1.bf16.xpose.msra.mxu0 %v4390
    %4413 = vmatprep.subr.bf16.mxu0 0
    %4414 = vmatpush1.bf16.xpose.msra.mxu0 %v4393
    %4415 = vmatprep.subr.bf16.mxu0 0
    %4416 = vmatpush1.bf16.xpose.msra.mxu0 %v4396
    %4417 = vmatprep.subr.bf16.mxu0 0
    %4418 = vmatpush1.bf16.xpose.msra.mxu0 %v4399
    %4419 = vmatprep.subr.bf16.mxu0 0
    %4420 = vmatpush1.bf16.xpose.msra.mxu0 %v4402
    %4421 = vmatprep.subr.bf16.mxu0 0
    %4422 = vmatpush1.bf16.xpose.msra.mxu0 %v4405
    %4423 = vmatprep.subr.bf16.mxu0 0
    %4424 = vmatpush1.bf16.xpose.msra.mxu0 0
    %4425 = vmatprep.subr.bf16.mxu0 0
    %4426 = vmatpush1.bf16.xpose.msra.mxu0 0
    %4427 = vmatprep.subr.bf16.mxu0 0
    %4428 = vmatpush1.bf16.xpose.msra.mxu0 0
    %4429 = vmatprep.subr.bf16.mxu0 0
    %4430 = vmatpush1.bf16.xpose.msra.mxu0 0
    %4431 = vmatprep.subr.bf16.mxu0 0
    %4432 = vmatpush1.bf16.xpose.msra.mxu0 0
    %4433 = vmatprep.subr.bf16.mxu0 0
    %4434 = vmatpush1.bf16.xpose.msra.mxu0 0
    %4435 = vmatprep.subr.bf16.mxu0 0
    %4436 = vmatpush1.bf16.xpose.msra.mxu0 0
    %4437 = vmatprep.subr.bf16.mxu0 0
    %4438 = vmatpush1.bf16.xpose.msra.mxu0 0
    %4439 = vmatprep.mubr.bf16.mxu0 0
    %4440 = vmatmul.mubr.bf16.gmra.mrb[0].mxu0 %v4360
    %v4441 = vpop.f32.mrb[0].mxu0
    %v4442 = vadd.f32 %v69, %v4441
    %v4443 = vpop.f32.mrb[0].mxu0
    %v4444 = vpop.f32.mrb[0].mxu0
    %v4445 = vadd.f32 %v70, %v4444
    %v4446 = vpop.f32.mrb[0].mxu0
    %4447 = vmatprep.mubr.bf16.mxu0 0
    %4448 = vmatmul.mubr.bf16.gmra.mrb[0].mxu0 %v4363
    %v4449 = vpop.f32.mrb[0].mxu0
    %v4450 = vadd.f32 %v71, %v4449
    %v4451 = vpop.f32.mrb[0].mxu0
    %v4452 = vpop.f32.mrb[0].mxu0
    %v4453 = vadd.f32 %v72, %v4452
    %v4454 = vpop.f32.mrb[0].mxu0
    %4455 = vmatprep.mubr.bf16.mxu0 0
    %4456 = vmatmul.mubr.bf16.gmra.mrb[0].mxu0 %v4366
    %v4457 = vpop.f32.mrb[0].mxu0
    %v4458 = vadd.f32 %v73, %v4457
    %v4459 = vpop.f32.mrb[0].mxu0
    %v4460 = vpop.f32.mrb[0].mxu0
    %v4461 = vadd.f32 %v74, %v4460
    %v4462 = vpop.f32.mrb[0].mxu0
    %4463 = vmatprep.mubr.bf16.mxu0 0
    %4464 = vmatmul.mubr.bf16.gmra.mrb[0].mxu0 %v4369
    %v4465 = vpop.f32.mrb[0].mxu0
    %v4466 = vadd.f32 %v75, %v4465
    %v4467 = vpop.f32.mrb[0].mxu0
    %v4468 = vpop.f32.mrb[0].mxu0
    %v4469 = vadd.f32 %v76, %v4468
    %v4470 = vpop.f32.mrb[0].mxu0
    %4471 = vmatprep.mubr.bf16.mxu0 0
    %4472 = vmatmul.mubr.bf16.gmra.mrb[0].mxu0 %v4372
    %v4473 = vpop.f32.mrb[0].mxu0
    %v4474 = vadd.f32 %v77, %v4473
    %v4475 = vpop.f32.mrb[0].mxu0
    %v4476 = vpop.f32.mrb[0].mxu0
    %v4477 = vadd.f32 %v78, %v4476
    %v4478 = vpop.f32.mrb[0].mxu0
    %4479 = vmatprep.mubr.bf16.mxu0 0
    %4480 = vmatmul.mubr.bf16.gmra.mrb[0].mxu0 %v4375
    %v4481 = vpop.f32.mrb[0].mxu0
    %v4482 = vadd.f32 %v79, %v4481
    %v4483 = vpop.f32.mrb[0].mxu0
    %v4484 = vpop.f32.mrb[0].mxu0
    %v4485 = vadd.f32 %v80, %v4484
    %v4486 = vpop.f32.mrb[0].mxu0
    %4487 = vmatprep.mubr.bf16.mxu0 0
    %4488 = vmatmul.mubr.bf16.gmra.mrb[0].mxu0 %v4378
    %v4489 = vpop.f32.mrb[0].mxu0
    %v4490 = vadd.f32 %v81, %v4489
    %v4491 = vpop.f32.mrb[0].mxu0
    %v4492 = vpop.f32.mrb[0].mxu0
    %v4493 = vadd.f32 %v82, %v4492
    %v4494 = vpop.f32.mrb[0].mxu0
    %4495 = vmatprep.mubr.bf16.mxu0 0
    %4496 = vmatmul.mubr.bf16.gmra.mrb[0].mxu0 %v4381
    %v4497 = vpop.f32.mrb[0].mxu0
    %v4498 = vadd.f32 %v83, %v4497
    %v4499 = vpop.f32.mrb[0].mxu0
    %v4500 = vpop.f32.mrb[0].mxu0
    %v4501 = vadd.f32 %v84, %v4500
    %v4502 = vpop.f32.mrb[0].mxu0
    %4503 = vdwg.mxu0
    %4504 = vmax.xlane.f32.xlu0 %v4442
    %v4505 = vpop.xlane.xlu0 %4504
    %4506 = vmax.xlane.f32.xlu0 %v4445
    %v4507 = vpop.xlane.xlu0 %4506
    %4508 = vmax.xlane.f32.xlu0 %v4450
    %v4509 = vpop.xlane.xlu0 %4508
    %4510 = vmax.xlane.f32.xlu0 %v4453
    %v4511 = vpop.xlane.xlu0 %4510
    %4512 = vmax.xlane.f32.xlu0 %v4458
    %v4513 = vpop.xlane.xlu0 %4512
    %4514 = vmax.xlane.f32.xlu0 %v4461
    %v4515 = vpop.xlane.xlu0 %4514
    %4516 = vmax.xlane.f32.xlu0 %v4466
    %v4517 = vpop.xlane.xlu0 %4516
    %4518 = vmax.xlane.f32.xlu0 %v4469
    %v4519 = vpop.xlane.xlu0 %4518
    %4520 = vmax.xlane.f32.xlu0 %v4474
    %v4521 = vpop.xlane.xlu0 %4520
    %4522 = vmax.xlane.f32.xlu0 %v4477
    %v4523 = vpop.xlane.xlu0 %4522
    %4524 = vmax.xlane.f32.xlu0 %v4482
    %v4525 = vpop.xlane.xlu0 %4524
    %4526 = vmax.xlane.f32.xlu0 %v4485
    %v4527 = vpop.xlane.xlu0 %4526
    %4528 = vmax.xlane.f32.xlu0 %v4490
    %v4529 = vpop.xlane.xlu0 %4528
    %4530 = vmax.xlane.f32.xlu0 %v4493
    %v4531 = vpop.xlane.xlu0 %4530
    %4532 = vmax.xlane.f32.xlu0 %v4498
    %v4533 = vpop.xlane.xlu0 %4532
    %4534 = vmax.xlane.f32.xlu0 %v4501
    %v4535 = vpop.xlane.xlu0 %4534
    %v4536 = vsub.f32 %v4442, %v4505
    %v4537 = vsub.f32 %v4445, %v4507
    %v4538 = vsub.f32 %v4450, %v4509
    %v4539 = vsub.f32 %v4453, %v4511
    %v4540 = vsub.f32 %v4458, %v4513
    %v4541 = vsub.f32 %v4461, %v4515
    %v4542 = vsub.f32 %v4466, %v4517
    %v4543 = vsub.f32 %v4469, %v4519
    %v4544 = vsub.f32 %v4474, %v4521
    %v4545 = vsub.f32 %v4477, %v4523
    %v4546 = vsub.f32 %v4482, %v4525
    %v4547 = vsub.f32 %v4485, %v4527
    %v4548 = vsub.f32 %v4490, %v4529
    %v4549 = vsub.f32 %v4493, %v4531
    %v4550 = vsub.f32 %v4498, %v4533
    %v4551 = vsub.f32 %v4501, %v4535
    %v4552 = vmul.f32 %v4536, 1.442695
    %v4553 = vpow.pop %v4552
    %v4554 = vmul.f32 %v4537, 1.442695
    %v4555 = vpow.pop %v4554
    %v4556 = vmul.f32 %v4538, 1.442695
    %v4557 = vpow.pop %v4556
    %v4558 = vmul.f32 %v4539, 1.442695
    %v4559 = vpow.pop %v4558
    %v4560 = vmul.f32 %v4540, 1.442695
    %v4561 = vpow.pop %v4560
    %v4562 = vmul.f32 %v4541, 1.442695
    %v4563 = vpow.pop %v4562
    %v4564 = vmul.f32 %v4542, 1.442695
    %v4565 = vpow.pop %v4564
    %v4566 = vmul.f32 %v4543, 1.442695
    %v4567 = vpow.pop %v4566
    %v4568 = vmul.f32 %v4544, 1.442695
    %v4569 = vpow.pop %v4568
    %v4570 = vmul.f32 %v4545, 1.442695
    %v4571 = vpow.pop %v4570
    %v4572 = vmul.f32 %v4546, 1.442695
    %v4573 = vpow.pop %v4572
    %v4574 = vmul.f32 %v4547, 1.442695
    %v4575 = vpow.pop %v4574
    %v4576 = vmul.f32 %v4548, 1.442695
    %v4577 = vpow.pop %v4576
    %v4578 = vmul.f32 %v4549, 1.442695
    %v4579 = vpow.pop %v4578
    %v4580 = vmul.f32 %v4550, 1.442695
    %v4581 = vpow.pop %v4580
    %v4582 = vmul.f32 %v4551, 1.442695
    %v4583 = vpow.pop %v4582
    %4584 = vadd.xlane.f32.xlu0 %v4553
    %v4585 = vpop.xlane.xlu0 %4584
    %4586 = vadd.xlane.f32.xlu0 %v4555
    %v4587 = vpop.xlane.xlu0 %4586
    %4588 = vadd.xlane.f32.xlu0 %v4557
    %v4589 = vpop.xlane.xlu0 %4588
    %4590 = vadd.xlane.f32.xlu0 %v4559
    %v4591 = vpop.xlane.xlu0 %4590
    %4592 = vadd.xlane.f32.xlu0 %v4561
    %v4593 = vpop.xlane.xlu0 %4592
    %4594 = vadd.xlane.f32.xlu0 %v4563
    %v4595 = vpop.xlane.xlu0 %4594
    %4596 = vadd.xlane.f32.xlu0 %v4565
    %v4597 = vpop.xlane.xlu0 %4596
    %4598 = vadd.xlane.f32.xlu0 %v4567
    %v4599 = vpop.xlane.xlu0 %4598
    %4600 = vadd.xlane.f32.xlu0 %v4569
    %v4601 = vpop.xlane.xlu0 %4600
    %4602 = vadd.xlane.f32.xlu0 %v4571
    %v4603 = vpop.xlane.xlu0 %4602
    %4604 = vadd.xlane.f32.xlu0 %v4573
    %v4605 = vpop.xlane.xlu0 %4604
    %4606 = vadd.xlane.f32.xlu0 %v4575
    %v4607 = vpop.xlane.xlu0 %4606
    %4608 = vadd.xlane.f32.xlu0 %v4577
    %v4609 = vpop.xlane.xlu0 %4608
    %4610 = vadd.xlane.f32.xlu0 %v4579
    %v4611 = vpop.xlane.xlu0 %4610
    %4612 = vadd.xlane.f32.xlu0 %v4581
    %v4613 = vpop.xlane.xlu0 %4612
    %4614 = vadd.xlane.f32.xlu0 %v4583
    %v4615 = vpop.xlane.xlu0 %4614
    %v4616 = vrcp.pop %v4585
    %v4617 = vmul.f32 %v4553, %v4616
    %v4618 = vrcp.pop %v4587
    %v4619 = vmul.f32 %v4555, %v4618
    %v4620 = vrcp.pop %v4589
    %v4621 = vmul.f32 %v4557, %v4620
    %v4622 = vrcp.pop %v4591
    %v4623 = vmul.f32 %v4559, %v4622
    %v4624 = vrcp.pop %v4593
    %v4625 = vmul.f32 %v4561, %v4624
    %v4626 = vrcp.pop %v4595
    %v4627 = vmul.f32 %v4563, %v4626
    %v4628 = vrcp.pop %v4597
    %v4629 = vmul.f32 %v4565, %v4628
    %v4630 = vrcp.pop %v4599
    %v4631 = vmul.f32 %v4567, %v4630
    %v4632 = vrcp.pop %v4601
    %v4633 = vmul.f32 %v4569, %v4632
    %v4634 = vrcp.pop %v4603
    %v4635 = vmul.f32 %v4571, %v4634
    %v4636 = vrcp.pop %v4605
    %v4637 = vmul.f32 %v4573, %v4636
    %v4638 = vrcp.pop %v4607
    %v4639 = vmul.f32 %v4575, %v4638
    %v4640 = vrcp.pop %v4609
    %v4641 = vmul.f32 %v4577, %v4640
    %v4642 = vrcp.pop %v4611
    %v4643 = vmul.f32 %v4579, %v4642
    %v4644 = vrcp.pop %v4613
    %v4645 = vmul.f32 %v4581, %v4644
    %v4646 = vrcp.pop %v4615
    %v4647 = vmul.f32 %v4583, %v4646
    %v4648 = vmul.f32 %v3880, %v1460
    %v4649 = vmul.f32 %v3883, %v1460
    %v4650 = vmul.f32 %v3888, %v1460
    %v4651 = vmul.f32 %v3891, %v1460
    %v4652 = vmul.f32 %v3896, %v1460
    %v4653 = vmul.f32 %v3899, %v1460
    %v4654 = vmul.f32 %v3904, %v1460
    %v4655 = vmul.f32 %v3907, %v1460
    %v4656 = vmul.f32 %v3912, %v1460
    %v4657 = vmul.f32 %v3915, %v1460
    %v4658 = vmul.f32 %v3920, %v1460
    %v4659 = vmul.f32 %v3923, %v1460
    %v4660 = vmul.f32 %v3928, %v1460
    %v4661 = vmul.f32 %v3931, %v1460
    %v4662 = vmul.f32 %v3936, %v1460
    %v4663 = vmul.f32 %v3939, %v1460
    %v4664 = vpack.c.bf16 %v4649, %v4648
    %v4665 = vpack.c.bf16 %v4651, %v4650
    %v4666 = vpack.c.bf16 %v4653, %v4652
    %v4667 = vpack.c.bf16 %v4655, %v4654
    %v4668 = vpack.c.bf16 %v4657, %v4656
    %v4669 = vpack.c.bf16 %v4659, %v4658
    %v4670 = vpack.c.bf16 %v4661, %v4660
    %v4671 = vpack.c.bf16 %v4663, %v4662
    %v4672 = vpack.c.bf16 %v4619, %v4617
    %v4673 = vpack.c.bf16 %v4623, %v4621
    %v4674 = vpack.c.bf16 %v4627, %v4625
    %v4675 = vpack.c.bf16 %v4631, %v4629
    %v4676 = vpack.c.bf16 %v4635, %v4633
    %v4677 = vpack.c.bf16 %v4639, %v4637
    %v4678 = vpack.c.bf16 %v4643, %v4641
    %v4679 = vpack.c.bf16 %v4647, %v4645
    %4688 = vrot.lane.b32.xlu0 %v4664, 64
    %v4689 = vpop.permute.xlu0 %4688
    %4690 = vrot.lane.b32.xlu0 %v4665, 64
    %v4691 = vpop.permute.xlu0 %4690
    %4692 = vrot.lane.b32.xlu0 %v4666, 64
    %v4693 = vpop.permute.xlu0 %4692
    %4694 = vrot.lane.b32.xlu0 %v4667, 64
    %v4695 = vpop.permute.xlu0 %4694
    %4696 = vrot.lane.b32.xlu0 %v4668, 64
    %v4697 = vpop.permute.xlu0 %4696
    %4698 = vrot.lane.b32.xlu0 %v4669, 64
    %v4699 = vpop.permute.xlu0 %4698
    %4700 = vrot.lane.b32.xlu0 %v4670, 64
    %v4701 = vpop.permute.xlu0 %4700
    %4702 = vrot.lane.b32.xlu0 %v4671, 64
    %v4703 = vpop.permute.xlu0 %4702
    %4712 = vmatprep.subr.bf16.mxu0 0
    %4713 = vmatpush1.bf16.msra.mxu0 %v4689
    %4714 = vmatprep.subr.bf16.mxu0 0
    %4715 = vmatpush1.bf16.msra.mxu0 %v4691
    %4716 = vmatprep.subr.bf16.mxu0 0
    %4717 = vmatpush1.bf16.msra.mxu0 %v4693
    %4718 = vmatprep.subr.bf16.mxu0 0
    %4719 = vmatpush1.bf16.msra.mxu0 %v4695
    %4720 = vmatprep.subr.bf16.mxu0 0
    %4721 = vmatpush1.bf16.msra.mxu0 %v4697
    %4722 = vmatprep.subr.bf16.mxu0 0
    %4723 = vmatpush1.bf16.msra.mxu0 %v4699
    %4724 = vmatprep.subr.bf16.mxu0 0
    %4725 = vmatpush1.bf16.msra.mxu0 %v4701
    %4726 = vmatprep.subr.bf16.mxu0 0
    %4727 = vmatpush1.bf16.msra.mxu0 %v4703
    %4728 = vmatprep.subr.bf16.mxu0 0
    %4729 = vmatpush1.bf16.msra.mxu0 0
    %4730 = vmatprep.subr.bf16.mxu0 0
    %4731 = vmatpush1.bf16.msra.mxu0 0
    %4732 = vmatprep.subr.bf16.mxu0 0
    %4733 = vmatpush1.bf16.msra.mxu0 0
    %4734 = vmatprep.subr.bf16.mxu0 0
    %4735 = vmatpush1.bf16.msra.mxu0 0
    %4736 = vmatprep.subr.bf16.mxu0 0
    %4737 = vmatpush1.bf16.msra.mxu0 0
    %4738 = vmatprep.subr.bf16.mxu0 0
    %4739 = vmatpush1.bf16.msra.mxu0 0
    %4740 = vmatprep.subr.bf16.mxu0 0
    %4741 = vmatpush1.bf16.msra.mxu0 0
    %4742 = vmatprep.subr.bf16.mxu0 0
    %4743 = vmatpush1.bf16.msra.mxu0 0
    %4744 = vmatprep.mubr.bf16.mxu0 0
    %4745 = vmatmul.mubr.bf16.gmra.mrb[0].mxu0 %v4672
    %v4746 = vpop.f32.mrb[0].mxu0
    %v4747 = vadd.f32 0.0, %v4746
    %v4748 = vpop.f32.mrb[0].mxu0
    %v4749 = vpop.f32.mrb[0].mxu0
    %v4750 = vadd.f32 0.0, %v4749
    %v4751 = vpop.f32.mrb[0].mxu0
    %4752 = vmatprep.mubr.bf16.mxu0 0
    %4753 = vmatmul.mubr.bf16.gmra.mrb[0].mxu0 %v4673
    %v4754 = vpop.f32.mrb[0].mxu0
    %v4755 = vadd.f32 0.0, %v4754
    %v4756 = vpop.f32.mrb[0].mxu0
    %v4757 = vpop.f32.mrb[0].mxu0
    %v4758 = vadd.f32 0.0, %v4757
    %v4759 = vpop.f32.mrb[0].mxu0
    %4760 = vmatprep.mubr.bf16.mxu0 0
    %4761 = vmatmul.mubr.bf16.gmra.mrb[0].mxu0 %v4674
    %v4762 = vpop.f32.mrb[0].mxu0
    %v4763 = vadd.f32 0.0, %v4762
    %v4764 = vpop.f32.mrb[0].mxu0
    %v4765 = vpop.f32.mrb[0].mxu0
    %v4766 = vadd.f32 0.0, %v4765
    %v4767 = vpop.f32.mrb[0].mxu0
    %4768 = vmatprep.mubr.bf16.mxu0 0
    %4769 = vmatmul.mubr.bf16.gmra.mrb[0].mxu0 %v4675
    %v4770 = vpop.f32.mrb[0].mxu0
    %v4771 = vadd.f32 0.0, %v4770
    %v4772 = vpop.f32.mrb[0].mxu0
    %v4773 = vpop.f32.mrb[0].mxu0
    %v4774 = vadd.f32 0.0, %v4773
    %v4775 = vpop.f32.mrb[0].mxu0
    %4776 = vmatprep.mubr.bf16.mxu0 0
    %4777 = vmatmul.mubr.bf16.gmra.mrb[0].mxu0 %v4676
    %v4778 = vpop.f32.mrb[0].mxu0
    %v4779 = vadd.f32 0.0, %v4778
    %v4780 = vpop.f32.mrb[0].mxu0
    %v4781 = vpop.f32.mrb[0].mxu0
    %v4782 = vadd.f32 0.0, %v4781
    %v4783 = vpop.f32.mrb[0].mxu0
    %4784 = vmatprep.mubr.bf16.mxu0 0
    %4785 = vmatmul.mubr.bf16.gmra.mrb[0].mxu0 %v4677
    %v4786 = vpop.f32.mrb[0].mxu0
    %v4787 = vadd.f32 0.0, %v4786
    %v4788 = vpop.f32.mrb[0].mxu0
    %v4789 = vpop.f32.mrb[0].mxu0
    %v4790 = vadd.f32 0.0, %v4789
    %v4791 = vpop.f32.mrb[0].mxu0
    %4792 = vmatprep.mubr.bf16.mxu0 0
    %4793 = vmatmul.mubr.bf16.gmra.mrb[0].mxu0 %v4678
    %v4794 = vpop.f32.mrb[0].mxu0
    %v4795 = vadd.f32 0.0, %v4794
    %v4796 = vpop.f32.mrb[0].mxu0
    %v4797 = vpop.f32.mrb[0].mxu0
    %v4798 = vadd.f32 0.0, %v4797
    %v4799 = vpop.f32.mrb[0].mxu0
    %4800 = vmatprep.mubr.bf16.mxu0 0
    %4801 = vmatmul.mubr.bf16.gmra.mrb[0].mxu0 %v4679
    %v4802 = vpop.f32.mrb[0].mxu0
    %v4803 = vadd.f32 0.0, %v4802
    %v4804 = vpop.f32.mrb[0].mxu0
    %v4805 = vpop.f32.mrb[0].mxu0
    %v4806 = vadd.f32 0.0, %v4805
    %v4807 = vpop.f32.mrb[0].mxu0
    %4808 = vdwg.mxu0
    %4817 = vrot.lane.b32.xlu0 %v4303, 64
    %v4818 = vpop.permute.xlu0 %4817
    %4819 = vrot.lane.b32.xlu0 %v4304, 64
    %v4820 = vpop.permute.xlu0 %4819
    %4821 = vrot.lane.b32.xlu0 %v4305, 64
    %v4822 = vpop.permute.xlu0 %4821
    %4823 = vrot.lane.b32.xlu0 %v4306, 64
    %v4824 = vpop.permute.xlu0 %4823
    %4825 = vrot.lane.b32.xlu0 %v4307, 64
    %v4826 = vpop.permute.xlu0 %4825
    %4827 = vrot.lane.b32.xlu0 %v4308, 64
    %v4828 = vpop.permute.xlu0 %4827
    %4829 = vrot.lane.b32.xlu0 %v4309, 64
    %v4830 = vpop.permute.xlu0 %4829
    %4831 = vrot.lane.b32.xlu0 %v4310, 64
    %v4832 = vpop.permute.xlu0 %4831
    %4841 = vmatprep.subr.bf16.mxu0 0
    %4842 = vmatpush1.bf16.msra.mxu0 %v4818
    %4843 = vmatprep.subr.bf16.mxu0 0
    %4844 = vmatpush1.bf16.msra.mxu0 %v4820
    %4845 = vmatprep.subr.bf16.mxu0 0
    %4846 = vmatpush1.bf16.msra.mxu0 %v4822
    %4847 = vmatprep.subr.bf16.mxu0 0
    %4848 = vmatpush1.bf16.msra.mxu0 %v4824
    %4849 = vmatprep.subr.bf16.mxu0 0
    %4850 = vmatpush1.bf16.msra.mxu0 %v4826
    %4851 = vmatprep.subr.bf16.mxu0 0
    %4852 = vmatpush1.bf16.msra.mxu0 %v4828
    %4853 = vmatprep.subr.bf16.mxu0 0
    %4854 = vmatpush1.bf16.msra.mxu0 %v4830
    %4855 = vmatprep.subr.bf16.mxu0 0
    %4856 = vmatpush1.bf16.msra.mxu0 %v4832
    %4857 = vmatprep.subr.bf16.mxu0 0
    %4858 = vmatpush1.bf16.msra.mxu0 0
    %4859 = vmatprep.subr.bf16.mxu0 0
    %4860 = vmatpush1.bf16.msra.mxu0 0
    %4861 = vmatprep.subr.bf16.mxu0 0
    %4862 = vmatpush1.bf16.msra.mxu0 0
    %4863 = vmatprep.subr.bf16.mxu0 0
    %4864 = vmatpush1.bf16.msra.mxu0 0
    %4865 = vmatprep.subr.bf16.mxu0 0
    %4866 = vmatpush1.bf16.msra.mxu0 0
    %4867 = vmatprep.subr.bf16.mxu0 0
    %4868 = vmatpush1.bf16.msra.mxu0 0
    %4869 = vmatprep.subr.bf16.mxu0 0
    %4870 = vmatpush1.bf16.msra.mxu0 0
    %4871 = vmatprep.subr.bf16.mxu0 0
    %4872 = vmatpush1.bf16.msra.mxu0 0
    %4873 = vmatprep.mubr.bf16.mxu0 0
    %4874 = vmatmul.mubr.bf16.gmra.mrb[0].mxu0 %v4311
    %v4875 = vpop.f32.mrb[0].mxu0
    %v4876 = vadd.f32 %v4747, %v4875
    %v4877 = vpop.f32.mrb[0].mxu0
    %v4878 = vpop.f32.mrb[0].mxu0
    %v4879 = vadd.f32 %v4750, %v4878
    %v4880 = vpop.f32.mrb[0].mxu0
    %4881 = vmatprep.mubr.bf16.mxu0 0
    %4882 = vmatmul.mubr.bf16.gmra.mrb[0].mxu0 %v4312
    %v4883 = vpop.f32.mrb[0].mxu0
    %v4884 = vadd.f32 %v4755, %v4883
    %v4885 = vpop.f32.mrb[0].mxu0
    %v4886 = vpop.f32.mrb[0].mxu0
    %v4887 = vadd.f32 %v4758, %v4886
    %v4888 = vpop.f32.mrb[0].mxu0
    %4889 = vmatprep.mubr.bf16.mxu0 0
    %4890 = vmatmul.mubr.bf16.gmra.mrb[0].mxu0 %v4313
    %v4891 = vpop.f32.mrb[0].mxu0
    %v4892 = vadd.f32 %v4763, %v4891
    %v4893 = vpop.f32.mrb[0].mxu0
    %v4894 = vpop.f32.mrb[0].mxu0
    %v4895 = vadd.f32 %v4766, %v4894
    %v4896 = vpop.f32.mrb[0].mxu0
    %4897 = vmatprep.mubr.bf16.mxu0 0
    %4898 = vmatmul.mubr.bf16.gmra.mrb[0].mxu0 %v4314
    %v4899 = vpop.f32.mrb[0].mxu0
    %v4900 = vadd.f32 %v4771, %v4899
    %v4901 = vpop.f32.mrb[0].mxu0
    %v4902 = vpop.f32.mrb[0].mxu0
    %v4903 = vadd.f32 %v4774, %v4902
    %v4904 = vpop.f32.mrb[0].mxu0
    %4905 = vmatprep.mubr.bf16.mxu0 0
    %4906 = vmatmul.mubr.bf16.gmra.mrb[0].mxu0 %v4315
    %v4907 = vpop.f32.mrb[0].mxu0
    %v4908 = vadd.f32 %v4779, %v4907
    %v4909 = vpop.f32.mrb[0].mxu0
    %v4910 = vpop.f32.mrb[0].mxu0
    %v4911 = vadd.f32 %v4782, %v4910
    %v4912 = vpop.f32.mrb[0].mxu0
    %4913 = vmatprep.mubr.bf16.mxu0 0
    %4914 = vmatmul.mubr.bf16.gmra.mrb[0].mxu0 %v4316
    %v4915 = vpop.f32.mrb[0].mxu0
    %v4916 = vadd.f32 %v4787, %v4915
    %v4917 = vpop.f32.mrb[0].mxu0
    %v4918 = vpop.f32.mrb[0].mxu0
    %v4919 = vadd.f32 %v4790, %v4918
    %v4920 = vpop.f32.mrb[0].mxu0
    %4921 = vmatprep.mubr.bf16.mxu0 0
    %4922 = vmatmul.mubr.bf16.gmra.mrb[0].mxu0 %v4317
    %v4923 = vpop.f32.mrb[0].mxu0
    %v4924 = vadd.f32 %v4795, %v4923
    %v4925 = vpop.f32.mrb[0].mxu0
    %v4926 = vpop.f32.mrb[0].mxu0
    %v4927 = vadd.f32 %v4798, %v4926
    %v4928 = vpop.f32.mrb[0].mxu0
    %4929 = vmatprep.mubr.bf16.mxu0 0
    %4930 = vmatmul.mubr.bf16.gmra.mrb[0].mxu0 %v4318
    %v4931 = vpop.f32.mrb[0].mxu0
    %v4932 = vadd.f32 %v4803, %v4931
    %v4933 = vpop.f32.mrb[0].mxu0
    %v4934 = vpop.f32.mrb[0].mxu0
    %v4935 = vadd.f32 %v4806, %v4934
    %v4936 = vpop.f32.mrb[0].mxu0
    %4937 = vdwg.mxu0
    %4938 = vrot.lane.b32.xlu0 %v3958, 112
    %v4939 = vpop.permute.xlu0 %4938
    %4940 = vrot.lane.b32.xlu0 %v3959, 112
    %v4941 = vpop.permute.xlu0 %4940
    %4942 = vrot.lane.b32.xlu0 %v3960, 112
    %v4943 = vpop.permute.xlu0 %4942
    %4944 = vrot.lane.b32.xlu0 %v3961, 112
    %v4945 = vpop.permute.xlu0 %4944
    %4946 = vrot.lane.b32.xlu0 %v3962, 112
    %v4947 = vpop.permute.xlu0 %4946
    %4948 = vrot.lane.b32.xlu0 %v3963, 112
    %v4949 = vpop.permute.xlu0 %4948
    %4950 = vrot.lane.b32.xlu0 %v3964, 112
    %v4951 = vpop.permute.xlu0 %4950
    %4952 = vrot.lane.b32.xlu0 %v3965, 112
    %v4953 = vpop.permute.xlu0 %4952
    %4954 = vrot.lane.b32.xlu0 %v3966, 80
    %v4955 = vpop.permute.xlu0 %4954
    %4956 = vrot.lane.b32.xlu0 %v3967, 80
    %v4957 = vpop.permute.xlu0 %4956
    %4958 = vrot.lane.b32.xlu0 %v3968, 80
    %v4959 = vpop.permute.xlu0 %4958
    %4960 = vrot.lane.b32.xlu0 %v3969, 80
    %v4961 = vpop.permute.xlu0 %4960
    %4962 = vrot.lane.b32.xlu0 %v3970, 80
    %v4963 = vpop.permute.xlu0 %4962
    %4964 = vrot.lane.b32.xlu0 %v3971, 80
    %v4965 = vpop.permute.xlu0 %4964
    %4966 = vrot.lane.b32.xlu0 %v3972, 80
    %v4967 = vpop.permute.xlu0 %4966
    %4968 = vrot.lane.b32.xlu0 %v3973, 80
    %v4969 = vpop.permute.xlu0 %4968
    %v4971 = vsel %vm792, %v4939, 0
    %v4974 = vsel %vm792, %v4941, 0
    %v4977 = vsel %vm792, %v4943, 0
    %v4980 = vsel %vm792, %v4945, 0
    %v4983 = vsel %vm792, %v4947, 0
    %v4986 = vsel %vm792, %v4949, 0
    %v4989 = vsel %vm792, %v4951, 0
    %v4992 = vsel %vm792, %v4953, 0
    %v4995 = vsel %vm792, %v4955, 0
    %v4998 = vsel %vm792, %v4957, 0
    %v5001 = vsel %vm792, %v4959, 0
    %v5004 = vsel %vm792, %v4961, 0
    %v5007 = vsel %vm792, %v4963, 0
    %v5010 = vsel %vm792, %v4965, 0
    %v5013 = vsel %vm792, %v4967, 0
    %v5016 = vsel %vm792, %v4969, 0
    %5018 = vmatprep.subr.bf16.mxu0 0
    %5019 = vmatpush1.bf16.xpose.msra.mxu0 %v4995
    %5020 = vmatprep.subr.bf16.mxu0 0
    %5021 = vmatpush1.bf16.xpose.msra.mxu0 %v4998
    %5022 = vmatprep.subr.bf16.mxu0 0
    %5023 = vmatpush1.bf16.xpose.msra.mxu0 %v5001
    %5024 = vmatprep.subr.bf16.mxu0 0
    %5025 = vmatpush1.bf16.xpose.msra.mxu0 %v5004
    %5026 = vmatprep.subr.bf16.mxu0 0
    %5027 = vmatpush1.bf16.xpose.msra.mxu0 %v5007
    %5028 = vmatprep.subr.bf16.mxu0 0
    %5029 = vmatpush1.bf16.xpose.msra.mxu0 %v5010
    %5030 = vmatprep.subr.bf16.mxu0 0
    %5031 = vmatpush1.bf16.xpose.msra.mxu0 %v5013
    %5032 = vmatprep.subr.bf16.mxu0 0
    %5033 = vmatpush1.bf16.xpose.msra.mxu0 %v5016
    %5034 = vmatprep.subr.bf16.mxu0 0
    %5035 = vmatpush1.bf16.xpose.msra.mxu0 0
    %5036 = vmatprep.subr.bf16.mxu0 0
    %5037 = vmatpush1.bf16.xpose.msra.mxu0 0
    %5038 = vmatprep.subr.bf16.mxu0 0
    %5039 = vmatpush1.bf16.xpose.msra.mxu0 0
    %5040 = vmatprep.subr.bf16.mxu0 0
    %5041 = vmatpush1.bf16.xpose.msra.mxu0 0
    %5042 = vmatprep.subr.bf16.mxu0 0
    %5043 = vmatpush1.bf16.xpose.msra.mxu0 0
    %5044 = vmatprep.subr.bf16.mxu0 0
    %5045 = vmatpush1.bf16.xpose.msra.mxu0 0
    %5046 = vmatprep.subr.bf16.mxu0 0
    %5047 = vmatpush1.bf16.xpose.msra.mxu0 0
    %5048 = vmatprep.subr.bf16.mxu0 0
    %5049 = vmatpush1.bf16.xpose.msra.mxu0 0
    %5050 = vmatprep.mubr.bf16.mxu0 0
    %5051 = vmatmul.mubr.bf16.gmra.mrb[0].mxu0 %v4971
    %v5052 = vpop.f32.mrb[0].mxu0
    %v5053 = vadd.f32 %v69, %v5052
    %v5054 = vpop.f32.mrb[0].mxu0
    %v5055 = vpop.f32.mrb[0].mxu0
    %v5056 = vadd.f32 %v70, %v5055
    %v5057 = vpop.f32.mrb[0].mxu0
    %5058 = vmatprep.mubr.bf16.mxu0 0
    %5059 = vmatmul.mubr.bf16.gmra.mrb[0].mxu0 %v4974
    %v5060 = vpop.f32.mrb[0].mxu0
    %v5061 = vadd.f32 %v71, %v5060
    %v5062 = vpop.f32.mrb[0].mxu0
    %v5063 = vpop.f32.mrb[0].mxu0
    %v5064 = vadd.f32 %v72, %v5063
    %v5065 = vpop.f32.mrb[0].mxu0
    %5066 = vmatprep.mubr.bf16.mxu0 0
    %5067 = vmatmul.mubr.bf16.gmra.mrb[0].mxu0 %v4977
    %v5068 = vpop.f32.mrb[0].mxu0
    %v5069 = vadd.f32 %v73, %v5068
    %v5070 = vpop.f32.mrb[0].mxu0
    %v5071 = vpop.f32.mrb[0].mxu0
    %v5072 = vadd.f32 %v74, %v5071
    %v5073 = vpop.f32.mrb[0].mxu0
    %5074 = vmatprep.mubr.bf16.mxu0 0
    %5075 = vmatmul.mubr.bf16.gmra.mrb[0].mxu0 %v4980
    %v5076 = vpop.f32.mrb[0].mxu0
    %v5077 = vadd.f32 %v75, %v5076
    %v5078 = vpop.f32.mrb[0].mxu0
    %v5079 = vpop.f32.mrb[0].mxu0
    %v5080 = vadd.f32 %v76, %v5079
    %v5081 = vpop.f32.mrb[0].mxu0
    %5082 = vmatprep.mubr.bf16.mxu0 0
    %5083 = vmatmul.mubr.bf16.gmra.mrb[0].mxu0 %v4983
    %v5084 = vpop.f32.mrb[0].mxu0
    %v5085 = vadd.f32 %v77, %v5084
    %v5086 = vpop.f32.mrb[0].mxu0
    %v5087 = vpop.f32.mrb[0].mxu0
    %v5088 = vadd.f32 %v78, %v5087
    %v5089 = vpop.f32.mrb[0].mxu0
    %5090 = vmatprep.mubr.bf16.mxu0 0
    %5091 = vmatmul.mubr.bf16.gmra.mrb[0].mxu0 %v4986
    %v5092 = vpop.f32.mrb[0].mxu0
    %v5093 = vadd.f32 %v79, %v5092
    %v5094 = vpop.f32.mrb[0].mxu0
    %v5095 = vpop.f32.mrb[0].mxu0
    %v5096 = vadd.f32 %v80, %v5095
    %v5097 = vpop.f32.mrb[0].mxu0
    %5098 = vmatprep.mubr.bf16.mxu0 0
    %5099 = vmatmul.mubr.bf16.gmra.mrb[0].mxu0 %v4989
    %v5100 = vpop.f32.mrb[0].mxu0
    %v5101 = vadd.f32 %v81, %v5100
    %v5102 = vpop.f32.mrb[0].mxu0
    %v5103 = vpop.f32.mrb[0].mxu0
    %v5104 = vadd.f32 %v82, %v5103
    %v5105 = vpop.f32.mrb[0].mxu0
    %5106 = vmatprep.mubr.bf16.mxu0 0
    %5107 = vmatmul.mubr.bf16.gmra.mrb[0].mxu0 %v4992
    %v5108 = vpop.f32.mrb[0].mxu0
    %v5109 = vadd.f32 %v83, %v5108
    %v5110 = vpop.f32.mrb[0].mxu0
    %v5111 = vpop.f32.mrb[0].mxu0
    %v5112 = vadd.f32 %v84, %v5111
    %v5113 = vpop.f32.mrb[0].mxu0
    %5114 = vdwg.mxu0
    %5115 = vmax.xlane.f32.xlu0 %v5053
    %v5116 = vpop.xlane.xlu0 %5115
    %5117 = vmax.xlane.f32.xlu0 %v5056
    %v5118 = vpop.xlane.xlu0 %5117
    %5119 = vmax.xlane.f32.xlu0 %v5061
    %v5120 = vpop.xlane.xlu0 %5119
    %5121 = vmax.xlane.f32.xlu0 %v5064
    %v5122 = vpop.xlane.xlu0 %5121
    %5123 = vmax.xlane.f32.xlu0 %v5069
    %v5124 = vpop.xlane.xlu0 %5123
    %5125 = vmax.xlane.f32.xlu0 %v5072
    %v5126 = vpop.xlane.xlu0 %5125
    %5127 = vmax.xlane.f32.xlu0 %v5077
    %v5128 = vpop.xlane.xlu0 %5127
    %5129 = vmax.xlane.f32.xlu0 %v5080
    %v5130 = vpop.xlane.xlu0 %5129
    %5131 = vmax.xlane.f32.xlu0 %v5085
    %v5132 = vpop.xlane.xlu0 %5131
    %5133 = vmax.xlane.f32.xlu0 %v5088
    %v5134 = vpop.xlane.xlu0 %5133
    %5135 = vmax.xlane.f32.xlu0 %v5093
    %v5136 = vpop.xlane.xlu0 %5135
    %5137 = vmax.xlane.f32.xlu0 %v5096
    %v5138 = vpop.xlane.xlu0 %5137
    %5139 = vmax.xlane.f32.xlu0 %v5101
    %v5140 = vpop.xlane.xlu0 %5139
    %5141 = vmax.xlane.f32.xlu0 %v5104
    %v5142 = vpop.xlane.xlu0 %5141
    %5143 = vmax.xlane.f32.xlu0 %v5109
    %v5144 = vpop.xlane.xlu0 %5143
    %5145 = vmax.xlane.f32.xlu0 %v5112
    %v5146 = vpop.xlane.xlu0 %5145
    %v5147 = vsub.f32 %v5053, %v5116
    %v5148 = vsub.f32 %v5056, %v5118
    %v5149 = vsub.f32 %v5061, %v5120
    %v5150 = vsub.f32 %v5064, %v5122
    %v5151 = vsub.f32 %v5069, %v5124
    %v5152 = vsub.f32 %v5072, %v5126
    %v5153 = vsub.f32 %v5077, %v5128
    %v5154 = vsub.f32 %v5080, %v5130
    %v5155 = vsub.f32 %v5085, %v5132
    %v5156 = vsub.f32 %v5088, %v5134
    %v5157 = vsub.f32 %v5093, %v5136
    %v5158 = vsub.f32 %v5096, %v5138
    %v5159 = vsub.f32 %v5101, %v5140
    %v5160 = vsub.f32 %v5104, %v5142
    %v5161 = vsub.f32 %v5109, %v5144
    %v5162 = vsub.f32 %v5112, %v5146
    %v5163 = vmul.f32 %v5147, 1.442695
    %v5164 = vpow.pop %v5163
    %v5165 = vmul.f32 %v5148, 1.442695
    %v5166 = vpow.pop %v5165
    %v5167 = vmul.f32 %v5149, 1.442695
    %v5168 = vpow.pop %v5167
    %v5169 = vmul.f32 %v5150, 1.442695
    %v5170 = vpow.pop %v5169
    %v5171 = vmul.f32 %v5151, 1.442695
    %v5172 = vpow.pop %v5171
    %v5173 = vmul.f32 %v5152, 1.442695
    %v5174 = vpow.pop %v5173
    %v5175 = vmul.f32 %v5153, 1.442695
    %v5176 = vpow.pop %v5175
    %v5177 = vmul.f32 %v5154, 1.442695
    %v5178 = vpow.pop %v5177
    %v5179 = vmul.f32 %v5155, 1.442695
    %v5180 = vpow.pop %v5179
    %v5181 = vmul.f32 %v5156, 1.442695
    %v5182 = vpow.pop %v5181
    %v5183 = vmul.f32 %v5157, 1.442695
    %v5184 = vpow.pop %v5183
    %v5185 = vmul.f32 %v5158, 1.442695
    %v5186 = vpow.pop %v5185
    %v5187 = vmul.f32 %v5159, 1.442695
    %v5188 = vpow.pop %v5187
    %v5189 = vmul.f32 %v5160, 1.442695
    %v5190 = vpow.pop %v5189
    %v5191 = vmul.f32 %v5161, 1.442695
    %v5192 = vpow.pop %v5191
    %v5193 = vmul.f32 %v5162, 1.442695
    %v5194 = vpow.pop %v5193
    %5195 = vadd.xlane.f32.xlu0 %v5164
    %v5196 = vpop.xlane.xlu0 %5195
    %5197 = vadd.xlane.f32.xlu0 %v5166
    %v5198 = vpop.xlane.xlu0 %5197
    %5199 = vadd.xlane.f32.xlu0 %v5168
    %v5200 = vpop.xlane.xlu0 %5199
    %5201 = vadd.xlane.f32.xlu0 %v5170
    %v5202 = vpop.xlane.xlu0 %5201
    %5203 = vadd.xlane.f32.xlu0 %v5172
    %v5204 = vpop.xlane.xlu0 %5203
    %5205 = vadd.xlane.f32.xlu0 %v5174
    %v5206 = vpop.xlane.xlu0 %5205
    %5207 = vadd.xlane.f32.xlu0 %v5176
    %v5208 = vpop.xlane.xlu0 %5207
    %5209 = vadd.xlane.f32.xlu0 %v5178
    %v5210 = vpop.xlane.xlu0 %5209
    %5211 = vadd.xlane.f32.xlu0 %v5180
    %v5212 = vpop.xlane.xlu0 %5211
    %5213 = vadd.xlane.f32.xlu0 %v5182
    %v5214 = vpop.xlane.xlu0 %5213
    %5215 = vadd.xlane.f32.xlu0 %v5184
    %v5216 = vpop.xlane.xlu0 %5215
    %5217 = vadd.xlane.f32.xlu0 %v5186
    %v5218 = vpop.xlane.xlu0 %5217
    %5219 = vadd.xlane.f32.xlu0 %v5188
    %v5220 = vpop.xlane.xlu0 %5219
    %5221 = vadd.xlane.f32.xlu0 %v5190
    %v5222 = vpop.xlane.xlu0 %5221
    %5223 = vadd.xlane.f32.xlu0 %v5192
    %v5224 = vpop.xlane.xlu0 %5223
    %5225 = vadd.xlane.f32.xlu0 %v5194
    %v5226 = vpop.xlane.xlu0 %5225
    %v5227 = vrcp.pop %v5196
    %v5228 = vmul.f32 %v5164, %v5227
    %v5229 = vrcp.pop %v5198
    %v5230 = vmul.f32 %v5166, %v5229
    %v5231 = vrcp.pop %v5200
    %v5232 = vmul.f32 %v5168, %v5231
    %v5233 = vrcp.pop %v5202
    %v5234 = vmul.f32 %v5170, %v5233
    %v5235 = vrcp.pop %v5204
    %v5236 = vmul.f32 %v5172, %v5235
    %v5237 = vrcp.pop %v5206
    %v5238 = vmul.f32 %v5174, %v5237
    %v5239 = vrcp.pop %v5208
    %v5240 = vmul.f32 %v5176, %v5239
    %v5241 = vrcp.pop %v5210
    %v5242 = vmul.f32 %v5178, %v5241
    %v5243 = vrcp.pop %v5212
    %v5244 = vmul.f32 %v5180, %v5243
    %v5245 = vrcp.pop %v5214
    %v5246 = vmul.f32 %v5182, %v5245
    %v5247 = vrcp.pop %v5216
    %v5248 = vmul.f32 %v5184, %v5247
    %v5249 = vrcp.pop %v5218
    %v5250 = vmul.f32 %v5186, %v5249
    %v5251 = vrcp.pop %v5220
    %v5252 = vmul.f32 %v5188, %v5251
    %v5253 = vrcp.pop %v5222
    %v5254 = vmul.f32 %v5190, %v5253
    %v5255 = vrcp.pop %v5224
    %v5256 = vmul.f32 %v5192, %v5255
    %v5257 = vrcp.pop %v5226
    %v5258 = vmul.f32 %v5194, %v5257
    %v5259 = vmul.f32 %v3880, %v2081
    %v5260 = vmul.f32 %v3883, %v2081
    %v5261 = vmul.f32 %v3888, %v2081
    %v5262 = vmul.f32 %v3891, %v2081
    %v5263 = vmul.f32 %v3896, %v2081
    %v5264 = vmul.f32 %v3899, %v2081
    %v5265 = vmul.f32 %v3904, %v2081
    %v5266 = vmul.f32 %v3907, %v2081
    %v5267 = vmul.f32 %v3912, %v2081
    %v5268 = vmul.f32 %v3915, %v2081
    %v5269 = vmul.f32 %v3920, %v2081
    %v5270 = vmul.f32 %v3923, %v2081
    %v5271 = vmul.f32 %v3928, %v2081
    %v5272 = vmul.f32 %v3931, %v2081
    %v5273 = vmul.f32 %v3936, %v2081
    %v5274 = vmul.f32 %v3939, %v2081
    %v5275 = vpack.c.bf16 %v5260, %v5259
    %v5276 = vpack.c.bf16 %v5262, %v5261
    %v5277 = vpack.c.bf16 %v5264, %v5263
    %v5278 = vpack.c.bf16 %v5266, %v5265
    %v5279 = vpack.c.bf16 %v5268, %v5267
    %v5280 = vpack.c.bf16 %v5270, %v5269
    %v5281 = vpack.c.bf16 %v5272, %v5271
    %v5282 = vpack.c.bf16 %v5274, %v5273
    %v5283 = vpack.c.bf16 %v5230, %v5228
    %v5284 = vpack.c.bf16 %v5234, %v5232
    %v5285 = vpack.c.bf16 %v5238, %v5236
    %v5286 = vpack.c.bf16 %v5242, %v5240
    %v5287 = vpack.c.bf16 %v5246, %v5244
    %v5288 = vpack.c.bf16 %v5250, %v5248
    %v5289 = vpack.c.bf16 %v5254, %v5252
    %v5290 = vpack.c.bf16 %v5258, %v5256
    %5299 = vrot.lane.b32.xlu0 %v5275, 64
    %v5300 = vpop.permute.xlu0 %5299
    %5301 = vrot.lane.b32.xlu0 %v5276, 64
    %v5302 = vpop.permute.xlu0 %5301
    %5303 = vrot.lane.b32.xlu0 %v5277, 64
    %v5304 = vpop.permute.xlu0 %5303
    %5305 = vrot.lane.b32.xlu0 %v5278, 64
    %v5306 = vpop.permute.xlu0 %5305
    %5307 = vrot.lane.b32.xlu0 %v5279, 64
    %v5308 = vpop.permute.xlu0 %5307
    %5309 = vrot.lane.b32.xlu0 %v5280, 64
    %v5310 = vpop.permute.xlu0 %5309
    %5311 = vrot.lane.b32.xlu0 %v5281, 64
    %v5312 = vpop.permute.xlu0 %5311
    %5313 = vrot.lane.b32.xlu0 %v5282, 64
    %v5314 = vpop.permute.xlu0 %5313
    %5323 = vmatprep.subr.bf16.mxu0 0
    %5324 = vmatpush1.bf16.msra.mxu0 %v5300
    %5325 = vmatprep.subr.bf16.mxu0 0
    %5326 = vmatpush1.bf16.msra.mxu0 %v5302
    %5327 = vmatprep.subr.bf16.mxu0 0
    %5328 = vmatpush1.bf16.msra.mxu0 %v5304
    %5329 = vmatprep.subr.bf16.mxu0 0
    %5330 = vmatpush1.bf16.msra.mxu0 %v5306
    %5331 = vmatprep.subr.bf16.mxu0 0
    %5332 = vmatpush1.bf16.msra.mxu0 %v5308
    %5333 = vmatprep.subr.bf16.mxu0 0
    %5334 = vmatpush1.bf16.msra.mxu0 %v5310
    %5335 = vmatprep.subr.bf16.mxu0 0
    %5336 = vmatpush1.bf16.msra.mxu0 %v5312
    %5337 = vmatprep.subr.bf16.mxu0 0
    %5338 = vmatpush1.bf16.msra.mxu0 %v5314
    %5339 = vmatprep.subr.bf16.mxu0 0
    %5340 = vmatpush1.bf16.msra.mxu0 0
    %5341 = vmatprep.subr.bf16.mxu0 0
    %5342 = vmatpush1.bf16.msra.mxu0 0
    %5343 = vmatprep.subr.bf16.mxu0 0
    %5344 = vmatpush1.bf16.msra.mxu0 0
    %5345 = vmatprep.subr.bf16.mxu0 0
    %5346 = vmatpush1.bf16.msra.mxu0 0
    %5347 = vmatprep.subr.bf16.mxu0 0
    %5348 = vmatpush1.bf16.msra.mxu0 0
    %5349 = vmatprep.subr.bf16.mxu0 0
    %5350 = vmatpush1.bf16.msra.mxu0 0
    %5351 = vmatprep.subr.bf16.mxu0 0
    %5352 = vmatpush1.bf16.msra.mxu0 0
    %5353 = vmatprep.subr.bf16.mxu0 0
    %5354 = vmatpush1.bf16.msra.mxu0 0
    %5355 = vmatprep.mubr.bf16.mxu0 0
    %5356 = vmatmul.mubr.bf16.gmra.mrb[0].mxu0 %v5283
    %v5357 = vpop.f32.mrb[0].mxu0
    %v5358 = vadd.f32 0.0, %v5357
    %v5359 = vpop.f32.mrb[0].mxu0
    %v5360 = vpop.f32.mrb[0].mxu0
    %v5361 = vadd.f32 0.0, %v5360
    %v5362 = vpop.f32.mrb[0].mxu0
    %5363 = vmatprep.mubr.bf16.mxu0 0
    %5364 = vmatmul.mubr.bf16.gmra.mrb[0].mxu0 %v5284
    %v5365 = vpop.f32.mrb[0].mxu0
    %v5366 = vadd.f32 0.0, %v5365
    %v5367 = vpop.f32.mrb[0].mxu0
    %v5368 = vpop.f32.mrb[0].mxu0
    %v5369 = vadd.f32 0.0, %v5368
    %v5370 = vpop.f32.mrb[0].mxu0
    %5371 = vmatprep.mubr.bf16.mxu0 0
    %5372 = vmatmul.mubr.bf16.gmra.mrb[0].mxu0 %v5285
    %v5373 = vpop.f32.mrb[0].mxu0
    %v5374 = vadd.f32 0.0, %v5373
    %v5375 = vpop.f32.mrb[0].mxu0
    %v5376 = vpop.f32.mrb[0].mxu0
    %v5377 = vadd.f32 0.0, %v5376
    %v5378 = vpop.f32.mrb[0].mxu0
    %5379 = vmatprep.mubr.bf16.mxu0 0
    %5380 = vmatmul.mubr.bf16.gmra.mrb[0].mxu0 %v5286
    %v5381 = vpop.f32.mrb[0].mxu0
    %v5382 = vadd.f32 0.0, %v5381
    %v5383 = vpop.f32.mrb[0].mxu0
    %v5384 = vpop.f32.mrb[0].mxu0
    %v5385 = vadd.f32 0.0, %v5384
    %v5386 = vpop.f32.mrb[0].mxu0
    %5387 = vmatprep.mubr.bf16.mxu0 0
    %5388 = vmatmul.mubr.bf16.gmra.mrb[0].mxu0 %v5287
    %v5389 = vpop.f32.mrb[0].mxu0
    %v5390 = vadd.f32 0.0, %v5389
    %v5391 = vpop.f32.mrb[0].mxu0
    %v5392 = vpop.f32.mrb[0].mxu0
    %v5393 = vadd.f32 0.0, %v5392
    %v5394 = vpop.f32.mrb[0].mxu0
    %5395 = vmatprep.mubr.bf16.mxu0 0
    %5396 = vmatmul.mubr.bf16.gmra.mrb[0].mxu0 %v5288
    %v5397 = vpop.f32.mrb[0].mxu0
    %v5398 = vadd.f32 0.0, %v5397
    %v5399 = vpop.f32.mrb[0].mxu0
    %v5400 = vpop.f32.mrb[0].mxu0
    %v5401 = vadd.f32 0.0, %v5400
    %v5402 = vpop.f32.mrb[0].mxu0
    %5403 = vmatprep.mubr.bf16.mxu0 0
    %5404 = vmatmul.mubr.bf16.gmra.mrb[0].mxu0 %v5289
    %v5405 = vpop.f32.mrb[0].mxu0
    %v5406 = vadd.f32 0.0, %v5405
    %v5407 = vpop.f32.mrb[0].mxu0
    %v5408 = vpop.f32.mrb[0].mxu0
    %v5409 = vadd.f32 0.0, %v5408
    %v5410 = vpop.f32.mrb[0].mxu0
    %5411 = vmatprep.mubr.bf16.mxu0 0
    %5412 = vmatmul.mubr.bf16.gmra.mrb[0].mxu0 %v5290
    %v5413 = vpop.f32.mrb[0].mxu0
    %v5414 = vadd.f32 0.0, %v5413
    %v5415 = vpop.f32.mrb[0].mxu0
    %v5416 = vpop.f32.mrb[0].mxu0
    %v5417 = vadd.f32 0.0, %v5416
    %v5418 = vpop.f32.mrb[0].mxu0
    %5419 = vdwg.mxu0
    %v5420 = vadd.f32 %v4876, %v5358
    %v5421 = vadd.f32 %v4879, %v5361
    %v5422 = vadd.f32 %v4884, %v5366
    %v5423 = vadd.f32 %v4887, %v5369
    %v5424 = vadd.f32 %v4892, %v5374
    %v5425 = vadd.f32 %v4895, %v5377
    %v5426 = vadd.f32 %v4900, %v5382
    %v5427 = vadd.f32 %v4903, %v5385
    %v5428 = vadd.f32 %v4908, %v5390
    %v5429 = vadd.f32 %v4911, %v5393
    %v5430 = vadd.f32 %v4916, %v5398
    %v5431 = vadd.f32 %v4919, %v5401
    %v5432 = vadd.f32 %v4924, %v5406
    %v5433 = vadd.f32 %v4927, %v5409
    %v5434 = vadd.f32 %v4932, %v5414
    %v5435 = vadd.f32 %v4935, %v5417
    %5436 = vrot.lane.b32.xlu0 %v3958, 104
    %v5437 = vpop.permute.xlu0 %5436
    %5438 = vrot.lane.b32.xlu0 %v3959, 104
    %v5439 = vpop.permute.xlu0 %5438
    %5440 = vrot.lane.b32.xlu0 %v3960, 104
    %v5441 = vpop.permute.xlu0 %5440
    %5442 = vrot.lane.b32.xlu0 %v3961, 104
    %v5443 = vpop.permute.xlu0 %5442
    %5444 = vrot.lane.b32.xlu0 %v3962, 104
    %v5445 = vpop.permute.xlu0 %5444
    %5446 = vrot.lane.b32.xlu0 %v3963, 104
    %v5447 = vpop.permute.xlu0 %5446
    %5448 = vrot.lane.b32.xlu0 %v3964, 104
    %v5449 = vpop.permute.xlu0 %5448
    %5450 = vrot.lane.b32.xlu0 %v3965, 104
    %v5451 = vpop.permute.xlu0 %5450
    %5452 = vrot.lane.b32.xlu0 %v3966, 72
    %v5453 = vpop.permute.xlu0 %5452
    %5454 = vrot.lane.b32.xlu0 %v3967, 72
    %v5455 = vpop.permute.xlu0 %5454
    %5456 = vrot.lane.b32.xlu0 %v3968, 72
    %v5457 = vpop.permute.xlu0 %5456
    %5458 = vrot.lane.b32.xlu0 %v3969, 72
    %v5459 = vpop.permute.xlu0 %5458
    %5460 = vrot.lane.b32.xlu0 %v3970, 72
    %v5461 = vpop.permute.xlu0 %5460
    %5462 = vrot.lane.b32.xlu0 %v3971, 72
    %v5463 = vpop.permute.xlu0 %5462
    %5464 = vrot.lane.b32.xlu0 %v3972, 72
    %v5465 = vpop.permute.xlu0 %5464
    %5466 = vrot.lane.b32.xlu0 %v3973, 72
    %v5467 = vpop.permute.xlu0 %5466
    %v5469 = vsel %vm792, %v5437, 0
    %v5472 = vsel %vm792, %v5439, 0
    %v5475 = vsel %vm792, %v5441, 0
    %v5478 = vsel %vm792, %v5443, 0
    %v5481 = vsel %vm792, %v5445, 0
    %v5484 = vsel %vm792, %v5447, 0
    %v5487 = vsel %vm792, %v5449, 0
    %v5490 = vsel %vm792, %v5451, 0
    %v5493 = vsel %vm792, %v5453, 0
    %v5496 = vsel %vm792, %v5455, 0
    %v5499 = vsel %vm792, %v5457, 0
    %v5502 = vsel %vm792, %v5459, 0
    %v5505 = vsel %vm792, %v5461, 0
    %v5508 = vsel %vm792, %v5463, 0
    %v5511 = vsel %vm792, %v5465, 0
    %v5514 = vsel %vm792, %v5467, 0
    %5516 = vmatprep.subr.bf16.mxu0 0
    %5517 = vmatpush1.bf16.xpose.msra.mxu0 %v5493
    %5518 = vmatprep.subr.bf16.mxu0 0
    %5519 = vmatpush1.bf16.xpose.msra.mxu0 %v5496
    %5520 = vmatprep.subr.bf16.mxu0 0
    %5521 = vmatpush1.bf16.xpose.msra.mxu0 %v5499
    %5522 = vmatprep.subr.bf16.mxu0 0
    %5523 = vmatpush1.bf16.xpose.msra.mxu0 %v5502
    %5524 = vmatprep.subr.bf16.mxu0 0
    %5525 = vmatpush1.bf16.xpose.msra.mxu0 %v5505
    %5526 = vmatprep.subr.bf16.mxu0 0
    %5527 = vmatpush1.bf16.xpose.msra.mxu0 %v5508
    %5528 = vmatprep.subr.bf16.mxu0 0
    %5529 = vmatpush1.bf16.xpose.msra.mxu0 %v5511
    %5530 = vmatprep.subr.bf16.mxu0 0
    %5531 = vmatpush1.bf16.xpose.msra.mxu0 %v5514
    %5532 = vmatprep.subr.bf16.mxu0 0
    %5533 = vmatpush1.bf16.xpose.msra.mxu0 0
    %5534 = vmatprep.subr.bf16.mxu0 0
    %5535 = vmatpush1.bf16.xpose.msra.mxu0 0
    %5536 = vmatprep.subr.bf16.mxu0 0
    %5537 = vmatpush1.bf16.xpose.msra.mxu0 0
    %5538 = vmatprep.subr.bf16.mxu0 0
    %5539 = vmatpush1.bf16.xpose.msra.mxu0 0
    %5540 = vmatprep.subr.bf16.mxu0 0
    %5541 = vmatpush1.bf16.xpose.msra.mxu0 0
    %5542 = vmatprep.subr.bf16.mxu0 0
    %5543 = vmatpush1.bf16.xpose.msra.mxu0 0
    %5544 = vmatprep.subr.bf16.mxu0 0
    %5545 = vmatpush1.bf16.xpose.msra.mxu0 0
    %5546 = vmatprep.subr.bf16.mxu0 0
    %5547 = vmatpush1.bf16.xpose.msra.mxu0 0
    %5548 = vmatprep.mubr.bf16.mxu0 0
    %5549 = vmatmul.mubr.bf16.gmra.mrb[0].mxu0 %v5469
    %v5550 = vpop.f32.mrb[0].mxu0
    %v5551 = vadd.f32 %v69, %v5550
    %v5552 = vpop.f32.mrb[0].mxu0
    %v5553 = vpop.f32.mrb[0].mxu0
    %v5554 = vadd.f32 %v70, %v5553
    %v5555 = vpop.f32.mrb[0].mxu0
    %5556 = vmatprep.mubr.bf16.mxu0 0
    %5557 = vmatmul.mubr.bf16.gmra.mrb[0].mxu0 %v5472
    %v5558 = vpop.f32.mrb[0].mxu0
    %v5559 = vadd.f32 %v71, %v5558
    %v5560 = vpop.f32.mrb[0].mxu0
    %v5561 = vpop.f32.mrb[0].mxu0
    %v5562 = vadd.f32 %v72, %v5561
    %v5563 = vpop.f32.mrb[0].mxu0
    %5564 = vmatprep.mubr.bf16.mxu0 0
    %5565 = vmatmul.mubr.bf16.gmra.mrb[0].mxu0 %v5475
    %v5566 = vpop.f32.mrb[0].mxu0
    %v5567 = vadd.f32 %v73, %v5566
    %v5568 = vpop.f32.mrb[0].mxu0
    %v5569 = vpop.f32.mrb[0].mxu0
    %v5570 = vadd.f32 %v74, %v5569
    %v5571 = vpop.f32.mrb[0].mxu0
    %5572 = vmatprep.mubr.bf16.mxu0 0
    %5573 = vmatmul.mubr.bf16.gmra.mrb[0].mxu0 %v5478
    %v5574 = vpop.f32.mrb[0].mxu0
    %v5575 = vadd.f32 %v75, %v5574
    %v5576 = vpop.f32.mrb[0].mxu0
    %v5577 = vpop.f32.mrb[0].mxu0
    %v5578 = vadd.f32 %v76, %v5577
    %v5579 = vpop.f32.mrb[0].mxu0
    %5580 = vmatprep.mubr.bf16.mxu0 0
    %5581 = vmatmul.mubr.bf16.gmra.mrb[0].mxu0 %v5481
    %v5582 = vpop.f32.mrb[0].mxu0
    %v5583 = vadd.f32 %v77, %v5582
    %v5584 = vpop.f32.mrb[0].mxu0
    %v5585 = vpop.f32.mrb[0].mxu0
    %v5586 = vadd.f32 %v78, %v5585
    %v5587 = vpop.f32.mrb[0].mxu0
    %5588 = vmatprep.mubr.bf16.mxu0 0
    %5589 = vmatmul.mubr.bf16.gmra.mrb[0].mxu0 %v5484
    %v5590 = vpop.f32.mrb[0].mxu0
    %v5591 = vadd.f32 %v79, %v5590
    %v5592 = vpop.f32.mrb[0].mxu0
    %v5593 = vpop.f32.mrb[0].mxu0
    %v5594 = vadd.f32 %v80, %v5593
    %v5595 = vpop.f32.mrb[0].mxu0
    %5596 = vmatprep.mubr.bf16.mxu0 0
    %5597 = vmatmul.mubr.bf16.gmra.mrb[0].mxu0 %v5487
    %v5598 = vpop.f32.mrb[0].mxu0
    %v5599 = vadd.f32 %v81, %v5598
    %v5600 = vpop.f32.mrb[0].mxu0
    %v5601 = vpop.f32.mrb[0].mxu0
    %v5602 = vadd.f32 %v82, %v5601
    %v5603 = vpop.f32.mrb[0].mxu0
    %5604 = vmatprep.mubr.bf16.mxu0 0
    %5605 = vmatmul.mubr.bf16.gmra.mrb[0].mxu0 %v5490
    %v5606 = vpop.f32.mrb[0].mxu0
    %v5607 = vadd.f32 %v83, %v5606
    %v5608 = vpop.f32.mrb[0].mxu0
    %v5609 = vpop.f32.mrb[0].mxu0
    %v5610 = vadd.f32 %v84, %v5609
    %v5611 = vpop.f32.mrb[0].mxu0
    %5612 = vdwg.mxu0
    %5613 = vmax.xlane.f32.xlu0 %v5551
    %v5614 = vpop.xlane.xlu0 %5613
    %5615 = vmax.xlane.f32.xlu0 %v5554
    %v5616 = vpop.xlane.xlu0 %5615
    %5617 = vmax.xlane.f32.xlu0 %v5559
    %v5618 = vpop.xlane.xlu0 %5617
    %5619 = vmax.xlane.f32.xlu0 %v5562
    %v5620 = vpop.xlane.xlu0 %5619
    %5621 = vmax.xlane.f32.xlu0 %v5567
    %v5622 = vpop.xlane.xlu0 %5621
    %5623 = vmax.xlane.f32.xlu0 %v5570
    %v5624 = vpop.xlane.xlu0 %5623
    %5625 = vmax.xlane.f32.xlu0 %v5575
    %v5626 = vpop.xlane.xlu0 %5625
    %5627 = vmax.xlane.f32.xlu0 %v5578
    %v5628 = vpop.xlane.xlu0 %5627
    %5629 = vmax.xlane.f32.xlu0 %v5583
    %v5630 = vpop.xlane.xlu0 %5629
    %5631 = vmax.xlane.f32.xlu0 %v5586
    %v5632 = vpop.xlane.xlu0 %5631
    %5633 = vmax.xlane.f32.xlu0 %v5591
    %v5634 = vpop.xlane.xlu0 %5633
    %5635 = vmax.xlane.f32.xlu0 %v5594
    %v5636 = vpop.xlane.xlu0 %5635
    %5637 = vmax.xlane.f32.xlu0 %v5599
    %v5638 = vpop.xlane.xlu0 %5637
    %5639 = vmax.xlane.f32.xlu0 %v5602
    %v5640 = vpop.xlane.xlu0 %5639
    %5641 = vmax.xlane.f32.xlu0 %v5607
    %v5642 = vpop.xlane.xlu0 %5641
    %5643 = vmax.xlane.f32.xlu0 %v5610
    %v5644 = vpop.xlane.xlu0 %5643
    %v5645 = vsub.f32 %v5551, %v5614
    %v5646 = vsub.f32 %v5554, %v5616
    %v5647 = vsub.f32 %v5559, %v5618
    %v5648 = vsub.f32 %v5562, %v5620
    %v5649 = vsub.f32 %v5567, %v5622
    %v5650 = vsub.f32 %v5570, %v5624
    %v5651 = vsub.f32 %v5575, %v5626
    %v5652 = vsub.f32 %v5578, %v5628
    %v5653 = vsub.f32 %v5583, %v5630
    %v5654 = vsub.f32 %v5586, %v5632
    %v5655 = vsub.f32 %v5591, %v5634
    %v5656 = vsub.f32 %v5594, %v5636
    %v5657 = vsub.f32 %v5599, %v5638
    %v5658 = vsub.f32 %v5602, %v5640
    %v5659 = vsub.f32 %v5607, %v5642
    %v5660 = vsub.f32 %v5610, %v5644
    %v5661 = vmul.f32 %v5645, 1.442695
    %v5662 = vpow.pop %v5661
    %v5663 = vmul.f32 %v5646, 1.442695
    %v5664 = vpow.pop %v5663
    %v5665 = vmul.f32 %v5647, 1.442695
    %v5666 = vpow.pop %v5665
    %v5667 = vmul.f32 %v5648, 1.442695
    %v5668 = vpow.pop %v5667
    %v5669 = vmul.f32 %v5649, 1.442695
    %v5670 = vpow.pop %v5669
    %v5671 = vmul.f32 %v5650, 1.442695
    %v5672 = vpow.pop %v5671
    %v5673 = vmul.f32 %v5651, 1.442695
    %v5674 = vpow.pop %v5673
    %v5675 = vmul.f32 %v5652, 1.442695
    %v5676 = vpow.pop %v5675
    %v5677 = vmul.f32 %v5653, 1.442695
    %v5678 = vpow.pop %v5677
    %v5679 = vmul.f32 %v5654, 1.442695
    %v5680 = vpow.pop %v5679
    %v5681 = vmul.f32 %v5655, 1.442695
    %v5682 = vpow.pop %v5681
    %v5683 = vmul.f32 %v5656, 1.442695
    %v5684 = vpow.pop %v5683
    %v5685 = vmul.f32 %v5657, 1.442695
    %v5686 = vpow.pop %v5685
    %v5687 = vmul.f32 %v5658, 1.442695
    %v5688 = vpow.pop %v5687
    %v5689 = vmul.f32 %v5659, 1.442695
    %v5690 = vpow.pop %v5689
    %v5691 = vmul.f32 %v5660, 1.442695
    %v5692 = vpow.pop %v5691
    %5693 = vadd.xlane.f32.xlu0 %v5662
    %v5694 = vpop.xlane.xlu0 %5693
    %5695 = vadd.xlane.f32.xlu0 %v5664
    %v5696 = vpop.xlane.xlu0 %5695
    %5697 = vadd.xlane.f32.xlu0 %v5666
    %v5698 = vpop.xlane.xlu0 %5697
    %5699 = vadd.xlane.f32.xlu0 %v5668
    %v5700 = vpop.xlane.xlu0 %5699
    %5701 = vadd.xlane.f32.xlu0 %v5670
    %v5702 = vpop.xlane.xlu0 %5701
    %5703 = vadd.xlane.f32.xlu0 %v5672
    %v5704 = vpop.xlane.xlu0 %5703
    %5705 = vadd.xlane.f32.xlu0 %v5674
    %v5706 = vpop.xlane.xlu0 %5705
    %5707 = vadd.xlane.f32.xlu0 %v5676
    %v5708 = vpop.xlane.xlu0 %5707
    %5709 = vadd.xlane.f32.xlu0 %v5678
    %v5710 = vpop.xlane.xlu0 %5709
    %5711 = vadd.xlane.f32.xlu0 %v5680
    %v5712 = vpop.xlane.xlu0 %5711
    %5713 = vadd.xlane.f32.xlu0 %v5682
    %v5714 = vpop.xlane.xlu0 %5713
    %5715 = vadd.xlane.f32.xlu0 %v5684
    %v5716 = vpop.xlane.xlu0 %5715
    %5717 = vadd.xlane.f32.xlu0 %v5686
    %v5718 = vpop.xlane.xlu0 %5717
    %5719 = vadd.xlane.f32.xlu0 %v5688
    %v5720 = vpop.xlane.xlu0 %5719
    %5721 = vadd.xlane.f32.xlu0 %v5690
    %v5722 = vpop.xlane.xlu0 %5721
    %5723 = vadd.xlane.f32.xlu0 %v5692
    %v5724 = vpop.xlane.xlu0 %5723
    %v5725 = vrcp.pop %v5694
    %v5726 = vmul.f32 %v5662, %v5725
    %v5727 = vrcp.pop %v5696
    %v5728 = vmul.f32 %v5664, %v5727
    %v5729 = vrcp.pop %v5698
    %v5730 = vmul.f32 %v5666, %v5729
    %v5731 = vrcp.pop %v5700
    %v5732 = vmul.f32 %v5668, %v5731
    %v5733 = vrcp.pop %v5702
    %v5734 = vmul.f32 %v5670, %v5733
    %v5735 = vrcp.pop %v5704
    %v5736 = vmul.f32 %v5672, %v5735
    %v5737 = vrcp.pop %v5706
    %v5738 = vmul.f32 %v5674, %v5737
    %v5739 = vrcp.pop %v5708
    %v5740 = vmul.f32 %v5676, %v5739
    %v5741 = vrcp.pop %v5710
    %v5742 = vmul.f32 %v5678, %v5741
    %v5743 = vrcp.pop %v5712
    %v5744 = vmul.f32 %v5680, %v5743
    %v5745 = vrcp.pop %v5714
    %v5746 = vmul.f32 %v5682, %v5745
    %v5747 = vrcp.pop %v5716
    %v5748 = vmul.f32 %v5684, %v5747
    %v5749 = vrcp.pop %v5718
    %v5750 = vmul.f32 %v5686, %v5749
    %v5751 = vrcp.pop %v5720
    %v5752 = vmul.f32 %v5688, %v5751
    %v5753 = vrcp.pop %v5722
    %v5754 = vmul.f32 %v5690, %v5753
    %v5755 = vrcp.pop %v5724
    %v5756 = vmul.f32 %v5692, %v5755
    %v5757 = vmul.f32 %v3880, %v2589
    %v5758 = vmul.f32 %v3883, %v2589
    %v5759 = vmul.f32 %v3888, %v2589
    %v5760 = vmul.f32 %v3891, %v2589
    %v5761 = vmul.f32 %v3896, %v2589
    %v5762 = vmul.f32 %v3899, %v2589
    %v5763 = vmul.f32 %v3904, %v2589
    %v5764 = vmul.f32 %v3907, %v2589
    %v5765 = vmul.f32 %v3912, %v2589
    %v5766 = vmul.f32 %v3915, %v2589
    %v5767 = vmul.f32 %v3920, %v2589
    %v5768 = vmul.f32 %v3923, %v2589
    %v5769 = vmul.f32 %v3928, %v2589
    %v5770 = vmul.f32 %v3931, %v2589
    %v5771 = vmul.f32 %v3936, %v2589
    %v5772 = vmul.f32 %v3939, %v2589
    %v5773 = vpack.c.bf16 %v5758, %v5757
    %v5774 = vpack.c.bf16 %v5760, %v5759
    %v5775 = vpack.c.bf16 %v5762, %v5761
    %v5776 = vpack.c.bf16 %v5764, %v5763
    %v5777 = vpack.c.bf16 %v5766, %v5765
    %v5778 = vpack.c.bf16 %v5768, %v5767
    %v5779 = vpack.c.bf16 %v5770, %v5769
    %v5780 = vpack.c.bf16 %v5772, %v5771
    %v5781 = vpack.c.bf16 %v5728, %v5726
    %v5782 = vpack.c.bf16 %v5732, %v5730
    %v5783 = vpack.c.bf16 %v5736, %v5734
    %v5784 = vpack.c.bf16 %v5740, %v5738
    %v5785 = vpack.c.bf16 %v5744, %v5742
    %v5786 = vpack.c.bf16 %v5748, %v5746
    %v5787 = vpack.c.bf16 %v5752, %v5750
    %v5788 = vpack.c.bf16 %v5756, %v5754
    %5797 = vrot.lane.b32.xlu0 %v5773, 64
    %v5798 = vpop.permute.xlu0 %5797
    %5799 = vrot.lane.b32.xlu0 %v5774, 64
    %v5800 = vpop.permute.xlu0 %5799
    %5801 = vrot.lane.b32.xlu0 %v5775, 64
    %v5802 = vpop.permute.xlu0 %5801
    %5803 = vrot.lane.b32.xlu0 %v5776, 64
    %v5804 = vpop.permute.xlu0 %5803
    %5805 = vrot.lane.b32.xlu0 %v5777, 64
    %v5806 = vpop.permute.xlu0 %5805
    %5807 = vrot.lane.b32.xlu0 %v5778, 64
    %v5808 = vpop.permute.xlu0 %5807
    %5809 = vrot.lane.b32.xlu0 %v5779, 64
    %v5810 = vpop.permute.xlu0 %5809
    %5811 = vrot.lane.b32.xlu0 %v5780, 64
    %v5812 = vpop.permute.xlu0 %5811
    %5821 = vmatprep.subr.bf16.mxu0 0
    %5822 = vmatpush1.bf16.msra.mxu0 %v5798
    %5823 = vmatprep.subr.bf16.mxu0 0
    %5824 = vmatpush1.bf16.msra.mxu0 %v5800
    %5825 = vmatprep.subr.bf16.mxu0 0
    %5826 = vmatpush1.bf16.msra.mxu0 %v5802
    %5827 = vmatprep.subr.bf16.mxu0 0
    %5828 = vmatpush1.bf16.msra.mxu0 %v5804
    %5829 = vmatprep.subr.bf16.mxu0 0
    %5830 = vmatpush1.bf16.msra.mxu0 %v5806
    %5831 = vmatprep.subr.bf16.mxu0 0
    %5832 = vmatpush1.bf16.msra.mxu0 %v5808
    %5833 = vmatprep.subr.bf16.mxu0 0
    %5834 = vmatpush1.bf16.msra.mxu0 %v5810
    %5835 = vmatprep.subr.bf16.mxu0 0
    %5836 = vmatpush1.bf16.msra.mxu0 %v5812
    %5837 = vmatprep.subr.bf16.mxu0 0
    %5838 = vmatpush1.bf16.msra.mxu0 0
    %5839 = vmatprep.subr.bf16.mxu0 0
    %5840 = vmatpush1.bf16.msra.mxu0 0
    %5841 = vmatprep.subr.bf16.mxu0 0
    %5842 = vmatpush1.bf16.msra.mxu0 0
    %5843 = vmatprep.subr.bf16.mxu0 0
    %5844 = vmatpush1.bf16.msra.mxu0 0
    %5845 = vmatprep.subr.bf16.mxu0 0
    %5846 = vmatpush1.bf16.msra.mxu0 0
    %5847 = vmatprep.subr.bf16.mxu0 0
    %5848 = vmatpush1.bf16.msra.mxu0 0
    %5849 = vmatprep.subr.bf16.mxu0 0
    %5850 = vmatpush1.bf16.msra.mxu0 0
    %5851 = vmatprep.subr.bf16.mxu0 0
    %5852 = vmatpush1.bf16.msra.mxu0 0
    %5853 = vmatprep.mubr.bf16.mxu0 0
    %5854 = vmatmul.mubr.bf16.gmra.mrb[0].mxu0 %v5781
    %v5855 = vpop.f32.mrb[0].mxu0
    %v5856 = vadd.f32 0.0, %v5855
    %v5857 = vpop.f32.mrb[0].mxu0
    %v5858 = vpop.f32.mrb[0].mxu0
    %v5859 = vadd.f32 0.0, %v5858
    %v5860 = vpop.f32.mrb[0].mxu0
    %5861 = vmatprep.mubr.bf16.mxu0 0
    %5862 = vmatmul.mubr.bf16.gmra.mrb[0].mxu0 %v5782
    %v5863 = vpop.f32.mrb[0].mxu0
    %v5864 = vadd.f32 0.0, %v5863
    %v5865 = vpop.f32.mrb[0].mxu0
    %v5866 = vpop.f32.mrb[0].mxu0
    %v5867 = vadd.f32 0.0, %v5866
    %v5868 = vpop.f32.mrb[0].mxu0
    %5869 = vmatprep.mubr.bf16.mxu0 0
    %5870 = vmatmul.mubr.bf16.gmra.mrb[0].mxu0 %v5783
    %v5871 = vpop.f32.mrb[0].mxu0
    %v5872 = vadd.f32 0.0, %v5871
    %v5873 = vpop.f32.mrb[0].mxu0
    %v5874 = vpop.f32.mrb[0].mxu0
    %v5875 = vadd.f32 0.0, %v5874
    %v5876 = vpop.f32.mrb[0].mxu0
    %5877 = vmatprep.mubr.bf16.mxu0 0
    %5878 = vmatmul.mubr.bf16.gmra.mrb[0].mxu0 %v5784
    %v5879 = vpop.f32.mrb[0].mxu0
    %v5880 = vadd.f32 0.0, %v5879
    %v5881 = vpop.f32.mrb[0].mxu0
    %v5882 = vpop.f32.mrb[0].mxu0
    %v5883 = vadd.f32 0.0, %v5882
    %v5884 = vpop.f32.mrb[0].mxu0
    %5885 = vmatprep.mubr.bf16.mxu0 0
    %5886 = vmatmul.mubr.bf16.gmra.mrb[0].mxu0 %v5785
    %v5887 = vpop.f32.mrb[0].mxu0
    %v5888 = vadd.f32 0.0, %v5887
    %v5889 = vpop.f32.mrb[0].mxu0
    %v5890 = vpop.f32.mrb[0].mxu0
    %v5891 = vadd.f32 0.0, %v5890
    %v5892 = vpop.f32.mrb[0].mxu0
    %5893 = vmatprep.mubr.bf16.mxu0 0
    %5894 = vmatmul.mubr.bf16.gmra.mrb[0].mxu0 %v5786
    %v5895 = vpop.f32.mrb[0].mxu0
    %v5896 = vadd.f32 0.0, %v5895
    %v5897 = vpop.f32.mrb[0].mxu0
    %v5898 = vpop.f32.mrb[0].mxu0
    %v5899 = vadd.f32 0.0, %v5898
    %v5900 = vpop.f32.mrb[0].mxu0
    %5901 = vmatprep.mubr.bf16.mxu0 0
    %5902 = vmatmul.mubr.bf16.gmra.mrb[0].mxu0 %v5787
    %v5903 = vpop.f32.mrb[0].mxu0
    %v5904 = vadd.f32 0.0, %v5903
    %v5905 = vpop.f32.mrb[0].mxu0
    %v5906 = vpop.f32.mrb[0].mxu0
    %v5907 = vadd.f32 0.0, %v5906
    %v5908 = vpop.f32.mrb[0].mxu0
    %5909 = vmatprep.mubr.bf16.mxu0 0
    %5910 = vmatmul.mubr.bf16.gmra.mrb[0].mxu0 %v5788
    %v5911 = vpop.f32.mrb[0].mxu0
    %v5912 = vadd.f32 0.0, %v5911
    %v5913 = vpop.f32.mrb[0].mxu0
    %v5914 = vpop.f32.mrb[0].mxu0
    %v5915 = vadd.f32 0.0, %v5914
    %v5916 = vpop.f32.mrb[0].mxu0
    %5917 = vdwg.mxu0
    %v5918 = vadd.f32 %v5420, %v5856
    %v5919 = vadd.f32 %v5421, %v5859
    %v5920 = vadd.f32 %v5422, %v5864
    %v5921 = vadd.f32 %v5423, %v5867
    %v5922 = vadd.f32 %v5424, %v5872
    %v5923 = vadd.f32 %v5425, %v5875
    %v5924 = vadd.f32 %v5426, %v5880
    %v5925 = vadd.f32 %v5427, %v5883
    %v5926 = vadd.f32 %v5428, %v5888
    %v5927 = vadd.f32 %v5429, %v5891
    %v5928 = vadd.f32 %v5430, %v5896
    %v5929 = vadd.f32 %v5431, %v5899
    %v5930 = vadd.f32 %v5432, %v5904
    %v5931 = vadd.f32 %v5433, %v5907
    %v5932 = vadd.f32 %v5434, %v5912
    %v5933 = vadd.f32 %v5435, %v5915
    %v5934 = vpack.c.bf16 %v5919, %v5918
    %v5935 = vpack.c.bf16 %v5921, %v5920
    %v5936 = vpack.c.bf16 %v5923, %v5922
    %v5937 = vpack.c.bf16 %v5925, %v5924
    %v5938 = vpack.c.bf16 %v5927, %v5926
    %v5939 = vpack.c.bf16 %v5929, %v5928
    %v5940 = vpack.c.bf16 %v5931, %v5930
    %v5941 = vpack.c.bf16 %v5933, %v5932
    %s5942 = scalar_lea.vmem %s8, 16
    %v5943 = vld [vmem:[%s5942] sm:$0xf]
    %v5944 = vld [vmem:[%s5942 + $0x4] sm:$0xf]
    %v5945 = vld [vmem:[%s5942 + $0x8] sm:$0xf]
    %v5946 = vld [vmem:[%s5942 + $0xc] sm:$0xf]
    %s5947 = scalar_lea.vmem %s9, 1
    %v5948 = vld [vmem:[%s5947] sm:$0x1]
    %v5950 = vlaneseq
    %v5951 = vshrl.u32 %v5950, 7
    %v5952 = vsub.s32 0, %v5951
    %v5953 = vrot.slane %v5948, %v5952
    %v5959 = vunpack.c.l.b16 %v5943
    %v5960 = vunpack.c.l.b16 %v5944
    %v5961 = vunpack.c.l.b16 %v5945
    %v5962 = vunpack.c.l.b16 %v5946
    %v5963 = vpack.c.b16 %v5960, %v5959
    %v5964 = vpack.c.b16 %v5962, %v5961
    %v5968 = vsel %vm614, %v5934, 0
    %v5971 = vsel %vm614, %v5935, 0
    %v5974 = vsel %vm614, %v5936, 0
    %v5977 = vsel %vm614, %v5937, 0
    %v5980 = vsel %vm614, %v5938, 0
    %v5983 = vsel %vm614, %v5939, 0
    %v5986 = vsel %vm614, %v5940, 0
    %v5989 = vsel %vm614, %v5941, 0
    %5991 = vmatprep.subr.bf16.mxu0 0
    %5992 = vmatpush1.bf16.msra.mxu0 %v5963
    %5993 = vmatprep.subr.bf16.mxu0 0
    %5994 = vmatpush1.bf16.msra.mxu0 %v5964
    %5995 = vmatprep.subr.bf16.mxu0 0
    %5996 = vmatpush1.bf16.msra.mxu0 0
    %5997 = vmatprep.subr.bf16.mxu0 0
    %5998 = vmatpush1.bf16.msra.mxu0 0
    %5999 = vmatprep.subr.bf16.mxu0 0
    %6000 = vmatpush1.bf16.msra.mxu0 0
    %6001 = vmatprep.subr.bf16.mxu0 0
    %6002 = vmatpush1.bf16.msra.mxu0 0
    %6003 = vmatprep.subr.bf16.mxu0 0
    %6004 = vmatpush1.bf16.msra.mxu0 0
    %6005 = vmatprep.subr.bf16.mxu0 0
    %6006 = vmatpush1.bf16.msra.mxu0 0
    %6007 = vmatprep.subr.bf16.mxu0 0
    %6008 = vmatpush1.bf16.msra.mxu0 0
    %6009 = vmatprep.subr.bf16.mxu0 0
    %6010 = vmatpush1.bf16.msra.mxu0 0
    %6011 = vmatprep.subr.bf16.mxu0 0
    %6012 = vmatpush1.bf16.msra.mxu0 0
    %6013 = vmatprep.subr.bf16.mxu0 0
    %6014 = vmatpush1.bf16.msra.mxu0 0
    %6015 = vmatprep.subr.bf16.mxu0 0
    %6016 = vmatpush1.bf16.msra.mxu0 0
    %6017 = vmatprep.subr.bf16.mxu0 0
    %6018 = vmatpush1.bf16.msra.mxu0 0
    %6019 = vmatprep.subr.bf16.mxu0 0
    %6020 = vmatpush1.bf16.msra.mxu0 0
    %6021 = vmatprep.subr.bf16.mxu0 0
    %6022 = vmatpush1.bf16.msra.mxu0 0
    %6023 = vmatprep.mubr.bf16.mxu0 0
    %6024 = vmatmul.mubr.bf16.gmra.mrb[0].mxu0 %v5968
    %v6025 = vpop.f32.mrb[0].mxu0
    %v6026 = vadd.f32 %v5953, %v6025
    %v6027 = vpop.f32.mrb[0].mxu0
    %v6028 = vpop.f32.mrb[0].mxu0
    %v6029 = vadd.f32 %v5953, %v6028
    %v6030 = vpop.f32.mrb[0].mxu0
    %6031 = vmatprep.mubr.bf16.mxu0 0
    %6032 = vmatmul.mubr.bf16.gmra.mrb[0].mxu0 %v5971
    %v6033 = vpop.f32.mrb[0].mxu0
    %v6034 = vadd.f32 %v5953, %v6033
    %v6035 = vpop.f32.mrb[0].mxu0
    %v6036 = vpop.f32.mrb[0].mxu0
    %v6037 = vadd.f32 %v5953, %v6036
    %v6038 = vpop.f32.mrb[0].mxu0
    %6039 = vmatprep.mubr.bf16.mxu0 0
    %6040 = vmatmul.mubr.bf16.gmra.mrb[0].mxu0 %v5974
    %v6041 = vpop.f32.mrb[0].mxu0
    %v6042 = vadd.f32 %v5953, %v6041
    %v6043 = vpop.f32.mrb[0].mxu0
    %v6044 = vpop.f32.mrb[0].mxu0
    %v6045 = vadd.f32 %v5953, %v6044
    %v6046 = vpop.f32.mrb[0].mxu0
    %6047 = vmatprep.mubr.bf16.mxu0 0
    %6048 = vmatmul.mubr.bf16.gmra.mrb[0].mxu0 %v5977
    %v6049 = vpop.f32.mrb[0].mxu0
    %v6050 = vadd.f32 %v5953, %v6049
    %v6051 = vpop.f32.mrb[0].mxu0
    %v6052 = vpop.f32.mrb[0].mxu0
    %v6053 = vadd.f32 %v5953, %v6052
    %v6054 = vpop.f32.mrb[0].mxu0
    %6055 = vmatprep.mubr.bf16.mxu0 0
    %6056 = vmatmul.mubr.bf16.gmra.mrb[0].mxu0 %v5980
    %v6057 = vpop.f32.mrb[0].mxu0
    %v6058 = vadd.f32 %v5953, %v6057
    %v6059 = vpop.f32.mrb[0].mxu0
    %v6060 = vpop.f32.mrb[0].mxu0
    %v6061 = vadd.f32 %v5953, %v6060
    %v6062 = vpop.f32.mrb[0].mxu0
    %6063 = vmatprep.mubr.bf16.mxu0 0
    %6064 = vmatmul.mubr.bf16.gmra.mrb[0].mxu0 %v5983
    %v6065 = vpop.f32.mrb[0].mxu0
    %v6066 = vadd.f32 %v5953, %v6065
    %v6067 = vpop.f32.mrb[0].mxu0
    %v6068 = vpop.f32.mrb[0].mxu0
    %v6069 = vadd.f32 %v5953, %v6068
    %v6070 = vpop.f32.mrb[0].mxu0
    %6071 = vmatprep.mubr.bf16.mxu0 0
    %6072 = vmatmul.mubr.bf16.gmra.mrb[0].mxu0 %v5986
    %v6073 = vpop.f32.mrb[0].mxu0
    %v6074 = vadd.f32 %v5953, %v6073
    %v6075 = vpop.f32.mrb[0].mxu0
    %v6076 = vpop.f32.mrb[0].mxu0
    %v6077 = vadd.f32 %v5953, %v6076
    %v6078 = vpop.f32.mrb[0].mxu0
    %6079 = vmatprep.mubr.bf16.mxu0 0
    %6080 = vmatmul.mubr.bf16.gmra.mrb[0].mxu0 %v5989
    %v6081 = vpop.f32.mrb[0].mxu0
    %v6082 = vadd.f32 %v5953, %v6081
    %v6083 = vpop.f32.mrb[0].mxu0
    %v6084 = vpop.f32.mrb[0].mxu0
    %v6085 = vadd.f32 %v5953, %v6084
    %v6086 = vpop.f32.mrb[0].mxu0
    %6087 = vdwg.mxu0
    %v6088 = vadd.f32 %v3772, %v6026
    %v6089 = vadd.f32 %v3773, %v6029
    %v6090 = vadd.f32 %v3774, %v6034
    %v6091 = vadd.f32 %v3775, %v6037
    %v6092 = vadd.f32 %v3776, %v6042
    %v6093 = vadd.f32 %v3777, %v6045
    %v6094 = vadd.f32 %v3778, %v6050
    %v6095 = vadd.f32 %v3779, %v6053
    %v6096 = vadd.f32 %v3780, %v6058
    %v6097 = vadd.f32 %v3781, %v6061
    %v6098 = vadd.f32 %v3782, %v6066
    %v6099 = vadd.f32 %v3783, %v6069
    %v6100 = vadd.f32 %v3784, %v6074
    %v6101 = vadd.f32 %v3785, %v6077
    %v6102 = vadd.f32 %v3786, %v6082
    %v6103 = vadd.f32 %v3787, %v6085
    %s6104 = scalar_lea.vmem %s10, 2
    %v6105 = vld [vmem:[%s6104] sm:$0x3]
    %v6106 = vsel %vm614, %v6088, 0.0
    %6107 = vadd.xlane.f32.xlu0 %v6106
    %v6108 = vpop.xlane.xlu0 %6107
    %v6109 = vsel %vm614, %v6089, 0.0
    %6110 = vadd.xlane.f32.xlu0 %v6109
    %v6111 = vpop.xlane.xlu0 %6110
    %v6112 = vsel %vm614, %v6090, 0.0
    %6113 = vadd.xlane.f32.xlu0 %v6112
    %v6114 = vpop.xlane.xlu0 %6113
    %v6115 = vsel %vm614, %v6091, 0.0
    %6116 = vadd.xlane.f32.xlu0 %v6115
    %v6117 = vpop.xlane.xlu0 %6116
    %v6118 = vsel %vm614, %v6092, 0.0
    %6119 = vadd.xlane.f32.xlu0 %v6118
    %v6120 = vpop.xlane.xlu0 %6119
    %v6121 = vsel %vm614, %v6093, 0.0
    %6122 = vadd.xlane.f32.xlu0 %v6121
    %v6123 = vpop.xlane.xlu0 %6122
    %v6124 = vsel %vm614, %v6094, 0.0
    %6125 = vadd.xlane.f32.xlu0 %v6124
    %v6126 = vpop.xlane.xlu0 %6125
    %v6127 = vsel %vm614, %v6095, 0.0
    %6128 = vadd.xlane.f32.xlu0 %v6127
    %v6129 = vpop.xlane.xlu0 %6128
    %v6130 = vsel %vm614, %v6096, 0.0
    %6131 = vadd.xlane.f32.xlu0 %v6130
    %v6132 = vpop.xlane.xlu0 %6131
    %v6133 = vsel %vm614, %v6097, 0.0
    %6134 = vadd.xlane.f32.xlu0 %v6133
    %v6135 = vpop.xlane.xlu0 %6134
    %v6136 = vsel %vm614, %v6098, 0.0
    %6137 = vadd.xlane.f32.xlu0 %v6136
    %v6138 = vpop.xlane.xlu0 %6137
    %v6139 = vsel %vm614, %v6099, 0.0
    %6140 = vadd.xlane.f32.xlu0 %v6139
    %v6141 = vpop.xlane.xlu0 %6140
    %v6142 = vsel %vm614, %v6100, 0.0
    %6143 = vadd.xlane.f32.xlu0 %v6142
    %v6144 = vpop.xlane.xlu0 %6143
    %v6145 = vsel %vm614, %v6101, 0.0
    %6146 = vadd.xlane.f32.xlu0 %v6145
    %v6147 = vpop.xlane.xlu0 %6146
    %v6148 = vsel %vm614, %v6102, 0.0
    %6149 = vadd.xlane.f32.xlu0 %v6148
    %v6150 = vpop.xlane.xlu0 %6149
    %v6151 = vsel %vm614, %v6103, 0.0
    %6152 = vadd.xlane.f32.xlu0 %v6151
    %v6153 = vpop.xlane.xlu0 %6152
    %v6154 = vmul.f32 %v6108, %v2985
    %v6155 = vmul.f32 %v6111, %v2985
    %v6156 = vmul.f32 %v6114, %v2985
    %v6157 = vmul.f32 %v6117, %v2985
    %v6158 = vmul.f32 %v6120, %v2985
    %v6159 = vmul.f32 %v6123, %v2985
    %v6160 = vmul.f32 %v6126, %v2985
    %v6161 = vmul.f32 %v6129, %v2985
    %v6162 = vmul.f32 %v6132, %v2985
    %v6163 = vmul.f32 %v6135, %v2985
    %v6164 = vmul.f32 %v6138, %v2985
    %v6165 = vmul.f32 %v6141, %v2985
    %v6166 = vmul.f32 %v6144, %v2985
    %v6167 = vmul.f32 %v6147, %v2985
    %v6168 = vmul.f32 %v6150, %v2985
    %v6169 = vmul.f32 %v6153, %v2985
    %v6170 = vsub.f32 %v6088, %v6154
    %v6171 = vsub.f32 %v6089, %v6155
    %v6172 = vsub.f32 %v6090, %v6156
    %v6173 = vsub.f32 %v6091, %v6157
    %v6174 = vsub.f32 %v6092, %v6158
    %v6175 = vsub.f32 %v6093, %v6159
    %v6176 = vsub.f32 %v6094, %v6160
    %v6177 = vsub.f32 %v6095, %v6161
    %v6178 = vsub.f32 %v6096, %v6162
    %v6179 = vsub.f32 %v6097, %v6163
    %v6180 = vsub.f32 %v6098, %v6164
    %v6181 = vsub.f32 %v6099, %v6165
    %v6182 = vsub.f32 %v6100, %v6166
    %v6183 = vsub.f32 %v6101, %v6167
    %v6184 = vsub.f32 %v6102, %v6168
    %v6185 = vsub.f32 %v6103, %v6169
    %v6186 = vmul.f32 %v6170, %v6170
    %v6187 = vmul.f32 %v6171, %v6171
    %v6188 = vmul.f32 %v6172, %v6172
    %v6189 = vmul.f32 %v6173, %v6173
    %v6190 = vmul.f32 %v6174, %v6174
    %v6191 = vmul.f32 %v6175, %v6175
    %v6192 = vmul.f32 %v6176, %v6176
    %v6193 = vmul.f32 %v6177, %v6177
    %v6194 = vmul.f32 %v6178, %v6178
    %v6195 = vmul.f32 %v6179, %v6179
    %v6196 = vmul.f32 %v6180, %v6180
    %v6197 = vmul.f32 %v6181, %v6181
    %v6198 = vmul.f32 %v6182, %v6182
    %v6199 = vmul.f32 %v6183, %v6183
    %v6200 = vmul.f32 %v6184, %v6184
    %v6201 = vmul.f32 %v6185, %v6185
    %v6202 = vsel %vm614, %v6186, 0.0
    %6203 = vadd.xlane.f32.xlu0 %v6202
    %v6204 = vpop.xlane.xlu0 %6203
    %v6205 = vsel %vm614, %v6187, 0.0
    %6206 = vadd.xlane.f32.xlu0 %v6205
    %v6207 = vpop.xlane.xlu0 %6206
    %v6208 = vsel %vm614, %v6188, 0.0
    %6209 = vadd.xlane.f32.xlu0 %v6208
    %v6210 = vpop.xlane.xlu0 %6209
    %v6211 = vsel %vm614, %v6189, 0.0
    %6212 = vadd.xlane.f32.xlu0 %v6211
    %v6213 = vpop.xlane.xlu0 %6212
    %v6214 = vsel %vm614, %v6190, 0.0
    %6215 = vadd.xlane.f32.xlu0 %v6214
    %v6216 = vpop.xlane.xlu0 %6215
    %v6217 = vsel %vm614, %v6191, 0.0
    %6218 = vadd.xlane.f32.xlu0 %v6217
    %v6219 = vpop.xlane.xlu0 %6218
    %v6220 = vsel %vm614, %v6192, 0.0
    %6221 = vadd.xlane.f32.xlu0 %v6220
    %v6222 = vpop.xlane.xlu0 %6221
    %v6223 = vsel %vm614, %v6193, 0.0
    %6224 = vadd.xlane.f32.xlu0 %v6223
    %v6225 = vpop.xlane.xlu0 %6224
    %v6226 = vsel %vm614, %v6194, 0.0
    %6227 = vadd.xlane.f32.xlu0 %v6226
    %v6228 = vpop.xlane.xlu0 %6227
    %v6229 = vsel %vm614, %v6195, 0.0
    %6230 = vadd.xlane.f32.xlu0 %v6229
    %v6231 = vpop.xlane.xlu0 %6230
    %v6232 = vsel %vm614, %v6196, 0.0
    %6233 = vadd.xlane.f32.xlu0 %v6232
    %v6234 = vpop.xlane.xlu0 %6233
    %v6235 = vsel %vm614, %v6197, 0.0
    %6236 = vadd.xlane.f32.xlu0 %v6235
    %v6237 = vpop.xlane.xlu0 %6236
    %v6238 = vsel %vm614, %v6198, 0.0
    %6239 = vadd.xlane.f32.xlu0 %v6238
    %v6240 = vpop.xlane.xlu0 %6239
    %v6241 = vsel %vm614, %v6199, 0.0
    %6242 = vadd.xlane.f32.xlu0 %v6241
    %v6243 = vpop.xlane.xlu0 %6242
    %v6244 = vsel %vm614, %v6200, 0.0
    %6245 = vadd.xlane.f32.xlu0 %v6244
    %v6246 = vpop.xlane.xlu0 %6245
    %v6247 = vsel %vm614, %v6201, 0.0
    %6248 = vadd.xlane.f32.xlu0 %v6247
    %v6249 = vpop.xlane.xlu0 %6248
    %v6250 = vmul.f32 %v6204, %v2985
    %v6251 = vmul.f32 %v6207, %v2985
    %v6252 = vmul.f32 %v6210, %v2985
    %v6253 = vmul.f32 %v6213, %v2985
    %v6254 = vmul.f32 %v6216, %v2985
    %v6255 = vmul.f32 %v6219, %v2985
    %v6256 = vmul.f32 %v6222, %v2985
    %v6257 = vmul.f32 %v6225, %v2985
    %v6258 = vmul.f32 %v6228, %v2985
    %v6259 = vmul.f32 %v6231, %v2985
    %v6260 = vmul.f32 %v6234, %v2985
    %v6261 = vmul.f32 %v6237, %v2985
    %v6262 = vmul.f32 %v6240, %v2985
    %v6263 = vmul.f32 %v6243, %v2985
    %v6264 = vmul.f32 %v6246, %v2985
    %v6265 = vmul.f32 %v6249, %v2985
    %v6266 = vadd.f32 %v6250, 1e-05
    %v6267 = vadd.f32 %v6251, 1e-05
    %v6268 = vadd.f32 %v6252, 1e-05
    %v6269 = vadd.f32 %v6253, 1e-05
    %v6270 = vadd.f32 %v6254, 1e-05
    %v6271 = vadd.f32 %v6255, 1e-05
    %v6272 = vadd.f32 %v6256, 1e-05
    %v6273 = vadd.f32 %v6257, 1e-05
    %v6274 = vadd.f32 %v6258, 1e-05
    %v6275 = vadd.f32 %v6259, 1e-05
    %v6276 = vadd.f32 %v6260, 1e-05
    %v6277 = vadd.f32 %v6261, 1e-05
    %v6278 = vadd.f32 %v6262, 1e-05
    %v6279 = vadd.f32 %v6263, 1e-05
    %v6280 = vadd.f32 %v6264, 1e-05
    %v6281 = vadd.f32 %v6265, 1e-05
    %v6282 = vrsqrt.pop %v6266
    %v6283 = vrsqrt.pop %v6267
    %v6284 = vrsqrt.pop %v6268
    %v6285 = vrsqrt.pop %v6269
    %v6286 = vrsqrt.pop %v6270
    %v6287 = vrsqrt.pop %v6271
    %v6288 = vrsqrt.pop %v6272
    %v6289 = vrsqrt.pop %v6273
    %v6290 = vrsqrt.pop %v6274
    %v6291 = vrsqrt.pop %v6275
    %v6292 = vrsqrt.pop %v6276
    %v6293 = vrsqrt.pop %v6277
    %v6294 = vrsqrt.pop %v6278
    %v6295 = vrsqrt.pop %v6279
    %v6296 = vrsqrt.pop %v6280
    %v6297 = vrsqrt.pop %v6281
    %v6298 = vmul.f32 %v6170, %v6282
    %v6299 = vmul.f32 %v6171, %v6283
    %v6300 = vmul.f32 %v6172, %v6284
    %v6301 = vmul.f32 %v6173, %v6285
    %v6302 = vmul.f32 %v6174, %v6286
    %v6303 = vmul.f32 %v6175, %v6287
    %v6304 = vmul.f32 %v6176, %v6288
    %v6305 = vmul.f32 %v6177, %v6289
    %v6306 = vmul.f32 %v6178, %v6290
    %v6307 = vmul.f32 %v6179, %v6291
    %v6308 = vmul.f32 %v6180, %v6292
    %v6309 = vmul.f32 %v6181, %v6293
    %v6310 = vmul.f32 %v6182, %v6294
    %v6311 = vmul.f32 %v6183, %v6295
    %v6312 = vmul.f32 %v6184, %v6296
    %v6313 = vmul.f32 %v6185, %v6297
    %v6314 = vlaneseq
    %v6315 = vshrl.u32 %v6314, 7
    %v6316 = vsub.s32 0, %v6315
    %v6317 = vrot.slane %v6105, %v6316
    %v6318 = vmul.f32 %v6298, %v6317
    %v6319 = vmul.f32 %v6299, %v6317
    %v6320 = vmul.f32 %v6300, %v6317
    %v6321 = vmul.f32 %v6301, %v6317
    %v6322 = vmul.f32 %v6302, %v6317
    %v6323 = vmul.f32 %v6303, %v6317
    %v6324 = vmul.f32 %v6304, %v6317
    %v6325 = vmul.f32 %v6305, %v6317
    %v6326 = vmul.f32 %v6306, %v6317
    %v6327 = vmul.f32 %v6307, %v6317
    %v6328 = vmul.f32 %v6308, %v6317
    %v6329 = vmul.f32 %v6309, %v6317
    %v6330 = vmul.f32 %v6310, %v6317
    %v6331 = vmul.f32 %v6311, %v6317
    %v6332 = vmul.f32 %v6312, %v6317
    %v6333 = vmul.f32 %v6313, %v6317
    %v6334 = vlaneseq
    %v6335 = vshrl.u32 %v6334, 7
    %v6336 = vsub.s32 1, %v6335
    %v6337 = vrot.slane %v6105, %v6336
    %v6338 = vadd.f32 %v6318, %v6337
    %v6339 = vadd.f32 %v6319, %v6337
    %v6340 = vadd.f32 %v6320, %v6337
    %v6341 = vadd.f32 %v6321, %v6337
    %v6342 = vadd.f32 %v6322, %v6337
    %v6343 = vadd.f32 %v6323, %v6337
    %v6344 = vadd.f32 %v6324, %v6337
    %v6345 = vadd.f32 %v6325, %v6337
    %v6346 = vadd.f32 %v6326, %v6337
    %v6347 = vadd.f32 %v6327, %v6337
    %v6348 = vadd.f32 %v6328, %v6337
    %v6349 = vadd.f32 %v6329, %v6337
    %v6350 = vadd.f32 %v6330, %v6337
    %v6351 = vadd.f32 %v6331, %v6337
    %v6352 = vadd.f32 %v6332, %v6337
    %v6353 = vadd.f32 %v6333, %v6337
    %v6354 = vpack.c.bf16 %v6339, %v6338
    %v6355 = vpack.c.bf16 %v6341, %v6340
    %v6356 = vpack.c.bf16 %v6343, %v6342
    %v6357 = vpack.c.bf16 %v6345, %v6344
    %v6358 = vpack.c.bf16 %v6347, %v6346
    %v6359 = vpack.c.bf16 %v6349, %v6348
    %v6360 = vpack.c.bf16 %v6351, %v6350
    %v6361 = vpack.c.bf16 %v6353, %v6352
    %s6362 = scalar_lea.vmem %s11, 16
    %v6363 = vld [vmem:[%s6362] sm:$0xf]
    %v6364 = vld [vmem:[%s6362 + $0x4] sm:$0xf]
    %v6365 = vld [vmem:[%s6362 + $0x8] sm:$0xf]
    %v6366 = vld [vmem:[%s6362 + $0xc] sm:$0xf]
    %s6367 = scalar_lea.vmem %s12, 1
    %v6368 = vld [vmem:[%s6367] sm:$0x1]
    %v6370 = vlaneseq
    %v6371 = vshrl.u32 %v6370, 7
    %v6372 = vsub.s32 0, %v6371
    %v6373 = vrot.slane %v6368, %v6372
    %v6379 = vunpack.c.l.b16 %v6363
    %v6380 = vunpack.c.l.b16 %v6364
    %v6381 = vunpack.c.l.b16 %v6365
    %v6382 = vunpack.c.l.b16 %v6366
    %v6383 = vpack.c.b16 %v6380, %v6379
    %v6384 = vpack.c.b16 %v6382, %v6381
    %v6388 = vsel %vm614, %v6354, 0
    %v6391 = vsel %vm614, %v6355, 0
    %v6394 = vsel %vm614, %v6356, 0
    %v6397 = vsel %vm614, %v6357, 0
    %v6400 = vsel %vm614, %v6358, 0
    %v6403 = vsel %vm614, %v6359, 0
    %v6406 = vsel %vm614, %v6360, 0
    %v6409 = vsel %vm614, %v6361, 0
    %6411 = vmatprep.subr.bf16.mxu0 0
    %6412 = vmatpush1.bf16.msra.mxu0 %v6383
    %6413 = vmatprep.subr.bf16.mxu0 0
    %6414 = vmatpush1.bf16.msra.mxu0 %v6384
    %6415 = vmatprep.subr.bf16.mxu0 0
    %6416 = vmatpush1.bf16.msra.mxu0 0
    %6417 = vmatprep.subr.bf16.mxu0 0
    %6418 = vmatpush1.bf16.msra.mxu0 0
    %6419 = vmatprep.subr.bf16.mxu0 0
    %6420 = vmatpush1.bf16.msra.mxu0 0
    %6421 = vmatprep.subr.bf16.mxu0 0
    %6422 = vmatpush1.bf16.msra.mxu0 0
    %6423 = vmatprep.subr.bf16.mxu0 0
    %6424 = vmatpush1.bf16.msra.mxu0 0
    %6425 = vmatprep.subr.bf16.mxu0 0
    %6426 = vmatpush1.bf16.msra.mxu0 0
    %6427 = vmatprep.subr.bf16.mxu0 0
    %6428 = vmatpush1.bf16.msra.mxu0 0
    %6429 = vmatprep.subr.bf16.mxu0 0
    %6430 = vmatpush1.bf16.msra.mxu0 0
    %6431 = vmatprep.subr.bf16.mxu0 0
    %6432 = vmatpush1.bf16.msra.mxu0 0
    %6433 = vmatprep.subr.bf16.mxu0 0
    %6434 = vmatpush1.bf16.msra.mxu0 0
    %6435 = vmatprep.subr.bf16.mxu0 0
    %6436 = vmatpush1.bf16.msra.mxu0 0
    %6437 = vmatprep.subr.bf16.mxu0 0
    %6438 = vmatpush1.bf16.msra.mxu0 0
    %6439 = vmatprep.subr.bf16.mxu0 0
    %6440 = vmatpush1.bf16.msra.mxu0 0
    %6441 = vmatprep.subr.bf16.mxu0 0
    %6442 = vmatpush1.bf16.msra.mxu0 0
    %6443 = vmatprep.mubr.bf16.mxu0 0
    %6444 = vmatmul.mubr.bf16.gmra.mrb[0].mxu0 %v6388
    %v6445 = vpop.f32.mrb[0].mxu0
    %v6446 = vadd.f32 %v6373, %v6445
    %v6447 = vpop.f32.mrb[0].mxu0
    %v6448 = vpop.f32.mrb[0].mxu0
    %v6449 = vadd.f32 %v6373, %v6448
    %v6450 = vpop.f32.mrb[0].mxu0
    %6451 = vmatprep.mubr.bf16.mxu0 0
    %6452 = vmatmul.mubr.bf16.gmra.mrb[0].mxu0 %v6391
    %v6453 = vpop.f32.mrb[0].mxu0
    %v6454 = vadd.f32 %v6373, %v6453
    %v6455 = vpop.f32.mrb[0].mxu0
    %v6456 = vpop.f32.mrb[0].mxu0
    %v6457 = vadd.f32 %v6373, %v6456
    %v6458 = vpop.f32.mrb[0].mxu0
    %6459 = vmatprep.mubr.bf16.mxu0 0
    %6460 = vmatmul.mubr.bf16.gmra.mrb[0].mxu0 %v6394
    %v6461 = vpop.f32.mrb[0].mxu0
    %v6462 = vadd.f32 %v6373, %v6461
    %v6463 = vpop.f32.mrb[0].mxu0
    %v6464 = vpop.f32.mrb[0].mxu0
    %v6465 = vadd.f32 %v6373, %v6464
    %v6466 = vpop.f32.mrb[0].mxu0
    %6467 = vmatprep.mubr.bf16.mxu0 0
    %6468 = vmatmul.mubr.bf16.gmra.mrb[0].mxu0 %v6397
    %v6469 = vpop.f32.mrb[0].mxu0
    %v6470 = vadd.f32 %v6373, %v6469
    %v6471 = vpop.f32.mrb[0].mxu0
    %v6472 = vpop.f32.mrb[0].mxu0
    %v6473 = vadd.f32 %v6373, %v6472
    %v6474 = vpop.f32.mrb[0].mxu0
    %6475 = vmatprep.mubr.bf16.mxu0 0
    %6476 = vmatmul.mubr.bf16.gmra.mrb[0].mxu0 %v6400
    %v6477 = vpop.f32.mrb[0].mxu0
    %v6478 = vadd.f32 %v6373, %v6477
    %v6479 = vpop.f32.mrb[0].mxu0
    %v6480 = vpop.f32.mrb[0].mxu0
    %v6481 = vadd.f32 %v6373, %v6480
    %v6482 = vpop.f32.mrb[0].mxu0
    %6483 = vmatprep.mubr.bf16.mxu0 0
    %6484 = vmatmul.mubr.bf16.gmra.mrb[0].mxu0 %v6403
    %v6485 = vpop.f32.mrb[0].mxu0
    %v6486 = vadd.f32 %v6373, %v6485
    %v6487 = vpop.f32.mrb[0].mxu0
    %v6488 = vpop.f32.mrb[0].mxu0
    %v6489 = vadd.f32 %v6373, %v6488
    %v6490 = vpop.f32.mrb[0].mxu0
    %6491 = vmatprep.mubr.bf16.mxu0 0
    %6492 = vmatmul.mubr.bf16.gmra.mrb[0].mxu0 %v6406
    %v6493 = vpop.f32.mrb[0].mxu0
    %v6494 = vadd.f32 %v6373, %v6493
    %v6495 = vpop.f32.mrb[0].mxu0
    %v6496 = vpop.f32.mrb[0].mxu0
    %v6497 = vadd.f32 %v6373, %v6496
    %v6498 = vpop.f32.mrb[0].mxu0
    %6499 = vmatprep.mubr.bf16.mxu0 0
    %6500 = vmatmul.mubr.bf16.gmra.mrb[0].mxu0 %v6409
    %v6501 = vpop.f32.mrb[0].mxu0
    %v6502 = vadd.f32 %v6373, %v6501
    %v6503 = vpop.f32.mrb[0].mxu0
    %v6504 = vpop.f32.mrb[0].mxu0
    %v6505 = vadd.f32 %v6373, %v6504
    %v6506 = vpop.f32.mrb[0].mxu0
    %6507 = vdwg.mxu0
    %v6508 = vmax.f32 %v6446, 0.0
    %v6509 = vmax.f32 %v6449, 0.0
    %v6510 = vmax.f32 %v6454, 0.0
    %v6511 = vmax.f32 %v6457, 0.0
    %v6512 = vmax.f32 %v6462, 0.0
    %v6513 = vmax.f32 %v6465, 0.0
    %v6514 = vmax.f32 %v6470, 0.0
    %v6515 = vmax.f32 %v6473, 0.0
    %v6516 = vmax.f32 %v6478, 0.0
    %v6517 = vmax.f32 %v6481, 0.0
    %v6518 = vmax.f32 %v6486, 0.0
    %v6519 = vmax.f32 %v6489, 0.0
    %v6520 = vmax.f32 %v6494, 0.0
    %v6521 = vmax.f32 %v6497, 0.0
    %v6522 = vmax.f32 %v6502, 0.0
    %v6523 = vmax.f32 %v6505, 0.0
    %v6524 = vpack.c.bf16 %v6509, %v6508
    %v6525 = vpack.c.bf16 %v6511, %v6510
    %v6526 = vpack.c.bf16 %v6513, %v6512
    %v6527 = vpack.c.bf16 %v6515, %v6514
    %v6528 = vpack.c.bf16 %v6517, %v6516
    %v6529 = vpack.c.bf16 %v6519, %v6518
    %v6530 = vpack.c.bf16 %v6521, %v6520
    %v6531 = vpack.c.bf16 %v6523, %v6522
    %s6532 = scalar_lea.vmem %s13, 32
    %v6533 = vld [vmem:[%s6532] sm:$0xf]
    %v6534 = vld [vmem:[%s6532 + $0x4] sm:$0xf]
    %v6535 = vld [vmem:[%s6532 + $0x8] sm:$0xf]
    %v6536 = vld [vmem:[%s6532 + $0xc] sm:$0xf]
    %v6537 = vld [vmem:[%s6532 + $0x10] sm:$0xf]
    %v6538 = vld [vmem:[%s6532 + $0x14] sm:$0xf]
    %v6539 = vld [vmem:[%s6532 + $0x18] sm:$0xf]
    %v6540 = vld [vmem:[%s6532 + $0x1c] sm:$0xf]
    %s6541 = scalar_lea.vmem %s14, 1
    %v6542 = vld [vmem:[%s6541] sm:$0x1]
    %v6544 = vlaneseq
    %v6545 = vshrl.u32 %v6544, 7
    %v6546 = vsub.s32 0, %v6545
    %v6547 = vrot.slane %v6542, %v6546
    %v6557 = vunpack.c.l.b16 %v6533
    %v6558 = vunpack.c.l.b16 %v6534
    %v6559 = vunpack.c.l.b16 %v6535
    %v6560 = vunpack.c.l.b16 %v6536
    %v6561 = vunpack.c.l.b16 %v6537
    %v6562 = vunpack.c.l.b16 %v6538
    %v6563 = vunpack.c.l.b16 %v6539
    %v6564 = vunpack.c.l.b16 %v6540
    %v6565 = vpack.c.b16 %v6558, %v6557
    %v6566 = vpack.c.b16 %v6560, %v6559
    %v6567 = vpack.c.b16 %v6562, %v6561
    %v6568 = vpack.c.b16 %v6564, %v6563
    %v6574 = vsel %vm3401, %v6524, 0
    %v6577 = vsel %vm3401, %v6525, 0
    %v6580 = vsel %vm3401, %v6526, 0
    %v6583 = vsel %vm3401, %v6527, 0
    %v6586 = vsel %vm3401, %v6528, 0
    %v6589 = vsel %vm3401, %v6529, 0
    %v6592 = vsel %vm3401, %v6530, 0
    %v6595 = vsel %vm3401, %v6531, 0
    %6597 = vmatprep.subr.bf16.mxu0 0
    %6598 = vmatpush1.bf16.msra.mxu0 %v6565
    %6599 = vmatprep.subr.bf16.mxu0 0
    %6600 = vmatpush1.bf16.msra.mxu0 %v6566
    %6601 = vmatprep.subr.bf16.mxu0 0
    %6602 = vmatpush1.bf16.msra.mxu0 %v6567
    %6603 = vmatprep.subr.bf16.mxu0 0
    %6604 = vmatpush1.bf16.msra.mxu0 %v6568
    %6605 = vmatprep.subr.bf16.mxu0 0
    %6606 = vmatpush1.bf16.msra.mxu0 0
    %6607 = vmatprep.subr.bf16.mxu0 0
    %6608 = vmatpush1.bf16.msra.mxu0 0
    %6609 = vmatprep.subr.bf16.mxu0 0
    %6610 = vmatpush1.bf16.msra.mxu0 0
    %6611 = vmatprep.subr.bf16.mxu0 0
    %6612 = vmatpush1.bf16.msra.mxu0 0
    %6613 = vmatprep.subr.bf16.mxu0 0
    %6614 = vmatpush1.bf16.msra.mxu0 0
    %6615 = vmatprep.subr.bf16.mxu0 0
    %6616 = vmatpush1.bf16.msra.mxu0 0
    %6617 = vmatprep.subr.bf16.mxu0 0
    %6618 = vmatpush1.bf16.msra.mxu0 0
    %6619 = vmatprep.subr.bf16.mxu0 0
    %6620 = vmatpush1.bf16.msra.mxu0 0
    %6621 = vmatprep.subr.bf16.mxu0 0
    %6622 = vmatpush1.bf16.msra.mxu0 0
    %6623 = vmatprep.subr.bf16.mxu0 0
    %6624 = vmatpush1.bf16.msra.mxu0 0
    %6625 = vmatprep.subr.bf16.mxu0 0
    %6626 = vmatpush1.bf16.msra.mxu0 0
    %6627 = vmatprep.subr.bf16.mxu0 0
    %6628 = vmatpush1.bf16.msra.mxu0 0
    %6629 = vmatprep.mubr.bf16.mxu0 0
    %6630 = vmatmul.mubr.bf16.gmra.mrb[0].mxu0 %v6574
    %v6631 = vpop.f32.mrb[0].mxu0
    %v6632 = vadd.f32 %v6547, %v6631
    %v6633 = vpop.f32.mrb[0].mxu0
    %v6634 = vpop.f32.mrb[0].mxu0
    %v6635 = vadd.f32 %v6547, %v6634
    %v6636 = vpop.f32.mrb[0].mxu0
    %6637 = vmatprep.mubr.bf16.mxu0 0
    %6638 = vmatmul.mubr.bf16.gmra.mrb[0].mxu0 %v6577
    %v6639 = vpop.f32.mrb[0].mxu0
    %v6640 = vadd.f32 %v6547, %v6639
    %v6641 = vpop.f32.mrb[0].mxu0
    %v6642 = vpop.f32.mrb[0].mxu0
    %v6643 = vadd.f32 %v6547, %v6642
    %v6644 = vpop.f32.mrb[0].mxu0
    %6645 = vmatprep.mubr.bf16.mxu0 0
    %6646 = vmatmul.mubr.bf16.gmra.mrb[0].mxu0 %v6580
    %v6647 = vpop.f32.mrb[0].mxu0
    %v6648 = vadd.f32 %v6547, %v6647
    %v6649 = vpop.f32.mrb[0].mxu0
    %v6650 = vpop.f32.mrb[0].mxu0
    %v6651 = vadd.f32 %v6547, %v6650
    %v6652 = vpop.f32.mrb[0].mxu0
    %6653 = vmatprep.mubr.bf16.mxu0 0
    %6654 = vmatmul.mubr.bf16.gmra.mrb[0].mxu0 %v6583
    %v6655 = vpop.f32.mrb[0].mxu0
    %v6656 = vadd.f32 %v6547, %v6655
    %v6657 = vpop.f32.mrb[0].mxu0
    %v6658 = vpop.f32.mrb[0].mxu0
    %v6659 = vadd.f32 %v6547, %v6658
    %v6660 = vpop.f32.mrb[0].mxu0
    %6661 = vmatprep.mubr.bf16.mxu0 0
    %6662 = vmatmul.mubr.bf16.gmra.mrb[0].mxu0 %v6586
    %v6663 = vpop.f32.mrb[0].mxu0
    %v6664 = vadd.f32 %v6547, %v6663
    %v6665 = vpop.f32.mrb[0].mxu0
    %v6666 = vpop.f32.mrb[0].mxu0
    %v6667 = vadd.f32 %v6547, %v6666
    %v6668 = vpop.f32.mrb[0].mxu0
    %6669 = vmatprep.mubr.bf16.mxu0 0
    %6670 = vmatmul.mubr.bf16.gmra.mrb[0].mxu0 %v6589
    %v6671 = vpop.f32.mrb[0].mxu0
    %v6672 = vadd.f32 %v6547, %v6671
    %v6673 = vpop.f32.mrb[0].mxu0
    %v6674 = vpop.f32.mrb[0].mxu0
    %v6675 = vadd.f32 %v6547, %v6674
    %v6676 = vpop.f32.mrb[0].mxu0
    %6677 = vmatprep.mubr.bf16.mxu0 0
    %6678 = vmatmul.mubr.bf16.gmra.mrb[0].mxu0 %v6592
    %v6679 = vpop.f32.mrb[0].mxu0
    %v6680 = vadd.f32 %v6547, %v6679
    %v6681 = vpop.f32.mrb[0].mxu0
    %v6682 = vpop.f32.mrb[0].mxu0
    %v6683 = vadd.f32 %v6547, %v6682
    %v6684 = vpop.f32.mrb[0].mxu0
    %6685 = vmatprep.mubr.bf16.mxu0 0
    %6686 = vmatmul.mubr.bf16.gmra.mrb[0].mxu0 %v6595
    %v6687 = vpop.f32.mrb[0].mxu0
    %v6688 = vadd.f32 %v6547, %v6687
    %v6689 = vpop.f32.mrb[0].mxu0
    %v6690 = vpop.f32.mrb[0].mxu0
    %v6691 = vadd.f32 %v6547, %v6690
    %v6692 = vpop.f32.mrb[0].mxu0
    %6693 = vdwg.mxu0
    %v6694 = vadd.f32 %v6338, %v6632
    %v6695 = vadd.f32 %v6339, %v6635
    %v6696 = vadd.f32 %v6340, %v6640
    %v6697 = vadd.f32 %v6341, %v6643
    %v6698 = vadd.f32 %v6342, %v6648
    %v6699 = vadd.f32 %v6343, %v6651
    %v6700 = vadd.f32 %v6344, %v6656
    %v6701 = vadd.f32 %v6345, %v6659
    %v6702 = vadd.f32 %v6346, %v6664
    %v6703 = vadd.f32 %v6347, %v6667
    %v6704 = vadd.f32 %v6348, %v6672
    %v6705 = vadd.f32 %v6349, %v6675
    %v6706 = vadd.f32 %v6350, %v6680
    %v6707 = vadd.f32 %v6351, %v6683
    %v6708 = vadd.f32 %v6352, %v6688
    %v6709 = vadd.f32 %v6353, %v6691
    %s6710 = scalar_lea.vmem %s15, 2
    %v6711 = vld [vmem:[%s6710] sm:$0x3]
    %v6712 = vsel %vm614, %v6694, 0.0
    %6713 = vadd.xlane.f32.xlu0 %v6712
    %v6714 = vpop.xlane.xlu0 %6713
    %v6715 = vsel %vm614, %v6695, 0.0
    %6716 = vadd.xlane.f32.xlu0 %v6715
    %v6717 = vpop.xlane.xlu0 %6716
    %v6718 = vsel %vm614, %v6696, 0.0
    %6719 = vadd.xlane.f32.xlu0 %v6718
    %v6720 = vpop.xlane.xlu0 %6719
    %v6721 = vsel %vm614, %v6697, 0.0
    %6722 = vadd.xlane.f32.xlu0 %v6721
    %v6723 = vpop.xlane.xlu0 %6722
    %v6724 = vsel %vm614, %v6698, 0.0
    %6725 = vadd.xlane.f32.xlu0 %v6724
    %v6726 = vpop.xlane.xlu0 %6725
    %v6727 = vsel %vm614, %v6699, 0.0
    %6728 = vadd.xlane.f32.xlu0 %v6727
    %v6729 = vpop.xlane.xlu0 %6728
    %v6730 = vsel %vm614, %v6700, 0.0
    %6731 = vadd.xlane.f32.xlu0 %v6730
    %v6732 = vpop.xlane.xlu0 %6731
    %v6733 = vsel %vm614, %v6701, 0.0
    %6734 = vadd.xlane.f32.xlu0 %v6733
    %v6735 = vpop.xlane.xlu0 %6734
    %v6736 = vsel %vm614, %v6702, 0.0
    %6737 = vadd.xlane.f32.xlu0 %v6736
    %v6738 = vpop.xlane.xlu0 %6737
    %v6739 = vsel %vm614, %v6703, 0.0
    %6740 = vadd.xlane.f32.xlu0 %v6739
    %v6741 = vpop.xlane.xlu0 %6740
    %v6742 = vsel %vm614, %v6704, 0.0
    %6743 = vadd.xlane.f32.xlu0 %v6742
    %v6744 = vpop.xlane.xlu0 %6743
    %v6745 = vsel %vm614, %v6705, 0.0
    %6746 = vadd.xlane.f32.xlu0 %v6745
    %v6747 = vpop.xlane.xlu0 %6746
    %v6748 = vsel %vm614, %v6706, 0.0
    %6749 = vadd.xlane.f32.xlu0 %v6748
    %v6750 = vpop.xlane.xlu0 %6749
    %v6751 = vsel %vm614, %v6707, 0.0
    %6752 = vadd.xlane.f32.xlu0 %v6751
    %v6753 = vpop.xlane.xlu0 %6752
    %v6754 = vsel %vm614, %v6708, 0.0
    %6755 = vadd.xlane.f32.xlu0 %v6754
    %v6756 = vpop.xlane.xlu0 %6755
    %v6757 = vsel %vm614, %v6709, 0.0
    %6758 = vadd.xlane.f32.xlu0 %v6757
    %v6759 = vpop.xlane.xlu0 %6758
    %v6760 = vmul.f32 %v6714, %v2985
    %v6761 = vmul.f32 %v6717, %v2985
    %v6762 = vmul.f32 %v6720, %v2985
    %v6763 = vmul.f32 %v6723, %v2985
    %v6764 = vmul.f32 %v6726, %v2985
    %v6765 = vmul.f32 %v6729, %v2985
    %v6766 = vmul.f32 %v6732, %v2985
    %v6767 = vmul.f32 %v6735, %v2985
    %v6768 = vmul.f32 %v6738, %v2985
    %v6769 = vmul.f32 %v6741, %v2985
    %v6770 = vmul.f32 %v6744, %v2985
    %v6771 = vmul.f32 %v6747, %v2985
    %v6772 = vmul.f32 %v6750, %v2985
    %v6773 = vmul.f32 %v6753, %v2985
    %v6774 = vmul.f32 %v6756, %v2985
    %v6775 = vmul.f32 %v6759, %v2985
    %v6776 = vsub.f32 %v6694, %v6760
    %v6777 = vsub.f32 %v6695, %v6761
    %v6778 = vsub.f32 %v6696, %v6762
    %v6779 = vsub.f32 %v6697, %v6763
    %v6780 = vsub.f32 %v6698, %v6764
    %v6781 = vsub.f32 %v6699, %v6765
    %v6782 = vsub.f32 %v6700, %v6766
    %v6783 = vsub.f32 %v6701, %v6767
    %v6784 = vsub.f32 %v6702, %v6768
    %v6785 = vsub.f32 %v6703, %v6769
    %v6786 = vsub.f32 %v6704, %v6770
    %v6787 = vsub.f32 %v6705, %v6771
    %v6788 = vsub.f32 %v6706, %v6772
    %v6789 = vsub.f32 %v6707, %v6773
    %v6790 = vsub.f32 %v6708, %v6774
    %v6791 = vsub.f32 %v6709, %v6775
    %v6792 = vmul.f32 %v6776, %v6776
    %v6793 = vmul.f32 %v6777, %v6777
    %v6794 = vmul.f32 %v6778, %v6778
    %v6795 = vmul.f32 %v6779, %v6779
    %v6796 = vmul.f32 %v6780, %v6780
    %v6797 = vmul.f32 %v6781, %v6781
    %v6798 = vmul.f32 %v6782, %v6782
    %v6799 = vmul.f32 %v6783, %v6783
    %v6800 = vmul.f32 %v6784, %v6784
    %v6801 = vmul.f32 %v6785, %v6785
    %v6802 = vmul.f32 %v6786, %v6786
    %v6803 = vmul.f32 %v6787, %v6787
    %v6804 = vmul.f32 %v6788, %v6788
    %v6805 = vmul.f32 %v6789, %v6789
    %v6806 = vmul.f32 %v6790, %v6790
    %v6807 = vmul.f32 %v6791, %v6791
    %v6808 = vsel %vm614, %v6792, 0.0
    %6809 = vadd.xlane.f32.xlu0 %v6808
    %v6810 = vpop.xlane.xlu0 %6809
    %v6811 = vsel %vm614, %v6793, 0.0
    %6812 = vadd.xlane.f32.xlu0 %v6811
    %v6813 = vpop.xlane.xlu0 %6812
    %v6814 = vsel %vm614, %v6794, 0.0
    %6815 = vadd.xlane.f32.xlu0 %v6814
    %v6816 = vpop.xlane.xlu0 %6815
    %v6817 = vsel %vm614, %v6795, 0.0
    %6818 = vadd.xlane.f32.xlu0 %v6817
    %v6819 = vpop.xlane.xlu0 %6818
    %v6820 = vsel %vm614, %v6796, 0.0
    %6821 = vadd.xlane.f32.xlu0 %v6820
    %v6822 = vpop.xlane.xlu0 %6821
    %v6823 = vsel %vm614, %v6797, 0.0
    %6824 = vadd.xlane.f32.xlu0 %v6823
    %v6825 = vpop.xlane.xlu0 %6824
    %v6826 = vsel %vm614, %v6798, 0.0
    %6827 = vadd.xlane.f32.xlu0 %v6826
    %v6828 = vpop.xlane.xlu0 %6827
    %v6829 = vsel %vm614, %v6799, 0.0
    %6830 = vadd.xlane.f32.xlu0 %v6829
    %v6831 = vpop.xlane.xlu0 %6830
    %v6832 = vsel %vm614, %v6800, 0.0
    %6833 = vadd.xlane.f32.xlu0 %v6832
    %v6834 = vpop.xlane.xlu0 %6833
    %v6835 = vsel %vm614, %v6801, 0.0
    %6836 = vadd.xlane.f32.xlu0 %v6835
    %v6837 = vpop.xlane.xlu0 %6836
    %v6838 = vsel %vm614, %v6802, 0.0
    %6839 = vadd.xlane.f32.xlu0 %v6838
    %v6840 = vpop.xlane.xlu0 %6839
    %v6841 = vsel %vm614, %v6803, 0.0
    %6842 = vadd.xlane.f32.xlu0 %v6841
    %v6843 = vpop.xlane.xlu0 %6842
    %v6844 = vsel %vm614, %v6804, 0.0
    %6845 = vadd.xlane.f32.xlu0 %v6844
    %v6846 = vpop.xlane.xlu0 %6845
    %v6847 = vsel %vm614, %v6805, 0.0
    %6848 = vadd.xlane.f32.xlu0 %v6847
    %v6849 = vpop.xlane.xlu0 %6848
    %v6850 = vsel %vm614, %v6806, 0.0
    %6851 = vadd.xlane.f32.xlu0 %v6850
    %v6852 = vpop.xlane.xlu0 %6851
    %v6853 = vsel %vm614, %v6807, 0.0
    %6854 = vadd.xlane.f32.xlu0 %v6853
    %v6855 = vpop.xlane.xlu0 %6854
    %v6856 = vmul.f32 %v6810, %v2985
    %v6857 = vmul.f32 %v6813, %v2985
    %v6858 = vmul.f32 %v6816, %v2985
    %v6859 = vmul.f32 %v6819, %v2985
    %v6860 = vmul.f32 %v6822, %v2985
    %v6861 = vmul.f32 %v6825, %v2985
    %v6862 = vmul.f32 %v6828, %v2985
    %v6863 = vmul.f32 %v6831, %v2985
    %v6864 = vmul.f32 %v6834, %v2985
    %v6865 = vmul.f32 %v6837, %v2985
    %v6866 = vmul.f32 %v6840, %v2985
    %v6867 = vmul.f32 %v6843, %v2985
    %v6868 = vmul.f32 %v6846, %v2985
    %v6869 = vmul.f32 %v6849, %v2985
    %v6870 = vmul.f32 %v6852, %v2985
    %v6871 = vmul.f32 %v6855, %v2985
    %v6872 = vadd.f32 %v6856, 1e-05
    %v6873 = vadd.f32 %v6857, 1e-05
    %v6874 = vadd.f32 %v6858, 1e-05
    %v6875 = vadd.f32 %v6859, 1e-05
    %v6876 = vadd.f32 %v6860, 1e-05
    %v6877 = vadd.f32 %v6861, 1e-05
    %v6878 = vadd.f32 %v6862, 1e-05
    %v6879 = vadd.f32 %v6863, 1e-05
    %v6880 = vadd.f32 %v6864, 1e-05
    %v6881 = vadd.f32 %v6865, 1e-05
    %v6882 = vadd.f32 %v6866, 1e-05
    %v6883 = vadd.f32 %v6867, 1e-05
    %v6884 = vadd.f32 %v6868, 1e-05
    %v6885 = vadd.f32 %v6869, 1e-05
    %v6886 = vadd.f32 %v6870, 1e-05
    %v6887 = vadd.f32 %v6871, 1e-05
    %v6888 = vrsqrt.pop %v6872
    %v6889 = vrsqrt.pop %v6873
    %v6890 = vrsqrt.pop %v6874
    %v6891 = vrsqrt.pop %v6875
    %v6892 = vrsqrt.pop %v6876
    %v6893 = vrsqrt.pop %v6877
    %v6894 = vrsqrt.pop %v6878
    %v6895 = vrsqrt.pop %v6879
    %v6896 = vrsqrt.pop %v6880
    %v6897 = vrsqrt.pop %v6881
    %v6898 = vrsqrt.pop %v6882
    %v6899 = vrsqrt.pop %v6883
    %v6900 = vrsqrt.pop %v6884
    %v6901 = vrsqrt.pop %v6885
    %v6902 = vrsqrt.pop %v6886
    %v6903 = vrsqrt.pop %v6887
    %v6904 = vmul.f32 %v6776, %v6888
    %v6905 = vmul.f32 %v6777, %v6889
    %v6906 = vmul.f32 %v6778, %v6890
    %v6907 = vmul.f32 %v6779, %v6891
    %v6908 = vmul.f32 %v6780, %v6892
    %v6909 = vmul.f32 %v6781, %v6893
    %v6910 = vmul.f32 %v6782, %v6894
    %v6911 = vmul.f32 %v6783, %v6895
    %v6912 = vmul.f32 %v6784, %v6896
    %v6913 = vmul.f32 %v6785, %v6897
    %v6914 = vmul.f32 %v6786, %v6898
    %v6915 = vmul.f32 %v6787, %v6899
    %v6916 = vmul.f32 %v6788, %v6900
    %v6917 = vmul.f32 %v6789, %v6901
    %v6918 = vmul.f32 %v6790, %v6902
    %v6919 = vmul.f32 %v6791, %v6903
    %v6920 = vlaneseq
    %v6921 = vshrl.u32 %v6920, 7
    %v6922 = vsub.s32 0, %v6921
    %v6923 = vrot.slane %v6711, %v6922
    %v6924 = vmul.f32 %v6904, %v6923
    %v6925 = vmul.f32 %v6905, %v6923
    %v6926 = vmul.f32 %v6906, %v6923
    %v6927 = vmul.f32 %v6907, %v6923
    %v6928 = vmul.f32 %v6908, %v6923
    %v6929 = vmul.f32 %v6909, %v6923
    %v6930 = vmul.f32 %v6910, %v6923
    %v6931 = vmul.f32 %v6911, %v6923
    %v6932 = vmul.f32 %v6912, %v6923
    %v6933 = vmul.f32 %v6913, %v6923
    %v6934 = vmul.f32 %v6914, %v6923
    %v6935 = vmul.f32 %v6915, %v6923
    %v6936 = vmul.f32 %v6916, %v6923
    %v6937 = vmul.f32 %v6917, %v6923
    %v6938 = vmul.f32 %v6918, %v6923
    %v6939 = vmul.f32 %v6919, %v6923
    %v6940 = vlaneseq
    %v6941 = vshrl.u32 %v6940, 7
    %v6942 = vsub.s32 1, %v6941
    %v6943 = vrot.slane %v6711, %v6942
    %v6944 = vadd.f32 %v6924, %v6943
    %v6945 = vadd.f32 %v6925, %v6943
    %v6946 = vadd.f32 %v6926, %v6943
    %v6947 = vadd.f32 %v6927, %v6943
    %v6948 = vadd.f32 %v6928, %v6943
    %v6949 = vadd.f32 %v6929, %v6943
    %v6950 = vadd.f32 %v6930, %v6943
    %v6951 = vadd.f32 %v6931, %v6943
    %v6952 = vadd.f32 %v6932, %v6943
    %v6953 = vadd.f32 %v6933, %v6943
    %v6954 = vadd.f32 %v6934, %v6943
    %v6955 = vadd.f32 %v6935, %v6943
    %v6956 = vadd.f32 %v6936, %v6943
    %v6957 = vadd.f32 %v6937, %v6943
    %v6958 = vadd.f32 %v6938, %v6943
    %v6959 = vadd.f32 %v6939, %v6943
    %v6960 = vld [vmem:[%s16] sm:$0x3]
    %v6961 = vsel %vm614, %v6944, 0.0
    %6962 = vadd.xlane.f32.xlu0 %v6961
    %v6963 = vpop.xlane.xlu0 %6962
    %v6964 = vsel %vm614, %v6945, 0.0
    %6965 = vadd.xlane.f32.xlu0 %v6964
    %v6966 = vpop.xlane.xlu0 %6965
    %v6967 = vsel %vm614, %v6946, 0.0
    %6968 = vadd.xlane.f32.xlu0 %v6967
    %v6969 = vpop.xlane.xlu0 %6968
    %v6970 = vsel %vm614, %v6947, 0.0
    %6971 = vadd.xlane.f32.xlu0 %v6970
    %v6972 = vpop.xlane.xlu0 %6971
    %v6973 = vsel %vm614, %v6948, 0.0
    %6974 = vadd.xlane.f32.xlu0 %v6973
    %v6975 = vpop.xlane.xlu0 %6974
    %v6976 = vsel %vm614, %v6949, 0.0
    %6977 = vadd.xlane.f32.xlu0 %v6976
    %v6978 = vpop.xlane.xlu0 %6977
    %v6979 = vsel %vm614, %v6950, 0.0
    %6980 = vadd.xlane.f32.xlu0 %v6979
    %v6981 = vpop.xlane.xlu0 %6980
    %v6982 = vsel %vm614, %v6951, 0.0
    %6983 = vadd.xlane.f32.xlu0 %v6982
    %v6984 = vpop.xlane.xlu0 %6983
    %v6985 = vsel %vm614, %v6952, 0.0
    %6986 = vadd.xlane.f32.xlu0 %v6985
    %v6987 = vpop.xlane.xlu0 %6986
    %v6988 = vsel %vm614, %v6953, 0.0
    %6989 = vadd.xlane.f32.xlu0 %v6988
    %v6990 = vpop.xlane.xlu0 %6989
    %v6991 = vsel %vm614, %v6954, 0.0
    %6992 = vadd.xlane.f32.xlu0 %v6991
    %v6993 = vpop.xlane.xlu0 %6992
    %v6994 = vsel %vm614, %v6955, 0.0
    %6995 = vadd.xlane.f32.xlu0 %v6994
    %v6996 = vpop.xlane.xlu0 %6995
    %v6997 = vsel %vm614, %v6956, 0.0
    %6998 = vadd.xlane.f32.xlu0 %v6997
    %v6999 = vpop.xlane.xlu0 %6998
    %v7000 = vsel %vm614, %v6957, 0.0
    %7001 = vadd.xlane.f32.xlu0 %v7000
    %v7002 = vpop.xlane.xlu0 %7001
    %v7003 = vsel %vm614, %v6958, 0.0
    %7004 = vadd.xlane.f32.xlu0 %v7003
    %v7005 = vpop.xlane.xlu0 %7004
    %v7006 = vsel %vm614, %v6959, 0.0
    %7007 = vadd.xlane.f32.xlu0 %v7006
    %v7008 = vpop.xlane.xlu0 %7007
    %v7009 = vmul.f32 %v6963, %v2985
    %v7010 = vmul.f32 %v6966, %v2985
    %v7011 = vmul.f32 %v6969, %v2985
    %v7012 = vmul.f32 %v6972, %v2985
    %v7013 = vmul.f32 %v6975, %v2985
    %v7014 = vmul.f32 %v6978, %v2985
    %v7015 = vmul.f32 %v6981, %v2985
    %v7016 = vmul.f32 %v6984, %v2985
    %v7017 = vmul.f32 %v6987, %v2985
    %v7018 = vmul.f32 %v6990, %v2985
    %v7019 = vmul.f32 %v6993, %v2985
    %v7020 = vmul.f32 %v6996, %v2985
    %v7021 = vmul.f32 %v6999, %v2985
    %v7022 = vmul.f32 %v7002, %v2985
    %v7023 = vmul.f32 %v7005, %v2985
    %v7024 = vmul.f32 %v7008, %v2985
    %v7025 = vsub.f32 %v6944, %v7009
    %v7026 = vsub.f32 %v6945, %v7010
    %v7027 = vsub.f32 %v6946, %v7011
    %v7028 = vsub.f32 %v6947, %v7012
    %v7029 = vsub.f32 %v6948, %v7013
    %v7030 = vsub.f32 %v6949, %v7014
    %v7031 = vsub.f32 %v6950, %v7015
    %v7032 = vsub.f32 %v6951, %v7016
    %v7033 = vsub.f32 %v6952, %v7017
    %v7034 = vsub.f32 %v6953, %v7018
    %v7035 = vsub.f32 %v6954, %v7019
    %v7036 = vsub.f32 %v6955, %v7020
    %v7037 = vsub.f32 %v6956, %v7021
    %v7038 = vsub.f32 %v6957, %v7022
    %v7039 = vsub.f32 %v6958, %v7023
    %v7040 = vsub.f32 %v6959, %v7024
    %v7041 = vmul.f32 %v7025, %v7025
    %v7042 = vmul.f32 %v7026, %v7026
    %v7043 = vmul.f32 %v7027, %v7027
    %v7044 = vmul.f32 %v7028, %v7028
    %v7045 = vmul.f32 %v7029, %v7029
    %v7046 = vmul.f32 %v7030, %v7030
    %v7047 = vmul.f32 %v7031, %v7031
    %v7048 = vmul.f32 %v7032, %v7032
    %v7049 = vmul.f32 %v7033, %v7033
    %v7050 = vmul.f32 %v7034, %v7034
    %v7051 = vmul.f32 %v7035, %v7035
    %v7052 = vmul.f32 %v7036, %v7036
    %v7053 = vmul.f32 %v7037, %v7037
    %v7054 = vmul.f32 %v7038, %v7038
    %v7055 = vmul.f32 %v7039, %v7039
    %v7056 = vmul.f32 %v7040, %v7040
    %v7057 = vsel %vm614, %v7041, 0.0
    %7058 = vadd.xlane.f32.xlu0 %v7057
    %v7059 = vpop.xlane.xlu0 %7058
    %v7060 = vsel %vm614, %v7042, 0.0
    %7061 = vadd.xlane.f32.xlu0 %v7060
    %v7062 = vpop.xlane.xlu0 %7061
    %v7063 = vsel %vm614, %v7043, 0.0
    %7064 = vadd.xlane.f32.xlu0 %v7063
    %v7065 = vpop.xlane.xlu0 %7064
    %v7066 = vsel %vm614, %v7044, 0.0
    %7067 = vadd.xlane.f32.xlu0 %v7066
    %v7068 = vpop.xlane.xlu0 %7067
    %v7069 = vsel %vm614, %v7045, 0.0
    %7070 = vadd.xlane.f32.xlu0 %v7069
    %v7071 = vpop.xlane.xlu0 %7070
    %v7072 = vsel %vm614, %v7046, 0.0
    %7073 = vadd.xlane.f32.xlu0 %v7072
    %v7074 = vpop.xlane.xlu0 %7073
    %v7075 = vsel %vm614, %v7047, 0.0
    %7076 = vadd.xlane.f32.xlu0 %v7075
    %v7077 = vpop.xlane.xlu0 %7076
    %v7078 = vsel %vm614, %v7048, 0.0
    %7079 = vadd.xlane.f32.xlu0 %v7078
    %v7080 = vpop.xlane.xlu0 %7079
    %v7081 = vsel %vm614, %v7049, 0.0
    %7082 = vadd.xlane.f32.xlu0 %v7081
    %v7083 = vpop.xlane.xlu0 %7082
    %v7084 = vsel %vm614, %v7050, 0.0
    %7085 = vadd.xlane.f32.xlu0 %v7084
    %v7086 = vpop.xlane.xlu0 %7085
    %v7087 = vsel %vm614, %v7051, 0.0
    %7088 = vadd.xlane.f32.xlu0 %v7087
    %v7089 = vpop.xlane.xlu0 %7088
    %v7090 = vsel %vm614, %v7052, 0.0
    %7091 = vadd.xlane.f32.xlu0 %v7090
    %v7092 = vpop.xlane.xlu0 %7091
    %v7093 = vsel %vm614, %v7053, 0.0
    %7094 = vadd.xlane.f32.xlu0 %v7093
    %v7095 = vpop.xlane.xlu0 %7094
    %v7096 = vsel %vm614, %v7054, 0.0
    %7097 = vadd.xlane.f32.xlu0 %v7096
    %v7098 = vpop.xlane.xlu0 %7097
    %v7099 = vsel %vm614, %v7055, 0.0
    %7100 = vadd.xlane.f32.xlu0 %v7099
    %v7101 = vpop.xlane.xlu0 %7100
    %v7102 = vsel %vm614, %v7056, 0.0
    %7103 = vadd.xlane.f32.xlu0 %v7102
    %v7104 = vpop.xlane.xlu0 %7103
    %v7105 = vmul.f32 %v7059, %v2985
    %v7106 = vmul.f32 %v7062, %v2985
    %v7107 = vmul.f32 %v7065, %v2985
    %v7108 = vmul.f32 %v7068, %v2985
    %v7109 = vmul.f32 %v7071, %v2985
    %v7110 = vmul.f32 %v7074, %v2985
    %v7111 = vmul.f32 %v7077, %v2985
    %v7112 = vmul.f32 %v7080, %v2985
    %v7113 = vmul.f32 %v7083, %v2985
    %v7114 = vmul.f32 %v7086, %v2985
    %v7115 = vmul.f32 %v7089, %v2985
    %v7116 = vmul.f32 %v7092, %v2985
    %v7117 = vmul.f32 %v7095, %v2985
    %v7118 = vmul.f32 %v7098, %v2985
    %v7119 = vmul.f32 %v7101, %v2985
    %v7120 = vmul.f32 %v7104, %v2985
    %v7121 = vadd.f32 %v7105, 1e-05
    %v7122 = vadd.f32 %v7106, 1e-05
    %v7123 = vadd.f32 %v7107, 1e-05
    %v7124 = vadd.f32 %v7108, 1e-05
    %v7125 = vadd.f32 %v7109, 1e-05
    %v7126 = vadd.f32 %v7110, 1e-05
    %v7127 = vadd.f32 %v7111, 1e-05
    %v7128 = vadd.f32 %v7112, 1e-05
    %v7129 = vadd.f32 %v7113, 1e-05
    %v7130 = vadd.f32 %v7114, 1e-05
    %v7131 = vadd.f32 %v7115, 1e-05
    %v7132 = vadd.f32 %v7116, 1e-05
    %v7133 = vadd.f32 %v7117, 1e-05
    %v7134 = vadd.f32 %v7118, 1e-05
    %v7135 = vadd.f32 %v7119, 1e-05
    %v7136 = vadd.f32 %v7120, 1e-05
    %v7137 = vrsqrt.pop %v7121
    %v7138 = vrsqrt.pop %v7122
    %v7139 = vrsqrt.pop %v7123
    %v7140 = vrsqrt.pop %v7124
    %v7141 = vrsqrt.pop %v7125
    %v7142 = vrsqrt.pop %v7126
    %v7143 = vrsqrt.pop %v7127
    %v7144 = vrsqrt.pop %v7128
    %v7145 = vrsqrt.pop %v7129
    %v7146 = vrsqrt.pop %v7130
    %v7147 = vrsqrt.pop %v7131
    %v7148 = vrsqrt.pop %v7132
    %v7149 = vrsqrt.pop %v7133
    %v7150 = vrsqrt.pop %v7134
    %v7151 = vrsqrt.pop %v7135
    %v7152 = vrsqrt.pop %v7136
    %v7153 = vmul.f32 %v7025, %v7137
    %v7154 = vmul.f32 %v7026, %v7138
    %v7155 = vmul.f32 %v7027, %v7139
    %v7156 = vmul.f32 %v7028, %v7140
    %v7157 = vmul.f32 %v7029, %v7141
    %v7158 = vmul.f32 %v7030, %v7142
    %v7159 = vmul.f32 %v7031, %v7143
    %v7160 = vmul.f32 %v7032, %v7144
    %v7161 = vmul.f32 %v7033, %v7145
    %v7162 = vmul.f32 %v7034, %v7146
    %v7163 = vmul.f32 %v7035, %v7147
    %v7164 = vmul.f32 %v7036, %v7148
    %v7165 = vmul.f32 %v7037, %v7149
    %v7166 = vmul.f32 %v7038, %v7150
    %v7167 = vmul.f32 %v7039, %v7151
    %v7168 = vmul.f32 %v7040, %v7152
    %v7169 = vlaneseq
    %v7170 = vshrl.u32 %v7169, 7
    %v7171 = vsub.s32 0, %v7170
    %v7172 = vrot.slane %v6960, %v7171
    %v7173 = vmul.f32 %v7153, %v7172
    %v7174 = vmul.f32 %v7154, %v7172
    %v7175 = vmul.f32 %v7155, %v7172
    %v7176 = vmul.f32 %v7156, %v7172
    %v7177 = vmul.f32 %v7157, %v7172
    %v7178 = vmul.f32 %v7158, %v7172
    %v7179 = vmul.f32 %v7159, %v7172
    %v7180 = vmul.f32 %v7160, %v7172
    %v7181 = vmul.f32 %v7161, %v7172
    %v7182 = vmul.f32 %v7162, %v7172
    %v7183 = vmul.f32 %v7163, %v7172
    %v7184 = vmul.f32 %v7164, %v7172
    %v7185 = vmul.f32 %v7165, %v7172
    %v7186 = vmul.f32 %v7166, %v7172
    %v7187 = vmul.f32 %v7167, %v7172
    %v7188 = vmul.f32 %v7168, %v7172
    %v7189 = vlaneseq
    %v7190 = vshrl.u32 %v7189, 7
    %v7191 = vsub.s32 1, %v7190
    %v7192 = vrot.slane %v6960, %v7191
    %v7193 = vadd.f32 %v7173, %v7192
    %v7194 = vadd.f32 %v7174, %v7192
    %v7195 = vadd.f32 %v7175, %v7192
    %v7196 = vadd.f32 %v7176, %v7192
    %v7197 = vadd.f32 %v7177, %v7192
    %v7198 = vadd.f32 %v7178, %v7192
    %v7199 = vadd.f32 %v7179, %v7192
    %v7200 = vadd.f32 %v7180, %v7192
    %v7201 = vadd.f32 %v7181, %v7192
    %v7202 = vadd.f32 %v7182, %v7192
    %v7203 = vadd.f32 %v7183, %v7192
    %v7204 = vadd.f32 %v7184, %v7192
    %v7205 = vadd.f32 %v7185, %v7192
    %v7206 = vadd.f32 %v7186, %v7192
    %v7207 = vadd.f32 %v7187, %v7192
    %v7208 = vadd.f32 %v7188, %v7192
    %v7209 = vpack.c.bf16 %v7194, %v7193
    %v7210 = vpack.c.bf16 %v7196, %v7195
    %v7211 = vpack.c.bf16 %v7198, %v7197
    %v7212 = vpack.c.bf16 %v7200, %v7199
    %v7213 = vpack.c.bf16 %v7202, %v7201
    %v7214 = vpack.c.bf16 %v7204, %v7203
    %v7215 = vpack.c.bf16 %v7206, %v7205
    %v7216 = vpack.c.bf16 %v7208, %v7207
    %v7217 = vld [vmem:[%s17] sm:$0xf]
    %v7218 = vld [vmem:[%s17 + $0x4] sm:$0xf]
    %v7219 = vld [vmem:[%s17 + $0x8] sm:$0xf]
    %v7220 = vld [vmem:[%s17 + $0xc] sm:$0xf]
    %v7221 = vld [vmem:[%s18] sm:$0x1]
    %v7223 = vlaneseq
    %v7224 = vshrl.u32 %v7223, 7
    %v7225 = vsub.s32 0, %v7224
    %v7226 = vrot.slane %v7221, %v7225
    %v7232 = vunpack.c.l.b16 %v7217
    %v7233 = vunpack.c.l.b16 %v7218
    %v7234 = vunpack.c.l.b16 %v7219
    %v7235 = vunpack.c.l.b16 %v7220
    %v7236 = vpack.c.b16 %v7233, %v7232
    %v7237 = vpack.c.b16 %v7235, %v7234
    %v7241 = vsel %vm614, %v7209, 0
    %v7244 = vsel %vm614, %v7210, 0
    %v7247 = vsel %vm614, %v7211, 0
    %v7250 = vsel %vm614, %v7212, 0
    %v7253 = vsel %vm614, %v7213, 0
    %v7256 = vsel %vm614, %v7214, 0
    %v7259 = vsel %vm614, %v7215, 0
    %v7262 = vsel %vm614, %v7216, 0
    %7264 = vmatprep.subr.bf16.mxu0 0
    %7265 = vmatpush1.bf16.msra.mxu0 %v7236
    %7266 = vmatprep.subr.bf16.mxu0 0
    %7267 = vmatpush1.bf16.msra.mxu0 %v7237
    %7268 = vmatprep.subr.bf16.mxu0 0
    %7269 = vmatpush1.bf16.msra.mxu0 0
    %7270 = vmatprep.subr.bf16.mxu0 0
    %7271 = vmatpush1.bf16.msra.mxu0 0
    %7272 = vmatprep.subr.bf16.mxu0 0
    %7273 = vmatpush1.bf16.msra.mxu0 0
    %7274 = vmatprep.subr.bf16.mxu0 0
    %7275 = vmatpush1.bf16.msra.mxu0 0
    %7276 = vmatprep.subr.bf16.mxu0 0
    %7277 = vmatpush1.bf16.msra.mxu0 0
    %7278 = vmatprep.subr.bf16.mxu0 0
    %7279 = vmatpush1.bf16.msra.mxu0 0
    %7280 = vmatprep.subr.bf16.mxu0 0
    %7281 = vmatpush1.bf16.msra.mxu0 0
    %7282 = vmatprep.subr.bf16.mxu0 0
    %7283 = vmatpush1.bf16.msra.mxu0 0
    %7284 = vmatprep.subr.bf16.mxu0 0
    %7285 = vmatpush1.bf16.msra.mxu0 0
    %7286 = vmatprep.subr.bf16.mxu0 0
    %7287 = vmatpush1.bf16.msra.mxu0 0
    %7288 = vmatprep.subr.bf16.mxu0 0
    %7289 = vmatpush1.bf16.msra.mxu0 0
    %7290 = vmatprep.subr.bf16.mxu0 0
    %7291 = vmatpush1.bf16.msra.mxu0 0
    %7292 = vmatprep.subr.bf16.mxu0 0
    %7293 = vmatpush1.bf16.msra.mxu0 0
    %7294 = vmatprep.subr.bf16.mxu0 0
    %7295 = vmatpush1.bf16.msra.mxu0 0
    %7296 = vmatprep.mubr.bf16.mxu0 0
    %7297 = vmatmul.mubr.bf16.gmra.mrb[0].mxu0 %v7241
    %v7298 = vpop.f32.mrb[0].mxu0
    %v7299 = vadd.f32 %v7226, %v7298
    %v7300 = vpop.f32.mrb[0].mxu0
    %v7301 = vpop.f32.mrb[0].mxu0
    %v7302 = vadd.f32 %v7226, %v7301
    %v7303 = vpop.f32.mrb[0].mxu0
    %7304 = vmatprep.mubr.bf16.mxu0 0
    %7305 = vmatmul.mubr.bf16.gmra.mrb[0].mxu0 %v7244
    %v7306 = vpop.f32.mrb[0].mxu0
    %v7307 = vadd.f32 %v7226, %v7306
    %v7308 = vpop.f32.mrb[0].mxu0
    %v7309 = vpop.f32.mrb[0].mxu0
    %v7310 = vadd.f32 %v7226, %v7309
    %v7311 = vpop.f32.mrb[0].mxu0
    %7312 = vmatprep.mubr.bf16.mxu0 0
    %7313 = vmatmul.mubr.bf16.gmra.mrb[0].mxu0 %v7247
    %v7314 = vpop.f32.mrb[0].mxu0
    %v7315 = vadd.f32 %v7226, %v7314
    %v7316 = vpop.f32.mrb[0].mxu0
    %v7317 = vpop.f32.mrb[0].mxu0
    %v7318 = vadd.f32 %v7226, %v7317
    %v7319 = vpop.f32.mrb[0].mxu0
    %7320 = vmatprep.mubr.bf16.mxu0 0
    %7321 = vmatmul.mubr.bf16.gmra.mrb[0].mxu0 %v7250
    %v7322 = vpop.f32.mrb[0].mxu0
    %v7323 = vadd.f32 %v7226, %v7322
    %v7324 = vpop.f32.mrb[0].mxu0
    %v7325 = vpop.f32.mrb[0].mxu0
    %v7326 = vadd.f32 %v7226, %v7325
    %v7327 = vpop.f32.mrb[0].mxu0
    %7328 = vmatprep.mubr.bf16.mxu0 0
    %7329 = vmatmul.mubr.bf16.gmra.mrb[0].mxu0 %v7253
    %v7330 = vpop.f32.mrb[0].mxu0
    %v7331 = vadd.f32 %v7226, %v7330
    %v7332 = vpop.f32.mrb[0].mxu0
    %v7333 = vpop.f32.mrb[0].mxu0
    %v7334 = vadd.f32 %v7226, %v7333
    %v7335 = vpop.f32.mrb[0].mxu0
    %7336 = vmatprep.mubr.bf16.mxu0 0
    %7337 = vmatmul.mubr.bf16.gmra.mrb[0].mxu0 %v7256
    %v7338 = vpop.f32.mrb[0].mxu0
    %v7339 = vadd.f32 %v7226, %v7338
    %v7340 = vpop.f32.mrb[0].mxu0
    %v7341 = vpop.f32.mrb[0].mxu0
    %v7342 = vadd.f32 %v7226, %v7341
    %v7343 = vpop.f32.mrb[0].mxu0
    %7344 = vmatprep.mubr.bf16.mxu0 0
    %7345 = vmatmul.mubr.bf16.gmra.mrb[0].mxu0 %v7259
    %v7346 = vpop.f32.mrb[0].mxu0
    %v7347 = vadd.f32 %v7226, %v7346
    %v7348 = vpop.f32.mrb[0].mxu0
    %v7349 = vpop.f32.mrb[0].mxu0
    %v7350 = vadd.f32 %v7226, %v7349
    %v7351 = vpop.f32.mrb[0].mxu0
    %7352 = vmatprep.mubr.bf16.mxu0 0
    %7353 = vmatmul.mubr.bf16.gmra.mrb[0].mxu0 %v7262
    %v7354 = vpop.f32.mrb[0].mxu0
    %v7355 = vadd.f32 %v7226, %v7354
    %v7356 = vpop.f32.mrb[0].mxu0
    %v7357 = vpop.f32.mrb[0].mxu0
    %v7358 = vadd.f32 %v7226, %v7357
    %v7359 = vpop.f32.mrb[0].mxu0
    %7360 = vdwg.mxu0
    %v7361 = vmul.f32 %v7299, %v301
    %v7362 = vmul.f32 %v7302, %v308
    %v7363 = vmul.f32 %v7307, %v315
    %v7364 = vmul.f32 %v7310, %v322
    %v7365 = vmul.f32 %v7315, %v329
    %v7366 = vmul.f32 %v7318, %v336
    %v7367 = vmul.f32 %v7323, %v343
    %v7368 = vmul.f32 %v7326, %v350
    %v7369 = vmul.f32 %v7331, %v357
    %v7370 = vmul.f32 %v7334, %v364
    %v7371 = vmul.f32 %v7339, %v371
    %v7372 = vmul.f32 %v7342, %v378
    %v7373 = vmul.f32 %v7347, %v385
    %v7374 = vmul.f32 %v7350, %v392
    %v7375 = vmul.f32 %v7355, %v399
    %v7376 = vmul.f32 %v7358, %v406
    %v7377 = vadd.f32 %v7361, %v167
    %v7378 = vadd.f32 %v7362, %v168
    %v7379 = vadd.f32 %v7363, %v169
    %v7380 = vadd.f32 %v7364, %v170
    %v7381 = vadd.f32 %v7365, %v171
    %v7382 = vadd.f32 %v7366, %v172
    %v7383 = vadd.f32 %v7367, %v173
    %v7384 = vadd.f32 %v7368, %v174
    %v7385 = vadd.f32 %v7369, %v175
    %v7386 = vadd.f32 %v7370, %v176
    %v7387 = vadd.f32 %v7371, %v177
    %v7388 = vadd.f32 %v7372, %v178
    %v7389 = vadd.f32 %v7373, %v179
    %v7390 = vadd.f32 %v7374, %v180
    %v7391 = vadd.f32 %v7375, %v181
    %v7392 = vadd.f32 %v7376, %v182
    %v7393 = vld [vmem:[#allocation2] sm:$0x1]
    %v7395 = vlaneseq
    %v7396 = vshrl.u32 %v7395, 7
    %v7397 = vsub.s32 0, %v7396
    %v7398 = vrot.slane %v7393, %v7397
    %7399 = vset.pattern.permute.xlu0 0
    %7400 = vperm.xlu0 %7399, %v7398
    %v7401 = vpop.permute.xlu0 %7400
    %7403 = vxpose.xlu0.b32.start [1/16] %v7377, 128
    %7404 = vxpose.xlu0.b32.cont [2/16] %v7378, 128
    %7405 = vxpose.xlu0.b32.cont [3/16] %v7379, 128
    %7406 = vxpose.xlu0.b32.cont [4/16] %v7380, 128
    %7407 = vxpose.xlu0.b32.cont [5/16] %v7381, 128
    %7408 = vxpose.xlu0.b32.cont [6/16] %v7382, 128
    %7409 = vxpose.xlu0.b32.cont [7/16] %v7383, 128
    %7410 = vxpose.xlu0.b32.cont [8/16] %v7384, 128
    %7411 = vxpose.xlu0.b32.cont [9/16] %v7385, 128
    %7412 = vxpose.xlu0.b32.cont [10/16] %v7386, 128
    %7413 = vxpose.xlu0.b32.cont [11/16] %v7387, 128
    %7414 = vxpose.xlu0.b32.cont [12/16] %v7388, 128
    %7415 = vxpose.xlu0.b32.cont [13/16] %v7389, 128
    %7416 = vxpose.xlu0.b32.cont [14/16] %v7390, 128
    %7417 = vxpose.xlu0.b32.cont [15/16] %v7391, 128
    %7418 = vxpose.xlu0.b32.end [16/16] %v7392, 128
    %v7419 = vpop.trf.xlu0
    %v7420 = vpop.trf.xlu0
    %v7421 = vpop.trf.xlu0
    %v7422 = vpop.trf.xlu0
    %v7423 = vpop.trf.xlu0
    %v7424 = vpop.trf.xlu0
    %v7425 = vpop.trf.xlu0
    %v7426 = vpop.trf.xlu0
    %v7427 = vpop.trf.xlu0
    %v7428 = vpop.trf.xlu0
    %v7429 = vpop.trf.xlu0
    %v7430 = vpop.trf.xlu0
    %v7431 = vpop.trf.xlu0
    %v7432 = vpop.trf.xlu0
    %v7433 = vpop.trf.xlu0
    %v7434 = vpop.trf.xlu0
    %7435 = vmatprep.subr.mxu0 0.0
    %7436 = vmatpush1.msra.mxu0 %v85
    %7437 = vmatprep.subr.mxu0 0.0
    %7438 = vmatpush1.msra.mxu0 %v86
    %7439 = vmatprep.subr.mxu0 0.0
    %7440 = vmatpush1.msra.mxu0 %v87
    %7441 = vmatprep.subr.mxu0 0.0
    %7442 = vmatpush1.msra.mxu0 %v88
    %7443 = vmatprep.subr.mxu0 0.0
    %7444 = vmatpush1.msra.mxu0 %v89
    %7445 = vmatprep.subr.mxu0 0.0
    %7446 = vmatpush1.msra.mxu0 %v90
    %7447 = vmatprep.subr.mxu0 0.0
    %7448 = vmatpush1.msra.mxu0 %v91
    %7449 = vmatprep.subr.mxu0 0.0
    %7450 = vmatpush1.msra.mxu0 %v92
    %7451 = vmatprep.subr.mxu0 0.0
    %7452 = vmatpush1.msra.mxu0 %v93
    %7453 = vmatprep.subr.mxu0 0.0
    %7454 = vmatpush1.msra.mxu0 %v94
    %7455 = vmatprep.subr.mxu0 0.0
    %7456 = vmatpush1.msra.mxu0 %v95
    %7457 = vmatprep.subr.mxu0 0.0
    %7458 = vmatpush1.msra.mxu0 %v96
    %7459 = vmatprep.subr.mxu0 0.0
    %7460 = vmatpush1.msra.mxu0 %v97
    %7461 = vmatprep.subr.mxu0 0.0
    %7462 = vmatpush1.msra.mxu0 %v98
    %7463 = vmatprep.subr.mxu0 0.0
    %7464 = vmatpush1.msra.mxu0 %v99
    %7465 = vmatprep.subr.mxu0 0.0
    %7466 = vmatpush1.msra.mxu0 %v100
    %7467 = vmatprep.subr.mxu0 0.0
    %7468 = vmatpush1.msra.mxu0 0.0
    %7469 = vmatprep.subr.mxu0 0.0
    %7470 = vmatpush1.msra.mxu0 0.0
    %7471 = vmatprep.subr.mxu0 0.0
    %7472 = vmatpush1.msra.mxu0 0.0
    %7473 = vmatprep.subr.mxu0 0.0
    %7474 = vmatpush1.msra.mxu0 0.0
    %7475 = vmatprep.subr.mxu0 0.0
    %7476 = vmatpush1.msra.mxu0 0.0
    %7477 = vmatprep.subr.mxu0 0.0
    %7478 = vmatpush1.msra.mxu0 0.0
    %7479 = vmatprep.subr.mxu0 0.0
    %7480 = vmatpush1.msra.mxu0 0.0
    %7481 = vmatprep.subr.mxu0 0.0
    %7482 = vmatpush1.msra.mxu0 0.0
    %7483 = vmatprep.subr.mxu0 0.0
    %7484 = vmatpush1.msra.mxu0 0.0
    %7485 = vmatprep.subr.mxu0 0.0
    %7486 = vmatpush1.msra.mxu0 0.0
    %7487 = vmatprep.subr.mxu0 0.0
    %7488 = vmatpush1.msra.mxu0 0.0
    %7489 = vmatprep.subr.mxu0 0.0
    %7490 = vmatpush1.msra.mxu0 0.0
    %7491 = vmatprep.subr.mxu0 0.0
    %7492 = vmatpush1.msra.mxu0 0.0
    %7493 = vmatprep.subr.mxu0 0.0
    %7494 = vmatpush1.msra.mxu0 0.0
    %7495 = vmatprep.subr.mxu0 0.0
    %7496 = vmatpush1.msra.mxu0 0.0
    %7497 = vmatprep.subr.mxu0 0.0
    %7498 = vmatpush1.msra.mxu0 0.0
    %7499 = vmatprep.mubr.f32.mxu0 0.0
    %7500 = vmatmul.mubr.f32.gmra.mrb[0].mxu0 %v7419
    %v7501 = vpop.f32.mrb[0].mxu0
    %v7502 = vadd.f32 %v7401, %v7501
    %v7503 = vpop.f32.mrb[0].mxu0
    %7504 = vdwg.mxu0
    %7505 = vst.msk [vmem:[#allocation3] sm:$0xff] %vm614, %v7502
    // Predicated region
    $region82: #{tpu_custom_call.1} parent=1 // pred_check
      _
    $region83: #{tpu_custom_call.1} parent=1 // pred_check_branch
      %7507 = sbr.rel (0) target = $region85
    $region84: #{tpu_custom_call.1} parent=1 // pred_region
      %s7509 = ssub.s32 128, 128
      %7510 = vsyncadd [#allocation4], %s7509
      %s7512 = sshll.u32 [#allocation3], 4
      %s7513 = int_to_ptr.vmem [resolvable:$true] %s7512
      %7515 = dma.vmem_to_hbm [thread:$0]  %s7513, 128, %s20, [#allocation4]
    $region85: #{tpu_custom_call.1} parent=1 // pred_fallthru
      _
    // Predicated region
    $region86: #{tpu_custom_call.1} parent=1 // pred_check
      _
    $region87: #{tpu_custom_call.1} parent=1 // pred_check_branch
      %7517 = sbr.rel (0) target = $region89
    $region88: #{tpu_custom_call.1} parent=1 // pred_region
      %7518 = dma.done [#allocation4], 128
    $region89: #{tpu_custom_call.1} parent=1 // pred_fallthru
      _
    %7519 = vsyncpa [#allocation4], 1

</llo_original>
